<compile_context>
chip_gen: v6e
topology: v6e:2x2x1
jax: 0.10.0
libtpu: 0.0.40
codegen_flags: <defaults>
</compile_context>

<pallas_src>
import functools

import jax
import jax.numpy as jnp
from jax.experimental import pallas as pl
from jax.experimental.pallas import tpu as pltpu

LANE = 128                                # channel dims padded to a multiple of this
EPS = 1e-5                                # BatchNorm eps (both BN flavours use 1e-5)
_VMEM_LIMIT_BYTES = 32 * 1024 * 1024      # explicit scoped-VMEM budget (v7x: 64 MiB phys)


# ----------------------------------------------------------------------------
# small helpers
# ----------------------------------------------------------------------------
def _rup(x, m):
    return ((x + m - 1) // m) * m


def _pad_axis(a, axis, multiple):
    rem = (-a.shape[axis]) % multiple
    if rem == 0:
        return a
    pads = [(0, 0)] * a.ndim
    pads[axis] = (0, rem)
    return jnp.pad(a, pads)


# ----------------------------------------------------------------------------
# kernel 1: 1x1 conv + folded BN + optional ReLU  (one MXU contraction / tile)
# ----------------------------------------------------------------------------
def _pw_conv_kernel(x_ref, w_ref, b_ref, o_ref, *, act):
    acc = jnp.dot(x_ref[...], w_ref[...], preferred_element_type=jnp.float32)
    y = acc + b_ref[0]
    if act == "relu":
        y = jnp.maximum(y, 0.0)
    o_ref[...] = y.astype(o_ref.dtype)


def _pointwise_conv(x2d, w, b, *, act, compute_dtype, tm=128):
    m, kp = x2d.shape
    kp2, np_ = w.shape
    assert kp == kp2
    xp = _pad_axis(x2d, 0, tm)
    mp = xp.shape[0]
    out = pl.pallas_call(
        functools.partial(_pw_conv_kernel, act=act),
        out_shape=jax.ShapeDtypeStruct((mp, np_), compute_dtype),
        grid=(mp // tm,),
        in_specs=[
            pl.BlockSpec((tm, kp), lambda i: (i, 0)),
            pl.BlockSpec((kp, np_), lambda i: (0, 0)),
            pl.BlockSpec((1, np_), lambda i: (0, 0)),
        ],
        out_specs=pl.BlockSpec((tm, np_), lambda i: (i, 0)),
        compiler_params=pltpu.CompilerParams(
            dimension_semantics=("parallel",),
            vmem_limit_bytes=_VMEM_LIMIT_BYTES),
    )(xp.astype(compute_dtype), w.astype(compute_dtype), b.astype(jnp.float32))
    return out[:m] if mp != m else out


# ----------------------------------------------------------------------------
# kernel 2: 3x3 stride-1 conv + folded BN + optional ReLU
#           (kw taps folded into the contraction; grid over batch x row tiles)
# ----------------------------------------------------------------------------
def _conv3x3_kernel(x_ref, w_ref, b_ref, o_ref, *, th, out_w, act):
    # x_ref: (1, Hp, Wp, CP) spatially padded image (resident per batch)
    # w_ref: (3, 3*CP, CPo)  weights with kw folded into K
    # b_ref: (1, CPo)
    # o_ref: (1, th, W, CPo)
    cp = x_ref.shape[-1]
    cpo = o_ref.shape[-1]
    row0 = pl.multiple_of(pl.program_id(1) * th, th)
    acc = jnp.zeros((th * out_w, cpo), jnp.float32)
    for kh in range(3):
        rows = x_ref[0, pl.ds(row0 + kh, th), :, :]                  # (th, Wp, CP)
        # fold the 3 kw taps into the contraction: K = 3*CP per kh
        lhs = jnp.concatenate([rows[:, kw:kw + out_w, :] for kw in range(3)],
                              axis=-1).reshape(th * out_w, 3 * cp)
        acc += jnp.dot(lhs, w_ref[kh], preferred_element_type=jnp.float32)
    y = acc + b_ref[0]
    if act == "relu":
        y = jnp.maximum(y, 0.0)
    o_ref[0] = y.reshape(th, out_w, cpo).astype(o_ref.dtype)


def _conv3x3(x_padded, wfold, b, *, act, compute_dtype, th=8):
    n, hp, wp, cp = x_padded.shape
    h, w = hp - 2, wp - 2
    cpo = wfold.shape[-1]
    if h % th != 0:
        th = h
    return pl.pallas_call(
        functools.partial(_conv3x3_kernel, th=th, out_w=w, act=act),
        out_shape=jax.ShapeDtypeStruct((n, h, w, cpo), compute_dtype),
        grid=(n, h // th),
        in_specs=[
            pl.BlockSpec((1, hp, wp, cp), lambda i, j: (i, 0, 0, 0)),
            pl.BlockSpec((3, 3 * cp, cpo), lambda i, j: (0, 0, 0)),
            pl.BlockSpec((1, cpo), lambda i, j: (0, 0)),
        ],
        out_specs=pl.BlockSpec((1, th, w, cpo), lambda i, j: (i, j, 0, 0)),
        compiler_params=pltpu.CompilerParams(
            dimension_semantics=("parallel", "parallel"),
            vmem_limit_bytes=_VMEM_LIMIT_BYTES),
    )(x_padded.astype(compute_dtype), wfold.astype(compute_dtype),
      b.astype(jnp.float32))


# ----------------------------------------------------------------------------
# kernel 3: fused TripletAttention (cw + hc gates) + residual add + ReLU
# ----------------------------------------------------------------------------
def _att_residual_kernel(w_ref, y_ref, s_ref, o_ref, *, c_real, ks):
    # w_ref: SMEM (2*(2*ks*ks+1),) f32:
    #        [cw conv w (spatially transposed), cw bias, hc conv w, hc bias]
    #        -- gate BatchNorm already folded in.
    # y_ref: (1, H, W, CP) branch2c output (padded channels are zero)
    # s_ref: (1, H, W, CP) shortcut branch
    y = y_ref[0].astype(jnp.float32)                  # (H, W, CP)
    h, w, cp = y.shape
    pad = (ks - 1) // 2
    nw = 2 * ks * ks

    def gate(pmax, pmean, base):
        # 7x7 "same" conv, 2 -> 1 channels, on the VPU (MXU useless at Cout=1).
        a, b = pmax.shape

        def spad(p):
            zr = jnp.zeros((pad, b), jnp.float32)
            p2 = jnp.concatenate([zr, p, zr], axis=0)
            zc = jnp.zeros((a + 2 * pad, pad), jnp.float32)
            return jnp.concatenate([zc, p2, zc], axis=1)

        planes = (spad(pmax), spad(pmean))
        acc = jnp.zeros((a, b), jnp.float32)
        for p in range(2):
            for dj in range(ks):
                for di in range(ks):
                    wsc = w_ref[base + (p * ks + dj) * ks + di]     # SMEM scalar
                    acc = acc + wsc * planes[p][dj:dj + a, di:di + b]
        return jax.nn.sigmoid(acc + w_ref[base + nw])

    # cw gate: ZPool over H, conv over (C, W); held in (W, C) orientation.
    s_cw = gate(jnp.max(y, axis=0)[:, :c_real],
                jnp.mean(y, axis=0)[:, :c_real], 0)                 # (W, C)
    # hc gate: ZPool over W, conv over (H, C); held in (H, C) orientation.
    s_hc = gate(jnp.max(y, axis=1)[:, :c_real],
                jnp.mean(y, axis=1)[:, :c_real], nw + 1)            # (H, C)

    # TODO(synk): hw (spatial) gate not implemented -- TripletAttention(ch_out*4)
    # makes `no_spatial` truthy in the original module, so the two gates are
    # averaged with weight 1/2.
    if cp > c_real:
        s_cw = jnp.concatenate(
            [s_cw, jnp.zeros((w, cp - c_real), jnp.float32)], axis=-1)
        s_hc = jnp.concatenate(
            [s_hc, jnp.zeros((h, cp - c_real), jnp.float32)], axis=-1)
    g = 0.5 * (s_cw[None, :, :] + s_hc[:, None, :])                 # (H, W, CP)

    out = jnp.maximum(y * g + s_ref[0].astype(jnp.float32), 0.0)
    o_ref[0] = out.astype(o_ref.dtype)


def _att_residual(wvec, y, sh, *, c_real, ks=7):
    n, h, w, cp = y.shape
    return pl.pallas_call(
        functools.partial(_att_residual_kernel, c_real=c_real, ks=ks),
        out_shape=jax.ShapeDtypeStruct((n, h, w, cp), y.dtype),
        grid=(n,),
        in_specs=[
            pl.BlockSpec(memory_space=pltpu.MemorySpace.SMEM),
            pl.BlockSpec((1, h, w, cp), lambda i: (i, 0, 0, 0)),
            pl.BlockSpec((1, h, w, cp), lambda i: (i, 0, 0, 0)),
        ],
        out_specs=pl.BlockSpec((1, h, w, cp), lambda i: (i, 0, 0, 0)),
        compiler_params=pltpu.CompilerParams(
            dimension_semantics=("parallel",),
            vmem_limit_bytes=_VMEM_LIMIT_BYTES),
    )(wvec, y, sh)


# ----------------------------------------------------------------------------
# kernel 4: residual add + ReLU (used only when att=False)
# ----------------------------------------------------------------------------
def _add_relu_kernel(a_ref, b_ref, o_ref):
    o_ref[...] = jnp.maximum(
        a_ref[...].astype(jnp.float32) + b_ref[...].astype(jnp.float32),
        0.0).astype(o_ref.dtype)


def _add_relu(a2d, b2d, *, tm=128):
    m, cp = a2d.shape
    ap = _pad_axis(a2d, 0, tm)
    bp = _pad_axis(b2d, 0, tm)
    mp = ap.shape[0]
    out = pl.pallas_call(
        _add_relu_kernel,
        out_shape=jax.ShapeDtypeStruct((mp, cp), a2d.dtype),
        grid=(mp // tm,),
        in_specs=[pl.BlockSpec((tm, cp), lambda i: (i, 0)),
                  pl.BlockSpec((tm, cp), lambda i: (i, 0))],
        out_specs=pl.BlockSpec((tm, cp), lambda i: (i, 0)),
        compiler_params=pltpu.CompilerParams(
            dimension_semantics=("parallel",),
            vmem_limit_bytes=_VMEM_LIMIT_BYTES),
    )(ap, bp)
    return out[:m] if mp != m else out


# ----------------------------------------------------------------------------
# parameter folding (eval-mode BN folded into conv weights, channel padding)
# ----------------------------------------------------------------------------
def _fold_cnl(p, cin_p, cout_p):
    kh, kw, cin, cout = p["w"].shape
    s = p["gamma"] / jnp.sqrt(p["var"] + EPS)
    w_eff = (p["w"] * s[None, None, None, :]).astype(jnp.float32)
    b_eff = ((p["b"] - p["mean"]) * s + p["beta"]).astype(jnp.float32)
    w_p = jnp.zeros((kh, kw, cin_p, cout_p), jnp.float32)
    w_p = w_p.at[:, :, :cin, :cout].set(w_eff)
    b_p = jnp.zeros((1, cout_p), jnp.float32).at[0, :cout].set(b_eff)
    return w_p, b_p


def _fold_gate(p, *, transpose_spatial):
    s = (p["gamma"] / jnp.sqrt(p["var"] + EPS))[0]
    w_eff = (p["w"][0] * s).astype(jnp.float32)                 # (2, 7, 7)
    b_eff = (p["beta"] - p["mean"] * s).astype(jnp.float32)     # (1,)
    if transpose_spatial:                                       # cw gate runs transposed
        w_eff = jnp.transpose(w_eff, (0, 2, 1))
    return jnp.concatenate([w_eff.reshape(-1), b_eff])


# ----------------------------------------------------------------------------
# full forward pass
# ----------------------------------------------------------------------------
def bottleneck_forward(x_nchw, params, *, shortcut=False, att=True,
                       act="relu", compute_dtype=jnp.float32):
    """BottleNeck_TripletAttention.forward (stride=1, eval-mode BatchNorm)."""
    if act not in ("relu", None):
        # TODO(synk): other torch.nn.functional activations not implemented.
        raise NotImplementedError(act)
    n, cin, h, w = x_nchw.shape
    width = params["branch2a"]["w"].shape[-1]
    cout = params["branch2c"]["w"].shape[-1]
    cin_p, width_p, cout_p = _rup(cin, LANE), _rup(width, LANE), _rup(cout, LANE)

    # One layout change + channel pad for the whole block (NCHW -> NHWC-P).
    xh = _pad_axis(jnp.transpose(x_nchw, (0, 2, 3, 1)).astype(compute_dtype),
                   3, LANE)
    x2d = xh.reshape(n * h * w, cin_p)

    w2a, b2a = _fold_cnl(params["branch2a"], cin_p, width_p)
    w2b, b2b = _fold_cnl(params["branch2b"], width_p, width_p)
    w2c, b2c = _fold_cnl(params["branch2c"], width_p, cout_p)

    # branch2a: 1x1 conv + BN + act
    y = _pointwise_conv(x2d, w2a.reshape(cin_p, width_p), b2a, act=act,
                        compute_dtype=compute_dtype)
    # branch2b: 3x3 conv + BN + act (one small spatial pad for the halo; the
    # kw taps are folded into the contraction inside the kernel)
    y = jnp.pad(y.reshape(n, h, w, width_p), ((0, 0), (1, 1), (1, 1), (0, 0)))
    y = _conv3x3(y, w2b.reshape(3, 3 * width_p, width_p), b2b, act=act,
                 compute_dtype=compute_dtype)
    # branch2c: 1x1 conv + BN (no activation)
    y = _pointwise_conv(y.reshape(n * h * w, width_p),
                        w2c.reshape(width_p, cout_p), b2c, act=None,
                        compute_dtype=compute_dtype)
    y = y.reshape(n, h, w, cout_p)

    # shortcut branch
    if shortcut:
        assert cin == cout and cin_p == cout_p
        sh = xh.reshape(n, h, w, cout_p)
    else:
        wsh, bsh = _fold_cnl(params["short"], cin_p, cout_p)
        sh = _pointwise_conv(x2d, wsh.reshape(cin_p, cout_p), bsh, act=None,
                             compute_dtype=compute_dtype).reshape(n, h, w, cout_p)

    if att:
        wvec = jnp.concatenate([
            _fold_gate(params["att_cw"], transpose_spatial=True),
            _fold_gate(params["att_hc"], transpose_spatial=False),
        ]).astype(jnp.float32)
        out = _att_residual(wvec, y, sh, c_real=cout)
    else:
        out = _add_relu(y.reshape(n * h * w, cout_p),
                        sh.reshape(n * h * w, cout_p)).reshape(n, h, w, cout_p)

    out = out[..., :cout]
    return jnp.transpose(out, (0, 3, 1, 2)).astype(x_nchw.dtype)


# ----------------------------------------------------------------------------
# pure-JAX reference (literal translation of the PyTorch module, eval-mode BN)
# ----------------------------------------------------------------------------
def _ref_cnl(x, p, *, stride, act):
    w = jnp.transpose(p["w"], (3, 2, 0, 1))                 # HWIO -> OIHW
    k = p["w"].shape[0]
    pad = (k - 1) // 2
    y = jax.lax.conv_general_dilated(
        x, w, (stride, stride), [(pad, pad), (pad, pad)],
        dimension_numbers=("NCHW", "OIHW", "NCHW"))
    y = y + p["b"][None, :, None, None]
    s = (p["gamma"] / jnp.sqrt(p["var"] + EPS))[None, :, None, None]
    y = (y - p["mean"][None, :, None, None]) * s + p["beta"][None, :, None, None]
    if act == "relu":
        y = jnp.maximum(y, 0.0)
    return y


def _ref_gate(xp, p):
    zp = jnp.concatenate([jnp.max(xp, axis=1, keepdims=True),
                          jnp.mean(xp, axis=1, keepdims=True)], axis=1)
    y = jax.lax.conv_general_dilated(zp, p["w"], (1, 1), [(3, 3), (3, 3)],
                                     dimension_numbers=("NCHW", "OIHW", "NCHW"))
    s = p["gamma"][0] / jnp.sqrt(p["var"][0] + EPS)
    y = (y - p["mean"][0]) * s + p["beta"][0]
    return xp * jax.nn.sigmoid(y)


def _ref_triplet(x, p_cw, p_hc):
    x1 = jnp.transpose(x, (0, 2, 1, 3))
    o11 = jnp.transpose(_ref_gate(x1, p_cw), (0, 2, 1, 3))
    x2 = jnp.transpose(x, (0, 3, 2, 1))
    o21 = jnp.transpose(_ref_gate(x2, p_hc), (0, 3, 2, 1))
    # TripletAttention(ch_out*4): no_spatial is truthy -> only cw + hc, 1/2.
    return 0.5 * (o11 + o21)


def _ref_bottleneck(x, params, *, shortcut, att, act="relu"):
    y = _ref_cnl(x, params["branch2a"], stride=1, act=act)
    y = _ref_cnl(y, params["branch2b"], stride=1, act=act)
    y = _ref_cnl(y, params["branch2c"], stride=1, act=None)
    if att:
        y = _ref_triplet(y, params["att_cw"], params["att_hc"])
    sh = x if shortcut else _ref_cnl(x, params["short"], stride=1, act=None)
    return jnp.maximum(y + sh, 0.0)


# ----------------------------------------------------------------------------
# deterministic demo parameters
# ----------------------------------------------------------------------------
def _make_cnl_params(key, cin, cout, k):
    k1, k2, k3, k4, k5, k6 = jax.random.split(key, 6)
    return dict(
        w=0.1 * jax.random.normal(k1, (k, k, cin, cout), jnp.float32),   # HWIO
        b=0.1 * jax.random.normal(k2, (cout,), jnp.float32),
        gamma=1.0 + 0.1 * jax.random.normal(k3, (cout,), jnp.float32),
        beta=0.1 * jax.random.normal(k4, (cout,), jnp.float32),
        mean=0.1 * jax.random.normal(k5, (cout,), jnp.float32),
        var=0.5 + jnp.abs(jax.random.normal(k6, (cout,), jnp.float32)),
    )


def _make_gate_params(key):
    k1, k2, k3, k4, k5 = jax.random.split(key, 5)
    return dict(
        w=0.1 * jax.random.normal(k1, (1, 2, 7, 7), jnp.float32),        # OIHW
        gamma=1.0 + 0.1 * jax.random.normal(k2, (1,), jnp.float32),
        beta=0.1 * jax.random.normal(k3, (1,), jnp.float32),
        mean=0.1 * jax.random.normal(k4, (1,), jnp.float32),
        var=0.5 + jnp.abs(jax.random.normal(k5, (1,), jnp.float32)),
    )


if __name__ == "__main__":
    key = jax.random.PRNGKey(0)
    keys = jax.random.split(key, 8)

    # Config 1: BottleNeck_TripletAttention(ch_in=4, ch_out=4, stride=1,
    #           shortcut=False, act='relu', variant='d', att=True)
    ch_in, ch_out, N, H, W = 4, 4, 2, 16, 16
    x = jax.random.normal(keys[0], (N, ch_in, H, W), jnp.float32)
    params = dict(
        branch2a=_make_cnl_params(keys[1], ch_in, ch_out, 1),
        branch2b=_make_cnl_params(keys[2], ch_out, ch_out, 3),
        branch2c=_make_cnl_params(keys[3], ch_out, ch_out * 4, 1),
        short=_make_cnl_params(keys[4], ch_in, ch_out * 4, 1),
        att_cw=_make_gate_params(keys[5]),
        att_hc=_make_gate_params(keys[6]),
    )
    fwd = jax.jit(functools.partial(bottleneck_forward, shortcut=False, att=True))
    out = jax.block_until_ready(fwd(x, params))
    ref = _ref_bottleneck(x, params, shortcut=False, att=True)
    assert out.shape == (N, ch_out * 4, H, W)
    assert jnp.allclose(out, ref, atol=2e-4, rtol=2e-4), (
        "config1 mismatch, max |diff| = %e" % float(jnp.max(jnp.abs(out - ref))))

    # Config 2: identity shortcut, no attention (ch_in == ch_out * 4).
    ch_in2, ch_out2 = 16, 4
    keys2 = jax.random.split(keys[7], 4)
    x2 = jax.random.normal(keys2[0], (N, ch_in2, H, W), jnp.float32)
    params2 = dict(
        branch2a=_make_cnl_params(keys2[1], ch_in2, ch_out2, 1),
        branch2b=_make_cnl_params(keys2[2], ch_out2, ch_out2, 3),
        branch2c=_make_cnl_params(keys2[3], ch_out2, ch_out2 * 4, 1),
    )
    fwd2 = jax.jit(functools.partial(bottleneck_forward, shortcut=True, att=False))
    out2 = jax.block_until_ready(fwd2(x2, params2))
    ref2 = _ref_bottleneck(x2, params2, shortcut=True, att=False)
    assert jnp.allclose(out2, ref2, atol=2e-4, rtol=2e-4), (
        "config2 mismatch, max |diff| = %e" % float(jnp.max(jnp.abs(out2 - ref2))))

    print("KERNEL_OK")
</pallas_src>

<mosaic_0001>
module attributes {stable_mosaic.version = 11 : i64} {
  func.func @_pw_conv_kernel(%arg0: i32, %arg1: memref<128x128xf32, #tpu.memory_space<vmem>>, %arg2: memref<128x128xf32, #tpu.memory_space<vmem>>, %arg3: memref<1x128xf32, #tpu.memory_space<vmem>>, %arg4: memref<128x128xf32, #tpu.memory_space<vmem>>) attributes {dimension_semantics = [#tpu.dimension_semantics<parallel>], iteration_bounds = array<i64: 4>, scalar_prefetch = 0 : i64, scratch_operands = 0 : i64, tpu.core_type = #tpu.core_type<tc>, window_params = [{transform_indices = @transform_0, window_bounds = array<i64: 128, 128>}, {pipeline_mode = #tpu.pipeline_mode<synchronous>, transform_indices = @transform_1, window_bounds = array<i64: 128, 128>}, {pipeline_mode = #tpu.pipeline_mode<synchronous>, transform_indices = @transform_2, window_bounds = array<i64: 1, 128>}, {transform_indices = @transform_3, window_bounds = array<i64: 128, 128>}]} {
    %c0 = arith.constant 0 : index
    %c0_0 = arith.constant 0 : index
    %0 = vector.load %arg1[%c0, %c0_0] : memref<128x128xf32, #tpu.memory_space<vmem>>, vector<128x128xf32>
    %c0_1 = arith.constant 0 : index
    %c0_2 = arith.constant 0 : index
    %1 = vector.load %arg2[%c0_1, %c0_2] : memref<128x128xf32, #tpu.memory_space<vmem>>, vector<128x128xf32>
    %cst = arith.constant dense<0.000000e+00> : vector<128x128xf32>
    %2 = tpu.matmul %0, %1, %cst {dimension_numbers = #tpu.dot_dimension_numbers<[1], [0], [0], [1], [0, 0, 1, 1], [], []>} : vector<128x128xf32>, vector<128x128xf32>, vector<128x128xf32> -> vector<128x128xf32>
    %c0_3 = arith.constant 0 : index
    %c0_4 = arith.constant 0 : index
    %3 = vector.load %arg3[%c0_3, %c0_4] : memref<1x128xf32, #tpu.memory_space<vmem>>, vector<1x128xf32>
    %4 = vector.shape_cast %3 : vector<1x128xf32> to vector<128xf32>
    %5 = vector.shape_cast %4 : vector<128xf32> to vector<1x128xf32>
    %6 = vector.broadcast %5 : vector<1x128xf32> to vector<128x128xf32>
    %7 = arith.addf %2, %6 : vector<128x128xf32>
    %cst_5 = arith.constant 0.000000e+00 : f32
    %8 = vector.broadcast %cst_5 : f32 to vector<128x128xf32>
    %9 = arith.maximumf %7, %8 : vector<128x128xf32>
    %c0_6 = arith.constant 0 : index
    %c0_7 = arith.constant 0 : index
    %10 = vector.load %arg4[%c0_6, %c0_7] : memref<128x128xf32, #tpu.memory_space<vmem>>, vector<128x128xf32>
    tpu.vector_store %arg4[%c0_6, %c0_7], %9 {strides = array<i32>} : memref<128x128xf32, #tpu.memory_space<vmem>>, vector<128x128xf32>,
    return
  }
  func.func @transform_0(%arg0: i32) -> (i32, i32) {
    %c0_i32 = arith.constant 0 : i32
    %c0_i32_0 = arith.constant 0 : i32
    return %arg0, %c0_i32 : i32, i32
  }
  func.func @transform_1(%arg0: i32) -> (i32, i32) {
    %c0_i32 = arith.constant 0 : i32
    %c0_i32_0 = arith.constant 0 : i32
    %c0_i32_1 = arith.constant 0 : i32
    return %c0_i32, %c0_i32_0 : i32, i32
  }
  func.func @transform_2(%arg0: i32) -> (i32, i32) {
    %c0_i32 = arith.constant 0 : i32
    %c0_i32_0 = arith.constant 0 : i32
    %c0_i32_1 = arith.constant 0 : i32
    return %c0_i32, %c0_i32_0 : i32, i32
  }
  func.func @transform_3(%arg0: i32) -> (i32, i32) {
    %c0_i32 = arith.constant 0 : i32
    %c0_i32_0 = arith.constant 0 : i32
    return %arg0, %c0_i32 : i32, i32
  }
}

module attributes {stable_mosaic.version = 11 : i64} {
  func.func @_conv3x3_kernel(%arg0: i32, %arg1: i32, %arg2: memref<1x18x18x128xf32, #tpu.memory_space<vmem>>, %arg3: memref<3x384x128xf32, #tpu.memory_space<vmem>>, %arg4: memref<1x128xf32, #tpu.memory_space<vmem>>, %arg5: memref<1x8x16x128xf32, #tpu.memory_space<vmem>>) attributes {dimension_semantics = [#tpu.dimension_semantics<parallel>, #tpu.dimension_semantics<parallel>], iteration_bounds = array<i64: 2, 2>, scalar_prefetch = 0 : i64, scratch_operands = 0 : i64, tpu.core_type = #tpu.core_type<tc>, window_params = [{transform_indices = @transform_0, window_bounds = array<i64: 1, 18, 18, 128>}, {pipeline_mode = #tpu.pipeline_mode<synchronous>, transform_indices = @transform_1, window_bounds = array<i64: 3, 384, 128>}, {pipeline_mode = #tpu.pipeline_mode<synchronous>, transform_indices = @transform_2, window_bounds = array<i64: 1, 128>}, {transform_indices = @transform_3, window_bounds = array<i64: 1, 8, 16, 128>}]} {
    %c8_i32 = arith.constant 8 : i32
    %0 = arith.muli %arg1, %c8_i32 : i32
    %1 = tpu.assume_multiple %0, 8 : i32
    %cst = arith.constant 0.000000e+00 : f32
    %2 = vector.broadcast %cst : f32 to vector<128x128xf32>
    %c0_i32 = arith.constant 0 : i32
    %3 = arith.addi %1, %c0_i32 : i32
    %c0 = arith.constant 0 : index
    %4 = arith.index_cast %3 : i32 to index
    %c0_0 = arith.constant 0 : index
    %c0_1 = arith.constant 0 : index
    %5 = vector.load %arg2[%c0, %4, %c0_0, %c0_1] : memref<1x18x18x128xf32, #tpu.memory_space<vmem>>, vector<1x8x18x128xf32>
    %6 = vector.shape_cast %5 : vector<1x8x18x128xf32> to vector<8x18x128xf32>
    %7 = vector.extract_strided_slice %6 {offsets = [0, 0, 0], sizes = [8, 16, 128], strides = [1, 1, 1]} : vector<8x18x128xf32> to vector<8x16x128xf32>
    %8 = vector.extract_strided_slice %6 {offsets = [0, 1, 0], sizes = [8, 16, 128], strides = [1, 1, 1]} : vector<8x18x128xf32> to vector<8x16x128xf32>
    %9 = vector.extract_strided_slice %6 {offsets = [0, 2, 0], sizes = [8, 16, 128], strides = [1, 1, 1]} : vector<8x18x128xf32> to vector<8x16x128xf32>
    %10 = tpu.concatenate %7, %8, %9 in 2 : vector<8x16x128xf32>, vector<8x16x128xf32>, vector<8x16x128xf32> -> vector<8x16x384xf32>
    %11 = vector.shape_cast %10 : vector<8x16x384xf32> to vector<128x384xf32>
    %c0_2 = arith.constant 0 : index
    %c0_3 = arith.constant 0 : index
    %c0_4 = arith.constant 0 : index
    %12 = vector.load %arg3[%c0_2, %c0_3, %c0_4] : memref<3x384x128xf32, #tpu.memory_space<vmem>>, vector<1x384x128xf32>
    %13 = vector.shape_cast %12 : vector<1x384x128xf32> to vector<384x128xf32>
    %cst_5 = arith.constant dense<0.000000e+00> : vector<128x128xf32>
    %14 = tpu.matmul %11, %13, %cst_5 {dimension_numbers = #tpu.dot_dimension_numbers<[1], [0], [0], [1], [0, 0, 1, 1], [], []>} : vector<128x384xf32>, vector<384x128xf32>, vector<128x128xf32> -> vector<128x128xf32>
    %15 = arith.addf %2, %14 : vector<128x128xf32>
    %c1_i32 = arith.constant 1 : i32
    %16 = arith.addi %1, %c1_i32 : i32
    %c0_6 = arith.constant 0 : index
    %17 = arith.index_cast %16 : i32 to index
    %c0_7 = arith.constant 0 : index
    %c0_8 = arith.constant 0 : index
    %18 = vector.load %arg2[%c0_6, %17, %c0_7, %c0_8] : memref<1x18x18x128xf32, #tpu.memory_space<vmem>>, vector<1x8x18x128xf32>
    %19 = vector.shape_cast %18 : vector<1x8x18x128xf32> to vector<8x18x128xf32>
    %20 = vector.extract_strided_slice %19 {offsets = [0, 0, 0], sizes = [8, 16, 128], strides = [1, 1, 1]} : vector<8x18x128xf32> to vector<8x16x128xf32>
    %21 = vector.extract_strided_slice %19 {offsets = [0, 1, 0], sizes = [8, 16, 128], strides = [1, 1, 1]} : vector<8x18x128xf32> to vector<8x16x128xf32>
    %22 = vector.extract_strided_slice %19 {offsets = [0, 2, 0], sizes = [8, 16, 128], strides = [1, 1, 1]} : vector<8x18x128xf32> to vector<8x16x128xf32>
    %23 = tpu.concatenate %20, %21, %22 in 2 : vector<8x16x128xf32>, vector<8x16x128xf32>, vector<8x16x128xf32> -> vector<8x16x384xf32>
    %24 = vector.shape_cast %23 : vector<8x16x384xf32> to vector<128x384xf32>
    %c1 = arith.constant 1 : index
    %c0_9 = arith.constant 0 : index
    %c0_10 = arith.constant 0 : index
    %25 = vector.load %arg3[%c1, %c0_9, %c0_10] : memref<3x384x128xf32, #tpu.memory_space<vmem>>, vector<1x384x128xf32>
    %26 = vector.shape_cast %25 : vector<1x384x128xf32> to vector<384x128xf32>
    %cst_11 = arith.constant dense<0.000000e+00> : vector<128x128xf32>
    %27 = tpu.matmul %24, %26, %cst_11 {dimension_numbers = #tpu.dot_dimension_numbers<[1], [0], [0], [1], [0, 0, 1, 1], [], []>} : vector<128x384xf32>, vector<384x128xf32>, vector<128x128xf32> -> vector<128x128xf32>
    %28 = arith.addf %15, %27 : vector<128x128xf32>
    %c2_i32 = arith.constant 2 : i32
    %29 = arith.addi %1, %c2_i32 : i32
    %c0_12 = arith.constant 0 : index
    %30 = arith.index_cast %29 : i32 to index
    %c0_13 = arith.constant 0 : index
    %c0_14 = arith.constant 0 : index
    %31 = vector.load %arg2[%c0_12, %30, %c0_13, %c0_14] : memref<1x18x18x128xf32, #tpu.memory_space<vmem>>, vector<1x8x18x128xf32>
    %32 = vector.shape_cast %31 : vector<1x8x18x128xf32> to vector<8x18x128xf32>
    %33 = vector.extract_strided_slice %32 {offsets = [0, 0, 0], sizes = [8, 16, 128], strides = [1, 1, 1]} : vector<8x18x128xf32> to vector<8x16x128xf32>
    %34 = vector.extract_strided_slice %32 {offsets = [0, 1, 0], sizes = [8, 16, 128], strides = [1, 1, 1]} : vector<8x18x128xf32> to vector<8x16x128xf32>
    %35 = vector.extract_strided_slice %32 {offsets = [0, 2, 0], sizes = [8, 16, 128], strides = [1, 1, 1]} : vector<8x18x128xf32> to vector<8x16x128xf32>
    %36 = tpu.concatenate %33, %34, %35 in 2 : vector<8x16x128xf32>, vector<8x16x128xf32>, vector<8x16x128xf32> -> vector<8x16x384xf32>
    %37 = vector.shape_cast %36 : vector<8x16x384xf32> to vector<128x384xf32>
    %c2 = arith.constant 2 : index
    %c0_15 = arith.constant 0 : index
    %c0_16 = arith.constant 0 : index
    %38 = vector.load %arg3[%c2, %c0_15, %c0_16] : memref<3x384x128xf32, #tpu.memory_space<vmem>>, vector<1x384x128xf32>
    %39 = vector.shape_cast %38 : vector<1x384x128xf32> to vector<384x128xf32>
    %cst_17 = arith.constant dense<0.000000e+00> : vector<128x128xf32>
    %40 = tpu.matmul %37, %39, %cst_17 {dimension_numbers = #tpu.dot_dimension_numbers<[1], [0], [0], [1], [0, 0, 1, 1], [], []>} : vector<128x384xf32>, vector<384x128xf32>, vector<128x128xf32> -> vector<128x128xf32>
    %41 = arith.addf %28, %40 : vector<128x128xf32>
    %c0_18 = arith.constant 0 : index
    %c0_19 = arith.constant 0 : index
    %42 = vector.load %arg4[%c0_18, %c0_19] : memref<1x128xf32, #tpu.memory_space<vmem>>, vector<1x128xf32>
    %43 = vector.shape_cast %42 : vector<1x128xf32> to vector<128xf32>
    %44 = vector.shape_cast %43 : vector<128xf32> to vector<1x128xf32>
    %45 = vector.broadcast %44 : vector<1x128xf32> to vector<128x128xf32>
    %46 = arith.addf %41, %45 : vector<128x128xf32>
    %cst_20 = arith.constant 0.000000e+00 : f32
    %47 = vector.broadcast %cst_20 : f32 to vector<128x128xf32>
    %48 = arith.maximumf %46, %47 : vector<128x128xf32>
    %49 = vector.shape_cast %48 : vector<128x128xf32> to vector<8x16x128xf32>
    %c0_21 = arith.constant 0 : index
    %c0_22 = arith.constant 0 : index
    %c0_23 = arith.constant 0 : index
    %c0_24 = arith.constant 0 : index
    %50 = vector.load %arg5[%c0_21, %c0_22, %c0_23, %c0_24] : memref<1x8x16x128xf32, #tpu.memory_space<vmem>>, vector<1x8x16x128xf32>
    %51 = vector.shape_cast %50 : vector<1x8x16x128xf32> to vector<8x16x128xf32>
    %52 = vector.shape_cast %49 : vector<8x16x128xf32> to vector<1x8x16x128xf32>
    tpu.vector_store %arg5[%c0_21, %c0_22, %c0_23, %c0_24], %52 {strides = array<i32>} : memref<1x8x16x128xf32, #tpu.memory_space<vmem>>, vector<1x8x16x128xf32>,
    return
  }
  func.func @transform_0(%arg0: i32, %arg1: i32) -> (i32, i32, i32, i32) {
    %c0_i32 = arith.constant 0 : i32
    %c0_i32_0 = arith.constant 0 : i32
    %c0_i32_1 = arith.constant 0 : i32
    %c0_i32_2 = arith.constant 0 : i32
    return %arg0, %c0_i32, %c0_i32_0, %c0_i32_1 : i32, i32, i32, i32
  }
  func.func @transform_1(%arg0: i32, %arg1: i32) -> (i32, i32, i32) {
    %c0_i32 = arith.constant 0 : i32
    %c0_i32_0 = arith.constant 0 : i32
    %c0_i32_1 = arith.constant 0 : i32
    %c0_i32_2 = arith.constant 0 : i32
    return %c0_i32, %c0_i32_0, %c0_i32_1 : i32, i32, i32
  }
  func.func @transform_2(%arg0: i32, %arg1: i32) -> (i32, i32) {
    %c0_i32 = arith.constant 0 : i32
    %c0_i32_0 = arith.constant 0 : i32
    %c0_i32_1 = arith.constant 0 : i32
    return %c0_i32, %c0_i32_0 : i32, i32
  }
  func.func @transform_3(%arg0: i32, %arg1: i32) -> (i32, i32, i32, i32) {
    %c0_i32 = arith.constant 0 : i32
    %c0_i32_0 = arith.constant 0 : i32
    %c0_i32_1 = arith.constant 0 : i32
    return %arg0, %arg1, %c0_i32, %c0_i32_0 : i32, i32, i32, i32
  }
}

module attributes {stable_mosaic.version = 11 : i64} {
  func.func @_pw_conv_kernel(%arg0: i32, %arg1: memref<128x128xf32, #tpu.memory_space<vmem>>, %arg2: memref<128x128xf32, #tpu.memory_space<vmem>>, %arg3: memref<1x128xf32, #tpu.memory_space<vmem>>, %arg4: memref<128x128xf32, #tpu.memory_space<vmem>>) attributes {dimension_semantics = [#tpu.dimension_semantics<parallel>], iteration_bounds = array<i64: 4>, scalar_prefetch = 0 : i64, scratch_operands = 0 : i64, tpu.core_type = #tpu.core_type<tc>, window_params = [{transform_indices = @transform_0, window_bounds = array<i64: 128, 128>}, {pipeline_mode = #tpu.pipeline_mode<synchronous>, transform_indices = @transform_1, window_bounds = array<i64: 128, 128>}, {pipeline_mode = #tpu.pipeline_mode<synchronous>, transform_indices = @transform_2, window_bounds = array<i64: 1, 128>}, {transform_indices = @transform_3, window_bounds = array<i64: 128, 128>}]} {
    %c0 = arith.constant 0 : index
    %c0_0 = arith.constant 0 : index
    %0 = vector.load %arg1[%c0, %c0_0] : memref<128x128xf32, #tpu.memory_space<vmem>>, vector<128x128xf32>
    %c0_1 = arith.constant 0 : index
    %c0_2 = arith.constant 0 : index
    %1 = vector.load %arg2[%c0_1, %c0_2] : memref<128x128xf32, #tpu.memory_space<vmem>>, vector<128x128xf32>
    %cst = arith.constant dense<0.000000e+00> : vector<128x128xf32>
    %2 = tpu.matmul %0, %1, %cst {dimension_numbers = #tpu.dot_dimension_numbers<[1], [0], [0], [1], [0, 0, 1, 1], [], []>} : vector<128x128xf32>, vector<128x128xf32>, vector<128x128xf32> -> vector<128x128xf32>
    %c0_3 = arith.constant 0 : index
    %c0_4 = arith.constant 0 : index
    %3 = vector.load %arg3[%c0_3, %c0_4] : memref<1x128xf32, #tpu.memory_space<vmem>>, vector<1x128xf32>
    %4 = vector.shape_cast %3 : vector<1x128xf32> to vector<128xf32>
    %5 = vector.shape_cast %4 : vector<128xf32> to vector<1x128xf32>
    %6 = vector.broadcast %5 : vector<1x128xf32> to vector<128x128xf32>
    %7 = arith.addf %2, %6 : vector<128x128xf32>
    %c0_5 = arith.constant 0 : index
    %c0_6 = arith.constant 0 : index
    %8 = vector.load %arg4[%c0_5, %c0_6] : memref<128x128xf32, #tpu.memory_space<vmem>>, vector<128x128xf32>
    tpu.vector_store %arg4[%c0_5, %c0_6], %7 {strides = array<i32>} : memref<128x128xf32, #tpu.memory_space<vmem>>, vector<128x128xf32>,
    return
  }
  func.func @transform_0(%arg0: i32) -> (i32, i32) {
    %c0_i32 = arith.constant 0 : i32
    %c0_i32_0 = arith.constant 0 : i32
    return %arg0, %c0_i32 : i32, i32
  }
  func.func @transform_1(%arg0: i32) -> (i32, i32) {
    %c0_i32 = arith.constant 0 : i32
    %c0_i32_0 = arith.constant 0 : i32
    %c0_i32_1 = arith.constant 0 : i32
    return %c0_i32, %c0_i32_0 : i32, i32
  }
  func.func @transform_2(%arg0: i32) -> (i32, i32) {
    %c0_i32 = arith.constant 0 : i32
    %c0_i32_0 = arith.constant 0 : i32
    %c0_i32_1 = arith.constant 0 : i32
    return %c0_i32, %c0_i32_0 : i32, i32
  }
  func.func @transform_3(%arg0: i32) -> (i32, i32) {
    %c0_i32 = arith.constant 0 : i32
    %c0_i32_0 = arith.constant 0 : i32
    return %arg0, %c0_i32 : i32, i32
  }
}

module attributes {stable_mosaic.version = 11 : i64} {
  func.func @_att_residual_kernel(%arg0: i32, %arg1: memref<198xf32, #tpu.memory_space<smem>>, %arg2: memref<1x16x16x128xf32, #tpu.memory_space<vmem>>, %arg3: memref<1x16x16x128xf32, #tpu.memory_space<vmem>>, %arg4: memref<1x16x16x128xf32, #tpu.memory_space<vmem>>) attributes {dimension_semantics = [#tpu.dimension_semantics<parallel>], iteration_bounds = array<i64: 2>, scalar_prefetch = 0 : i64, scratch_operands = 0 : i64, tpu.core_type = #tpu.core_type<tc>, window_params = [{transform_indices = @transform_0, window_bounds = array<i64: 198>}, {transform_indices = @transform_1, window_bounds = array<i64: 1, 16, 16, 128>}, {transform_indices = @transform_2, window_bounds = array<i64: 1, 16, 16, 128>}, {transform_indices = @transform_3, window_bounds = array<i64: 1, 16, 16, 128>}]} {
    %c0 = arith.constant 0 : index
    %c0_0 = arith.constant 0 : index
    %c0_1 = arith.constant 0 : index
    %c0_2 = arith.constant 0 : index
    %0 = vector.load %arg2[%c0, %c0_0, %c0_1, %c0_2] : memref<1x16x16x128xf32, #tpu.memory_space<vmem>>, vector<1x16x16x128xf32>
    %1 = vector.shape_cast %0 : vector<1x16x16x128xf32> to vector<16x16x128xf32>
    %cst = arith.constant dense<0xFF800000> : vector<16x128xf32>
    %2 = vector.multi_reduction <maximumf>, %1, %cst [0] : vector<16x16x128xf32> to vector<16x128xf32>
    %3 = vector.extract_strided_slice %2 {offsets = [0, 0], sizes = [16, 16], strides = [1, 1]} : vector<16x128xf32> to vector<16x16xf32>
    %cst_3 = arith.constant dense<0.000000e+00> : vector<16x128xf32>
    %4 = vector.multi_reduction <add>, %1, %cst_3 [0] : vector<16x16x128xf32> to vector<16x128xf32>
    %cst_4 = arith.constant 1.600000e+01 : f32
    %5 = vector.broadcast %cst_4 : f32 to vector<16x128xf32>
    %6 = arith.divf %4, %5 : vector<16x128xf32>
    %7 = vector.extract_strided_slice %6 {offsets = [0, 0], sizes = [16, 16], strides = [1, 1]} : vector<16x128xf32> to vector<16x16xf32>
    %cst_5 = arith.constant 0.000000e+00 : f32
    %8 = vector.broadcast %cst_5 : f32 to vector<3x16xf32>
    %9 = tpu.concatenate %8, %3, %8 in 0 : vector<3x16xf32>, vector<16x16xf32>, vector<3x16xf32> -> vector<22x16xf32>
    %cst_6 = arith.constant 0.000000e+00 : f32
    %10 = vector.broadcast %cst_6 : f32 to vector<22x3xf32>
    %11 = tpu.concatenate %10, %9, %10 in 1 : vector<22x3xf32>, vector<22x16xf32>, vector<22x3xf32> -> vector<22x22xf32>
    %cst_7 = arith.constant 0.000000e+00 : f32
    %12 = vector.broadcast %cst_7 : f32 to vector<3x16xf32>
    %13 = tpu.concatenate %12, %7, %12 in 0 : vector<3x16xf32>, vector<16x16xf32>, vector<3x16xf32> -> vector<22x16xf32>
    %cst_8 = arith.constant 0.000000e+00 : f32
    %14 = vector.broadcast %cst_8 : f32 to vector<22x3xf32>
    %15 = tpu.concatenate %14, %13, %14 in 1 : vector<22x3xf32>, vector<22x16xf32>, vector<22x3xf32> -> vector<22x22xf32>
    %cst_9 = arith.constant 0.000000e+00 : f32
    %16 = vector.broadcast %cst_9 : f32 to vector<16x16xf32>
    %c0_10 = arith.constant 0 : index
    %17 = memref.load %arg1[%c0_10] : memref<198xf32, #tpu.memory_space<smem>>
    %18 = vector.extract_strided_slice %11 {offsets = [0, 0], sizes = [16, 16], strides = [1, 1]} : vector<22x22xf32> to vector<16x16xf32>
    %19 = vector.broadcast %17 : f32 to vector<16x16xf32>
    %20 = arith.mulf %19, %18 : vector<16x16xf32>
    %21 = arith.addf %16, %20 : vector<16x16xf32>
    %c1 = arith.constant 1 : index
    %22 = memref.load %arg1[%c1] : memref<198xf32, #tpu.memory_space<smem>>
    %23 = vector.extract_strided_slice %11 {offsets = [0, 1], sizes = [16, 16], strides = [1, 1]} : vector<22x22xf32> to vector<16x16xf32>
    %24 = vector.broadcast %22 : f32 to vector<16x16xf32>
    %25 = arith.mulf %24, %23 : vector<16x16xf32>
    %26 = arith.addf %21, %25 : vector<16x16xf32>
    %c2 = arith.constant 2 : index
    %27 = memref.load %arg1[%c2] : memref<198xf32, #tpu.memory_space<smem>>
    %28 = vector.extract_strided_slice %11 {offsets = [0, 2], sizes = [16, 16], strides = [1, 1]} : vector<22x22xf32> to vector<16x16xf32>
    %29 = vector.broadcast %27 : f32 to vector<16x16xf32>
    %30 = arith.mulf %29, %28 : vector<16x16xf32>
    %31 = arith.addf %26, %30 : vector<16x16xf32>
    %c3 = arith.constant 3 : index
    %32 = memref.load %arg1[%c3] : memref<198xf32, #tpu.memory_space<smem>>
    %33 = vector.extract_strided_slice %11 {offsets = [0, 3], sizes = [16, 16], strides = [1, 1]} : vector<22x22xf32> to vector<16x16xf32>
    %34 = vector.broadcast %32 : f32 to vector<16x16xf32>
    %35 = arith.mulf %34, %33 : vector<16x16xf32>
    %36 = arith.addf %31, %35 : vector<16x16xf32>
    %c4 = arith.constant 4 : index
    %37 = memref.load %arg1[%c4] : memref<198xf32, #tpu.memory_space<smem>>
    %38 = vector.extract_strided_slice %11 {offsets = [0, 4], sizes = [16, 16], strides = [1, 1]} : vector<22x22xf32> to vector<16x16xf32>
    %39 = vector.broadcast %37 : f32 to vector<16x16xf32>
    %40 = arith.mulf %39, %38 : vector<16x16xf32>
    %41 = arith.addf %36, %40 : vector<16x16xf32>
    %c5 = arith.constant 5 : index
    %42 = memref.load %arg1[%c5] : memref<198xf32, #tpu.memory_space<smem>>
    %43 = vector.extract_strided_slice %11 {offsets = [0, 5], sizes = [16, 16], strides = [1, 1]} : vector<22x22xf32> to vector<16x16xf32>
    %44 = vector.broadcast %42 : f32 to vector<16x16xf32>
    %45 = arith.mulf %44, %43 : vector<16x16xf32>
    %46 = arith.addf %41, %45 : vector<16x16xf32>
    %c6 = arith.constant 6 : index
    %47 = memref.load %arg1[%c6] : memref<198xf32, #tpu.memory_space<smem>>
    %48 = vector.extract_strided_slice %11 {offsets = [0, 6], sizes = [16, 16], strides = [1, 1]} : vector<22x22xf32> to vector<16x16xf32>
    %49 = vector.broadcast %47 : f32 to vector<16x16xf32>
    %50 = arith.mulf %49, %48 : vector<16x16xf32>
    %51 = arith.addf %46, %50 : vector<16x16xf32>
    %c7 = arith.constant 7 : index
    %52 = memref.load %arg1[%c7] : memref<198xf32, #tpu.memory_space<smem>>
    %53 = vector.extract_strided_slice %11 {offsets = [1, 0], sizes = [16, 16], strides = [1, 1]} : vector<22x22xf32> to vector<16x16xf32>
    %54 = vector.broadcast %52 : f32 to vector<16x16xf32>
    %55 = arith.mulf %54, %53 : vector<16x16xf32>
    %56 = arith.addf %51, %55 : vector<16x16xf32>
    %c8 = arith.constant 8 : index
    %57 = memref.load %arg1[%c8] : memref<198xf32, #tpu.memory_space<smem>>
    %58 = vector.extract_strided_slice %11 {offsets = [1, 1], sizes = [16, 16], strides = [1, 1]} : vector<22x22xf32> to vector<16x16xf32>
    %59 = vector.broadcast %57 : f32 to vector<16x16xf32>
    %60 = arith.mulf %59, %58 : vector<16x16xf32>
    %61 = arith.addf %56, %60 : vector<16x16xf32>
    %c9 = arith.constant 9 : index
    %62 = memref.load %arg1[%c9] : memref<198xf32, #tpu.memory_space<smem>>
    %63 = vector.extract_strided_slice %11 {offsets = [1, 2], sizes = [16, 16], strides = [1, 1]} : vector<22x22xf32> to vector<16x16xf32>
    %64 = vector.broadcast %62 : f32 to vector<16x16xf32>
    %65 = arith.mulf %64, %63 : vector<16x16xf32>
    %66 = arith.addf %61, %65 : vector<16x16xf32>
    %c10 = arith.constant 10 : index
    %67 = memref.load %arg1[%c10] : memref<198xf32, #tpu.memory_space<smem>>
    %68 = vector.extract_strided_slice %11 {offsets = [1, 3], sizes = [16, 16], strides = [1, 1]} : vector<22x22xf32> to vector<16x16xf32>
    %69 = vector.broadcast %67 : f32 to vector<16x16xf32>
    %70 = arith.mulf %69, %68 : vector<16x16xf32>
    %71 = arith.addf %66, %70 : vector<16x16xf32>
    %c11 = arith.constant 11 : index
    %72 = memref.load %arg1[%c11] : memref<198xf32, #tpu.memory_space<smem>>
    %73 = vector.extract_strided_slice %11 {offsets = [1, 4], sizes = [16, 16], strides = [1, 1]} : vector<22x22xf32> to vector<16x16xf32>
    %74 = vector.broadcast %72 : f32 to vector<16x16xf32>
    %75 = arith.mulf %74, %73 : vector<16x16xf32>
    %76 = arith.addf %71, %75 : vector<16x16xf32>
    %c12 = arith.constant 12 : index
    %77 = memref.load %arg1[%c12] : memref<198xf32, #tpu.memory_space<smem>>
    %78 = vector.extract_strided_slice %11 {offsets = [1, 5], sizes = [16, 16], strides = [1, 1]} : vector<22x22xf32> to vector<16x16xf32>
    %79 = vector.broadcast %77 : f32 to vector<16x16xf32>
    %80 = arith.mulf %79, %78 : vector<16x16xf32>
    %81 = arith.addf %76, %80 : vector<16x16xf32>
    %c13 = arith.constant 13 : index
    %82 = memref.load %arg1[%c13] : memref<198xf32, #tpu.memory_space<smem>>
    %83 = vector.extract_strided_slice %11 {offsets = [1, 6], sizes = [16, 16], strides = [1, 1]} : vector<22x22xf32> to vector<16x16xf32>
    %84 = vector.broadcast %82 : f32 to vector<16x16xf32>
    %85 = arith.mulf %84, %83 : vector<16x16xf32>
    %86 = arith.addf %81, %85 : vector<16x16xf32>
    %c14 = arith.constant 14 : index
    %87 = memref.load %arg1[%c14] : memref<198xf32, #tpu.memory_space<smem>>
    %88 = vector.extract_strided_slice %11 {offsets = [2, 0], sizes = [16, 16], strides = [1, 1]} : vector<22x22xf32> to vector<16x16xf32>
    %89 = vector.broadcast %87 : f32 to vector<16x16xf32>
    %90 = arith.mulf %89, %88 : vector<16x16xf32>
    %91 = arith.addf %86, %90 : vector<16x16xf32>
    %c15 = arith.constant 15 : index
    %92 = memref.load %arg1[%c15] : memref<198xf32, #tpu.memory_space<smem>>
    %93 = vector.extract_strided_slice %11 {offsets = [2, 1], sizes = [16, 16], strides = [1, 1]} : vector<22x22xf32> to vector<16x16xf32>
    %94 = vector.broadcast %92 : f32 to vector<16x16xf32>
    %95 = arith.mulf %94, %93 : vector<16x16xf32>
    %96 = arith.addf %91, %95 : vector<16x16xf32>
    %c16 = arith.constant 16 : index
    %97 = memref.load %arg1[%c16] : memref<198xf32, #tpu.memory_space<smem>>
    %98 = vector.extract_strided_slice %11 {offsets = [2, 2], sizes = [16, 16], strides = [1, 1]} : vector<22x22xf32> to vector<16x16xf32>
    %99 = vector.broadcast %97 : f32 to vector<16x16xf32>
    %100 = arith.mulf %99, %98 : vector<16x16xf32>
    %101 = arith.addf %96, %100 : vector<16x16xf32>
    %c17 = arith.constant 17 : index
    %102 = memref.load %arg1[%c17] : memref<198xf32, #tpu.memory_space<smem>>
    %103 = vector.extract_strided_slice %11 {offsets = [2, 3], sizes = [16, 16], strides = [1, 1]} : vector<22x22xf32> to vector<16x16xf32>
    %104 = vector.broadcast %102 : f32 to vector<16x16xf32>
    %105 = arith.mulf %104, %103 : vector<16x16xf32>
    %106 = arith.addf %101, %105 : vector<16x16xf32>
    %c18 = arith.constant 18 : index
    %107 = memref.load %arg1[%c18] : memref<198xf32, #tpu.memory_space<smem>>
    %108 = vector.extract_strided_slice %11 {offsets = [2, 4], sizes = [16, 16], strides = [1, 1]} : vector<22x22xf32> to vector<16x16xf32>
    %109 = vector.broadcast %107 : f32 to vector<16x16xf32>
    %110 = arith.mulf %109, %108 : vector<16x16xf32>
    %111 = arith.addf %106, %110 : vector<16x16xf32>
    %c19 = arith.constant 19 : index
    %112 = memref.load %arg1[%c19] : memref<198xf32, #tpu.memory_space<smem>>
    %113 = vector.extract_strided_slice %11 {offsets = [2, 5], sizes = [16, 16], strides = [1, 1]} : vector<22x22xf32> to vector<16x16xf32>
    %114 = vector.broadcast %112 : f32 to vector<16x16xf32>
    %115 = arith.mulf %114, %113 : vector<16x16xf32>
    %116 = arith.addf %111, %115 : vector<16x16xf32>
    %c20 = arith.constant 20 : index
    %117 = memref.load %arg1[%c20] : memref<198xf32, #tpu.memory_space<smem>>
    %118 = vector.extract_strided_slice %11 {offsets = [2, 6], sizes = [16, 16], strides = [1, 1]} : vector<22x22xf32> to vector<16x16xf32>
    %119 = vector.broadcast %117 : f32 to vector<16x16xf32>
    %120 = arith.mulf %119, %118 : vector<16x16xf32>
    %121 = arith.addf %116, %120 : vector<16x16xf32>
    %c21 = arith.constant 21 : index
    %122 = memref.load %arg1[%c21] : memref<198xf32, #tpu.memory_space<smem>>
    %123 = vector.extract_strided_slice %11 {offsets = [3, 0], sizes = [16, 16], strides = [1, 1]} : vector<22x22xf32> to vector<16x16xf32>
    %124 = vector.broadcast %122 : f32 to vector<16x16xf32>
    %125 = arith.mulf %124, %123 : vector<16x16xf32>
    %126 = arith.addf %121, %125 : vector<16x16xf32>
    %c22 = arith.constant 22 : index
    %127 = memref.load %arg1[%c22] : memref<198xf32, #tpu.memory_space<smem>>
    %128 = vector.extract_strided_slice %11 {offsets = [3, 1], sizes = [16, 16], strides = [1, 1]} : vector<22x22xf32> to vector<16x16xf32>
    %129 = vector.broadcast %127 : f32 to vector<16x16xf32>
    %130 = arith.mulf %129, %128 : vector<16x16xf32>
    %131 = arith.addf %126, %130 : vector<16x16xf32>
    %c23 = arith.constant 23 : index
    %132 = memref.load %arg1[%c23] : memref<198xf32, #tpu.memory_space<smem>>
    %133 = vector.extract_strided_slice %11 {offsets = [3, 2], sizes = [16, 16], strides = [1, 1]} : vector<22x22xf32> to vector<16x16xf32>
    %134 = vector.broadcast %132 : f32 to vector<16x16xf32>
    %135 = arith.mulf %134, %133 : vector<16x16xf32>
    %136 = arith.addf %131, %135 : vector<16x16xf32>
    %c24 = arith.constant 24 : index
    %137 = memref.load %arg1[%c24] : memref<198xf32, #tpu.memory_space<smem>>
    %138 = vector.extract_strided_slice %11 {offsets = [3, 3], sizes = [16, 16], strides = [1, 1]} : vector<22x22xf32> to vector<16x16xf32>
    %139 = vector.broadcast %137 : f32 to vector<16x16xf32>
    %140 = arith.mulf %139, %138 : vector<16x16xf32>
    %141 = arith.addf %136, %140 : vector<16x16xf32>
    %c25 = arith.constant 25 : index
    %142 = memref.load %arg1[%c25] : memref<198xf32, #tpu.memory_space<smem>>
    %143 = vector.extract_strided_slice %11 {offsets = [3, 4], sizes = [16, 16], strides = [1, 1]} : vector<22x22xf32> to vector<16x16xf32>
    %144 = vector.broadcast %142 : f32 to vector<16x16xf32>
    %145 = arith.mulf %144, %143 : vector<16x16xf32>
    %146 = arith.addf %141, %145 : vector<16x16xf32>
    %c26 = arith.constant 26 : index
    %147 = memref.load %arg1[%c26] : memref<198xf32, #tpu.memory_space<smem>>
    %148 = vector.extract_strided_slice %11 {offsets = [3, 5], sizes = [16, 16], strides = [1, 1]} : vector<22x22xf32> to vector<16x16xf32>
    %149 = vector.broadcast %147 : f32 to vector<16x16xf32>
    %150 = arith.mulf %149, %148 : vector<16x16xf32>
    %151 = arith.addf %146, %150 : vector<16x16xf32>
    %c27 = arith.constant 27 : index
    %152 = memref.load %arg1[%c27] : memref<198xf32, #tpu.memory_space<smem>>
    %153 = vector.extract_strided_slice %11 {offsets = [3, 6], sizes = [16, 16], strides = [1, 1]} : vector<22x22xf32> to vector<16x16xf32>
    %154 = vector.broadcast %152 : f32 to vector<16x16xf32>
    %155 = arith.mulf %154, %153 : vector<16x16xf32>
    %156 = arith.addf %151, %155 : vector<16x16xf32>
    %c28 = arith.constant 28 : index
    %157 = memref.load %arg1[%c28] : memref<198xf32, #tpu.memory_space<smem>>
    %158 = vector.extract_strided_slice %11 {offsets = [4, 0], sizes = [16, 16], strides = [1, 1]} : vector<22x22xf32> to vector<16x16xf32>
    %159 = vector.broadcast %157 : f32 to vector<16x16xf32>
    %160 = arith.mulf %159, %158 : vector<16x16xf32>
    %161 = arith.addf %156, %160 : vector<16x16xf32>
    %c29 = arith.constant 29 : index
    %162 = memref.load %arg1[%c29] : memref<198xf32, #tpu.memory_space<smem>>
    %163 = vector.extract_strided_slice %11 {offsets = [4, 1], sizes = [16, 16], strides = [1, 1]} : vector<22x22xf32> to vector<16x16xf32>
    %164 = vector.broadcast %162 : f32 to vector<16x16xf32>
    %165 = arith.mulf %164, %163 : vector<16x16xf32>
    %166 = arith.addf %161, %165 : vector<16x16xf32>
    %c30 = arith.constant 30 : index
    %167 = memref.load %arg1[%c30] : memref<198xf32, #tpu.memory_space<smem>>
    %168 = vector.extract_strided_slice %11 {offsets = [4, 2], sizes = [16, 16], strides = [1, 1]} : vector<22x22xf32> to vector<16x16xf32>
    %169 = vector.broadcast %167 : f32 to vector<16x16xf32>
    %170 = arith.mulf %169, %168 : vector<16x16xf32>
    %171 = arith.addf %166, %170 : vector<16x16xf32>
    %c31 = arith.constant 31 : index
    %172 = memref.load %arg1[%c31] : memref<198xf32, #tpu.memory_space<smem>>
    %173 = vector.extract_strided_slice %11 {offsets = [4, 3], sizes = [16, 16], strides = [1, 1]} : vector<22x22xf32> to vector<16x16xf32>
    %174 = vector.broadcast %172 : f32 to vector<16x16xf32>
    %175 = arith.mulf %174, %173 : vector<16x16xf32>
    %176 = arith.addf %171, %175 : vector<16x16xf32>
    %c32 = arith.constant 32 : index
    %177 = memref.load %arg1[%c32] : memref<198xf32, #tpu.memory_space<smem>>
    %178 = vector.extract_strided_slice %11 {offsets = [4, 4], sizes = [16, 16], strides = [1, 1]} : vector<22x22xf32> to vector<16x16xf32>
    %179 = vector.broadcast %177 : f32 to vector<16x16xf32>
    %180 = arith.mulf %179, %178 : vector<16x16xf32>
    %181 = arith.addf %176, %180 : vector<16x16xf32>
    %c33 = arith.constant 33 : index
    %182 = memref.load %arg1[%c33] : memref<198xf32, #tpu.memory_space<smem>>
    %183 = vector.extract_strided_slice %11 {offsets = [4, 5], sizes = [16, 16], strides = [1, 1]} : vector<22x22xf32> to vector<16x16xf32>
    %184 = vector.broadcast %182 : f32 to vector<16x16xf32>
    %185 = arith.mulf %184, %183 : vector<16x16xf32>
    %186 = arith.addf %181, %185 : vector<16x16xf32>
    %c34 = arith.constant 34 : index
    %187 = memref.load %arg1[%c34] : memref<198xf32, #tpu.memory_space<smem>>
    %188 = vector.extract_strided_slice %11 {offsets = [4, 6], sizes = [16, 16], strides = [1, 1]} : vector<22x22xf32> to vector<16x16xf32>
    %189 = vector.broadcast %187 : f32 to vector<16x16xf32>
    %190 = arith.mulf %189, %188 : vector<16x16xf32>
    %191 = arith.addf %186, %190 : vector<16x16xf32>
    %c35 = arith.constant 35 : index
    %192 = memref.load %arg1[%c35] : memref<198xf32, #tpu.memory_space<smem>>
    %193 = vector.extract_strided_slice %11 {offsets = [5, 0], sizes = [16, 16], strides = [1, 1]} : vector<22x22xf32> to vector<16x16xf32>
    %194 = vector.broadcast %192 : f32 to vector<16x16xf32>
    %195 = arith.mulf %194, %193 : vector<16x16xf32>
    %196 = arith.addf %191, %195 : vector<16x16xf32>
    %c36 = arith.constant 36 : index
    %197 = memref.load %arg1[%c36] : memref<198xf32, #tpu.memory_space<smem>>
    %198 = vector.extract_strided_slice %11 {offsets = [5, 1], sizes = [16, 16], strides = [1, 1]} : vector<22x22xf32> to vector<16x16xf32>
    %199 = vector.broadcast %197 : f32 to vector<16x16xf32>
    %200 = arith.mulf %199, %198 : vector<16x16xf32>
    %201 = arith.addf %196, %200 : vector<16x16xf32>
    %c37 = arith.constant 37 : index
    %202 = memref.load %arg1[%c37] : memref<198xf32, #tpu.memory_space<smem>>
    %203 = vector.extract_strided_slice %11 {offsets = [5, 2], sizes = [16, 16], strides = [1, 1]} : vector<22x22xf32> to vector<16x16xf32>
    %204 = vector.broadcast %202 : f32 to vector<16x16xf32>
    %205 = arith.mulf %204, %203 : vector<16x16xf32>
    %206 = arith.addf %201, %205 : vector<16x16xf32>
    %c38 = arith.constant 38 : index
    %207 = memref.load %arg1[%c38] : memref<198xf32, #tpu.memory_space<smem>>
    %208 = vector.extract_strided_slice %11 {offsets = [5, 3], sizes = [16, 16], strides = [1, 1]} : vector<22x22xf32> to vector<16x16xf32>
    %209 = vector.broadcast %207 : f32 to vector<16x16xf32>
    %210 = arith.mulf %209, %208 : vector<16x16xf32>
    %211 = arith.addf %206, %210 : vector<16x16xf32>
    %c39 = arith.constant 39 : index
    %212 = memref.load %arg1[%c39] : memref<198xf32, #tpu.memory_space<smem>>
    %213 = vector.extract_strided_slice %11 {offsets = [5, 4], sizes = [16, 16], strides = [1, 1]} : vector<22x22xf32> to vector<16x16xf32>
    %214 = vector.broadcast %212 : f32 to vector<16x16xf32>
    %215 = arith.mulf %214, %213 : vector<16x16xf32>
    %216 = arith.addf %211, %215 : vector<16x16xf32>
    %c40 = arith.constant 40 : index
    %217 = memref.load %arg1[%c40] : memref<198xf32, #tpu.memory_space<smem>>
    %218 = vector.extract_strided_slice %11 {offsets = [5, 5], sizes = [16, 16], strides = [1, 1]} : vector<22x22xf32> to vector<16x16xf32>
    %219 = vector.broadcast %217 : f32 to vector<16x16xf32>
    %220 = arith.mulf %219, %218 : vector<16x16xf32>
    %221 = arith.addf %216, %220 : vector<16x16xf32>
    %c41 = arith.constant 41 : index
    %222 = memref.load %arg1[%c41] : memref<198xf32, #tpu.memory_space<smem>>
    %223 = vector.extract_strided_slice %11 {offsets = [5, 6], sizes = [16, 16], strides = [1, 1]} : vector<22x22xf32> to vector<16x16xf32>
    %224 = vector.broadcast %222 : f32 to vector<16x16xf32>
    %225 = arith.mulf %224, %223 : vector<16x16xf32>
    %226 = arith.addf %221, %225 : vector<16x16xf32>
    %c42 = arith.constant 42 : index
    %227 = memref.load %arg1[%c42] : memref<198xf32, #tpu.memory_space<smem>>
    %228 = vector.extract_strided_slice %11 {offsets = [6, 0], sizes = [16, 16], strides = [1, 1]} : vector<22x22xf32> to vector<16x16xf32>
    %229 = vector.broadcast %227 : f32 to vector<16x16xf32>
    %230 = arith.mulf %229, %228 : vector<16x16xf32>
    %231 = arith.addf %226, %230 : vector<16x16xf32>
    %c43 = arith.constant 43 : index
    %232 = memref.load %arg1[%c43] : memref<198xf32, #tpu.memory_space<smem>>
    %233 = vector.extract_strided_slice %11 {offsets = [6, 1], sizes = [16, 16], strides = [1, 1]} : vector<22x22xf32> to vector<16x16xf32>
    %234 = vector.broadcast %232 : f32 to vector<16x16xf32>
    %235 = arith.mulf %234, %233 : vector<16x16xf32>
    %236 = arith.addf %231, %235 : vector<16x16xf32>
    %c44 = arith.constant 44 : index
    %237 = memref.load %arg1[%c44] : memref<198xf32, #tpu.memory_space<smem>>
    %238 = vector.extract_strided_slice %11 {offsets = [6, 2], sizes = [16, 16], strides = [1, 1]} : vector<22x22xf32> to vector<16x16xf32>
    %239 = vector.broadcast %237 : f32 to vector<16x16xf32>
    %240 = arith.mulf %239, %238 : vector<16x16xf32>
    %241 = arith.addf %236, %240 : vector<16x16xf32>
    %c45 = arith.constant 45 : index
    %242 = memref.load %arg1[%c45] : memref<198xf32, #tpu.memory_space<smem>>
    %243 = vector.extract_strided_slice %11 {offsets = [6, 3], sizes = [16, 16], strides = [1, 1]} : vector<22x22xf32> to vector<16x16xf32>
    %244 = vector.broadcast %242 : f32 to vector<16x16xf32>
    %245 = arith.mulf %244, %243 : vector<16x16xf32>
    %246 = arith.addf %241, %245 : vector<16x16xf32>
    %c46 = arith.constant 46 : index
    %247 = memref.load %arg1[%c46] : memref<198xf32, #tpu.memory_space<smem>>
    %248 = vector.extract_strided_slice %11 {offsets = [6, 4], sizes = [16, 16], strides = [1, 1]} : vector<22x22xf32> to vector<16x16xf32>
    %249 = vector.broadcast %247 : f32 to vector<16x16xf32>
    %250 = arith.mulf %249, %248 : vector<16x16xf32>
    %251 = arith.addf %246, %250 : vector<16x16xf32>
    %c47 = arith.constant 47 : index
    %252 = memref.load %arg1[%c47] : memref<198xf32, #tpu.memory_space<smem>>
    %253 = vector.extract_strided_slice %11 {offsets = [6, 5], sizes = [16, 16], strides = [1, 1]} : vector<22x22xf32> to vector<16x16xf32>
    %254 = vector.broadcast %252 : f32 to vector<16x16xf32>
    %255 = arith.mulf %254, %253 : vector<16x16xf32>
    %256 = arith.addf %251, %255 : vector<16x16xf32>
    %c48 = arith.constant 48 : index
    %257 = memref.load %arg1[%c48] : memref<198xf32, #tpu.memory_space<smem>>
    %258 = vector.extract_strided_slice %11 {offsets = [6, 6], sizes = [16, 16], strides = [1, 1]} : vector<22x22xf32> to vector<16x16xf32>
    %259 = vector.broadcast %257 : f32 to vector<16x16xf32>
    %260 = arith.mulf %259, %258 : vector<16x16xf32>
    %261 = arith.addf %256, %260 : vector<16x16xf32>
    %c49 = arith.constant 49 : index
    %262 = memref.load %arg1[%c49] : memref<198xf32, #tpu.memory_space<smem>>
    %263 = vector.extract_strided_slice %15 {offsets = [0, 0], sizes = [16, 16], strides = [1, 1]} : vector<22x22xf32> to vector<16x16xf32>
    %264 = vector.broadcast %262 : f32 to vector<16x16xf32>
    %265 = arith.mulf %264, %263 : vector<16x16xf32>
    %266 = arith.addf %261, %265 : vector<16x16xf32>
    %c50 = arith.constant 50 : index
    %267 = memref.load %arg1[%c50] : memref<198xf32, #tpu.memory_space<smem>>
    %268 = vector.extract_strided_slice %15 {offsets = [0, 1], sizes = [16, 16], strides = [1, 1]} : vector<22x22xf32> to vector<16x16xf32>
    %269 = vector.broadcast %267 : f32 to vector<16x16xf32>
    %270 = arith.mulf %269, %268 : vector<16x16xf32>
    %271 = arith.addf %266, %270 : vector<16x16xf32>
    %c51 = arith.constant 51 : index
    %272 = memref.load %arg1[%c51] : memref<198xf32, #tpu.memory_space<smem>>
    %273 = vector.extract_strided_slice %15 {offsets = [0, 2], sizes = [16, 16], strides = [1, 1]} : vector<22x22xf32> to vector<16x16xf32>
    %274 = vector.broadcast %272 : f32 to vector<16x16xf32>
    %275 = arith.mulf %274, %273 : vector<16x16xf32>
    %276 = arith.addf %271, %275 : vector<16x16xf32>
    %c52 = arith.constant 52 : index
    %277 = memref.load %arg1[%c52] : memref<198xf32, #tpu.memory_space<smem>>
    %278 = vector.extract_strided_slice %15 {offsets = [0, 3], sizes = [16, 16], strides = [1, 1]} : vector<22x22xf32> to vector<16x16xf32>
    %279 = vector.broadcast %277 : f32 to vector<16x16xf32>
    %280 = arith.mulf %279, %278 : vector<16x16xf32>
    %281 = arith.addf %276, %280 : vector<16x16xf32>
    %c53 = arith.constant 53 : index
    %282 = memref.load %arg1[%c53] : memref<198xf32, #tpu.memory_space<smem>>
    %283 = vector.extract_strided_slice %15 {offsets = [0, 4], sizes = [16, 16], strides = [1, 1]} : vector<22x22xf32> to vector<16x16xf32>
    %284 = vector.broadcast %282 : f32 to vector<16x16xf32>
    %285 = arith.mulf %284, %283 : vector<16x16xf32>
    %286 = arith.addf %281, %285 : vector<16x16xf32>
    %c54 = arith.constant 54 : index
    %287 = memref.load %arg1[%c54] : memref<198xf32, #tpu.memory_space<smem>>
    %288 = vector.extract_strided_slice %15 {offsets = [0, 5], sizes = [16, 16], strides = [1, 1]} : vector<22x22xf32> to vector<16x16xf32>
    %289 = vector.broadcast %287 : f32 to vector<16x16xf32>
    %290 = arith.mulf %289, %288 : vector<16x16xf32>
    %291 = arith.addf %286, %290 : vector<16x16xf32>
    %c55 = arith.constant 55 : index
    %292 = memref.load %arg1[%c55] : memref<198xf32, #tpu.memory_space<smem>>
    %293 = vector.extract_strided_slice %15 {offsets = [0, 6], sizes = [16, 16], strides = [1, 1]} : vector<22x22xf32> to vector<16x16xf32>
    %294 = vector.broadcast %292 : f32 to vector<16x16xf32>
    %295 = arith.mulf %294, %293 : vector<16x16xf32>
    %296 = arith.addf %291, %295 : vector<16x16xf32>
    %c56 = arith.constant 56 : index
    %297 = memref.load %arg1[%c56] : memref<198xf32, #tpu.memory_space<smem>>
    %298 = vector.extract_strided_slice %15 {offsets = [1, 0], sizes = [16, 16], strides = [1, 1]} : vector<22x22xf32> to vector<16x16xf32>
    %299 = vector.broadcast %297 : f32 to vector<16x16xf32>
    %300 = arith.mulf %299, %298 : vector<16x16xf32>
    %301 = arith.addf %296, %300 : vector<16x16xf32>
    %c57 = arith.constant 57 : index
    %302 = memref.load %arg1[%c57] : memref<198xf32, #tpu.memory_space<smem>>
    %303 = vector.extract_strided_slice %15 {offsets = [1, 1], sizes = [16, 16], strides = [1, 1]} : vector<22x22xf32> to vector<16x16xf32>
    %304 = vector.broadcast %302 : f32 to vector<16x16xf32>
    %305 = arith.mulf %304, %303 : vector<16x16xf32>
    %306 = arith.addf %301, %305 : vector<16x16xf32>
    %c58 = arith.constant 58 : index
    %307 = memref.load %arg1[%c58] : memref<198xf32, #tpu.memory_space<smem>>
    %308 = vector.extract_strided_slice %15 {offsets = [1, 2], sizes = [16, 16], strides = [1, 1]} : vector<22x22xf32> to vector<16x16xf32>
    %309 = vector.broadcast %307 : f32 to vector<16x16xf32>
    %310 = arith.mulf %309, %308 : vector<16x16xf32>
    %311 = arith.addf %306, %310 : vector<16x16xf32>
    %c59 = arith.constant 59 : index
    %312 = memref.load %arg1[%c59] : memref<198xf32, #tpu.memory_space<smem>>
    %313 = vector.extract_strided_slice %15 {offsets = [1, 3], sizes = [16, 16], strides = [1, 1]} : vector<22x22xf32> to vector<16x16xf32>
    %314 = vector.broadcast %312 : f32 to vector<16x16xf32>
    %315 = arith.mulf %314, %313 : vector<16x16xf32>
    %316 = arith.addf %311, %315 : vector<16x16xf32>
    %c60 = arith.constant 60 : index
    %317 = memref.load %arg1[%c60] : memref<198xf32, #tpu.memory_space<smem>>
    %318 = vector.extract_strided_slice %15 {offsets = [1, 4], sizes = [16, 16], strides = [1, 1]} : vector<22x22xf32> to vector<16x16xf32>
    %319 = vector.broadcast %317 : f32 to vector<16x16xf32>
    %320 = arith.mulf %319, %318 : vector<16x16xf32>
    %321 = arith.addf %316, %320 : vector<16x16xf32>
    %c61 = arith.constant 61 : index
    %322 = memref.load %arg1[%c61] : memref<198xf32, #tpu.memory_space<smem>>
    %323 = vector.extract_strided_slice %15 {offsets = [1, 5], sizes = [16, 16], strides = [1, 1]} : vector<22x22xf32> to vector<16x16xf32>
    %324 = vector.broadcast %322 : f32 to vector<16x16xf32>
    %325 = arith.mulf %324, %323 : vector<16x16xf32>
    %326 = arith.addf %321, %325 : vector<16x16xf32>
    %c62 = arith.constant 62 : index
    %327 = memref.load %arg1[%c62] : memref<198xf32, #tpu.memory_space<smem>>
    %328 = vector.extract_strided_slice %15 {offsets = [1, 6], sizes = [16, 16], strides = [1, 1]} : vector<22x22xf32> to vector<16x16xf32>
    %329 = vector.broadcast %327 : f32 to vector<16x16xf32>
    %330 = arith.mulf %329, %328 : vector<16x16xf32>
    %331 = arith.addf %326, %330 : vector<16x16xf32>
    %c63 = arith.constant 63 : index
    %332 = memref.load %arg1[%c63] : memref<198xf32, #tpu.memory_space<smem>>
    %333 = vector.extract_strided_slice %15 {offsets = [2, 0], sizes = [16, 16], strides = [1, 1]} : vector<22x22xf32> to vector<16x16xf32>
    %334 = vector.broadcast %332 : f32 to vector<16x16xf32>
    %335 = arith.mulf %334, %333 : vector<16x16xf32>
    %336 = arith.addf %331, %335 : vector<16x16xf32>
    %c64 = arith.constant 64 : index
    %337 = memref.load %arg1[%c64] : memref<198xf32, #tpu.memory_space<smem>>
    %338 = vector.extract_strided_slice %15 {offsets = [2, 1], sizes = [16, 16], strides = [1, 1]} : vector<22x22xf32> to vector<16x16xf32>
    %339 = vector.broadcast %337 : f32 to vector<16x16xf32>
    %340 = arith.mulf %339, %338 : vector<16x16xf32>
    %341 = arith.addf %336, %340 : vector<16x16xf32>
    %c65 = arith.constant 65 : index
    %342 = memref.load %arg1[%c65] : memref<198xf32, #tpu.memory_space<smem>>
    %343 = vector.extract_strided_slice %15 {offsets = [2, 2], sizes = [16, 16], strides = [1, 1]} : vector<22x22xf32> to vector<16x16xf32>
    %344 = vector.broadcast %342 : f32 to vector<16x16xf32>
    %345 = arith.mulf %344, %343 : vector<16x16xf32>
    %346 = arith.addf %341, %345 : vector<16x16xf32>
    %c66 = arith.constant 66 : index
    %347 = memref.load %arg1[%c66] : memref<198xf32, #tpu.memory_space<smem>>
    %348 = vector.extract_strided_slice %15 {offsets = [2, 3], sizes = [16, 16], strides = [1, 1]} : vector<22x22xf32> to vector<16x16xf32>
    %349 = vector.broadcast %347 : f32 to vector<16x16xf32>
    %350 = arith.mulf %349, %348 : vector<16x16xf32>
    %351 = arith.addf %346, %350 : vector<16x16xf32>
    %c67 = arith.constant 67 : index
    %352 = memref.load %arg1[%c67] : memref<198xf32, #tpu.memory_space<smem>>
    %353 = vector.extract_strided_slice %15 {offsets = [2, 4], sizes = [16, 16], strides = [1, 1]} : vector<22x22xf32> to vector<16x16xf32>
    %354 = vector.broadcast %352 : f32 to vector<16x16xf32>
    %355 = arith.mulf %354, %353 : vector<16x16xf32>
    %356 = arith.addf %351, %355 : vector<16x16xf32>
    %c68 = arith.constant 68 : index
    %357 = memref.load %arg1[%c68] : memref<198xf32, #tpu.memory_space<smem>>
    %358 = vector.extract_strided_slice %15 {offsets = [2, 5], sizes = [16, 16], strides = [1, 1]} : vector<22x22xf32> to vector<16x16xf32>
    %359 = vector.broadcast %357 : f32 to vector<16x16xf32>
    %360 = arith.mulf %359, %358 : vector<16x16xf32>
    %361 = arith.addf %356, %360 : vector<16x16xf32>
    %c69 = arith.constant 69 : index
    %362 = memref.load %arg1[%c69] : memref<198xf32, #tpu.memory_space<smem>>
    %363 = vector.extract_strided_slice %15 {offsets = [2, 6], sizes = [16, 16], strides = [1, 1]} : vector<22x22xf32> to vector<16x16xf32>
    %364 = vector.broadcast %362 : f32 to vector<16x16xf32>
    %365 = arith.mulf %364, %363 : vector<16x16xf32>
    %366 = arith.addf %361, %365 : vector<16x16xf32>
    %c70 = arith.constant 70 : index
    %367 = memref.load %arg1[%c70] : memref<198xf32, #tpu.memory_space<smem>>
    %368 = vector.extract_strided_slice %15 {offsets = [3, 0], sizes = [16, 16], strides = [1, 1]} : vector<22x22xf32> to vector<16x16xf32>
    %369 = vector.broadcast %367 : f32 to vector<16x16xf32>
    %370 = arith.mulf %369, %368 : vector<16x16xf32>
    %371 = arith.addf %366, %370 : vector<16x16xf32>
    %c71 = arith.constant 71 : index
    %372 = memref.load %arg1[%c71] : memref<198xf32, #tpu.memory_space<smem>>
    %373 = vector.extract_strided_slice %15 {offsets = [3, 1], sizes = [16, 16], strides = [1, 1]} : vector<22x22xf32> to vector<16x16xf32>
    %374 = vector.broadcast %372 : f32 to vector<16x16xf32>
    %375 = arith.mulf %374, %373 : vector<16x16xf32>
    %376 = arith.addf %371, %375 : vector<16x16xf32>
    %c72 = arith.constant 72 : index
    %377 = memref.load %arg1[%c72] : memref<198xf32, #tpu.memory_space<smem>>
    %378 = vector.extract_strided_slice %15 {offsets = [3, 2], sizes = [16, 16], strides = [1, 1]} : vector<22x22xf32> to vector<16x16xf32>
    %379 = vector.broadcast %377 : f32 to vector<16x16xf32>
    %380 = arith.mulf %379, %378 : vector<16x16xf32>
    %381 = arith.addf %376, %380 : vector<16x16xf32>
    %c73 = arith.constant 73 : index
    %382 = memref.load %arg1[%c73] : memref<198xf32, #tpu.memory_space<smem>>
    %383 = vector.extract_strided_slice %15 {offsets = [3, 3], sizes = [16, 16], strides = [1, 1]} : vector<22x22xf32> to vector<16x16xf32>
    %384 = vector.broadcast %382 : f32 to vector<16x16xf32>
    %385 = arith.mulf %384, %383 : vector<16x16xf32>
    %386 = arith.addf %381, %385 : vector<16x16xf32>
    %c74 = arith.constant 74 : index
    %387 = memref.load %arg1[%c74] : memref<198xf32, #tpu.memory_space<smem>>
    %388 = vector.extract_strided_slice %15 {offsets = [3, 4], sizes = [16, 16], strides = [1, 1]} : vector<22x22xf32> to vector<16x16xf32>
    %389 = vector.broadcast %387 : f32 to vector<16x16xf32>
    %390 = arith.mulf %389, %388 : vector<16x16xf32>
    %391 = arith.addf %386, %390 : vector<16x16xf32>
    %c75 = arith.constant 75 : index
    %392 = memref.load %arg1[%c75] : memref<198xf32, #tpu.memory_space<smem>>
    %393 = vector.extract_strided_slice %15 {offsets = [3, 5], sizes = [16, 16], strides = [1, 1]} : vector<22x22xf32> to vector<16x16xf32>
    %394 = vector.broadcast %392 : f32 to vector<16x16xf32>
    %395 = arith.mulf %394, %393 : vector<16x16xf32>
    %396 = arith.addf %391, %395 : vector<16x16xf32>
    %c76 = arith.constant 76 : index
    %397 = memref.load %arg1[%c76] : memref<198xf32, #tpu.memory_space<smem>>
    %398 = vector.extract_strided_slice %15 {offsets = [3, 6], sizes = [16, 16], strides = [1, 1]} : vector<22x22xf32> to vector<16x16xf32>
    %399 = vector.broadcast %397 : f32 to vector<16x16xf32>
    %400 = arith.mulf %399, %398 : vector<16x16xf32>
    %401 = arith.addf %396, %400 : vector<16x16xf32>
    %c77 = arith.constant 77 : index
    %402 = memref.load %arg1[%c77] : memref<198xf32, #tpu.memory_space<smem>>
    %403 = vector.extract_strided_slice %15 {offsets = [4, 0], sizes = [16, 16], strides = [1, 1]} : vector<22x22xf32> to vector<16x16xf32>
    %404 = vector.broadcast %402 : f32 to vector<16x16xf32>
    %405 = arith.mulf %404, %403 : vector<16x16xf32>
    %406 = arith.addf %401, %405 : vector<16x16xf32>
    %c78 = arith.constant 78 : index
    %407 = memref.load %arg1[%c78] : memref<198xf32, #tpu.memory_space<smem>>
    %408 = vector.extract_strided_slice %15 {offsets = [4, 1], sizes = [16, 16], strides = [1, 1]} : vector<22x22xf32> to vector<16x16xf32>
    %409 = vector.broadcast %407 : f32 to vector<16x16xf32>
    %410 = arith.mulf %409, %408 : vector<16x16xf32>
    %411 = arith.addf %406, %410 : vector<16x16xf32>
    %c79 = arith.constant 79 : index
    %412 = memref.load %arg1[%c79] : memref<198xf32, #tpu.memory_space<smem>>
    %413 = vector.extract_strided_slice %15 {offsets = [4, 2], sizes = [16, 16], strides = [1, 1]} : vector<22x22xf32> to vector<16x16xf32>
    %414 = vector.broadcast %412 : f32 to vector<16x16xf32>
    %415 = arith.mulf %414, %413 : vector<16x16xf32>
    %416 = arith.addf %411, %415 : vector<16x16xf32>
    %c80 = arith.constant 80 : index
    %417 = memref.load %arg1[%c80] : memref<198xf32, #tpu.memory_space<smem>>
    %418 = vector.extract_strided_slice %15 {offsets = [4, 3], sizes = [16, 16], strides = [1, 1]} : vector<22x22xf32> to vector<16x16xf32>
    %419 = vector.broadcast %417 : f32 to vector<16x16xf32>
    %420 = arith.mulf %419, %418 : vector<16x16xf32>
    %421 = arith.addf %416, %420 : vector<16x16xf32>
    %c81 = arith.constant 81 : index
    %422 = memref.load %arg1[%c81] : memref<198xf32, #tpu.memory_space<smem>>
    %423 = vector.extract_strided_slice %15 {offsets = [4, 4], sizes = [16, 16], strides = [1, 1]} : vector<22x22xf32> to vector<16x16xf32>
    %424 = vector.broadcast %422 : f32 to vector<16x16xf32>
    %425 = arith.mulf %424, %423 : vector<16x16xf32>
    %426 = arith.addf %421, %425 : vector<16x16xf32>
    %c82 = arith.constant 82 : index
    %427 = memref.load %arg1[%c82] : memref<198xf32, #tpu.memory_space<smem>>
    %428 = vector.extract_strided_slice %15 {offsets = [4, 5], sizes = [16, 16], strides = [1, 1]} : vector<22x22xf32> to vector<16x16xf32>
    %429 = vector.broadcast %427 : f32 to vector<16x16xf32>
    %430 = arith.mulf %429, %428 : vector<16x16xf32>
    %431 = arith.addf %426, %430 : vector<16x16xf32>
    %c83 = arith.constant 83 : index
    %432 = memref.load %arg1[%c83] : memref<198xf32, #tpu.memory_space<smem>>
    %433 = vector.extract_strided_slice %15 {offsets = [4, 6], sizes = [16, 16], strides = [1, 1]} : vector<22x22xf32> to vector<16x16xf32>
    %434 = vector.broadcast %432 : f32 to vector<16x16xf32>
    %435 = arith.mulf %434, %433 : vector<16x16xf32>
    %436 = arith.addf %431, %435 : vector<16x16xf32>
    %c84 = arith.constant 84 : index
    %437 = memref.load %arg1[%c84] : memref<198xf32, #tpu.memory_space<smem>>
    %438 = vector.extract_strided_slice %15 {offsets = [5, 0], sizes = [16, 16], strides = [1, 1]} : vector<22x22xf32> to vector<16x16xf32>
    %439 = vector.broadcast %437 : f32 to vector<16x16xf32>
    %440 = arith.mulf %439, %438 : vector<16x16xf32>
    %441 = arith.addf %436, %440 : vector<16x16xf32>
    %c85 = arith.constant 85 : index
    %442 = memref.load %arg1[%c85] : memref<198xf32, #tpu.memory_space<smem>>
    %443 = vector.extract_strided_slice %15 {offsets = [5, 1], sizes = [16, 16], strides = [1, 1]} : vector<22x22xf32> to vector<16x16xf32>
    %444 = vector.broadcast %442 : f32 to vector<16x16xf32>
    %445 = arith.mulf %444, %443 : vector<16x16xf32>
    %446 = arith.addf %441, %445 : vector<16x16xf32>
    %c86 = arith.constant 86 : index
    %447 = memref.load %arg1[%c86] : memref<198xf32, #tpu.memory_space<smem>>
    %448 = vector.extract_strided_slice %15 {offsets = [5, 2], sizes = [16, 16], strides = [1, 1]} : vector<22x22xf32> to vector<16x16xf32>
    %449 = vector.broadcast %447 : f32 to vector<16x16xf32>
    %450 = arith.mulf %449, %448 : vector<16x16xf32>
    %451 = arith.addf %446, %450 : vector<16x16xf32>
    %c87 = arith.constant 87 : index
    %452 = memref.load %arg1[%c87] : memref<198xf32, #tpu.memory_space<smem>>
    %453 = vector.extract_strided_slice %15 {offsets = [5, 3], sizes = [16, 16], strides = [1, 1]} : vector<22x22xf32> to vector<16x16xf32>
    %454 = vector.broadcast %452 : f32 to vector<16x16xf32>
    %455 = arith.mulf %454, %453 : vector<16x16xf32>
    %456 = arith.addf %451, %455 : vector<16x16xf32>
    %c88 = arith.constant 88 : index
    %457 = memref.load %arg1[%c88] : memref<198xf32, #tpu.memory_space<smem>>
    %458 = vector.extract_strided_slice %15 {offsets = [5, 4], sizes = [16, 16], strides = [1, 1]} : vector<22x22xf32> to vector<16x16xf32>
    %459 = vector.broadcast %457 : f32 to vector<16x16xf32>
    %460 = arith.mulf %459, %458 : vector<16x16xf32>
    %461 = arith.addf %456, %460 : vector<16x16xf32>
    %c89 = arith.constant 89 : index
    %462 = memref.load %arg1[%c89] : memref<198xf32, #tpu.memory_space<smem>>
    %463 = vector.extract_strided_slice %15 {offsets = [5, 5], sizes = [16, 16], strides = [1, 1]} : vector<22x22xf32> to vector<16x16xf32>
    %464 = vector.broadcast %462 : f32 to vector<16x16xf32>
    %465 = arith.mulf %464, %463 : vector<16x16xf32>
    %466 = arith.addf %461, %465 : vector<16x16xf32>
    %c90 = arith.constant 90 : index
    %467 = memref.load %arg1[%c90] : memref<198xf32, #tpu.memory_space<smem>>
    %468 = vector.extract_strided_slice %15 {offsets = [5, 6], sizes = [16, 16], strides = [1, 1]} : vector<22x22xf32> to vector<16x16xf32>
    %469 = vector.broadcast %467 : f32 to vector<16x16xf32>
    %470 = arith.mulf %469, %468 : vector<16x16xf32>
    %471 = arith.addf %466, %470 : vector<16x16xf32>
    %c91 = arith.constant 91 : index
    %472 = memref.load %arg1[%c91] : memref<198xf32, #tpu.memory_space<smem>>
    %473 = vector.extract_strided_slice %15 {offsets = [6, 0], sizes = [16, 16], strides = [1, 1]} : vector<22x22xf32> to vector<16x16xf32>
    %474 = vector.broadcast %472 : f32 to vector<16x16xf32>
    %475 = arith.mulf %474, %473 : vector<16x16xf32>
    %476 = arith.addf %471, %475 : vector<16x16xf32>
    %c92 = arith.constant 92 : index
    %477 = memref.load %arg1[%c92] : memref<198xf32, #tpu.memory_space<smem>>
    %478 = vector.extract_strided_slice %15 {offsets = [6, 1], sizes = [16, 16], strides = [1, 1]} : vector<22x22xf32> to vector<16x16xf32>
    %479 = vector.broadcast %477 : f32 to vector<16x16xf32>
    %480 = arith.mulf %479, %478 : vector<16x16xf32>
    %481 = arith.addf %476, %480 : vector<16x16xf32>
    %c93 = arith.constant 93 : index
    %482 = memref.load %arg1[%c93] : memref<198xf32, #tpu.memory_space<smem>>
    %483 = vector.extract_strided_slice %15 {offsets = [6, 2], sizes = [16, 16], strides = [1, 1]} : vector<22x22xf32> to vector<16x16xf32>
    %484 = vector.broadcast %482 : f32 to vector<16x16xf32>
    %485 = arith.mulf %484, %483 : vector<16x16xf32>
    %486 = arith.addf %481, %485 : vector<16x16xf32>
    %c94 = arith.constant 94 : index
    %487 = memref.load %arg1[%c94] : memref<198xf32, #tpu.memory_space<smem>>
    %488 = vector.extract_strided_slice %15 {offsets = [6, 3], sizes = [16, 16], strides = [1, 1]} : vector<22x22xf32> to vector<16x16xf32>
    %489 = vector.broadcast %487 : f32 to vector<16x16xf32>
    %490 = arith.mulf %489, %488 : vector<16x16xf32>
    %491 = arith.addf %486, %490 : vector<16x16xf32>
    %c95 = arith.constant 95 : index
    %492 = memref.load %arg1[%c95] : memref<198xf32, #tpu.memory_space<smem>>
    %493 = vector.extract_strided_slice %15 {offsets = [6, 4], sizes = [16, 16], strides = [1, 1]} : vector<22x22xf32> to vector<16x16xf32>
    %494 = vector.broadcast %492 : f32 to vector<16x16xf32>
    %495 = arith.mulf %494, %493 : vector<16x16xf32>
    %496 = arith.addf %491, %495 : vector<16x16xf32>
    %c96 = arith.constant 96 : index
    %497 = memref.load %arg1[%c96] : memref<198xf32, #tpu.memory_space<smem>>
    %498 = vector.extract_strided_slice %15 {offsets = [6, 5], sizes = [16, 16], strides = [1, 1]} : vector<22x22xf32> to vector<16x16xf32>
    %499 = vector.broadcast %497 : f32 to vector<16x16xf32>
    %500 = arith.mulf %499, %498 : vector<16x16xf32>
    %501 = arith.addf %496, %500 : vector<16x16xf32>
    %c97 = arith.constant 97 : index
    %502 = memref.load %arg1[%c97] : memref<198xf32, #tpu.memory_space<smem>>
    %503 = vector.extract_strided_slice %15 {offsets = [6, 6], sizes = [16, 16], strides = [1, 1]} : vector<22x22xf32> to vector<16x16xf32>
    %504 = vector.broadcast %502 : f32 to vector<16x16xf32>
    %505 = arith.mulf %504, %503 : vector<16x16xf32>
    %506 = arith.addf %501, %505 : vector<16x16xf32>
    %c98 = arith.constant 98 : index
    %507 = memref.load %arg1[%c98] : memref<198xf32, #tpu.memory_space<smem>>
    %508 = vector.broadcast %507 : f32 to vector<16x16xf32>
    %509 = arith.addf %506, %508 : vector<16x16xf32>
    %510 = arith.negf %509 : vector<16x16xf32>
    %511 = math.exp %510 : vector<16x16xf32>
    %cst_11 = arith.constant 1.000000e+00 : f32
    %512 = vector.broadcast %cst_11 : f32 to vector<16x16xf32>
    %513 = arith.addf %512, %511 : vector<16x16xf32>
    %514 = arith.divf %512, %513 : vector<16x16xf32>
    %cst_12 = arith.constant dense<0xFF800000> : vector<16x128xf32>
    %515 = vector.multi_reduction <maximumf>, %1, %cst_12 [1] : vector<16x16x128xf32> to vector<16x128xf32>
    %516 = vector.extract_strided_slice %515 {offsets = [0, 0], sizes = [16, 16], strides = [1, 1]} : vector<16x128xf32> to vector<16x16xf32>
    %cst_13 = arith.constant dense<0.000000e+00> : vector<16x128xf32>
    %517 = vector.multi_reduction <add>, %1, %cst_13 [1] : vector<16x16x128xf32> to vector<16x128xf32>
    %cst_14 = arith.constant 1.600000e+01 : f32
    %518 = vector.broadcast %cst_14 : f32 to vector<16x128xf32>
    %519 = arith.divf %517, %518 : vector<16x128xf32>
    %520 = vector.extract_strided_slice %519 {offsets = [0, 0], sizes = [16, 16], strides = [1, 1]} : vector<16x128xf32> to vector<16x16xf32>
    %cst_15 = arith.constant 0.000000e+00 : f32
    %521 = vector.broadcast %cst_15 : f32 to vector<3x16xf32>
    %522 = tpu.concatenate %521, %516, %521 in 0 : vector<3x16xf32>, vector<16x16xf32>, vector<3x16xf32> -> vector<22x16xf32>
    %cst_16 = arith.constant 0.000000e+00 : f32
    %523 = vector.broadcast %cst_16 : f32 to vector<22x3xf32>
    %524 = tpu.concatenate %523, %522, %523 in 1 : vector<22x3xf32>, vector<22x16xf32>, vector<22x3xf32> -> vector<22x22xf32>
    %cst_17 = arith.constant 0.000000e+00 : f32
    %525 = vector.broadcast %cst_17 : f32 to vector<3x16xf32>
    %526 = tpu.concatenate %525, %520, %525 in 0 : vector<3x16xf32>, vector<16x16xf32>, vector<3x16xf32> -> vector<22x16xf32>
    %cst_18 = arith.constant 0.000000e+00 : f32
    %527 = vector.broadcast %cst_18 : f32 to vector<22x3xf32>
    %528 = tpu.concatenate %527, %526, %527 in 1 : vector<22x3xf32>, vector<22x16xf32>, vector<22x3xf32> -> vector<22x22xf32>
    %cst_19 = arith.constant 0.000000e+00 : f32
    %529 = vector.broadcast %cst_19 : f32 to vector<16x16xf32>
    %c99 = arith.constant 99 : index
    %530 = memref.load %arg1[%c99] : memref<198xf32, #tpu.memory_space<smem>>
    %531 = vector.extract_strided_slice %524 {offsets = [0, 0], sizes = [16, 16], strides = [1, 1]} : vector<22x22xf32> to vector<16x16xf32>
    %532 = vector.broadcast %530 : f32 to vector<16x16xf32>
    %533 = arith.mulf %532, %531 : vector<16x16xf32>
    %534 = arith.addf %529, %533 : vector<16x16xf32>
    %c100 = arith.constant 100 : index
    %535 = memref.load %arg1[%c100] : memref<198xf32, #tpu.memory_space<smem>>
    %536 = vector.extract_strided_slice %524 {offsets = [0, 1], sizes = [16, 16], strides = [1, 1]} : vector<22x22xf32> to vector<16x16xf32>
    %537 = vector.broadcast %535 : f32 to vector<16x16xf32>
    %538 = arith.mulf %537, %536 : vector<16x16xf32>
    %539 = arith.addf %534, %538 : vector<16x16xf32>
    %c101 = arith.constant 101 : index
    %540 = memref.load %arg1[%c101] : memref<198xf32, #tpu.memory_space<smem>>
    %541 = vector.extract_strided_slice %524 {offsets = [0, 2], sizes = [16, 16], strides = [1, 1]} : vector<22x22xf32> to vector<16x16xf32>
    %542 = vector.broadcast %540 : f32 to vector<16x16xf32>
    %543 = arith.mulf %542, %541 : vector<16x16xf32>
    %544 = arith.addf %539, %543 : vector<16x16xf32>
    %c102 = arith.constant 102 : index
    %545 = memref.load %arg1[%c102] : memref<198xf32, #tpu.memory_space<smem>>
    %546 = vector.extract_strided_slice %524 {offsets = [0, 3], sizes = [16, 16], strides = [1, 1]} : vector<22x22xf32> to vector<16x16xf32>
    %547 = vector.broadcast %545 : f32 to vector<16x16xf32>
    %548 = arith.mulf %547, %546 : vector<16x16xf32>
    %549 = arith.addf %544, %548 : vector<16x16xf32>
    %c103 = arith.constant 103 : index
    %550 = memref.load %arg1[%c103] : memref<198xf32, #tpu.memory_space<smem>>
    %551 = vector.extract_strided_slice %524 {offsets = [0, 4], sizes = [16, 16], strides = [1, 1]} : vector<22x22xf32> to vector<16x16xf32>
    %552 = vector.broadcast %550 : f32 to vector<16x16xf32>
    %553 = arith.mulf %552, %551 : vector<16x16xf32>
    %554 = arith.addf %549, %553 : vector<16x16xf32>
    %c104 = arith.constant 104 : index
    %555 = memref.load %arg1[%c104] : memref<198xf32, #tpu.memory_space<smem>>
    %556 = vector.extract_strided_slice %524 {offsets = [0, 5], sizes = [16, 16], strides = [1, 1]} : vector<22x22xf32> to vector<16x16xf32>
    %557 = vector.broadcast %555 : f32 to vector<16x16xf32>
    %558 = arith.mulf %557, %556 : vector<16x16xf32>
    %559 = arith.addf %554, %558 : vector<16x16xf32>
    %c105 = arith.constant 105 : index
    %560 = memref.load %arg1[%c105] : memref<198xf32, #tpu.memory_space<smem>>
    %561 = vector.extract_strided_slice %524 {offsets = [0, 6], sizes = [16, 16], strides = [1, 1]} : vector<22x22xf32> to vector<16x16xf32>
    %562 = vector.broadcast %560 : f32 to vector<16x16xf32>
    %563 = arith.mulf %562, %561 : vector<16x16xf32>
    %564 = arith.addf %559, %563 : vector<16x16xf32>
    %c106 = arith.constant 106 : index
    %565 = memref.load %arg1[%c106] : memref<198xf32, #tpu.memory_space<smem>>
    %566 = vector.extract_strided_slice %524 {offsets = [1, 0], sizes = [16, 16], strides = [1, 1]} : vector<22x22xf32> to vector<16x16xf32>
    %567 = vector.broadcast %565 : f32 to vector<16x16xf32>
    %568 = arith.mulf %567, %566 : vector<16x16xf32>
    %569 = arith.addf %564, %568 : vector<16x16xf32>
    %c107 = arith.constant 107 : index
    %570 = memref.load %arg1[%c107] : memref<198xf32, #tpu.memory_space<smem>>
    %571 = vector.extract_strided_slice %524 {offsets = [1, 1], sizes = [16, 16], strides = [1, 1]} : vector<22x22xf32> to vector<16x16xf32>
    %572 = vector.broadcast %570 : f32 to vector<16x16xf32>
    %573 = arith.mulf %572, %571 : vector<16x16xf32>
    %574 = arith.addf %569, %573 : vector<16x16xf32>
    %c108 = arith.constant 108 : index
    %575 = memref.load %arg1[%c108] : memref<198xf32, #tpu.memory_space<smem>>
    %576 = vector.extract_strided_slice %524 {offsets = [1, 2], sizes = [16, 16], strides = [1, 1]} : vector<22x22xf32> to vector<16x16xf32>
    %577 = vector.broadcast %575 : f32 to vector<16x16xf32>
    %578 = arith.mulf %577, %576 : vector<16x16xf32>
    %579 = arith.addf %574, %578 : vector<16x16xf32>
    %c109 = arith.constant 109 : index
    %580 = memref.load %arg1[%c109] : memref<198xf32, #tpu.memory_space<smem>>
    %581 = vector.extract_strided_slice %524 {offsets = [1, 3], sizes = [16, 16], strides = [1, 1]} : vector<22x22xf32> to vector<16x16xf32>
    %582 = vector.broadcast %580 : f32 to vector<16x16xf32>
    %583 = arith.mulf %582, %581 : vector<16x16xf32>
    %584 = arith.addf %579, %583 : vector<16x16xf32>
    %c110 = arith.constant 110 : index
    %585 = memref.load %arg1[%c110] : memref<198xf32, #tpu.memory_space<smem>>
    %586 = vector.extract_strided_slice %524 {offsets = [1, 4], sizes = [16, 16], strides = [1, 1]} : vector<22x22xf32> to vector<16x16xf32>
    %587 = vector.broadcast %585 : f32 to vector<16x16xf32>
    %588 = arith.mulf %587, %586 : vector<16x16xf32>
    %589 = arith.addf %584, %588 : vector<16x16xf32>
    %c111 = arith.constant 111 : index
    %590 = memref.load %arg1[%c111] : memref<198xf32, #tpu.memory_space<smem>>
    %591 = vector.extract_strided_slice %524 {offsets = [1, 5], sizes = [16, 16], strides = [1, 1]} : vector<22x22xf32> to vector<16x16xf32>
    %592 = vector.broadcast %590 : f32 to vector<16x16xf32>
    %593 = arith.mulf %592, %591 : vector<16x16xf32>
    %594 = arith.addf %589, %593 : vector<16x16xf32>
    %c112 = arith.constant 112 : index
    %595 = memref.load %arg1[%c112] : memref<198xf32, #tpu.memory_space<smem>>
    %596 = vector.extract_strided_slice %524 {offsets = [1, 6], sizes = [16, 16], strides = [1, 1]} : vector<22x22xf32> to vector<16x16xf32>
    %597 = vector.broadcast %595 : f32 to vector<16x16xf32>
    %598 = arith.mulf %597, %596 : vector<16x16xf32>
    %599 = arith.addf %594, %598 : vector<16x16xf32>
    %c113 = arith.constant 113 : index
    %600 = memref.load %arg1[%c113] : memref<198xf32, #tpu.memory_space<smem>>
    %601 = vector.extract_strided_slice %524 {offsets = [2, 0], sizes = [16, 16], strides = [1, 1]} : vector<22x22xf32> to vector<16x16xf32>
    %602 = vector.broadcast %600 : f32 to vector<16x16xf32>
    %603 = arith.mulf %602, %601 : vector<16x16xf32>
    %604 = arith.addf %599, %603 : vector<16x16xf32>
    %c114 = arith.constant 114 : index
    %605 = memref.load %arg1[%c114] : memref<198xf32, #tpu.memory_space<smem>>
    %606 = vector.extract_strided_slice %524 {offsets = [2, 1], sizes = [16, 16], strides = [1, 1]} : vector<22x22xf32> to vector<16x16xf32>
    %607 = vector.broadcast %605 : f32 to vector<16x16xf32>
    %608 = arith.mulf %607, %606 : vector<16x16xf32>
    %609 = arith.addf %604, %608 : vector<16x16xf32>
    %c115 = arith.constant 115 : index
    %610 = memref.load %arg1[%c115] : memref<198xf32, #tpu.memory_space<smem>>
    %611 = vector.extract_strided_slice %524 {offsets = [2, 2], sizes = [16, 16], strides = [1, 1]} : vector<22x22xf32> to vector<16x16xf32>
    %612 = vector.broadcast %610 : f32 to vector<16x16xf32>
    %613 = arith.mulf %612, %611 : vector<16x16xf32>
    %614 = arith.addf %609, %613 : vector<16x16xf32>
    %c116 = arith.constant 116 : index
    %615 = memref.load %arg1[%c116] : memref<198xf32, #tpu.memory_space<smem>>
    %616 = vector.extract_strided_slice %524 {offsets = [2, 3], sizes = [16, 16], strides = [1, 1]} : vector<22x22xf32> to vector<16x16xf32>
    %617 = vector.broadcast %615 : f32 to vector<16x16xf32>
    %618 = arith.mulf %617, %616 : vector<16x16xf32>
    %619 = arith.addf %614, %618 : vector<16x16xf32>
    %c117 = arith.constant 117 : index
    %620 = memref.load %arg1[%c117] : memref<198xf32, #tpu.memory_space<smem>>
    %621 = vector.extract_strided_slice %524 {offsets = [2, 4], sizes = [16, 16], strides = [1, 1]} : vector<22x22xf32> to vector<16x16xf32>
    %622 = vector.broadcast %620 : f32 to vector<16x16xf32>
    %623 = arith.mulf %622, %621 : vector<16x16xf32>
    %624 = arith.addf %619, %623 : vector<16x16xf32>
    %c118 = arith.constant 118 : index
    %625 = memref.load %arg1[%c118] : memref<198xf32, #tpu.memory_space<smem>>
    %626 = vector.extract_strided_slice %524 {offsets = [2, 5], sizes = [16, 16], strides = [1, 1]} : vector<22x22xf32> to vector<16x16xf32>
    %627 = vector.broadcast %625 : f32 to vector<16x16xf32>
    %628 = arith.mulf %627, %626 : vector<16x16xf32>
    %629 = arith.addf %624, %628 : vector<16x16xf32>
    %c119 = arith.constant 119 : index
    %630 = memref.load %arg1[%c119] : memref<198xf32, #tpu.memory_space<smem>>
    %631 = vector.extract_strided_slice %524 {offsets = [2, 6], sizes = [16, 16], strides = [1, 1]} : vector<22x22xf32> to vector<16x16xf32>
    %632 = vector.broadcast %630 : f32 to vector<16x16xf32>
    %633 = arith.mulf %632, %631 : vector<16x16xf32>
    %634 = arith.addf %629, %633 : vector<16x16xf32>
    %c120 = arith.constant 120 : index
    %635 = memref.load %arg1[%c120] : memref<198xf32, #tpu.memory_space<smem>>
    %636 = vector.extract_strided_slice %524 {offsets = [3, 0], sizes = [16, 16], strides = [1, 1]} : vector<22x22xf32> to vector<16x16xf32>
    %637 = vector.broadcast %635 : f32 to vector<16x16xf32>
    %638 = arith.mulf %637, %636 : vector<16x16xf32>
    %639 = arith.addf %634, %638 : vector<16x16xf32>
    %c121 = arith.constant 121 : index
    %640 = memref.load %arg1[%c121] : memref<198xf32, #tpu.memory_space<smem>>
    %641 = vector.extract_strided_slice %524 {offsets = [3, 1], sizes = [16, 16], strides = [1, 1]} : vector<22x22xf32> to vector<16x16xf32>
    %642 = vector.broadcast %640 : f32 to vector<16x16xf32>
    %643 = arith.mulf %642, %641 : vector<16x16xf32>
    %644 = arith.addf %639, %643 : vector<16x16xf32>
    %c122 = arith.constant 122 : index
    %645 = memref.load %arg1[%c122] : memref<198xf32, #tpu.memory_space<smem>>
    %646 = vector.extract_strided_slice %524 {offsets = [3, 2], sizes = [16, 16], strides = [1, 1]} : vector<22x22xf32> to vector<16x16xf32>
    %647 = vector.broadcast %645 : f32 to vector<16x16xf32>
    %648 = arith.mulf %647, %646 : vector<16x16xf32>
    %649 = arith.addf %644, %648 : vector<16x16xf32>
    %c123 = arith.constant 123 : index
    %650 = memref.load %arg1[%c123] : memref<198xf32, #tpu.memory_space<smem>>
    %651 = vector.extract_strided_slice %524 {offsets = [3, 3], sizes = [16, 16], strides = [1, 1]} : vector<22x22xf32> to vector<16x16xf32>
    %652 = vector.broadcast %650 : f32 to vector<16x16xf32>
    %653 = arith.mulf %652, %651 : vector<16x16xf32>
    %654 = arith.addf %649, %653 : vector<16x16xf32>
    %c124 = arith.constant 124 : index
    %655 = memref.load %arg1[%c124] : memref<198xf32, #tpu.memory_space<smem>>
    %656 = vector.extract_strided_slice %524 {offsets = [3, 4], sizes = [16, 16], strides = [1, 1]} : vector<22x22xf32> to vector<16x16xf32>
    %657 = vector.broadcast %655 : f32 to vector<16x16xf32>
    %658 = arith.mulf %657, %656 : vector<16x16xf32>
    %659 = arith.addf %654, %658 : vector<16x16xf32>
    %c125 = arith.constant 125 : index
    %660 = memref.load %arg1[%c125] : memref<198xf32, #tpu.memory_space<smem>>
    %661 = vector.extract_strided_slice %524 {offsets = [3, 5], sizes = [16, 16], strides = [1, 1]} : vector<22x22xf32> to vector<16x16xf32>
    %662 = vector.broadcast %660 : f32 to vector<16x16xf32>
    %663 = arith.mulf %662, %661 : vector<16x16xf32>
    %664 = arith.addf %659, %663 : vector<16x16xf32>
    %c126 = arith.constant 126 : index
    %665 = memref.load %arg1[%c126] : memref<198xf32, #tpu.memory_space<smem>>
    %666 = vector.extract_strided_slice %524 {offsets = [3, 6], sizes = [16, 16], strides = [1, 1]} : vector<22x22xf32> to vector<16x16xf32>
    %667 = vector.broadcast %665 : f32 to vector<16x16xf32>
    %668 = arith.mulf %667, %666 : vector<16x16xf32>
    %669 = arith.addf %664, %668 : vector<16x16xf32>
    %c127 = arith.constant 127 : index
    %670 = memref.load %arg1[%c127] : memref<198xf32, #tpu.memory_space<smem>>
    %671 = vector.extract_strided_slice %524 {offsets = [4, 0], sizes = [16, 16], strides = [1, 1]} : vector<22x22xf32> to vector<16x16xf32>
    %672 = vector.broadcast %670 : f32 to vector<16x16xf32>
    %673 = arith.mulf %672, %671 : vector<16x16xf32>
    %674 = arith.addf %669, %673 : vector<16x16xf32>
    %c128 = arith.constant 128 : index
    %675 = memref.load %arg1[%c128] : memref<198xf32, #tpu.memory_space<smem>>
    %676 = vector.extract_strided_slice %524 {offsets = [4, 1], sizes = [16, 16], strides = [1, 1]} : vector<22x22xf32> to vector<16x16xf32>
    %677 = vector.broadcast %675 : f32 to vector<16x16xf32>
    %678 = arith.mulf %677, %676 : vector<16x16xf32>
    %679 = arith.addf %674, %678 : vector<16x16xf32>
    %c129 = arith.constant 129 : index
    %680 = memref.load %arg1[%c129] : memref<198xf32, #tpu.memory_space<smem>>
    %681 = vector.extract_strided_slice %524 {offsets = [4, 2], sizes = [16, 16], strides = [1, 1]} : vector<22x22xf32> to vector<16x16xf32>
    %682 = vector.broadcast %680 : f32 to vector<16x16xf32>
    %683 = arith.mulf %682, %681 : vector<16x16xf32>
    %684 = arith.addf %679, %683 : vector<16x16xf32>
    %c130 = arith.constant 130 : index
    %685 = memref.load %arg1[%c130] : memref<198xf32, #tpu.memory_space<smem>>
    %686 = vector.extract_strided_slice %524 {offsets = [4, 3], sizes = [16, 16], strides = [1, 1]} : vector<22x22xf32> to vector<16x16xf32>
    %687 = vector.broadcast %685 : f32 to vector<16x16xf32>
    %688 = arith.mulf %687, %686 : vector<16x16xf32>
    %689 = arith.addf %684, %688 : vector<16x16xf32>
    %c131 = arith.constant 131 : index
    %690 = memref.load %arg1[%c131] : memref<198xf32, #tpu.memory_space<smem>>
    %691 = vector.extract_strided_slice %524 {offsets = [4, 4], sizes = [16, 16], strides = [1, 1]} : vector<22x22xf32> to vector<16x16xf32>
    %692 = vector.broadcast %690 : f32 to vector<16x16xf32>
    %693 = arith.mulf %692, %691 : vector<16x16xf32>
    %694 = arith.addf %689, %693 : vector<16x16xf32>
    %c132 = arith.constant 132 : index
    %695 = memref.load %arg1[%c132] : memref<198xf32, #tpu.memory_space<smem>>
    %696 = vector.extract_strided_slice %524 {offsets = [4, 5], sizes = [16, 16], strides = [1, 1]} : vector<22x22xf32> to vector<16x16xf32>
    %697 = vector.broadcast %695 : f32 to vector<16x16xf32>
    %698 = arith.mulf %697, %696 : vector<16x16xf32>
    %699 = arith.addf %694, %698 : vector<16x16xf32>
    %c133 = arith.constant 133 : index
    %700 = memref.load %arg1[%c133] : memref<198xf32, #tpu.memory_space<smem>>
    %701 = vector.extract_strided_slice %524 {offsets = [4, 6], sizes = [16, 16], strides = [1, 1]} : vector<22x22xf32> to vector<16x16xf32>
    %702 = vector.broadcast %700 : f32 to vector<16x16xf32>
    %703 = arith.mulf %702, %701 : vector<16x16xf32>
    %704 = arith.addf %699, %703 : vector<16x16xf32>
    %c134 = arith.constant 134 : index
    %705 = memref.load %arg1[%c134] : memref<198xf32, #tpu.memory_space<smem>>
    %706 = vector.extract_strided_slice %524 {offsets = [5, 0], sizes = [16, 16], strides = [1, 1]} : vector<22x22xf32> to vector<16x16xf32>
    %707 = vector.broadcast %705 : f32 to vector<16x16xf32>
    %708 = arith.mulf %707, %706 : vector<16x16xf32>
    %709 = arith.addf %704, %708 : vector<16x16xf32>
    %c135 = arith.constant 135 : index
    %710 = memref.load %arg1[%c135] : memref<198xf32, #tpu.memory_space<smem>>
    %711 = vector.extract_strided_slice %524 {offsets = [5, 1], sizes = [16, 16], strides = [1, 1]} : vector<22x22xf32> to vector<16x16xf32>
    %712 = vector.broadcast %710 : f32 to vector<16x16xf32>
    %713 = arith.mulf %712, %711 : vector<16x16xf32>
    %714 = arith.addf %709, %713 : vector<16x16xf32>
    %c136 = arith.constant 136 : index
    %715 = memref.load %arg1[%c136] : memref<198xf32, #tpu.memory_space<smem>>
    %716 = vector.extract_strided_slice %524 {offsets = [5, 2], sizes = [16, 16], strides = [1, 1]} : vector<22x22xf32> to vector<16x16xf32>
    %717 = vector.broadcast %715 : f32 to vector<16x16xf32>
    %718 = arith.mulf %717, %716 : vector<16x16xf32>
    %719 = arith.addf %714, %718 : vector<16x16xf32>
    %c137 = arith.constant 137 : index
    %720 = memref.load %arg1[%c137] : memref<198xf32, #tpu.memory_space<smem>>
    %721 = vector.extract_strided_slice %524 {offsets = [5, 3], sizes = [16, 16], strides = [1, 1]} : vector<22x22xf32> to vector<16x16xf32>
    %722 = vector.broadcast %720 : f32 to vector<16x16xf32>
    %723 = arith.mulf %722, %721 : vector<16x16xf32>
    %724 = arith.addf %719, %723 : vector<16x16xf32>
    %c138 = arith.constant 138 : index
    %725 = memref.load %arg1[%c138] : memref<198xf32, #tpu.memory_space<smem>>
    %726 = vector.extract_strided_slice %524 {offsets = [5, 4], sizes = [16, 16], strides = [1, 1]} : vector<22x22xf32> to vector<16x16xf32>
    %727 = vector.broadcast %725 : f32 to vector<16x16xf32>
    %728 = arith.mulf %727, %726 : vector<16x16xf32>
    %729 = arith.addf %724, %728 : vector<16x16xf32>
    %c139 = arith.constant 139 : index
    %730 = memref.load %arg1[%c139] : memref<198xf32, #tpu.memory_space<smem>>
    %731 = vector.extract_strided_slice %524 {offsets = [5, 5], sizes = [16, 16], strides = [1, 1]} : vector<22x22xf32> to vector<16x16xf32>
    %732 = vector.broadcast %730 : f32 to vector<16x16xf32>
    %733 = arith.mulf %732, %731 : vector<16x16xf32>
    %734 = arith.addf %729, %733 : vector<16x16xf32>
    %c140 = arith.constant 140 : index
    %735 = memref.load %arg1[%c140] : memref<198xf32, #tpu.memory_space<smem>>
    %736 = vector.extract_strided_slice %524 {offsets = [5, 6], sizes = [16, 16], strides = [1, 1]} : vector<22x22xf32> to vector<16x16xf32>
    %737 = vector.broadcast %735 : f32 to vector<16x16xf32>
    %738 = arith.mulf %737, %736 : vector<16x16xf32>
    %739 = arith.addf %734, %738 : vector<16x16xf32>
    %c141 = arith.constant 141 : index
    %740 = memref.load %arg1[%c141] : memref<198xf32, #tpu.memory_space<smem>>
    %741 = vector.extract_strided_slice %524 {offsets = [6, 0], sizes = [16, 16], strides = [1, 1]} : vector<22x22xf32> to vector<16x16xf32>
    %742 = vector.broadcast %740 : f32 to vector<16x16xf32>
    %743 = arith.mulf %742, %741 : vector<16x16xf32>
    %744 = arith.addf %739, %743 : vector<16x16xf32>
    %c142 = arith.constant 142 : index
    %745 = memref.load %arg1[%c142] : memref<198xf32, #tpu.memory_space<smem>>
    %746 = vector.extract_strided_slice %524 {offsets = [6, 1], sizes = [16, 16], strides = [1, 1]} : vector<22x22xf32> to vector<16x16xf32>
    %747 = vector.broadcast %745 : f32 to vector<16x16xf32>
    %748 = arith.mulf %747, %746 : vector<16x16xf32>
    %749 = arith.addf %744, %748 : vector<16x16xf32>
    %c143 = arith.constant 143 : index
    %750 = memref.load %arg1[%c143] : memref<198xf32, #tpu.memory_space<smem>>
    %751 = vector.extract_strided_slice %524 {offsets = [6, 2], sizes = [16, 16], strides = [1, 1]} : vector<22x22xf32> to vector<16x16xf32>
    %752 = vector.broadcast %750 : f32 to vector<16x16xf32>
    %753 = arith.mulf %752, %751 : vector<16x16xf32>
    %754 = arith.addf %749, %753 : vector<16x16xf32>
    %c144 = arith.constant 144 : index
    %755 = memref.load %arg1[%c144] : memref<198xf32, #tpu.memory_space<smem>>
    %756 = vector.extract_strided_slice %524 {offsets = [6, 3], sizes = [16, 16], strides = [1, 1]} : vector<22x22xf32> to vector<16x16xf32>
    %757 = vector.broadcast %755 : f32 to vector<16x16xf32>
    %758 = arith.mulf %757, %756 : vector<16x16xf32>
    %759 = arith.addf %754, %758 : vector<16x16xf32>
    %c145 = arith.constant 145 : index
    %760 = memref.load %arg1[%c145] : memref<198xf32, #tpu.memory_space<smem>>
    %761 = vector.extract_strided_slice %524 {offsets = [6, 4], sizes = [16, 16], strides = [1, 1]} : vector<22x22xf32> to vector<16x16xf32>
    %762 = vector.broadcast %760 : f32 to vector<16x16xf32>
    %763 = arith.mulf %762, %761 : vector<16x16xf32>
    %764 = arith.addf %759, %763 : vector<16x16xf32>
    %c146 = arith.constant 146 : index
    %765 = memref.load %arg1[%c146] : memref<198xf32, #tpu.memory_space<smem>>
    %766 = vector.extract_strided_slice %524 {offsets = [6, 5], sizes = [16, 16], strides = [1, 1]} : vector<22x22xf32> to vector<16x16xf32>
    %767 = vector.broadcast %765 : f32 to vector<16x16xf32>
    %768 = arith.mulf %767, %766 : vector<16x16xf32>
    %769 = arith.addf %764, %768 : vector<16x16xf32>
    %c147 = arith.constant 147 : index
    %770 = memref.load %arg1[%c147] : memref<198xf32, #tpu.memory_space<smem>>
    %771 = vector.extract_strided_slice %524 {offsets = [6, 6], sizes = [16, 16], strides = [1, 1]} : vector<22x22xf32> to vector<16x16xf32>
    %772 = vector.broadcast %770 : f32 to vector<16x16xf32>
    %773 = arith.mulf %772, %771 : vector<16x16xf32>
    %774 = arith.addf %769, %773 : vector<16x16xf32>
    %c148 = arith.constant 148 : index
    %775 = memref.load %arg1[%c148] : memref<198xf32, #tpu.memory_space<smem>>
    %776 = vector.extract_strided_slice %528 {offsets = [0, 0], sizes = [16, 16], strides = [1, 1]} : vector<22x22xf32> to vector<16x16xf32>
    %777 = vector.broadcast %775 : f32 to vector<16x16xf32>
    %778 = arith.mulf %777, %776 : vector<16x16xf32>
    %779 = arith.addf %774, %778 : vector<16x16xf32>
    %c149 = arith.constant 149 : index
    %780 = memref.load %arg1[%c149] : memref<198xf32, #tpu.memory_space<smem>>
    %781 = vector.extract_strided_slice %528 {offsets = [0, 1], sizes = [16, 16], strides = [1, 1]} : vector<22x22xf32> to vector<16x16xf32>
    %782 = vector.broadcast %780 : f32 to vector<16x16xf32>
    %783 = arith.mulf %782, %781 : vector<16x16xf32>
    %784 = arith.addf %779, %783 : vector<16x16xf32>
    %c150 = arith.constant 150 : index
    %785 = memref.load %arg1[%c150] : memref<198xf32, #tpu.memory_space<smem>>
    %786 = vector.extract_strided_slice %528 {offsets = [0, 2], sizes = [16, 16], strides = [1, 1]} : vector<22x22xf32> to vector<16x16xf32>
    %787 = vector.broadcast %785 : f32 to vector<16x16xf32>
    %788 = arith.mulf %787, %786 : vector<16x16xf32>
    %789 = arith.addf %784, %788 : vector<16x16xf32>
    %c151 = arith.constant 151 : index
    %790 = memref.load %arg1[%c151] : memref<198xf32, #tpu.memory_space<smem>>
    %791 = vector.extract_strided_slice %528 {offsets = [0, 3], sizes = [16, 16], strides = [1, 1]} : vector<22x22xf32> to vector<16x16xf32>
    %792 = vector.broadcast %790 : f32 to vector<16x16xf32>
    %793 = arith.mulf %792, %791 : vector<16x16xf32>
    %794 = arith.addf %789, %793 : vector<16x16xf32>
    %c152 = arith.constant 152 : index
    %795 = memref.load %arg1[%c152] : memref<198xf32, #tpu.memory_space<smem>>
    %796 = vector.extract_strided_slice %528 {offsets = [0, 4], sizes = [16, 16], strides = [1, 1]} : vector<22x22xf32> to vector<16x16xf32>
    %797 = vector.broadcast %795 : f32 to vector<16x16xf32>
    %798 = arith.mulf %797, %796 : vector<16x16xf32>
    %799 = arith.addf %794, %798 : vector<16x16xf32>
    %c153 = arith.constant 153 : index
    %800 = memref.load %arg1[%c153] : memref<198xf32, #tpu.memory_space<smem>>
    %801 = vector.extract_strided_slice %528 {offsets = [0, 5], sizes = [16, 16], strides = [1, 1]} : vector<22x22xf32> to vector<16x16xf32>
    %802 = vector.broadcast %800 : f32 to vector<16x16xf32>
    %803 = arith.mulf %802, %801 : vector<16x16xf32>
    %804 = arith.addf %799, %803 : vector<16x16xf32>
    %c154 = arith.constant 154 : index
    %805 = memref.load %arg1[%c154] : memref<198xf32, #tpu.memory_space<smem>>
    %806 = vector.extract_strided_slice %528 {offsets = [0, 6], sizes = [16, 16], strides = [1, 1]} : vector<22x22xf32> to vector<16x16xf32>
    %807 = vector.broadcast %805 : f32 to vector<16x16xf32>
    %808 = arith.mulf %807, %806 : vector<16x16xf32>
    %809 = arith.addf %804, %808 : vector<16x16xf32>
    %c155 = arith.constant 155 : index
    %810 = memref.load %arg1[%c155] : memref<198xf32, #tpu.memory_space<smem>>
    %811 = vector.extract_strided_slice %528 {offsets = [1, 0], sizes = [16, 16], strides = [1, 1]} : vector<22x22xf32> to vector<16x16xf32>
    %812 = vector.broadcast %810 : f32 to vector<16x16xf32>
    %813 = arith.mulf %812, %811 : vector<16x16xf32>
    %814 = arith.addf %809, %813 : vector<16x16xf32>
    %c156 = arith.constant 156 : index
    %815 = memref.load %arg1[%c156] : memref<198xf32, #tpu.memory_space<smem>>
    %816 = vector.extract_strided_slice %528 {offsets = [1, 1], sizes = [16, 16], strides = [1, 1]} : vector<22x22xf32> to vector<16x16xf32>
    %817 = vector.broadcast %815 : f32 to vector<16x16xf32>
    %818 = arith.mulf %817, %816 : vector<16x16xf32>
    %819 = arith.addf %814, %818 : vector<16x16xf32>
    %c157 = arith.constant 157 : index
    %820 = memref.load %arg1[%c157] : memref<198xf32, #tpu.memory_space<smem>>
    %821 = vector.extract_strided_slice %528 {offsets = [1, 2], sizes = [16, 16], strides = [1, 1]} : vector<22x22xf32> to vector<16x16xf32>
    %822 = vector.broadcast %820 : f32 to vector<16x16xf32>
    %823 = arith.mulf %822, %821 : vector<16x16xf32>
    %824 = arith.addf %819, %823 : vector<16x16xf32>
    %c158 = arith.constant 158 : index
    %825 = memref.load %arg1[%c158] : memref<198xf32, #tpu.memory_space<smem>>
    %826 = vector.extract_strided_slice %528 {offsets = [1, 3], sizes = [16, 16], strides = [1, 1]} : vector<22x22xf32> to vector<16x16xf32>
    %827 = vector.broadcast %825 : f32 to vector<16x16xf32>
    %828 = arith.mulf %827, %826 : vector<16x16xf32>
    %829 = arith.addf %824, %828 : vector<16x16xf32>
    %c159 = arith.constant 159 : index
    %830 = memref.load %arg1[%c159] : memref<198xf32, #tpu.memory_space<smem>>
    %831 = vector.extract_strided_slice %528 {offsets = [1, 4], sizes = [16, 16], strides = [1, 1]} : vector<22x22xf32> to vector<16x16xf32>
    %832 = vector.broadcast %830 : f32 to vector<16x16xf32>
    %833 = arith.mulf %832, %831 : vector<16x16xf32>
    %834 = arith.addf %829, %833 : vector<16x16xf32>
    %c160 = arith.constant 160 : index
    %835 = memref.load %arg1[%c160] : memref<198xf32, #tpu.memory_space<smem>>
    %836 = vector.extract_strided_slice %528 {offsets = [1, 5], sizes = [16, 16], strides = [1, 1]} : vector<22x22xf32> to vector<16x16xf32>
    %837 = vector.broadcast %835 : f32 to vector<16x16xf32>
    %838 = arith.mulf %837, %836 : vector<16x16xf32>
    %839 = arith.addf %834, %838 : vector<16x16xf32>
    %c161 = arith.constant 161 : index
    %840 = memref.load %arg1[%c161] : memref<198xf32, #tpu.memory_space<smem>>
    %841 = vector.extract_strided_slice %528 {offsets = [1, 6], sizes = [16, 16], strides = [1, 1]} : vector<22x22xf32> to vector<16x16xf32>
    %842 = vector.broadcast %840 : f32 to vector<16x16xf32>
    %843 = arith.mulf %842, %841 : vector<16x16xf32>
    %844 = arith.addf %839, %843 : vector<16x16xf32>
    %c162 = arith.constant 162 : index
    %845 = memref.load %arg1[%c162] : memref<198xf32, #tpu.memory_space<smem>>
    %846 = vector.extract_strided_slice %528 {offsets = [2, 0], sizes = [16, 16], strides = [1, 1]} : vector<22x22xf32> to vector<16x16xf32>
    %847 = vector.broadcast %845 : f32 to vector<16x16xf32>
    %848 = arith.mulf %847, %846 : vector<16x16xf32>
    %849 = arith.addf %844, %848 : vector<16x16xf32>
    %c163 = arith.constant 163 : index
    %850 = memref.load %arg1[%c163] : memref<198xf32, #tpu.memory_space<smem>>
    %851 = vector.extract_strided_slice %528 {offsets = [2, 1], sizes = [16, 16], strides = [1, 1]} : vector<22x22xf32> to vector<16x16xf32>
    %852 = vector.broadcast %850 : f32 to vector<16x16xf32>
    %853 = arith.mulf %852, %851 : vector<16x16xf32>
    %854 = arith.addf %849, %853 : vector<16x16xf32>
    %c164 = arith.constant 164 : index
    %855 = memref.load %arg1[%c164] : memref<198xf32, #tpu.memory_space<smem>>
    %856 = vector.extract_strided_slice %528 {offsets = [2, 2], sizes = [16, 16], strides = [1, 1]} : vector<22x22xf32> to vector<16x16xf32>
    %857 = vector.broadcast %855 : f32 to vector<16x16xf32>
    %858 = arith.mulf %857, %856 : vector<16x16xf32>
    %859 = arith.addf %854, %858 : vector<16x16xf32>
    %c165 = arith.constant 165 : index
    %860 = memref.load %arg1[%c165] : memref<198xf32, #tpu.memory_space<smem>>
    %861 = vector.extract_strided_slice %528 {offsets = [2, 3], sizes = [16, 16], strides = [1, 1]} : vector<22x22xf32> to vector<16x16xf32>
    %862 = vector.broadcast %860 : f32 to vector<16x16xf32>
    %863 = arith.mulf %862, %861 : vector<16x16xf32>
    %864 = arith.addf %859, %863 : vector<16x16xf32>
    %c166 = arith.constant 166 : index
    %865 = memref.load %arg1[%c166] : memref<198xf32, #tpu.memory_space<smem>>
    %866 = vector.extract_strided_slice %528 {offsets = [2, 4], sizes = [16, 16], strides = [1, 1]} : vector<22x22xf32> to vector<16x16xf32>
    %867 = vector.broadcast %865 : f32 to vector<16x16xf32>
    %868 = arith.mulf %867, %866 : vector<16x16xf32>
    %869 = arith.addf %864, %868 : vector<16x16xf32>
    %c167 = arith.constant 167 : index
    %870 = memref.load %arg1[%c167] : memref<198xf32, #tpu.memory_space<smem>>
    %871 = vector.extract_strided_slice %528 {offsets = [2, 5], sizes = [16, 16], strides = [1, 1]} : vector<22x22xf32> to vector<16x16xf32>
    %872 = vector.broadcast %870 : f32 to vector<16x16xf32>
    %873 = arith.mulf %872, %871 : vector<16x16xf32>
    %874 = arith.addf %869, %873 : vector<16x16xf32>
    %c168 = arith.constant 168 : index
    %875 = memref.load %arg1[%c168] : memref<198xf32, #tpu.memory_space<smem>>
    %876 = vector.extract_strided_slice %528 {offsets = [2, 6], sizes = [16, 16], strides = [1, 1]} : vector<22x22xf32> to vector<16x16xf32>
    %877 = vector.broadcast %875 : f32 to vector<16x16xf32>
    %878 = arith.mulf %877, %876 : vector<16x16xf32>
    %879 = arith.addf %874, %878 : vector<16x16xf32>
    %c169 = arith.constant 169 : index
    %880 = memref.load %arg1[%c169] : memref<198xf32, #tpu.memory_space<smem>>
    %881 = vector.extract_strided_slice %528 {offsets = [3, 0], sizes = [16, 16], strides = [1, 1]} : vector<22x22xf32> to vector<16x16xf32>
    %882 = vector.broadcast %880 : f32 to vector<16x16xf32>
    %883 = arith.mulf %882, %881 : vector<16x16xf32>
    %884 = arith.addf %879, %883 : vector<16x16xf32>
    %c170 = arith.constant 170 : index
    %885 = memref.load %arg1[%c170] : memref<198xf32, #tpu.memory_space<smem>>
    %886 = vector.extract_strided_slice %528 {offsets = [3, 1], sizes = [16, 16], strides = [1, 1]} : vector<22x22xf32> to vector<16x16xf32>
    %887 = vector.broadcast %885 : f32 to vector<16x16xf32>
    %888 = arith.mulf %887, %886 : vector<16x16xf32>
    %889 = arith.addf %884, %888 : vector<16x16xf32>
    %c171 = arith.constant 171 : index
    %890 = memref.load %arg1[%c171] : memref<198xf32, #tpu.memory_space<smem>>
    %891 = vector.extract_strided_slice %528 {offsets = [3, 2], sizes = [16, 16], strides = [1, 1]} : vector<22x22xf32> to vector<16x16xf32>
    %892 = vector.broadcast %890 : f32 to vector<16x16xf32>
    %893 = arith.mulf %892, %891 : vector<16x16xf32>
    %894 = arith.addf %889, %893 : vector<16x16xf32>
    %c172 = arith.constant 172 : index
    %895 = memref.load %arg1[%c172] : memref<198xf32, #tpu.memory_space<smem>>
    %896 = vector.extract_strided_slice %528 {offsets = [3, 3], sizes = [16, 16], strides = [1, 1]} : vector<22x22xf32> to vector<16x16xf32>
    %897 = vector.broadcast %895 : f32 to vector<16x16xf32>
    %898 = arith.mulf %897, %896 : vector<16x16xf32>
    %899 = arith.addf %894, %898 : vector<16x16xf32>
    %c173 = arith.constant 173 : index
    %900 = memref.load %arg1[%c173] : memref<198xf32, #tpu.memory_space<smem>>
    %901 = vector.extract_strided_slice %528 {offsets = [3, 4], sizes = [16, 16], strides = [1, 1]} : vector<22x22xf32> to vector<16x16xf32>
    %902 = vector.broadcast %900 : f32 to vector<16x16xf32>
    %903 = arith.mulf %902, %901 : vector<16x16xf32>
    %904 = arith.addf %899, %903 : vector<16x16xf32>
    %c174 = arith.constant 174 : index
    %905 = memref.load %arg1[%c174] : memref<198xf32, #tpu.memory_space<smem>>
    %906 = vector.extract_strided_slice %528 {offsets = [3, 5], sizes = [16, 16], strides = [1, 1]} : vector<22x22xf32> to vector<16x16xf32>
    %907 = vector.broadcast %905 : f32 to vector<16x16xf32>
    %908 = arith.mulf %907, %906 : vector<16x16xf32>
    %909 = arith.addf %904, %908 : vector<16x16xf32>
    %c175 = arith.constant 175 : index
    %910 = memref.load %arg1[%c175] : memref<198xf32, #tpu.memory_space<smem>>
    %911 = vector.extract_strided_slice %528 {offsets = [3, 6], sizes = [16, 16], strides = [1, 1]} : vector<22x22xf32> to vector<16x16xf32>
    %912 = vector.broadcast %910 : f32 to vector<16x16xf32>
    %913 = arith.mulf %912, %911 : vector<16x16xf32>
    %914 = arith.addf %909, %913 : vector<16x16xf32>
    %c176 = arith.constant 176 : index
    %915 = memref.load %arg1[%c176] : memref<198xf32, #tpu.memory_space<smem>>
    %916 = vector.extract_strided_slice %528 {offsets = [4, 0], sizes = [16, 16], strides = [1, 1]} : vector<22x22xf32> to vector<16x16xf32>
    %917 = vector.broadcast %915 : f32 to vector<16x16xf32>
    %918 = arith.mulf %917, %916 : vector<16x16xf32>
    %919 = arith.addf %914, %918 : vector<16x16xf32>
    %c177 = arith.constant 177 : index
    %920 = memref.load %arg1[%c177] : memref<198xf32, #tpu.memory_space<smem>>
    %921 = vector.extract_strided_slice %528 {offsets = [4, 1], sizes = [16, 16], strides = [1, 1]} : vector<22x22xf32> to vector<16x16xf32>
    %922 = vector.broadcast %920 : f32 to vector<16x16xf32>
    %923 = arith.mulf %922, %921 : vector<16x16xf32>
    %924 = arith.addf %919, %923 : vector<16x16xf32>
    %c178 = arith.constant 178 : index
    %925 = memref.load %arg1[%c178] : memref<198xf32, #tpu.memory_space<smem>>
    %926 = vector.extract_strided_slice %528 {offsets = [4, 2], sizes = [16, 16], strides = [1, 1]} : vector<22x22xf32> to vector<16x16xf32>
    %927 = vector.broadcast %925 : f32 to vector<16x16xf32>
    %928 = arith.mulf %927, %926 : vector<16x16xf32>
    %929 = arith.addf %924, %928 : vector<16x16xf32>
    %c179 = arith.constant 179 : index
    %930 = memref.load %arg1[%c179] : memref<198xf32, #tpu.memory_space<smem>>
    %931 = vector.extract_strided_slice %528 {offsets = [4, 3], sizes = [16, 16], strides = [1, 1]} : vector<22x22xf32> to vector<16x16xf32>
    %932 = vector.broadcast %930 : f32 to vector<16x16xf32>
    %933 = arith.mulf %932, %931 : vector<16x16xf32>
    %934 = arith.addf %929, %933 : vector<16x16xf32>
    %c180 = arith.constant 180 : index
    %935 = memref.load %arg1[%c180] : memref<198xf32, #tpu.memory_space<smem>>
    %936 = vector.extract_strided_slice %528 {offsets = [4, 4], sizes = [16, 16], strides = [1, 1]} : vector<22x22xf32> to vector<16x16xf32>
    %937 = vector.broadcast %935 : f32 to vector<16x16xf32>
    %938 = arith.mulf %937, %936 : vector<16x16xf32>
    %939 = arith.addf %934, %938 : vector<16x16xf32>
    %c181 = arith.constant 181 : index
    %940 = memref.load %arg1[%c181] : memref<198xf32, #tpu.memory_space<smem>>
    %941 = vector.extract_strided_slice %528 {offsets = [4, 5], sizes = [16, 16], strides = [1, 1]} : vector<22x22xf32> to vector<16x16xf32>
    %942 = vector.broadcast %940 : f32 to vector<16x16xf32>
    %943 = arith.mulf %942, %941 : vector<16x16xf32>
    %944 = arith.addf %939, %943 : vector<16x16xf32>
    %c182 = arith.constant 182 : index
    %945 = memref.load %arg1[%c182] : memref<198xf32, #tpu.memory_space<smem>>
    %946 = vector.extract_strided_slice %528 {offsets = [4, 6], sizes = [16, 16], strides = [1, 1]} : vector<22x22xf32> to vector<16x16xf32>
    %947 = vector.broadcast %945 : f32 to vector<16x16xf32>
    %948 = arith.mulf %947, %946 : vector<16x16xf32>
    %949 = arith.addf %944, %948 : vector<16x16xf32>
    %c183 = arith.constant 183 : index
    %950 = memref.load %arg1[%c183] : memref<198xf32, #tpu.memory_space<smem>>
    %951 = vector.extract_strided_slice %528 {offsets = [5, 0], sizes = [16, 16], strides = [1, 1]} : vector<22x22xf32> to vector<16x16xf32>
    %952 = vector.broadcast %950 : f32 to vector<16x16xf32>
    %953 = arith.mulf %952, %951 : vector<16x16xf32>
    %954 = arith.addf %949, %953 : vector<16x16xf32>
    %c184 = arith.constant 184 : index
    %955 = memref.load %arg1[%c184] : memref<198xf32, #tpu.memory_space<smem>>
    %956 = vector.extract_strided_slice %528 {offsets = [5, 1], sizes = [16, 16], strides = [1, 1]} : vector<22x22xf32> to vector<16x16xf32>
    %957 = vector.broadcast %955 : f32 to vector<16x16xf32>
    %958 = arith.mulf %957, %956 : vector<16x16xf32>
    %959 = arith.addf %954, %958 : vector<16x16xf32>
    %c185 = arith.constant 185 : index
    %960 = memref.load %arg1[%c185] : memref<198xf32, #tpu.memory_space<smem>>
    %961 = vector.extract_strided_slice %528 {offsets = [5, 2], sizes = [16, 16], strides = [1, 1]} : vector<22x22xf32> to vector<16x16xf32>
    %962 = vector.broadcast %960 : f32 to vector<16x16xf32>
    %963 = arith.mulf %962, %961 : vector<16x16xf32>
    %964 = arith.addf %959, %963 : vector<16x16xf32>
    %c186 = arith.constant 186 : index
    %965 = memref.load %arg1[%c186] : memref<198xf32, #tpu.memory_space<smem>>
    %966 = vector.extract_strided_slice %528 {offsets = [5, 3], sizes = [16, 16], strides = [1, 1]} : vector<22x22xf32> to vector<16x16xf32>
    %967 = vector.broadcast %965 : f32 to vector<16x16xf32>
    %968 = arith.mulf %967, %966 : vector<16x16xf32>
    %969 = arith.addf %964, %968 : vector<16x16xf32>
    %c187 = arith.constant 187 : index
    %970 = memref.load %arg1[%c187] : memref<198xf32, #tpu.memory_space<smem>>
    %971 = vector.extract_strided_slice %528 {offsets = [5, 4], sizes = [16, 16], strides = [1, 1]} : vector<22x22xf32> to vector<16x16xf32>
    %972 = vector.broadcast %970 : f32 to vector<16x16xf32>
    %973 = arith.mulf %972, %971 : vector<16x16xf32>
    %974 = arith.addf %969, %973 : vector<16x16xf32>
    %c188 = arith.constant 188 : index
    %975 = memref.load %arg1[%c188] : memref<198xf32, #tpu.memory_space<smem>>
    %976 = vector.extract_strided_slice %528 {offsets = [5, 5], sizes = [16, 16], strides = [1, 1]} : vector<22x22xf32> to vector<16x16xf32>
    %977 = vector.broadcast %975 : f32 to vector<16x16xf32>
    %978 = arith.mulf %977, %976 : vector<16x16xf32>
    %979 = arith.addf %974, %978 : vector<16x16xf32>
    %c189 = arith.constant 189 : index
    %980 = memref.load %arg1[%c189] : memref<198xf32, #tpu.memory_space<smem>>
    %981 = vector.extract_strided_slice %528 {offsets = [5, 6], sizes = [16, 16], strides = [1, 1]} : vector<22x22xf32> to vector<16x16xf32>
    %982 = vector.broadcast %980 : f32 to vector<16x16xf32>
    %983 = arith.mulf %982, %981 : vector<16x16xf32>
    %984 = arith.addf %979, %983 : vector<16x16xf32>
    %c190 = arith.constant 190 : index
    %985 = memref.load %arg1[%c190] : memref<198xf32, #tpu.memory_space<smem>>
    %986 = vector.extract_strided_slice %528 {offsets = [6, 0], sizes = [16, 16], strides = [1, 1]} : vector<22x22xf32> to vector<16x16xf32>
    %987 = vector.broadcast %985 : f32 to vector<16x16xf32>
    %988 = arith.mulf %987, %986 : vector<16x16xf32>
    %989 = arith.addf %984, %988 : vector<16x16xf32>
    %c191 = arith.constant 191 : index
    %990 = memref.load %arg1[%c191] : memref<198xf32, #tpu.memory_space<smem>>
    %991 = vector.extract_strided_slice %528 {offsets = [6, 1], sizes = [16, 16], strides = [1, 1]} : vector<22x22xf32> to vector<16x16xf32>
    %992 = vector.broadcast %990 : f32 to vector<16x16xf32>
    %993 = arith.mulf %992, %991 : vector<16x16xf32>
    %994 = arith.addf %989, %993 : vector<16x16xf32>
    %c192 = arith.constant 192 : index
    %995 = memref.load %arg1[%c192] : memref<198xf32, #tpu.memory_space<smem>>
    %996 = vector.extract_strided_slice %528 {offsets = [6, 2], sizes = [16, 16], strides = [1, 1]} : vector<22x22xf32> to vector<16x16xf32>
    %997 = vector.broadcast %995 : f32 to vector<16x16xf32>
    %998 = arith.mulf %997, %996 : vector<16x16xf32>
    %999 = arith.addf %994, %998 : vector<16x16xf32>
    %c193 = arith.constant 193 : index
    %1000 = memref.load %arg1[%c193] : memref<198xf32, #tpu.memory_space<smem>>
    %1001 = vector.extract_strided_slice %528 {offsets = [6, 3], sizes = [16, 16], strides = [1, 1]} : vector<22x22xf32> to vector<16x16xf32>
    %1002 = vector.broadcast %1000 : f32 to vector<16x16xf32>
    %1003 = arith.mulf %1002, %1001 : vector<16x16xf32>
    %1004 = arith.addf %999, %1003 : vector<16x16xf32>
    %c194 = arith.constant 194 : index
    %1005 = memref.load %arg1[%c194] : memref<198xf32, #tpu.memory_space<smem>>
    %1006 = vector.extract_strided_slice %528 {offsets = [6, 4], sizes = [16, 16], strides = [1, 1]} : vector<22x22xf32> to vector<16x16xf32>
    %1007 = vector.broadcast %1005 : f32 to vector<16x16xf32>
    %1008 = arith.mulf %1007, %1006 : vector<16x16xf32>
    %1009 = arith.addf %1004, %1008 : vector<16x16xf32>
    %c195 = arith.constant 195 : index
    %1010 = memref.load %arg1[%c195] : memref<198xf32, #tpu.memory_space<smem>>
    %1011 = vector.extract_strided_slice %528 {offsets = [6, 5], sizes = [16, 16], strides = [1, 1]} : vector<22x22xf32> to vector<16x16xf32>
    %1012 = vector.broadcast %1010 : f32 to vector<16x16xf32>
    %1013 = arith.mulf %1012, %1011 : vector<16x16xf32>
    %1014 = arith.addf %1009, %1013 : vector<16x16xf32>
    %c196 = arith.constant 196 : index
    %1015 = memref.load %arg1[%c196] : memref<198xf32, #tpu.memory_space<smem>>
    %1016 = vector.extract_strided_slice %528 {offsets = [6, 6], sizes = [16, 16], strides = [1, 1]} : vector<22x22xf32> to vector<16x16xf32>
    %1017 = vector.broadcast %1015 : f32 to vector<16x16xf32>
    %1018 = arith.mulf %1017, %1016 : vector<16x16xf32>
    %1019 = arith.addf %1014, %1018 : vector<16x16xf32>
    %c197 = arith.constant 197 : index
    %1020 = memref.load %arg1[%c197] : memref<198xf32, #tpu.memory_space<smem>>
    %1021 = vector.broadcast %1020 : f32 to vector<16x16xf32>
    %1022 = arith.addf %1019, %1021 : vector<16x16xf32>
    %1023 = arith.negf %1022 : vector<16x16xf32>
    %1024 = math.exp %1023 : vector<16x16xf32>
    %cst_20 = arith.constant 1.000000e+00 : f32
    %1025 = vector.broadcast %cst_20 : f32 to vector<16x16xf32>
    %1026 = arith.addf %1025, %1024 : vector<16x16xf32>
    %1027 = arith.divf %1025, %1026 : vector<16x16xf32>
    %cst_21 = arith.constant 0.000000e+00 : f32
    %1028 = vector.broadcast %cst_21 : f32 to vector<16x112xf32>
    %1029 = tpu.concatenate %514, %1028 in 1 : vector<16x16xf32>, vector<16x112xf32> -> vector<16x128xf32>
    %cst_22 = arith.constant 0.000000e+00 : f32
    %1030 = vector.broadcast %cst_22 : f32 to vector<16x112xf32>
    %1031 = tpu.concatenate %1027, %1030 in 1 : vector<16x16xf32>, vector<16x112xf32> -> vector<16x128xf32>
    %1032 = vector.shape_cast %1029 : vector<16x128xf32> to vector<1x16x128xf32>
    %1033 = vector.shape_cast %1031 : vector<16x128xf32> to vector<16x1x128xf32>
    %1034 = vector.broadcast %1032 : vector<1x16x128xf32> to vector<16x16x128xf32>
    %1035 = vector.broadcast %1033 : vector<16x1x128xf32> to vector<16x16x128xf32>
    %1036 = arith.addf %1034, %1035 : vector<16x16x128xf32>
    %cst_23 = arith.constant 5.000000e-01 : f32
    %1037 = vector.broadcast %cst_23 : f32 to vector<16x16x128xf32>
    %1038 = arith.mulf %1037, %1036 : vector<16x16x128xf32>
    %1039 = arith.mulf %1, %1038 : vector<16x16x128xf32>
    %c0_24 = arith.constant 0 : index
    %c0_25 = arith.constant 0 : index
    %c0_26 = arith.constant 0 : index
    %c0_27 = arith.constant 0 : index
    %1040 = vector.load %arg3[%c0_24, %c0_25, %c0_26, %c0_27] : memref<1x16x16x128xf32, #tpu.memory_space<vmem>>, vector<1x16x16x128xf32>
    %1041 = vector.shape_cast %1040 : vector<1x16x16x128xf32> to vector<16x16x128xf32>
    %1042 = arith.addf %1039, %1041 : vector<16x16x128xf32>
    %cst_28 = arith.constant 0.000000e+00 : f32
    %1043 = vector.broadcast %cst_28 : f32 to vector<16x16x128xf32>
    %1044 = arith.maximumf %1042, %1043 : vector<16x16x128xf32>
    %c0_29 = arith.constant 0 : index
    %c0_30 = arith.constant 0 : index
    %c0_31 = arith.constant 0 : index
    %c0_32 = arith.constant 0 : index
    %1045 = vector.load %arg4[%c0_29, %c0_30, %c0_31, %c0_32] : memref<1x16x16x128xf32, #tpu.memory_space<vmem>>, vector<1x16x16x128xf32>
    %1046 = vector.shape_cast %1045 : vector<1x16x16x128xf32> to vector<16x16x128xf32>
    %1047 = vector.shape_cast %1044 : vector<16x16x128xf32> to vector<1x16x16x128xf32>
    tpu.vector_store %arg4[%c0_29, %c0_30, %c0_31, %c0_32], %1047 {strides = array<i32>} : memref<1x16x16x128xf32, #tpu.memory_space<vmem>>, vector<1x16x16x128xf32>,
    return
  }
  func.func @transform_0(%arg0: i32) -> i32 {
    %c0_i32 = arith.constant 0 : i32
    %c0_i32_0 = arith.constant 0 : i32
    return %c0_i32 : i32
  }
  func.func @transform_1(%arg0: i32) -> (i32, i32, i32, i32) {
    %c0_i32 = arith.constant 0 : i32
    %c0_i32_0 = arith.constant 0 : i32
    %c0_i32_1 = arith.constant 0 : i32
    %c0_i32_2 = arith.constant 0 : i32
    return %arg0, %c0_i32, %c0_i32_0, %c0_i32_1 : i32, i32, i32, i32
  }
  func.func @transform_2(%arg0: i32) -> (i32, i32, i32, i32) {
    %c0_i32 = arith.constant 0 : i32
    %c0_i32_0 = arith.constant 0 : i32
    %c0_i32_1 = arith.constant 0 : i32
    %c0_i32_2 = arith.constant 0 : i32
    return %arg0, %c0_i32, %c0_i32_0, %c0_i32_1 : i32, i32, i32, i32
  }
  func.func @transform_3(%arg0: i32) -> (i32, i32, i32, i32) {
    %c0_i32 = arith.constant 0 : i32
    %c0_i32_0 = arith.constant 0 : i32
    %c0_i32_1 = arith.constant 0 : i32
    %c0_i32_2 = arith.constant 0 : i32
    return %arg0, %c0_i32, %c0_i32_0, %c0_i32_1 : i32, i32, i32, i32
  }
}

</mosaic_0001>

<llo_original>
// kernel: bottleneck_forward.5
$region0: #{bottleneck_forward.5}
  #allocation0 [shape = 'u32[]', space=smem, size = 0x4, offset = 0x4, fixed_abs, tag = 'smem constant byte address 0x4 - core index']
  #allocation1 [shape = 'u32[144,128]{1,0:T(1,128)}', space=vmem, size = 0x12000, scoped, tag = 'internal scratch']
  %s0 = inlined_call_operand.vmem [shape: f32[512,128], index: 0, kind: input, shape index: {}]
  %s1 = inlined_call_operand.vmem [shape: f32[128,128], index: 1, kind: input, shape index: {}]
  %s2 = inlined_call_operand.vmem [shape: f32[1,128], index: 2, kind: input, shape index: {}]
  %s3 = inlined_call_operand.vmem [shape: f32[512,128], index: 3, kind: output, shape index: {}]
  %s4 = sld [smem:[#allocation0]]
  $region45: #{bottleneck_forward.5} parent=0
    _
  %s6 = ssub.s32 1, %s4
  %s7 = scalar_select 0, %s6, %s4
  loop: start=0, step=1, limit=6
  $region2: #{bottleneck_forward.5} parent=0 // loop_pre_header
    _
  $region3: #{bottleneck_forward.5} parent=0 // loop_header
    %s9 = sphi 0, %s13
    %p10 = scmp.ge.s32.totalorder %s9, 6
    %s19 = sphi 0, %s21
    %s22 = sphi 0, %s19
    %s23 = sphi 0, %s22
    %s39 = sphi 0, %s23
    %s43 = sphi 0, %s43
    %s45 = sphi 0, %s43
    %s46 = sphi 0, %s45
    %s60 = sphi 0, %s46
    %s64 = sphi 0, %s64
    %s66 = sphi 0, %s64
    %s67 = sphi 0, %s66
    %s81 = sphi 0, %s67
    %s87 = sphi 0, %s89
    %s90 = sphi 0, %s87
    %s91 = sphi 0, %s90
    %s107 = sphi 0, %s91
  $region4: #{bottleneck_forward.5} parent=0 // loop_header_branch
    %12 = sbr.rel (%p10) target = $region8
  $region5: #{bottleneck_forward.5} parent=0 // loop_body
    %s14 = ssub.s32 %s9, 1
    %s15 = ssub.s32 %s9, 2
    %s16 = sadd.s32 %s9, 1
    %s17 = ssub.s32 %s9, %s16
    %p18 = scmp.eq.s32.totalorder %s17, 0
    %s20 = sadd.s32 %s19, 1
    %s21 = scalar_select %p18, %s19, %s20
    %p24 = pneg %p18
    %p25 = scmp.eq.s32.totalorder %s9, 3
    %p26 = por %p24, %p25
    %p27 = scmp.ne.s32.totalorder %s19, %s22
    %p28 = scmp.eq.s32.totalorder %s9, 0
    %p29 = por %p27, %p28
    %p30 = scmp.ne.s32.totalorder %s19, %s22
    %p31 = scmp.eq.s32.totalorder %s14, 3
    %p32 = por %p30, %p31
    %p33 = scmp.ne.s32.totalorder %s22, %s23
    %p34 = scmp.eq.s32.totalorder %s14, 0
    %p35 = por %p33, %p34
    %p36 = scmp.ne.s32.totalorder %s22, %s23
    %p37 = scmp.eq.s32.totalorder %s15, 3
    %p38 = por %p36, %p37
    %p40 = scmp.ne.s32.totalorder %s23, %s39
    %p41 = scmp.eq.s32.totalorder %s15, 0
    %p42 = por %p40, %p41
    %s44 = sadd.s32 %s43, 1
    %p47 = scmp.eq.s32.totalorder %s9, 3
    %p48 = scmp.ne.s32.totalorder %s43, %s45
    %p49 = scmp.eq.s32.totalorder %s9, 0
    %p50 = por %p48, %p49
    %p51 = scmp.ne.s32.totalorder %s43, %s45
    %p52 = scmp.eq.s32.totalorder %s14, 3
    %p53 = por %p51, %p52
    %p54 = scmp.ne.s32.totalorder %s45, %s46
    %p55 = scmp.eq.s32.totalorder %s14, 0
    %p56 = por %p54, %p55
    %p57 = scmp.ne.s32.totalorder %s45, %s46
    %p58 = scmp.eq.s32.totalorder %s15, 3
    %p59 = por %p57, %p58
    %p61 = scmp.ne.s32.totalorder %s46, %s60
    %p62 = scmp.eq.s32.totalorder %s15, 0
    %p63 = por %p61, %p62
    %s65 = sadd.s32 %s64, 1
    %p68 = scmp.eq.s32.totalorder %s9, 3
    %p69 = scmp.ne.s32.totalorder %s64, %s66
    %p70 = scmp.eq.s32.totalorder %s9, 0
    %p71 = por %p69, %p70
    %p72 = scmp.ne.s32.totalorder %s64, %s66
    %p73 = scmp.eq.s32.totalorder %s14, 3
    %p74 = por %p72, %p73
    %p75 = scmp.ne.s32.totalorder %s66, %s67
    %p76 = scmp.eq.s32.totalorder %s14, 0
    %p77 = por %p75, %p76
    %p78 = scmp.ne.s32.totalorder %s66, %s67
    %p79 = scmp.eq.s32.totalorder %s15, 3
    %p80 = por %p78, %p79
    %p82 = scmp.ne.s32.totalorder %s67, %s81
    %p83 = scmp.eq.s32.totalorder %s15, 0
    %p84 = por %p82, %p83
    %s85 = ssub.s32 %s9, %s16
    %p86 = scmp.eq.s32.totalorder %s85, 0
    %s88 = sadd.s32 %s87, 1
    %s89 = scalar_select %p86, %s87, %s88
    %p92 = pneg %p86
    %p93 = scmp.eq.s32.totalorder %s9, 3
    %p94 = por %p92, %p93
    %p95 = scmp.ne.s32.totalorder %s87, %s90
    %p96 = scmp.eq.s32.totalorder %s9, 0
    %p97 = por %p95, %p96
    %p98 = scmp.ne.s32.totalorder %s87, %s90
    %p99 = scmp.eq.s32.totalorder %s14, 3
    %p100 = por %p98, %p99
    %p101 = scmp.ne.s32.totalorder %s90, %s91
    %p102 = scmp.eq.s32.totalorder %s14, 0
    %p103 = por %p101, %p102
    %p104 = scmp.ne.s32.totalorder %s90, %s91
    %p105 = scmp.eq.s32.totalorder %s15, 3
    %p106 = por %p104, %p105
    %p108 = scmp.ne.s32.totalorder %s91, %s107
    %p109 = scmp.eq.s32.totalorder %s15, 0
    %p110 = por %p108, %p109
    %p111 = scmp.le.s32.totalorder 1, %s9
    %p112 = scmp.lt.s32.totalorder %s9, 5
    %p113 = pnand %p111, %p112
    %p114 = pneg %p113
    // Predicated region
    $region9: #{bottleneck_forward.5} parent=5 // pred_check
      _
    $region10: #{bottleneck_forward.5} parent=5 // pred_check_branch
      %116 = sbr.rel (%p113) target = $region12
    $region11: #{bottleneck_forward.5} parent=5 // pred_region
      %s117 = ssub.s32 %s9, 1
      // Predicated region
      $region13: #{bottleneck_forward.5} parent=11 // pred_check
        %p118 = pneg %p56
      $region14: #{bottleneck_forward.5} parent=11 // pred_check_branch
        %120 = sbr.rel (%p118) target = $region16
      $region15: #{bottleneck_forward.5} parent=11 // pred_region
        _
      $region16: #{bottleneck_forward.5} parent=11 // pred_fallthru
        _
      // Predicated region
      $region17: #{bottleneck_forward.5} parent=11 // pred_check
        %p121 = pneg %p77
      $region18: #{bottleneck_forward.5} parent=11 // pred_check_branch
        %123 = sbr.rel (%p121) target = $region20
      $region19: #{bottleneck_forward.5} parent=11 // pred_region
        _
      $region20: #{bottleneck_forward.5} parent=11 // pred_fallthru
        _
    $region12: #{bottleneck_forward.5} parent=5 // pred_fallthru
      _
    %p124 = scmp.lt.s32.totalorder %s9, 4
    // Predicated region
    $region21: #{bottleneck_forward.5} parent=5 // pred_check
      %p125 = pneg %p124
    $region22: #{bottleneck_forward.5} parent=5 // pred_check_branch
      %127 = sbr.rel (%p125) target = $region24
    $region23: #{bottleneck_forward.5} parent=5 // pred_region
      // Predicated region
      $region25: #{bottleneck_forward.5} parent=23 // pred_check
        %p128 = pneg %p29
      $region26: #{bottleneck_forward.5} parent=23 // pred_check_branch
        %130 = sbr.rel (%p128) target = $region28
      $region27: #{bottleneck_forward.5} parent=23 // pred_region
        %s131 = smul.u32 16, %s9
        %p132 = scmp.lt.s32.totalorder %s131, 63
        %s133 = scalar_select %p132, %s131, 63
        %s134 = smul.addr %s133, 8
        %s135 = scalar_lea.vmem %s0, %s134
        %s136 = smul.u32 16, %s9
      $region28: #{bottleneck_forward.5} parent=23 // pred_fallthru
        _
    $region24: #{bottleneck_forward.5} parent=5 // pred_fallthru
      _
    %p137 = scmp.le.s32.totalorder 1, %s9
    %p138 = scmp.lt.s32.totalorder %s9, 5
    %p139 = pnand %p137, %p138
    %p140 = pneg %p139
    // Predicated region
    $region29: #{bottleneck_forward.5} parent=5 // pred_check
      _
    $region30: #{bottleneck_forward.5} parent=5 // pred_check_branch
      %142 = sbr.rel (%p139) target = $region32
    $region31: #{bottleneck_forward.5} parent=5 // pred_region
      %s143 = ssub.s32 %s9, 1
      %s144 = smul.u32 16, %s14
      %p145 = scmp.lt.s32.totalorder %s144, 63
      %s146 = scalar_select %p145, %s144, 63
      %s147 = smul.addr %s146, 8
      %s148 = scalar_lea.vmem %s0, %s147
      %p149 = pneg %p35
      %p150 = pneg %p32
      %p151 = pneg %p56
      %p152 = pneg %p53
      %p153 = pneg %p77
      %p154 = pneg %p74
      %p155 = pneg %p103
      %p156 = pneg %p100
      %s157 = smul.u32 16, %s14
      %p158 = scmp.lt.s32.totalorder %s157, 63
      %s159 = scalar_select %p158, %s157, 63
      %s160 = smul.addr %s159, 8
      %s161 = scalar_lea.vmem %s3, %s160
      %s162 = smul.u32 16, %s14
      %p163 = scmp.lt.s32.totalorder %s162, 63
      %s164 = scalar_select %p163, %s162, 63
      %s165 = smul.addr %s164, 8
      %s166 = scalar_lea.vmem %s0, %s165
      %s167 = smul.u32 16, %s14
      %s168 = smul.u32 16, %s14
      %p169 = scmp.lt.s32.totalorder %s168, 63
      %s170 = scalar_select %p169, %s168, 63
      %s171 = smul.addr %s170, 8
      %s172 = scalar_lea.vmem %s3, %s171
      %s173 = smul.u32 16, %s14
      %v174 = vld [vmem:[%s166] sm:$0xff]
      %v175 = vld [vmem:[%s166 + $0x8] sm:$0xff]
      %v176 = vld [vmem:[%s166 + $0x10] sm:$0xff]
      %v177 = vld [vmem:[%s166 + $0x18] sm:$0xff]
      %v178 = vld [vmem:[%s166 + $0x20] sm:$0xff]
      %v179 = vld [vmem:[%s166 + $0x28] sm:$0xff]
      %v180 = vld [vmem:[%s166 + $0x30] sm:$0xff]
      %v181 = vld [vmem:[%s166 + $0x38] sm:$0xff]
      %v182 = vld [vmem:[%s166 + $0x40] sm:$0xff]
      %v183 = vld [vmem:[%s166 + $0x48] sm:$0xff]
      %v184 = vld [vmem:[%s166 + $0x50] sm:$0xff]
      %v185 = vld [vmem:[%s166 + $0x58] sm:$0xff]
      %v186 = vld [vmem:[%s166 + $0x60] sm:$0xff]
      %v187 = vld [vmem:[%s166 + $0x68] sm:$0xff]
      %v188 = vld [vmem:[%s166 + $0x70] sm:$0xff]
      %v189 = vld [vmem:[%s166 + $0x78] sm:$0xff]
      %v190 = vld [vmem:[%s1] sm:$0xff]
      %v191 = vld [vmem:[%s1 + $0x8] sm:$0xff]
      %v192 = vld [vmem:[%s1 + $0x10] sm:$0xff]
      %v193 = vld [vmem:[%s1 + $0x18] sm:$0xff]
      %v194 = vld [vmem:[%s1 + $0x20] sm:$0xff]
      %v195 = vld [vmem:[%s1 + $0x28] sm:$0xff]
      %v196 = vld [vmem:[%s1 + $0x30] sm:$0xff]
      %v197 = vld [vmem:[%s1 + $0x38] sm:$0xff]
      %v198 = vld [vmem:[%s1 + $0x40] sm:$0xff]
      %v199 = vld [vmem:[%s1 + $0x48] sm:$0xff]
      %v200 = vld [vmem:[%s1 + $0x50] sm:$0xff]
      %v201 = vld [vmem:[%s1 + $0x58] sm:$0xff]
      %v202 = vld [vmem:[%s1 + $0x60] sm:$0xff]
      %v203 = vld [vmem:[%s1 + $0x68] sm:$0xff]
      %v204 = vld [vmem:[%s1 + $0x70] sm:$0xff]
      %v205 = vld [vmem:[%s1 + $0x78] sm:$0xff]
      %v206 = vld [vmem:[%s2] sm:$0x1]
      %v208 = vlaneseq
      %v209 = vshrl.u32 %v208, 7
      %v210 = vsub.s32 0, %v209
      %v211 = vrot.slane %v206, %v210
      %213 = vmatprep.subr.mxu0 0.0
      %214 = vmatpush1.msra.mxu0 %v205
      %215 = vmatprep.subr.mxu0 0.0
      %216 = vmatpush1.msra.mxu0 %v204
      %217 = vmatprep.subr.mxu0 0.0
      %218 = vmatpush1.msra.mxu0 %v203
      %219 = vmatprep.subr.mxu0 0.0
      %220 = vmatpush1.msra.mxu0 %v202
      %221 = vmatprep.subr.mxu0 0.0
      %222 = vmatpush1.msra.mxu0 %v201
      %223 = vmatprep.subr.mxu0 0.0
      %224 = vmatpush1.msra.mxu0 %v200
      %225 = vmatprep.subr.mxu0 0.0
      %226 = vmatpush1.msra.mxu0 %v199
      %227 = vmatprep.subr.mxu0 0.0
      %228 = vmatpush1.msra.mxu0 %v198
      %229 = vmatprep.subr.mxu0 0.0
      %230 = vmatpush1.msra.mxu0 %v197
      %231 = vmatprep.subr.mxu0 0.0
      %232 = vmatpush1.msra.mxu0 %v196
      %233 = vmatprep.subr.mxu0 0.0
      %234 = vmatpush1.msra.mxu0 %v195
      %235 = vmatprep.subr.mxu0 0.0
      %236 = vmatpush1.msra.mxu0 %v194
      %237 = vmatprep.subr.mxu0 0.0
      %238 = vmatpush1.msra.mxu0 %v193
      %239 = vmatprep.subr.mxu0 0.0
      %240 = vmatpush1.msra.mxu0 %v192
      %241 = vmatprep.subr.mxu0 0.0
      %242 = vmatpush1.msra.mxu0 %v191
      %243 = vmatprep.subr.mxu0 0.0
      %244 = vmatpush1.msra.mxu0 %v190
      %245 = vmatprep.subr.mxu0 0.0
      %246 = vmatpush2.msra.mxu0 0.0
      %247 = vmatprep.subr.mxu0 0.0
      %248 = vmatpush2.msra.mxu0 0.0
      %249 = vmatprep.subr.mxu0 0.0
      %250 = vmatpush2.msra.mxu0 0.0
      %251 = vmatprep.subr.mxu0 0.0
      %252 = vmatpush2.msra.mxu0 0.0
      %253 = vmatprep.subr.mxu0 0.0
      %254 = vmatpush2.msra.mxu0 0.0
      %255 = vmatprep.subr.mxu0 0.0
      %256 = vmatpush2.msra.mxu0 0.0
      %257 = vmatprep.subr.mxu0 0.0
      %258 = vmatpush2.msra.mxu0 0.0
      %259 = vmatprep.subr.mxu0 0.0
      %260 = vmatpush2.msra.mxu0 0.0
      %261 = vmatprep.subr.mxu0 0.0
      %262 = vmatpush2.msra.mxu0 0.0
      %263 = vmatprep.subr.mxu0 0.0
      %264 = vmatpush2.msra.mxu0 0.0
      %265 = vmatprep.subr.mxu0 0.0
      %266 = vmatpush2.msra.mxu0 0.0
      %267 = vmatprep.subr.mxu0 0.0
      %268 = vmatpush2.msra.mxu0 0.0
      %269 = vmatprep.subr.mxu0 0.0
      %270 = vmatpush2.msra.mxu0 0.0
      %271 = vmatprep.subr.mxu0 0.0
      %272 = vmatpush2.msra.mxu0 0.0
      %273 = vmatprep.subr.mxu0 0.0
      %274 = vmatpush2.msra.mxu0 0.0
      %275 = vmatprep.subr.mxu0 0.0
      %276 = vmatpush2.msra.mxu0 0.0
      %277 = vmatprep.mubr.f32.mxu0 0.0
      %278 = vmatmul.mubr.f32.gmra.mxu0 %v174
      %v279 = vpop.f32.mrf.mxu0
      %v280 = vadd.f32 %v211, %v279
      %v281 = vpop.f32.mrf.mxu0
      %282 = vmatprep.mubr.f32.mxu0 0.0
      %283 = vmatmul.mubr.f32.gmra.mxu0 %v175
      %v284 = vpop.f32.mrf.mxu0
      %v285 = vadd.f32 %v211, %v284
      %v286 = vpop.f32.mrf.mxu0
      %287 = vmatprep.mubr.f32.mxu0 0.0
      %288 = vmatmul.mubr.f32.gmra.mxu0 %v176
      %v289 = vpop.f32.mrf.mxu0
      %v290 = vadd.f32 %v211, %v289
      %v291 = vpop.f32.mrf.mxu0
      %292 = vmatprep.mubr.f32.mxu0 0.0
      %293 = vmatmul.mubr.f32.gmra.mxu0 %v177
      %v294 = vpop.f32.mrf.mxu0
      %v295 = vadd.f32 %v211, %v294
      %v296 = vpop.f32.mrf.mxu0
      %297 = vmatprep.mubr.f32.mxu0 0.0
      %298 = vmatmul.mubr.f32.gmra.mxu0 %v178
      %v299 = vpop.f32.mrf.mxu0
      %v300 = vadd.f32 %v211, %v299
      %v301 = vpop.f32.mrf.mxu0
      %302 = vmatprep.mubr.f32.mxu0 0.0
      %303 = vmatmul.mubr.f32.gmra.mxu0 %v179
      %v304 = vpop.f32.mrf.mxu0
      %v305 = vadd.f32 %v211, %v304
      %v306 = vpop.f32.mrf.mxu0
      %307 = vmatprep.mubr.f32.mxu0 0.0
      %308 = vmatmul.mubr.f32.gmra.mxu0 %v180
      %v309 = vpop.f32.mrf.mxu0
      %v310 = vadd.f32 %v211, %v309
      %v311 = vpop.f32.mrf.mxu0
      %312 = vmatprep.mubr.f32.mxu0 0.0
      %313 = vmatmul.mubr.f32.gmra.mxu0 %v181
      %v314 = vpop.f32.mrf.mxu0
      %v315 = vadd.f32 %v211, %v314
      %v316 = vpop.f32.mrf.mxu0
      %317 = vmatprep.mubr.f32.mxu0 0.0
      %318 = vmatmul.mubr.f32.gmra.mxu0 %v182
      %v319 = vpop.f32.mrf.mxu0
      %v320 = vadd.f32 %v211, %v319
      %v321 = vpop.f32.mrf.mxu0
      %322 = vmatprep.mubr.f32.mxu0 0.0
      %323 = vmatmul.mubr.f32.gmra.mxu0 %v183
      %v324 = vpop.f32.mrf.mxu0
      %v325 = vadd.f32 %v211, %v324
      %v326 = vpop.f32.mrf.mxu0
      %327 = vmatprep.mubr.f32.mxu0 0.0
      %328 = vmatmul.mubr.f32.gmra.mxu0 %v184
      %v329 = vpop.f32.mrf.mxu0
      %v330 = vadd.f32 %v211, %v329
      %v331 = vpop.f32.mrf.mxu0
      %332 = vmatprep.mubr.f32.mxu0 0.0
      %333 = vmatmul.mubr.f32.gmra.mxu0 %v185
      %v334 = vpop.f32.mrf.mxu0
      %v335 = vadd.f32 %v211, %v334
      %v336 = vpop.f32.mrf.mxu0
      %337 = vmatprep.mubr.f32.mxu0 0.0
      %338 = vmatmul.mubr.f32.gmra.mxu0 %v186
      %v339 = vpop.f32.mrf.mxu0
      %v340 = vadd.f32 %v211, %v339
      %v341 = vpop.f32.mrf.mxu0
      %342 = vmatprep.mubr.f32.mxu0 0.0
      %343 = vmatmul.mubr.f32.gmra.mxu0 %v187
      %v344 = vpop.f32.mrf.mxu0
      %v345 = vadd.f32 %v211, %v344
      %v346 = vpop.f32.mrf.mxu0
      %347 = vmatprep.mubr.f32.mxu0 0.0
      %348 = vmatmul.mubr.f32.gmra.mxu0 %v188
      %v349 = vpop.f32.mrf.mxu0
      %v350 = vadd.f32 %v211, %v349
      %v351 = vpop.f32.mrf.mxu0
      %352 = vmatprep.mubr.f32.mxu0 0.0
      %353 = vmatmul.mubr.f32.gmra.mxu0 %v189
      %v354 = vpop.f32.mrf.mxu0
      %v355 = vadd.f32 %v211, %v354
      %v356 = vpop.f32.mrf.mxu0
      %357 = vdwg.mxu0
      %v358 = vmax.f32 %v280, 0.0
      %v359 = vmax.f32 %v285, 0.0
      %v360 = vmax.f32 %v290, 0.0
      %v361 = vmax.f32 %v295, 0.0
      %v362 = vmax.f32 %v300, 0.0
      %v363 = vmax.f32 %v305, 0.0
      %v364 = vmax.f32 %v310, 0.0
      %v365 = vmax.f32 %v315, 0.0
      %v366 = vmax.f32 %v320, 0.0
      %v367 = vmax.f32 %v325, 0.0
      %v368 = vmax.f32 %v330, 0.0
      %v369 = vmax.f32 %v335, 0.0
      %v370 = vmax.f32 %v340, 0.0
      %v371 = vmax.f32 %v345, 0.0
      %v372 = vmax.f32 %v350, 0.0
      %v373 = vmax.f32 %v355, 0.0
      %374 = vst [vmem:[%s172] sm:$0xff] %v358
      %375 = vst [vmem:[%s172 + $0x8] sm:$0xff] %v359
      %376 = vst [vmem:[%s172 + $0x10] sm:$0xff] %v360
      %377 = vst [vmem:[%s172 + $0x18] sm:$0xff] %v361
      %378 = vst [vmem:[%s172 + $0x20] sm:$0xff] %v362
      %379 = vst [vmem:[%s172 + $0x28] sm:$0xff] %v363
      %380 = vst [vmem:[%s172 + $0x30] sm:$0xff] %v364
      %381 = vst [vmem:[%s172 + $0x38] sm:$0xff] %v365
      %382 = vst [vmem:[%s172 + $0x40] sm:$0xff] %v366
      %383 = vst [vmem:[%s172 + $0x48] sm:$0xff] %v367
      %384 = vst [vmem:[%s172 + $0x50] sm:$0xff] %v368
      %385 = vst [vmem:[%s172 + $0x58] sm:$0xff] %v369
      %386 = vst [vmem:[%s172 + $0x60] sm:$0xff] %v370
      %387 = vst [vmem:[%s172 + $0x68] sm:$0xff] %v371
      %388 = vst [vmem:[%s172 + $0x70] sm:$0xff] %v372
      %389 = vst [vmem:[%s172 + $0x78] sm:$0xff] %v373
      %s390 = smul.u32 16, %s14
      %p391 = scmp.lt.s32.totalorder %s390, 63
      %s392 = scalar_select %p391, %s390, 63
      %s393 = smul.addr %s392, 8
      %s394 = scalar_lea.vmem %s3, %s393
      // Predicated region
      $region33: #{bottleneck_forward.5} parent=31 // pred_check
        %p395 = pneg %p100
      $region34: #{bottleneck_forward.5} parent=31 // pred_check_branch
        %397 = sbr.rel (%p395) target = $region36
      $region35: #{bottleneck_forward.5} parent=31 // pred_region
        %s398 = smul.u32 16, %s14
      $region36: #{bottleneck_forward.5} parent=31 // pred_fallthru
        _
    $region32: #{bottleneck_forward.5} parent=5 // pred_fallthru
      _
    %p399 = scmp.le.s32.totalorder 2, %s9
    // Predicated region
    $region37: #{bottleneck_forward.5} parent=5 // pred_check
      %p400 = pneg %p399
    $region38: #{bottleneck_forward.5} parent=5 // pred_check_branch
      %402 = sbr.rel (%p400) target = $region40
    $region39: #{bottleneck_forward.5} parent=5 // pred_region
      %s403 = ssub.s32 %s9, 2
      // Predicated region
      $region41: #{bottleneck_forward.5} parent=39 // pred_check
        %p404 = pneg %p106
      $region42: #{bottleneck_forward.5} parent=39 // pred_check_branch
        %406 = sbr.rel (%p404) target = $region44
      $region43: #{bottleneck_forward.5} parent=39 // pred_region
        %s407 = smul.u32 16, %s15
        %p408 = scmp.lt.s32.totalorder %s407, 63
        %s409 = scalar_select %p408, %s407, 63
        %s410 = smul.addr %s409, 8
        %s411 = scalar_lea.vmem %s3, %s410
      $region44: #{bottleneck_forward.5} parent=39 // pred_fallthru
        _
    $region40: #{bottleneck_forward.5} parent=5 // pred_fallthru
      _
  $region6: #{bottleneck_forward.5} parent=0 // loop_footer
    %s13 = sadd.s32 1, %s9
  $region7: #{bottleneck_forward.5} parent=0 // loop_footer_branch
    %8 = sbr.rel target = $region3
  $region8: #{bottleneck_forward.5} parent=0 // loop_exit
    _

// kernel: bottleneck_forward.7
$region0: #{bottleneck_forward.7}
  #allocation0 [shape = 'u32[]', space=smem, size = 0x4, offset = 0x4, fixed_abs, tag = 'smem constant byte address 0x4 - core index']
  #allocation1 [shape = 'u32[144,128]{1,0:T(1,128)}', space=vmem, size = 0x12000, scoped, tag = 'internal scratch']
  %s0 = inlined_call_operand.vmem [shape: f32[512,128], index: 0, kind: input, shape index: {}]
  %s1 = inlined_call_operand.vmem [shape: f32[128,128], index: 1, kind: input, shape index: {}]
  %s2 = inlined_call_operand.vmem [shape: f32[1,128], index: 2, kind: input, shape index: {}]
  %s3 = inlined_call_operand.vmem [shape: f32[512,128], index: 3, kind: output, shape index: {}]
  %s4 = sld [smem:[#allocation0]]
  $region45: #{bottleneck_forward.7} parent=0
    _
  %s6 = ssub.s32 1, %s4
  %s7 = scalar_select 0, %s6, %s4
  loop: start=0, step=1, limit=6
  $region2: #{bottleneck_forward.7} parent=0 // loop_pre_header
    _
  $region3: #{bottleneck_forward.7} parent=0 // loop_header
    %s9 = sphi 0, %s13
    %p10 = scmp.ge.s32.totalorder %s9, 6
    %s19 = sphi 0, %s21
    %s22 = sphi 0, %s19
    %s23 = sphi 0, %s22
    %s39 = sphi 0, %s23
    %s43 = sphi 0, %s43
    %s45 = sphi 0, %s43
    %s46 = sphi 0, %s45
    %s60 = sphi 0, %s46
    %s64 = sphi 0, %s64
    %s66 = sphi 0, %s64
    %s67 = sphi 0, %s66
    %s81 = sphi 0, %s67
    %s87 = sphi 0, %s89
    %s90 = sphi 0, %s87
    %s91 = sphi 0, %s90
    %s107 = sphi 0, %s91
  $region4: #{bottleneck_forward.7} parent=0 // loop_header_branch
    %12 = sbr.rel (%p10) target = $region8
  $region5: #{bottleneck_forward.7} parent=0 // loop_body
    %s14 = ssub.s32 %s9, 1
    %s15 = ssub.s32 %s9, 2
    %s16 = sadd.s32 %s9, 1
    %s17 = ssub.s32 %s9, %s16
    %p18 = scmp.eq.s32.totalorder %s17, 0
    %s20 = sadd.s32 %s19, 1
    %s21 = scalar_select %p18, %s19, %s20
    %p24 = pneg %p18
    %p25 = scmp.eq.s32.totalorder %s9, 3
    %p26 = por %p24, %p25
    %p27 = scmp.ne.s32.totalorder %s19, %s22
    %p28 = scmp.eq.s32.totalorder %s9, 0
    %p29 = por %p27, %p28
    %p30 = scmp.ne.s32.totalorder %s19, %s22
    %p31 = scmp.eq.s32.totalorder %s14, 3
    %p32 = por %p30, %p31
    %p33 = scmp.ne.s32.totalorder %s22, %s23
    %p34 = scmp.eq.s32.totalorder %s14, 0
    %p35 = por %p33, %p34
    %p36 = scmp.ne.s32.totalorder %s22, %s23
    %p37 = scmp.eq.s32.totalorder %s15, 3
    %p38 = por %p36, %p37
    %p40 = scmp.ne.s32.totalorder %s23, %s39
    %p41 = scmp.eq.s32.totalorder %s15, 0
    %p42 = por %p40, %p41
    %s44 = sadd.s32 %s43, 1
    %p47 = scmp.eq.s32.totalorder %s9, 3
    %p48 = scmp.ne.s32.totalorder %s43, %s45
    %p49 = scmp.eq.s32.totalorder %s9, 0
    %p50 = por %p48, %p49
    %p51 = scmp.ne.s32.totalorder %s43, %s45
    %p52 = scmp.eq.s32.totalorder %s14, 3
    %p53 = por %p51, %p52
    %p54 = scmp.ne.s32.totalorder %s45, %s46
    %p55 = scmp.eq.s32.totalorder %s14, 0
    %p56 = por %p54, %p55
    %p57 = scmp.ne.s32.totalorder %s45, %s46
    %p58 = scmp.eq.s32.totalorder %s15, 3
    %p59 = por %p57, %p58
    %p61 = scmp.ne.s32.totalorder %s46, %s60
    %p62 = scmp.eq.s32.totalorder %s15, 0
    %p63 = por %p61, %p62
    %s65 = sadd.s32 %s64, 1
    %p68 = scmp.eq.s32.totalorder %s9, 3
    %p69 = scmp.ne.s32.totalorder %s64, %s66
    %p70 = scmp.eq.s32.totalorder %s9, 0
    %p71 = por %p69, %p70
    %p72 = scmp.ne.s32.totalorder %s64, %s66
    %p73 = scmp.eq.s32.totalorder %s14, 3
    %p74 = por %p72, %p73
    %p75 = scmp.ne.s32.totalorder %s66, %s67
    %p76 = scmp.eq.s32.totalorder %s14, 0
    %p77 = por %p75, %p76
    %p78 = scmp.ne.s32.totalorder %s66, %s67
    %p79 = scmp.eq.s32.totalorder %s15, 3
    %p80 = por %p78, %p79
    %p82 = scmp.ne.s32.totalorder %s67, %s81
    %p83 = scmp.eq.s32.totalorder %s15, 0
    %p84 = por %p82, %p83
    %s85 = ssub.s32 %s9, %s16
    %p86 = scmp.eq.s32.totalorder %s85, 0
    %s88 = sadd.s32 %s87, 1
    %s89 = scalar_select %p86, %s87, %s88
    %p92 = pneg %p86
    %p93 = scmp.eq.s32.totalorder %s9, 3
    %p94 = por %p92, %p93
    %p95 = scmp.ne.s32.totalorder %s87, %s90
    %p96 = scmp.eq.s32.totalorder %s9, 0
    %p97 = por %p95, %p96
    %p98 = scmp.ne.s32.totalorder %s87, %s90
    %p99 = scmp.eq.s32.totalorder %s14, 3
    %p100 = por %p98, %p99
    %p101 = scmp.ne.s32.totalorder %s90, %s91
    %p102 = scmp.eq.s32.totalorder %s14, 0
    %p103 = por %p101, %p102
    %p104 = scmp.ne.s32.totalorder %s90, %s91
    %p105 = scmp.eq.s32.totalorder %s15, 3
    %p106 = por %p104, %p105
    %p108 = scmp.ne.s32.totalorder %s91, %s107
    %p109 = scmp.eq.s32.totalorder %s15, 0
    %p110 = por %p108, %p109
    %p111 = scmp.le.s32.totalorder 1, %s9
    %p112 = scmp.lt.s32.totalorder %s9, 5
    %p113 = pnand %p111, %p112
    %p114 = pneg %p113
    // Predicated region
    $region9: #{bottleneck_forward.7} parent=5 // pred_check
      _
    $region10: #{bottleneck_forward.7} parent=5 // pred_check_branch
      %116 = sbr.rel (%p113) target = $region12
    $region11: #{bottleneck_forward.7} parent=5 // pred_region
      %s117 = ssub.s32 %s9, 1
      // Predicated region
      $region13: #{bottleneck_forward.7} parent=11 // pred_check
        %p118 = pneg %p56
      $region14: #{bottleneck_forward.7} parent=11 // pred_check_branch
        %120 = sbr.rel (%p118) target = $region16
      $region15: #{bottleneck_forward.7} parent=11 // pred_region
        _
      $region16: #{bottleneck_forward.7} parent=11 // pred_fallthru
        _
      // Predicated region
      $region17: #{bottleneck_forward.7} parent=11 // pred_check
        %p121 = pneg %p77
      $region18: #{bottleneck_forward.7} parent=11 // pred_check_branch
        %123 = sbr.rel (%p121) target = $region20
      $region19: #{bottleneck_forward.7} parent=11 // pred_region
        _
      $region20: #{bottleneck_forward.7} parent=11 // pred_fallthru
        _
    $region12: #{bottleneck_forward.7} parent=5 // pred_fallthru
      _
    %p124 = scmp.lt.s32.totalorder %s9, 4
    // Predicated region
    $region21: #{bottleneck_forward.7} parent=5 // pred_check
      %p125 = pneg %p124
    $region22: #{bottleneck_forward.7} parent=5 // pred_check_branch
      %127 = sbr.rel (%p125) target = $region24
    $region23: #{bottleneck_forward.7} parent=5 // pred_region
      // Predicated region
      $region25: #{bottleneck_forward.7} parent=23 // pred_check
        %p128 = pneg %p29
      $region26: #{bottleneck_forward.7} parent=23 // pred_check_branch
        %130 = sbr.rel (%p128) target = $region28
      $region27: #{bottleneck_forward.7} parent=23 // pred_region
        %s131 = smul.u32 16, %s9
        %p132 = scmp.lt.s32.totalorder %s131, 63
        %s133 = scalar_select %p132, %s131, 63
        %s134 = smul.addr %s133, 8
        %s135 = scalar_lea.vmem %s0, %s134
        %s136 = smul.u32 16, %s9
      $region28: #{bottleneck_forward.7} parent=23 // pred_fallthru
        _
    $region24: #{bottleneck_forward.7} parent=5 // pred_fallthru
      _
    %p137 = scmp.le.s32.totalorder 1, %s9
    %p138 = scmp.lt.s32.totalorder %s9, 5
    %p139 = pnand %p137, %p138
    %p140 = pneg %p139
    // Predicated region
    $region29: #{bottleneck_forward.7} parent=5 // pred_check
      _
    $region30: #{bottleneck_forward.7} parent=5 // pred_check_branch
      %142 = sbr.rel (%p139) target = $region32
    $region31: #{bottleneck_forward.7} parent=5 // pred_region
      %s143 = ssub.s32 %s9, 1
      %s144 = smul.u32 16, %s14
      %p145 = scmp.lt.s32.totalorder %s144, 63
      %s146 = scalar_select %p145, %s144, 63
      %s147 = smul.addr %s146, 8
      %s148 = scalar_lea.vmem %s0, %s147
      %p149 = pneg %p35
      %p150 = pneg %p32
      %p151 = pneg %p56
      %p152 = pneg %p53
      %p153 = pneg %p77
      %p154 = pneg %p74
      %p155 = pneg %p103
      %p156 = pneg %p100
      %s157 = smul.u32 16, %s14
      %p158 = scmp.lt.s32.totalorder %s157, 63
      %s159 = scalar_select %p158, %s157, 63
      %s160 = smul.addr %s159, 8
      %s161 = scalar_lea.vmem %s3, %s160
      %s162 = smul.u32 16, %s14
      %p163 = scmp.lt.s32.totalorder %s162, 63
      %s164 = scalar_select %p163, %s162, 63
      %s165 = smul.addr %s164, 8
      %s166 = scalar_lea.vmem %s0, %s165
      %s167 = smul.u32 16, %s14
      %s168 = smul.u32 16, %s14
      %p169 = scmp.lt.s32.totalorder %s168, 63
      %s170 = scalar_select %p169, %s168, 63
      %s171 = smul.addr %s170, 8
      %s172 = scalar_lea.vmem %s3, %s171
      %s173 = smul.u32 16, %s14
      %v174 = vld [vmem:[%s166] sm:$0xff]
      %v175 = vld [vmem:[%s166 + $0x8] sm:$0xff]
      %v176 = vld [vmem:[%s166 + $0x10] sm:$0xff]
      %v177 = vld [vmem:[%s166 + $0x18] sm:$0xff]
      %v178 = vld [vmem:[%s166 + $0x20] sm:$0xff]
      %v179 = vld [vmem:[%s166 + $0x28] sm:$0xff]
      %v180 = vld [vmem:[%s166 + $0x30] sm:$0xff]
      %v181 = vld [vmem:[%s166 + $0x38] sm:$0xff]
      %v182 = vld [vmem:[%s166 + $0x40] sm:$0xff]
      %v183 = vld [vmem:[%s166 + $0x48] sm:$0xff]
      %v184 = vld [vmem:[%s166 + $0x50] sm:$0xff]
      %v185 = vld [vmem:[%s166 + $0x58] sm:$0xff]
      %v186 = vld [vmem:[%s166 + $0x60] sm:$0xff]
      %v187 = vld [vmem:[%s166 + $0x68] sm:$0xff]
      %v188 = vld [vmem:[%s166 + $0x70] sm:$0xff]
      %v189 = vld [vmem:[%s166 + $0x78] sm:$0xff]
      %v190 = vld [vmem:[%s1] sm:$0xff]
      %v191 = vld [vmem:[%s1 + $0x8] sm:$0xff]
      %v192 = vld [vmem:[%s1 + $0x10] sm:$0xff]
      %v193 = vld [vmem:[%s1 + $0x18] sm:$0xff]
      %v194 = vld [vmem:[%s1 + $0x20] sm:$0xff]
      %v195 = vld [vmem:[%s1 + $0x28] sm:$0xff]
      %v196 = vld [vmem:[%s1 + $0x30] sm:$0xff]
      %v197 = vld [vmem:[%s1 + $0x38] sm:$0xff]
      %v198 = vld [vmem:[%s1 + $0x40] sm:$0xff]
      %v199 = vld [vmem:[%s1 + $0x48] sm:$0xff]
      %v200 = vld [vmem:[%s1 + $0x50] sm:$0xff]
      %v201 = vld [vmem:[%s1 + $0x58] sm:$0xff]
      %v202 = vld [vmem:[%s1 + $0x60] sm:$0xff]
      %v203 = vld [vmem:[%s1 + $0x68] sm:$0xff]
      %v204 = vld [vmem:[%s1 + $0x70] sm:$0xff]
      %v205 = vld [vmem:[%s1 + $0x78] sm:$0xff]
      %v206 = vld [vmem:[%s2] sm:$0x1]
      %v208 = vlaneseq
      %v209 = vshrl.u32 %v208, 7
      %v210 = vsub.s32 0, %v209
      %v211 = vrot.slane %v206, %v210
      %213 = vmatprep.subr.mxu0 0.0
      %214 = vmatpush1.msra.mxu0 %v205
      %215 = vmatprep.subr.mxu0 0.0
      %216 = vmatpush1.msra.mxu0 %v204
      %217 = vmatprep.subr.mxu0 0.0
      %218 = vmatpush1.msra.mxu0 %v203
      %219 = vmatprep.subr.mxu0 0.0
      %220 = vmatpush1.msra.mxu0 %v202
      %221 = vmatprep.subr.mxu0 0.0
      %222 = vmatpush1.msra.mxu0 %v201
      %223 = vmatprep.subr.mxu0 0.0
      %224 = vmatpush1.msra.mxu0 %v200
      %225 = vmatprep.subr.mxu0 0.0
      %226 = vmatpush1.msra.mxu0 %v199
      %227 = vmatprep.subr.mxu0 0.0
      %228 = vmatpush1.msra.mxu0 %v198
      %229 = vmatprep.subr.mxu0 0.0
      %230 = vmatpush1.msra.mxu0 %v197
      %231 = vmatprep.subr.mxu0 0.0
      %232 = vmatpush1.msra.mxu0 %v196
      %233 = vmatprep.subr.mxu0 0.0
      %234 = vmatpush1.msra.mxu0 %v195
      %235 = vmatprep.subr.mxu0 0.0
      %236 = vmatpush1.msra.mxu0 %v194
      %237 = vmatprep.subr.mxu0 0.0
      %238 = vmatpush1.msra.mxu0 %v193
      %239 = vmatprep.subr.mxu0 0.0
      %240 = vmatpush1.msra.mxu0 %v192
      %241 = vmatprep.subr.mxu0 0.0
      %242 = vmatpush1.msra.mxu0 %v191
      %243 = vmatprep.subr.mxu0 0.0
      %244 = vmatpush1.msra.mxu0 %v190
      %245 = vmatprep.subr.mxu0 0.0
      %246 = vmatpush2.msra.mxu0 0.0
      %247 = vmatprep.subr.mxu0 0.0
      %248 = vmatpush2.msra.mxu0 0.0
      %249 = vmatprep.subr.mxu0 0.0
      %250 = vmatpush2.msra.mxu0 0.0
      %251 = vmatprep.subr.mxu0 0.0
      %252 = vmatpush2.msra.mxu0 0.0
      %253 = vmatprep.subr.mxu0 0.0
      %254 = vmatpush2.msra.mxu0 0.0
      %255 = vmatprep.subr.mxu0 0.0
      %256 = vmatpush2.msra.mxu0 0.0
      %257 = vmatprep.subr.mxu0 0.0
      %258 = vmatpush2.msra.mxu0 0.0
      %259 = vmatprep.subr.mxu0 0.0
      %260 = vmatpush2.msra.mxu0 0.0
      %261 = vmatprep.subr.mxu0 0.0
      %262 = vmatpush2.msra.mxu0 0.0
      %263 = vmatprep.subr.mxu0 0.0
      %264 = vmatpush2.msra.mxu0 0.0
      %265 = vmatprep.subr.mxu0 0.0
      %266 = vmatpush2.msra.mxu0 0.0
      %267 = vmatprep.subr.mxu0 0.0
      %268 = vmatpush2.msra.mxu0 0.0
      %269 = vmatprep.subr.mxu0 0.0
      %270 = vmatpush2.msra.mxu0 0.0
      %271 = vmatprep.subr.mxu0 0.0
      %272 = vmatpush2.msra.mxu0 0.0
      %273 = vmatprep.subr.mxu0 0.0
      %274 = vmatpush2.msra.mxu0 0.0
      %275 = vmatprep.subr.mxu0 0.0
      %276 = vmatpush2.msra.mxu0 0.0
      %277 = vmatprep.mubr.f32.mxu0 0.0
      %278 = vmatmul.mubr.f32.gmra.mxu0 %v174
      %v279 = vpop.f32.mrf.mxu0
      %v280 = vadd.f32 %v211, %v279
      %v281 = vpop.f32.mrf.mxu0
      %282 = vmatprep.mubr.f32.mxu0 0.0
      %283 = vmatmul.mubr.f32.gmra.mxu0 %v175
      %v284 = vpop.f32.mrf.mxu0
      %v285 = vadd.f32 %v211, %v284
      %v286 = vpop.f32.mrf.mxu0
      %287 = vmatprep.mubr.f32.mxu0 0.0
      %288 = vmatmul.mubr.f32.gmra.mxu0 %v176
      %v289 = vpop.f32.mrf.mxu0
      %v290 = vadd.f32 %v211, %v289
      %v291 = vpop.f32.mrf.mxu0
      %292 = vmatprep.mubr.f32.mxu0 0.0
      %293 = vmatmul.mubr.f32.gmra.mxu0 %v177
      %v294 = vpop.f32.mrf.mxu0
      %v295 = vadd.f32 %v211, %v294
      %v296 = vpop.f32.mrf.mxu0
      %297 = vmatprep.mubr.f32.mxu0 0.0
      %298 = vmatmul.mubr.f32.gmra.mxu0 %v178
      %v299 = vpop.f32.mrf.mxu0
      %v300 = vadd.f32 %v211, %v299
      %v301 = vpop.f32.mrf.mxu0
      %302 = vmatprep.mubr.f32.mxu0 0.0
      %303 = vmatmul.mubr.f32.gmra.mxu0 %v179
      %v304 = vpop.f32.mrf.mxu0
      %v305 = vadd.f32 %v211, %v304
      %v306 = vpop.f32.mrf.mxu0
      %307 = vmatprep.mubr.f32.mxu0 0.0
      %308 = vmatmul.mubr.f32.gmra.mxu0 %v180
      %v309 = vpop.f32.mrf.mxu0
      %v310 = vadd.f32 %v211, %v309
      %v311 = vpop.f32.mrf.mxu0
      %312 = vmatprep.mubr.f32.mxu0 0.0
      %313 = vmatmul.mubr.f32.gmra.mxu0 %v181
      %v314 = vpop.f32.mrf.mxu0
      %v315 = vadd.f32 %v211, %v314
      %v316 = vpop.f32.mrf.mxu0
      %317 = vmatprep.mubr.f32.mxu0 0.0
      %318 = vmatmul.mubr.f32.gmra.mxu0 %v182
      %v319 = vpop.f32.mrf.mxu0
      %v320 = vadd.f32 %v211, %v319
      %v321 = vpop.f32.mrf.mxu0
      %322 = vmatprep.mubr.f32.mxu0 0.0
      %323 = vmatmul.mubr.f32.gmra.mxu0 %v183
      %v324 = vpop.f32.mrf.mxu0
      %v325 = vadd.f32 %v211, %v324
      %v326 = vpop.f32.mrf.mxu0
      %327 = vmatprep.mubr.f32.mxu0 0.0
      %328 = vmatmul.mubr.f32.gmra.mxu0 %v184
      %v329 = vpop.f32.mrf.mxu0
      %v330 = vadd.f32 %v211, %v329
      %v331 = vpop.f32.mrf.mxu0
      %332 = vmatprep.mubr.f32.mxu0 0.0
      %333 = vmatmul.mubr.f32.gmra.mxu0 %v185
      %v334 = vpop.f32.mrf.mxu0
      %v335 = vadd.f32 %v211, %v334
      %v336 = vpop.f32.mrf.mxu0
      %337 = vmatprep.mubr.f32.mxu0 0.0
      %338 = vmatmul.mubr.f32.gmra.mxu0 %v186
      %v339 = vpop.f32.mrf.mxu0
      %v340 = vadd.f32 %v211, %v339
      %v341 = vpop.f32.mrf.mxu0
      %342 = vmatprep.mubr.f32.mxu0 0.0
      %343 = vmatmul.mubr.f32.gmra.mxu0 %v187
      %v344 = vpop.f32.mrf.mxu0
      %v345 = vadd.f32 %v211, %v344
      %v346 = vpop.f32.mrf.mxu0
      %347 = vmatprep.mubr.f32.mxu0 0.0
      %348 = vmatmul.mubr.f32.gmra.mxu0 %v188
      %v349 = vpop.f32.mrf.mxu0
      %v350 = vadd.f32 %v211, %v349
      %v351 = vpop.f32.mrf.mxu0
      %352 = vmatprep.mubr.f32.mxu0 0.0
      %353 = vmatmul.mubr.f32.gmra.mxu0 %v189
      %v354 = vpop.f32.mrf.mxu0
      %v355 = vadd.f32 %v211, %v354
      %v356 = vpop.f32.mrf.mxu0
      %357 = vdwg.mxu0
      %358 = vst [vmem:[%s172] sm:$0xff] %v280
      %359 = vst [vmem:[%s172 + $0x8] sm:$0xff] %v285
      %360 = vst [vmem:[%s172 + $0x10] sm:$0xff] %v290
      %361 = vst [vmem:[%s172 + $0x18] sm:$0xff] %v295
      %362 = vst [vmem:[%s172 + $0x20] sm:$0xff] %v300
      %363 = vst [vmem:[%s172 + $0x28] sm:$0xff] %v305
      %364 = vst [vmem:[%s172 + $0x30] sm:$0xff] %v310
      %365 = vst [vmem:[%s172 + $0x38] sm:$0xff] %v315
      %366 = vst [vmem:[%s172 + $0x40] sm:$0xff] %v320
      %367 = vst [vmem:[%s172 + $0x48] sm:$0xff] %v325
      %368 = vst [vmem:[%s172 + $0x50] sm:$0xff] %v330
      %369 = vst [vmem:[%s172 + $0x58] sm:$0xff] %v335
      %370 = vst [vmem:[%s172 + $0x60] sm:$0xff] %v340
      %371 = vst [vmem:[%s172 + $0x68] sm:$0xff] %v345
      %372 = vst [vmem:[%s172 + $0x70] sm:$0xff] %v350
      %373 = vst [vmem:[%s172 + $0x78] sm:$0xff] %v355
      %s374 = smul.u32 16, %s14
      %p375 = scmp.lt.s32.totalorder %s374, 63
      %s376 = scalar_select %p375, %s374, 63
      %s377 = smul.addr %s376, 8
      %s378 = scalar_lea.vmem %s3, %s377
      // Predicated region
      $region33: #{bottleneck_forward.7} parent=31 // pred_check
        %p379 = pneg %p100
      $region34: #{bottleneck_forward.7} parent=31 // pred_check_branch
        %381 = sbr.rel (%p379) target = $region36
      $region35: #{bottleneck_forward.7} parent=31 // pred_region
        %s382 = smul.u32 16, %s14
      $region36: #{bottleneck_forward.7} parent=31 // pred_fallthru
        _
    $region32: #{bottleneck_forward.7} parent=5 // pred_fallthru
      _
    %p383 = scmp.le.s32.totalorder 2, %s9
    // Predicated region
    $region37: #{bottleneck_forward.7} parent=5 // pred_check
      %p384 = pneg %p383
    $region38: #{bottleneck_forward.7} parent=5 // pred_check_branch
      %386 = sbr.rel (%p384) target = $region40
    $region39: #{bottleneck_forward.7} parent=5 // pred_region
      %s387 = ssub.s32 %s9, 2
      // Predicated region
      $region41: #{bottleneck_forward.7} parent=39 // pred_check
        %p388 = pneg %p106
      $region42: #{bottleneck_forward.7} parent=39 // pred_check_branch
        %390 = sbr.rel (%p388) target = $region44
      $region43: #{bottleneck_forward.7} parent=39 // pred_region
        %s391 = smul.u32 16, %s15
        %p392 = scmp.lt.s32.totalorder %s391, 63
        %s393 = scalar_select %p392, %s391, 63
        %s394 = smul.addr %s393, 8
        %s395 = scalar_lea.vmem %s3, %s394
      $region44: #{bottleneck_forward.7} parent=39 // pred_fallthru
        _
    $region40: #{bottleneck_forward.7} parent=5 // pred_fallthru
      _
  $region6: #{bottleneck_forward.7} parent=0 // loop_footer
    %s13 = sadd.s32 1, %s9
  $region7: #{bottleneck_forward.7} parent=0 // loop_footer_branch
    %8 = sbr.rel target = $region3
  $region8: #{bottleneck_forward.7} parent=0 // loop_exit
    _

// kernel: bottleneck_forward.6
$region0: #{bottleneck_forward.6}
  #allocation0 [shape = 'u32[]', space=smem, size = 0x4, offset = 0x4, fixed_abs, tag = 'smem constant byte address 0x4 - core index']
  #allocation1 [shape = 'u32[144,128]{1,0:T(1,128)}', space=vmem, size = 0x12000, scoped, tag = 'internal scratch']
  %s0 = inlined_call_operand.vmem [shape: f32[2,18,18,128], index: 0, kind: input, shape index: {}]
  %s1 = inlined_call_operand.vmem [shape: f32[3,384,128], index: 1, kind: input, shape index: {}]
  %s2 = inlined_call_operand.vmem [shape: f32[1,128], index: 2, kind: input, shape index: {}]
  %s3 = inlined_call_operand.vmem [shape: f32[2,16,16,128], index: 3, kind: output, shape index: {}]
  %s4 = sld [smem:[#allocation0]]
  $region45: #{bottleneck_forward.6} parent=0
    _
  %s6 = ssub.s32 1, %s4
  %s7 = scalar_select 0, %s6, %s4
  loop: start=0, step=1, limit=6
  $region2: #{bottleneck_forward.6} parent=0 // loop_pre_header
    _
  $region3: #{bottleneck_forward.6} parent=0 // loop_header
    %s9 = sphi 0, %s13
    %p10 = scmp.ge.s32.totalorder %s9, 6
    %s16 = sphi 0, %s28
    %s17 = sphi 0, %s24
    %s18 = sphi 0, %s16
    %s19 = sphi 0, %s17
    %s20 = sphi 0, %s18
    %s21 = sphi 0, %s19
    %s31 = sphi 0, %s33
    %s34 = sphi 0, %s31
    %s35 = sphi 0, %s34
    %s51 = sphi 0, %s35
    %s55 = sphi 0, %s55
    %s57 = sphi 0, %s55
    %s58 = sphi 0, %s57
    %s72 = sphi 0, %s58
    %s76 = sphi 0, %s76
    %s78 = sphi 0, %s76
    %s79 = sphi 0, %s78
    %s93 = sphi 0, %s79
    %s101 = sphi 0, %s103
    %s104 = sphi 0, %s101
    %s105 = sphi 0, %s104
    %s121 = sphi 0, %s105
  $region4: #{bottleneck_forward.6} parent=0 // loop_header_branch
    %12 = sbr.rel (%p10) target = $region8
  $region5: #{bottleneck_forward.6} parent=0 // loop_body
    %s14 = ssub.s32 %s9, 1
    %s15 = ssub.s32 %s9, 2
    %s22 = sadd.s32 1, %s17
    %p23 = scmp.ge.s32.totalorder %s22, 2
    %s24 = scalar_select %p23, 0, %s22
    %s25 = sadd.s32 1, %s16
    %s26 = scalar_select %p23, %s25, %s16
    %p27 = scmp.ge.s32.totalorder %s26, 2
    %s28 = scalar_select %p27, 0, %s26
    %s29 = ssub.s32 %s16, %s28
    %p30 = scmp.eq.s32.totalorder %s29, 0
    %s32 = sadd.s32 %s31, 1
    %s33 = scalar_select %p30, %s31, %s32
    %p36 = pneg %p30
    %p37 = scmp.eq.s32.totalorder %s9, 3
    %p38 = por %p36, %p37
    %p39 = scmp.ne.s32.totalorder %s31, %s34
    %p40 = scmp.eq.s32.totalorder %s9, 0
    %p41 = por %p39, %p40
    %p42 = scmp.ne.s32.totalorder %s31, %s34
    %p43 = scmp.eq.s32.totalorder %s14, 3
    %p44 = por %p42, %p43
    %p45 = scmp.ne.s32.totalorder %s34, %s35
    %p46 = scmp.eq.s32.totalorder %s14, 0
    %p47 = por %p45, %p46
    %p48 = scmp.ne.s32.totalorder %s34, %s35
    %p49 = scmp.eq.s32.totalorder %s15, 3
    %p50 = por %p48, %p49
    %p52 = scmp.ne.s32.totalorder %s35, %s51
    %p53 = scmp.eq.s32.totalorder %s15, 0
    %p54 = por %p52, %p53
    %s56 = sadd.s32 %s55, 1
    %p59 = scmp.eq.s32.totalorder %s9, 3
    %p60 = scmp.ne.s32.totalorder %s55, %s57
    %p61 = scmp.eq.s32.totalorder %s9, 0
    %p62 = por %p60, %p61
    %p63 = scmp.ne.s32.totalorder %s55, %s57
    %p64 = scmp.eq.s32.totalorder %s14, 3
    %p65 = por %p63, %p64
    %p66 = scmp.ne.s32.totalorder %s57, %s58
    %p67 = scmp.eq.s32.totalorder %s14, 0
    %p68 = por %p66, %p67
    %p69 = scmp.ne.s32.totalorder %s57, %s58
    %p70 = scmp.eq.s32.totalorder %s15, 3
    %p71 = por %p69, %p70
    %p73 = scmp.ne.s32.totalorder %s58, %s72
    %p74 = scmp.eq.s32.totalorder %s15, 0
    %p75 = por %p73, %p74
    %s77 = sadd.s32 %s76, 1
    %p80 = scmp.eq.s32.totalorder %s9, 3
    %p81 = scmp.ne.s32.totalorder %s76, %s78
    %p82 = scmp.eq.s32.totalorder %s9, 0
    %p83 = por %p81, %p82
    %p84 = scmp.ne.s32.totalorder %s76, %s78
    %p85 = scmp.eq.s32.totalorder %s14, 3
    %p86 = por %p84, %p85
    %p87 = scmp.ne.s32.totalorder %s78, %s79
    %p88 = scmp.eq.s32.totalorder %s14, 0
    %p89 = por %p87, %p88
    %p90 = scmp.ne.s32.totalorder %s78, %s79
    %p91 = scmp.eq.s32.totalorder %s15, 3
    %p92 = por %p90, %p91
    %p94 = scmp.ne.s32.totalorder %s79, %s93
    %p95 = scmp.eq.s32.totalorder %s15, 0
    %p96 = por %p94, %p95
    %s97 = ssub.s32 %s16, %s28
    %s98 = ssub.s32 %s17, %s24
    %s99 = sor.u32 %s97, %s98
    %p100 = scmp.eq.s32.totalorder %s99, 0
    %s102 = sadd.s32 %s101, 1
    %s103 = scalar_select %p100, %s101, %s102
    %p106 = pneg %p100
    %p107 = scmp.eq.s32.totalorder %s9, 3
    %p108 = por %p106, %p107
    %p109 = scmp.ne.s32.totalorder %s101, %s104
    %p110 = scmp.eq.s32.totalorder %s9, 0
    %p111 = por %p109, %p110
    %p112 = scmp.ne.s32.totalorder %s101, %s104
    %p113 = scmp.eq.s32.totalorder %s14, 3
    %p114 = por %p112, %p113
    %p115 = scmp.ne.s32.totalorder %s104, %s105
    %p116 = scmp.eq.s32.totalorder %s14, 0
    %p117 = por %p115, %p116
    %p118 = scmp.ne.s32.totalorder %s104, %s105
    %p119 = scmp.eq.s32.totalorder %s15, 3
    %p120 = por %p118, %p119
    %p122 = scmp.ne.s32.totalorder %s105, %s121
    %p123 = scmp.eq.s32.totalorder %s15, 0
    %p124 = por %p122, %p123
    %p125 = scmp.le.s32.totalorder 1, %s9
    %p126 = scmp.lt.s32.totalorder %s9, 5
    %p127 = pnand %p125, %p126
    %p128 = pneg %p127
    // Predicated region
    $region9: #{bottleneck_forward.6} parent=5 // pred_check
      _
    $region10: #{bottleneck_forward.6} parent=5 // pred_check_branch
      %130 = sbr.rel (%p127) target = $region12
    $region11: #{bottleneck_forward.6} parent=5 // pred_region
      %s131 = ssub.s32 %s9, 1
      // Predicated region
      $region13: #{bottleneck_forward.6} parent=11 // pred_check
        %p132 = pneg %p68
      $region14: #{bottleneck_forward.6} parent=11 // pred_check_branch
        %134 = sbr.rel (%p132) target = $region16
      $region15: #{bottleneck_forward.6} parent=11 // pred_region
        _
      $region16: #{bottleneck_forward.6} parent=11 // pred_fallthru
        _
      // Predicated region
      $region17: #{bottleneck_forward.6} parent=11 // pred_check
        %p135 = pneg %p89
      $region18: #{bottleneck_forward.6} parent=11 // pred_check_branch
        %137 = sbr.rel (%p135) target = $region20
      $region19: #{bottleneck_forward.6} parent=11 // pred_region
        _
      $region20: #{bottleneck_forward.6} parent=11 // pred_fallthru
        _
    $region12: #{bottleneck_forward.6} parent=5 // pred_fallthru
      _
    %p138 = scmp.lt.s32.totalorder %s9, 4
    // Predicated region
    $region21: #{bottleneck_forward.6} parent=5 // pred_check
      %p139 = pneg %p138
    $region22: #{bottleneck_forward.6} parent=5 // pred_check_branch
      %141 = sbr.rel (%p139) target = $region24
    $region23: #{bottleneck_forward.6} parent=5 // pred_region
      // Predicated region
      $region25: #{bottleneck_forward.6} parent=23 // pred_check
        %p142 = pneg %p41
      $region26: #{bottleneck_forward.6} parent=23 // pred_check_branch
        %144 = sbr.rel (%p142) target = $region28
      $region27: #{bottleneck_forward.6} parent=23 // pred_region
        %p145 = scmp.lt.s32.totalorder %s16, 1
        %s146 = scalar_select %p145, %s16, 1
        %s147 = smul.addr %s146, 54
        %s148 = smul.addr %s147, 8
        %s149 = scalar_lea.vmem %s0, %s148
      $region28: #{bottleneck_forward.6} parent=23 // pred_fallthru
        _
    $region24: #{bottleneck_forward.6} parent=5 // pred_fallthru
      _
    %p150 = scmp.le.s32.totalorder 1, %s9
    %p151 = scmp.lt.s32.totalorder %s9, 5
    %p152 = pnand %p150, %p151
    %p153 = pneg %p152
    // Predicated region
    $region29: #{bottleneck_forward.6} parent=5 // pred_check
      _
    $region30: #{bottleneck_forward.6} parent=5 // pred_check_branch
      %155 = sbr.rel (%p152) target = $region32
    $region31: #{bottleneck_forward.6} parent=5 // pred_region
      %s156 = ssub.s32 %s9, 1
      %p157 = scmp.lt.s32.totalorder %s18, 1
      %s158 = scalar_select %p157, %s18, 1
      %s159 = smul.addr %s158, 54
      %s160 = smul.addr %s159, 8
      %s161 = scalar_lea.vmem %s0, %s160
      %p162 = pneg %p47
      %p163 = pneg %p44
      %p164 = pneg %p68
      %p165 = pneg %p65
      %p166 = pneg %p89
      %p167 = pneg %p86
      %p168 = pneg %p117
      %p169 = pneg %p114
      %s170 = smul.u32 8, %s19
      %p171 = scmp.lt.s32.totalorder %s18, 1
      %s172 = scalar_select %p171, %s18, 1
      %p173 = scmp.lt.s32.totalorder %s170, 15
      %s174 = scalar_select %p173, %s170, 15
      %s175 = smul.addr %s174, 2
      %s176 = smul.addr %s172, 32
      %s177 = sadd.s32 %s175, %s176
      %s178 = smul.addr %s177, 8
      %s179 = scalar_lea.vmem %s3, %s178
      %p180 = scmp.lt.s32.totalorder %s18, 1
      %s181 = scalar_select %p180, %s18, 1
      %s182 = smul.addr %s181, 54
      %s183 = smul.addr %s182, 8
      %s184 = scalar_lea.vmem %s0, %s183
      %s185 = smul.u32 8, %s19
      %p186 = scmp.lt.s32.totalorder %s18, 1
      %s187 = scalar_select %p186, %s18, 1
      %p188 = scmp.lt.s32.totalorder %s185, 15
      %s189 = scalar_select %p188, %s185, 15
      %s190 = smul.addr %s189, 2
      %s191 = smul.addr %s187, 32
      %s192 = sadd.s32 %s190, %s191
      %s193 = smul.addr %s192, 8
      %s194 = scalar_lea.vmem %s3, %s193
      %s195 = smul.u32 8, %s19
      %s196 = smul.u32 %s19, 8
      %s197 = smul.u32 %s196, 24
      %s198 = scalar_lea.vmem %s184, %s197
      %v199 = vld [vmem:[%s198] sm:$0xff]
      %v200 = vld [vmem:[%s198 + $0x8] sm:$0xff]
      %v201 = vld [vmem:[%s198 + $0x10] sm:$0x3]
      %v202 = vld [vmem:[%s198 + $0x18] sm:$0xff]
      %v203 = vld [vmem:[%s198 + $0x20] sm:$0xff]
      %v204 = vld [vmem:[%s198 + $0x28] sm:$0x3]
      %v205 = vld [vmem:[%s198 + $0x30] sm:$0xff]
      %v206 = vld [vmem:[%s198 + $0x38] sm:$0xff]
      %v207 = vld [vmem:[%s198 + $0x40] sm:$0x3]
      %v208 = vld [vmem:[%s198 + $0x48] sm:$0xff]
      %v209 = vld [vmem:[%s198 + $0x50] sm:$0xff]
      %v210 = vld [vmem:[%s198 + $0x58] sm:$0x3]
      %v211 = vld [vmem:[%s198 + $0x60] sm:$0xff]
      %v212 = vld [vmem:[%s198 + $0x68] sm:$0xff]
      %v213 = vld [vmem:[%s198 + $0x70] sm:$0x3]
      %v214 = vld [vmem:[%s198 + $0x78] sm:$0xff]
      %v215 = vld [vmem:[%s198 + $0x80] sm:$0xff]
      %v216 = vld [vmem:[%s198 + $0x88] sm:$0x3]
      %v217 = vld [vmem:[%s198 + $0x90] sm:$0xff]
      %v218 = vld [vmem:[%s198 + $0x98] sm:$0xff]
      %v219 = vld [vmem:[%s198 + $0xa0] sm:$0x3]
      %v220 = vld [vmem:[%s198 + $0xa8] sm:$0xff]
      %v221 = vld [vmem:[%s198 + $0xb0] sm:$0xff]
      %v222 = vld [vmem:[%s198 + $0xb8] sm:$0x3]
      %vm247 = vcmask 1046528
      %v248 = vrot.slane %v199, 1
      %v249 = vrot.slane %v200, 1
      %v250 = vsel %vm247, %v248, %v249
      %v251 = vrot.slane %v201, 1
      %v252 = vsel %vm247, %v249, %v251
      %v253 = vrot.slane %v202, 1
      %v254 = vrot.slane %v203, 1
      %v255 = vsel %vm247, %v253, %v254
      %v256 = vrot.slane %v204, 1
      %v257 = vsel %vm247, %v254, %v256
      %v258 = vrot.slane %v205, 1
      %v259 = vrot.slane %v206, 1
      %v260 = vsel %vm247, %v258, %v259
      %v261 = vrot.slane %v207, 1
      %v262 = vsel %vm247, %v259, %v261
      %v263 = vrot.slane %v208, 1
      %v264 = vrot.slane %v209, 1
      %v265 = vsel %vm247, %v263, %v264
      %v266 = vrot.slane %v210, 1
      %v267 = vsel %vm247, %v264, %v266
      %v268 = vrot.slane %v211, 1
      %v269 = vrot.slane %v212, 1
      %v270 = vsel %vm247, %v268, %v269
      %v271 = vrot.slane %v213, 1
      %v272 = vsel %vm247, %v269, %v271
      %v273 = vrot.slane %v214, 1
      %v274 = vrot.slane %v215, 1
      %v275 = vsel %vm247, %v273, %v274
      %v276 = vrot.slane %v216, 1
      %v277 = vsel %vm247, %v274, %v276
      %v278 = vrot.slane %v217, 1
      %v279 = vrot.slane %v218, 1
      %v280 = vsel %vm247, %v278, %v279
      %v281 = vrot.slane %v219, 1
      %v282 = vsel %vm247, %v279, %v281
      %v283 = vrot.slane %v220, 1
      %v284 = vrot.slane %v221, 1
      %v285 = vsel %vm247, %v283, %v284
      %v286 = vrot.slane %v222, 1
      %v287 = vsel %vm247, %v284, %v286
      %vm304 = vcmask 1045504
      %v305 = vrot.slane %v199, 2
      %v306 = vrot.slane %v200, 2
      %v307 = vsel %vm304, %v305, %v306
      %v308 = vrot.slane %v201, 2
      %v309 = vsel %vm304, %v306, %v308
      %v310 = vrot.slane %v202, 2
      %v311 = vrot.slane %v203, 2
      %v312 = vsel %vm304, %v310, %v311
      %v313 = vrot.slane %v204, 2
      %v314 = vsel %vm304, %v311, %v313
      %v315 = vrot.slane %v205, 2
      %v316 = vrot.slane %v206, 2
      %v317 = vsel %vm304, %v315, %v316
      %v318 = vrot.slane %v207, 2
      %v319 = vsel %vm304, %v316, %v318
      %v320 = vrot.slane %v208, 2
      %v321 = vrot.slane %v209, 2
      %v322 = vsel %vm304, %v320, %v321
      %v323 = vrot.slane %v210, 2
      %v324 = vsel %vm304, %v321, %v323
      %v325 = vrot.slane %v211, 2
      %v326 = vrot.slane %v212, 2
      %v327 = vsel %vm304, %v325, %v326
      %v328 = vrot.slane %v213, 2
      %v329 = vsel %vm304, %v326, %v328
      %v330 = vrot.slane %v214, 2
      %v331 = vrot.slane %v215, 2
      %v332 = vsel %vm304, %v330, %v331
      %v333 = vrot.slane %v216, 2
      %v334 = vsel %vm304, %v331, %v333
      %v335 = vrot.slane %v217, 2
      %v336 = vrot.slane %v218, 2
      %v337 = vsel %vm304, %v335, %v336
      %v338 = vrot.slane %v219, 2
      %v339 = vsel %vm304, %v336, %v338
      %v340 = vrot.slane %v220, 2
      %v341 = vrot.slane %v221, 2
      %v342 = vsel %vm304, %v340, %v341
      %v343 = vrot.slane %v222, 2
      %v344 = vsel %vm304, %v341, %v343
      %v361 = vld [vmem:[%s1] sm:$0xff]
      %v362 = vld [vmem:[%s1 + $0x8] sm:$0xff]
      %v363 = vld [vmem:[%s1 + $0x10] sm:$0xff]
      %v364 = vld [vmem:[%s1 + $0x18] sm:$0xff]
      %v365 = vld [vmem:[%s1 + $0x20] sm:$0xff]
      %v366 = vld [vmem:[%s1 + $0x28] sm:$0xff]
      %v367 = vld [vmem:[%s1 + $0x30] sm:$0xff]
      %v368 = vld [vmem:[%s1 + $0x38] sm:$0xff]
      %v369 = vld [vmem:[%s1 + $0x40] sm:$0xff]
      %v370 = vld [vmem:[%s1 + $0x48] sm:$0xff]
      %v371 = vld [vmem:[%s1 + $0x50] sm:$0xff]
      %v372 = vld [vmem:[%s1 + $0x58] sm:$0xff]
      %v373 = vld [vmem:[%s1 + $0x60] sm:$0xff]
      %v374 = vld [vmem:[%s1 + $0x68] sm:$0xff]
      %v375 = vld [vmem:[%s1 + $0x70] sm:$0xff]
      %v376 = vld [vmem:[%s1 + $0x78] sm:$0xff]
      %v377 = vld [vmem:[%s1 + $0x80] sm:$0xff]
      %v378 = vld [vmem:[%s1 + $0x88] sm:$0xff]
      %v379 = vld [vmem:[%s1 + $0x90] sm:$0xff]
      %v380 = vld [vmem:[%s1 + $0x98] sm:$0xff]
      %v381 = vld [vmem:[%s1 + $0xa0] sm:$0xff]
      %v382 = vld [vmem:[%s1 + $0xa8] sm:$0xff]
      %v383 = vld [vmem:[%s1 + $0xb0] sm:$0xff]
      %v384 = vld [vmem:[%s1 + $0xb8] sm:$0xff]
      %v385 = vld [vmem:[%s1 + $0xc0] sm:$0xff]
      %v386 = vld [vmem:[%s1 + $0xc8] sm:$0xff]
      %v387 = vld [vmem:[%s1 + $0xd0] sm:$0xff]
      %v388 = vld [vmem:[%s1 + $0xd8] sm:$0xff]
      %v389 = vld [vmem:[%s1 + $0xe0] sm:$0xff]
      %v390 = vld [vmem:[%s1 + $0xe8] sm:$0xff]
      %v391 = vld [vmem:[%s1 + $0xf0] sm:$0xff]
      %v392 = vld [vmem:[%s1 + $0xf8] sm:$0xff]
      %v393 = vld [vmem:[%s1 + $0x100] sm:$0xff]
      %v394 = vld [vmem:[%s1 + $0x108] sm:$0xff]
      %v395 = vld [vmem:[%s1 + $0x110] sm:$0xff]
      %v396 = vld [vmem:[%s1 + $0x118] sm:$0xff]
      %v397 = vld [vmem:[%s1 + $0x120] sm:$0xff]
      %v398 = vld [vmem:[%s1 + $0x128] sm:$0xff]
      %v399 = vld [vmem:[%s1 + $0x130] sm:$0xff]
      %v400 = vld [vmem:[%s1 + $0x138] sm:$0xff]
      %v401 = vld [vmem:[%s1 + $0x140] sm:$0xff]
      %v402 = vld [vmem:[%s1 + $0x148] sm:$0xff]
      %v403 = vld [vmem:[%s1 + $0x150] sm:$0xff]
      %v404 = vld [vmem:[%s1 + $0x158] sm:$0xff]
      %v405 = vld [vmem:[%s1 + $0x160] sm:$0xff]
      %v406 = vld [vmem:[%s1 + $0x168] sm:$0xff]
      %v407 = vld [vmem:[%s1 + $0x170] sm:$0xff]
      %v408 = vld [vmem:[%s1 + $0x178] sm:$0xff]
      %s409 = sadd.s32 %s196, 1
      %s410 = smul.u32 %s409, 24
      %s411 = scalar_lea.vmem %s184, %s410
      %v412 = vld [vmem:[%s411] sm:$0xff]
      %v413 = vld [vmem:[%s411 + $0x8] sm:$0xff]
      %v414 = vld [vmem:[%s411 + $0x10] sm:$0x3]
      %v415 = vld [vmem:[%s411 + $0x18] sm:$0xff]
      %v416 = vld [vmem:[%s411 + $0x20] sm:$0xff]
      %v417 = vld [vmem:[%s411 + $0x28] sm:$0x3]
      %v418 = vld [vmem:[%s411 + $0x30] sm:$0xff]
      %v419 = vld [vmem:[%s411 + $0x38] sm:$0xff]
      %v420 = vld [vmem:[%s411 + $0x40] sm:$0x3]
      %v421 = vld [vmem:[%s411 + $0x48] sm:$0xff]
      %v422 = vld [vmem:[%s411 + $0x50] sm:$0xff]
      %v423 = vld [vmem:[%s411 + $0x58] sm:$0x3]
      %v424 = vld [vmem:[%s411 + $0x60] sm:$0xff]
      %v425 = vld [vmem:[%s411 + $0x68] sm:$0xff]
      %v426 = vld [vmem:[%s411 + $0x70] sm:$0x3]
      %v427 = vld [vmem:[%s411 + $0x78] sm:$0xff]
      %v428 = vld [vmem:[%s411 + $0x80] sm:$0xff]
      %v429 = vld [vmem:[%s411 + $0x88] sm:$0x3]
      %v430 = vld [vmem:[%s411 + $0x90] sm:$0xff]
      %v431 = vld [vmem:[%s411 + $0x98] sm:$0xff]
      %v432 = vld [vmem:[%s411 + $0xa0] sm:$0x3]
      %v433 = vld [vmem:[%s411 + $0xa8] sm:$0xff]
      %v434 = vld [vmem:[%s411 + $0xb0] sm:$0xff]
      %v435 = vld [vmem:[%s411 + $0xb8] sm:$0x3]
      %v460 = vrot.slane %v412, 1
      %v461 = vrot.slane %v413, 1
      %v462 = vsel %vm247, %v460, %v461
      %v463 = vrot.slane %v414, 1
      %v464 = vsel %vm247, %v461, %v463
      %v465 = vrot.slane %v415, 1
      %v466 = vrot.slane %v416, 1
      %v467 = vsel %vm247, %v465, %v466
      %v468 = vrot.slane %v417, 1
      %v469 = vsel %vm247, %v466, %v468
      %v470 = vrot.slane %v418, 1
      %v471 = vrot.slane %v419, 1
      %v472 = vsel %vm247, %v470, %v471
      %v473 = vrot.slane %v420, 1
      %v474 = vsel %vm247, %v471, %v473
      %v475 = vrot.slane %v421, 1
      %v476 = vrot.slane %v422, 1
      %v477 = vsel %vm247, %v475, %v476
      %v478 = vrot.slane %v423, 1
      %v479 = vsel %vm247, %v476, %v478
      %v480 = vrot.slane %v424, 1
      %v481 = vrot.slane %v425, 1
      %v482 = vsel %vm247, %v480, %v481
      %v483 = vrot.slane %v426, 1
      %v484 = vsel %vm247, %v481, %v483
      %v485 = vrot.slane %v427, 1
      %v486 = vrot.slane %v428, 1
      %v487 = vsel %vm247, %v485, %v486
      %v488 = vrot.slane %v429, 1
      %v489 = vsel %vm247, %v486, %v488
      %v490 = vrot.slane %v430, 1
      %v491 = vrot.slane %v431, 1
      %v492 = vsel %vm247, %v490, %v491
      %v493 = vrot.slane %v432, 1
      %v494 = vsel %vm247, %v491, %v493
      %v495 = vrot.slane %v433, 1
      %v496 = vrot.slane %v434, 1
      %v497 = vsel %vm247, %v495, %v496
      %v498 = vrot.slane %v435, 1
      %v499 = vsel %vm247, %v496, %v498
      %v516 = vrot.slane %v412, 2
      %v517 = vrot.slane %v413, 2
      %v518 = vsel %vm304, %v516, %v517
      %v519 = vrot.slane %v414, 2
      %v520 = vsel %vm304, %v517, %v519
      %v521 = vrot.slane %v415, 2
      %v522 = vrot.slane %v416, 2
      %v523 = vsel %vm304, %v521, %v522
      %v524 = vrot.slane %v417, 2
      %v525 = vsel %vm304, %v522, %v524
      %v526 = vrot.slane %v418, 2
      %v527 = vrot.slane %v419, 2
      %v528 = vsel %vm304, %v526, %v527
      %v529 = vrot.slane %v420, 2
      %v530 = vsel %vm304, %v527, %v529
      %v531 = vrot.slane %v421, 2
      %v532 = vrot.slane %v422, 2
      %v533 = vsel %vm304, %v531, %v532
      %v534 = vrot.slane %v423, 2
      %v535 = vsel %vm304, %v532, %v534
      %v536 = vrot.slane %v424, 2
      %v537 = vrot.slane %v425, 2
      %v538 = vsel %vm304, %v536, %v537
      %v539 = vrot.slane %v426, 2
      %v540 = vsel %vm304, %v537, %v539
      %v541 = vrot.slane %v427, 2
      %v542 = vrot.slane %v428, 2
      %v543 = vsel %vm304, %v541, %v542
      %v544 = vrot.slane %v429, 2
      %v545 = vsel %vm304, %v542, %v544
      %v546 = vrot.slane %v430, 2
      %v547 = vrot.slane %v431, 2
      %v548 = vsel %vm304, %v546, %v547
      %v549 = vrot.slane %v432, 2
      %v550 = vsel %vm304, %v547, %v549
      %v551 = vrot.slane %v433, 2
      %v552 = vrot.slane %v434, 2
      %v553 = vsel %vm304, %v551, %v552
      %v554 = vrot.slane %v435, 2
      %v555 = vsel %vm304, %v552, %v554
      %s572 = scalar_lea.vmem %s1, 384
      %v573 = vld [vmem:[%s572] sm:$0xff]
      %v574 = vld [vmem:[%s572 + $0x8] sm:$0xff]
      %v575 = vld [vmem:[%s572 + $0x10] sm:$0xff]
      %v576 = vld [vmem:[%s572 + $0x18] sm:$0xff]
      %v577 = vld [vmem:[%s572 + $0x20] sm:$0xff]
      %v578 = vld [vmem:[%s572 + $0x28] sm:$0xff]
      %v579 = vld [vmem:[%s572 + $0x30] sm:$0xff]
      %v580 = vld [vmem:[%s572 + $0x38] sm:$0xff]
      %v581 = vld [vmem:[%s572 + $0x40] sm:$0xff]
      %v582 = vld [vmem:[%s572 + $0x48] sm:$0xff]
      %v583 = vld [vmem:[%s572 + $0x50] sm:$0xff]
      %v584 = vld [vmem:[%s572 + $0x58] sm:$0xff]
      %v585 = vld [vmem:[%s572 + $0x60] sm:$0xff]
      %v586 = vld [vmem:[%s572 + $0x68] sm:$0xff]
      %v587 = vld [vmem:[%s572 + $0x70] sm:$0xff]
      %v588 = vld [vmem:[%s572 + $0x78] sm:$0xff]
      %v589 = vld [vmem:[%s572 + $0x80] sm:$0xff]
      %v590 = vld [vmem:[%s572 + $0x88] sm:$0xff]
      %v591 = vld [vmem:[%s572 + $0x90] sm:$0xff]
      %v592 = vld [vmem:[%s572 + $0x98] sm:$0xff]
      %v593 = vld [vmem:[%s572 + $0xa0] sm:$0xff]
      %v594 = vld [vmem:[%s572 + $0xa8] sm:$0xff]
      %v595 = vld [vmem:[%s572 + $0xb0] sm:$0xff]
      %v596 = vld [vmem:[%s572 + $0xb8] sm:$0xff]
      %v597 = vld [vmem:[%s572 + $0xc0] sm:$0xff]
      %v598 = vld [vmem:[%s572 + $0xc8] sm:$0xff]
      %v599 = vld [vmem:[%s572 + $0xd0] sm:$0xff]
      %v600 = vld [vmem:[%s572 + $0xd8] sm:$0xff]
      %v601 = vld [vmem:[%s572 + $0xe0] sm:$0xff]
      %v602 = vld [vmem:[%s572 + $0xe8] sm:$0xff]
      %v603 = vld [vmem:[%s572 + $0xf0] sm:$0xff]
      %v604 = vld [vmem:[%s572 + $0xf8] sm:$0xff]
      %v605 = vld [vmem:[%s572 + $0x100] sm:$0xff]
      %v606 = vld [vmem:[%s572 + $0x108] sm:$0xff]
      %v607 = vld [vmem:[%s572 + $0x110] sm:$0xff]
      %v608 = vld [vmem:[%s572 + $0x118] sm:$0xff]
      %v609 = vld [vmem:[%s572 + $0x120] sm:$0xff]
      %v610 = vld [vmem:[%s572 + $0x128] sm:$0xff]
      %v611 = vld [vmem:[%s572 + $0x130] sm:$0xff]
      %v612 = vld [vmem:[%s572 + $0x138] sm:$0xff]
      %v613 = vld [vmem:[%s572 + $0x140] sm:$0xff]
      %v614 = vld [vmem:[%s572 + $0x148] sm:$0xff]
      %v615 = vld [vmem:[%s572 + $0x150] sm:$0xff]
      %v616 = vld [vmem:[%s572 + $0x158] sm:$0xff]
      %v617 = vld [vmem:[%s572 + $0x160] sm:$0xff]
      %v618 = vld [vmem:[%s572 + $0x168] sm:$0xff]
      %v619 = vld [vmem:[%s572 + $0x170] sm:$0xff]
      %v620 = vld [vmem:[%s572 + $0x178] sm:$0xff]
      %621 = vmatprep.subr.mxu0 0.0
      %622 = vmatpush1.msra.mxu0 %v588
      %623 = vmatprep.subr.mxu0 0.0
      %624 = vmatpush1.msra.mxu0 %v587
      %625 = vmatprep.subr.mxu0 0.0
      %626 = vmatpush1.msra.mxu0 %v586
      %627 = vmatprep.subr.mxu0 0.0
      %628 = vmatpush1.msra.mxu0 %v585
      %629 = vmatprep.subr.mxu0 0.0
      %630 = vmatpush1.msra.mxu0 %v584
      %631 = vmatprep.subr.mxu0 0.0
      %632 = vmatpush1.msra.mxu0 %v583
      %633 = vmatprep.subr.mxu0 0.0
      %634 = vmatpush1.msra.mxu0 %v582
      %635 = vmatprep.subr.mxu0 0.0
      %636 = vmatpush1.msra.mxu0 %v581
      %637 = vmatprep.subr.mxu0 0.0
      %638 = vmatpush1.msra.mxu0 %v580
      %639 = vmatprep.subr.mxu0 0.0
      %640 = vmatpush1.msra.mxu0 %v579
      %641 = vmatprep.subr.mxu0 0.0
      %642 = vmatpush1.msra.mxu0 %v578
      %643 = vmatprep.subr.mxu0 0.0
      %644 = vmatpush1.msra.mxu0 %v577
      %645 = vmatprep.subr.mxu0 0.0
      %646 = vmatpush1.msra.mxu0 %v576
      %647 = vmatprep.subr.mxu0 0.0
      %648 = vmatpush1.msra.mxu0 %v575
      %649 = vmatprep.subr.mxu0 0.0
      %650 = vmatpush1.msra.mxu0 %v574
      %651 = vmatprep.subr.mxu0 0.0
      %652 = vmatpush1.msra.mxu0 %v573
      %653 = vmatprep.subr.mxu0 0.0
      %654 = vmatpush2.msra.mxu0 %v604
      %655 = vmatprep.subr.mxu0 0.0
      %656 = vmatpush2.msra.mxu0 %v603
      %657 = vmatprep.subr.mxu0 0.0
      %658 = vmatpush2.msra.mxu0 %v602
      %659 = vmatprep.subr.mxu0 0.0
      %660 = vmatpush2.msra.mxu0 %v601
      %661 = vmatprep.subr.mxu0 0.0
      %662 = vmatpush2.msra.mxu0 %v600
      %663 = vmatprep.subr.mxu0 0.0
      %664 = vmatpush2.msra.mxu0 %v599
      %665 = vmatprep.subr.mxu0 0.0
      %666 = vmatpush2.msra.mxu0 %v598
      %667 = vmatprep.subr.mxu0 0.0
      %668 = vmatpush2.msra.mxu0 %v597
      %669 = vmatprep.subr.mxu0 0.0
      %670 = vmatpush2.msra.mxu0 %v596
      %671 = vmatprep.subr.mxu0 0.0
      %672 = vmatpush2.msra.mxu0 %v595
      %673 = vmatprep.subr.mxu0 0.0
      %674 = vmatpush2.msra.mxu0 %v594
      %675 = vmatprep.subr.mxu0 0.0
      %676 = vmatpush2.msra.mxu0 %v593
      %677 = vmatprep.subr.mxu0 0.0
      %678 = vmatpush2.msra.mxu0 %v592
      %679 = vmatprep.subr.mxu0 0.0
      %680 = vmatpush2.msra.mxu0 %v591
      %681 = vmatprep.subr.mxu0 0.0
      %682 = vmatpush2.msra.mxu0 %v590
      %683 = vmatprep.subr.mxu0 0.0
      %684 = vmatpush2.msra.mxu0 %v589
      %685 = vmatprep.mubr.f32.mxu0 %v462
      %686 = vmatmul.mubr.f32.gmra.mxu0 %v412
      %v687 = vpop.f32.mrf.mxu0
      %v688 = vadd.f32 0.0, %v687
      %v689 = vpop.f32.mrf.mxu0
      %690 = vmatprep.mubr.f32.mxu0 %v464
      %691 = vmatmul.mubr.f32.gmra.mxu0 %v413
      %v692 = vpop.f32.mrf.mxu0
      %v693 = vadd.f32 0.0, %v692
      %v694 = vpop.f32.mrf.mxu0
      %695 = vmatprep.mubr.f32.mxu0 %v467
      %696 = vmatmul.mubr.f32.gmra.mxu0 %v415
      %v697 = vpop.f32.mrf.mxu0
      %v698 = vadd.f32 0.0, %v697
      %v699 = vpop.f32.mrf.mxu0
      %700 = vmatprep.mubr.f32.mxu0 %v469
      %701 = vmatmul.mubr.f32.gmra.mxu0 %v416
      %v702 = vpop.f32.mrf.mxu0
      %v703 = vadd.f32 0.0, %v702
      %v704 = vpop.f32.mrf.mxu0
      %705 = vmatprep.mubr.f32.mxu0 %v472
      %706 = vmatmul.mubr.f32.gmra.mxu0 %v418
      %v707 = vpop.f32.mrf.mxu0
      %v708 = vadd.f32 0.0, %v707
      %v709 = vpop.f32.mrf.mxu0
      %710 = vmatprep.mubr.f32.mxu0 %v474
      %711 = vmatmul.mubr.f32.gmra.mxu0 %v419
      %v712 = vpop.f32.mrf.mxu0
      %v713 = vadd.f32 0.0, %v712
      %v714 = vpop.f32.mrf.mxu0
      %715 = vmatprep.mubr.f32.mxu0 %v477
      %716 = vmatmul.mubr.f32.gmra.mxu0 %v421
      %v717 = vpop.f32.mrf.mxu0
      %v718 = vadd.f32 0.0, %v717
      %v719 = vpop.f32.mrf.mxu0
      %720 = vmatprep.mubr.f32.mxu0 %v479
      %721 = vmatmul.mubr.f32.gmra.mxu0 %v422
      %v722 = vpop.f32.mrf.mxu0
      %v723 = vadd.f32 0.0, %v722
      %v724 = vpop.f32.mrf.mxu0
      %725 = vmatprep.mubr.f32.mxu0 %v482
      %726 = vmatmul.mubr.f32.gmra.mxu0 %v424
      %v727 = vpop.f32.mrf.mxu0
      %v728 = vadd.f32 0.0, %v727
      %v729 = vpop.f32.mrf.mxu0
      %730 = vmatprep.mubr.f32.mxu0 %v484
      %731 = vmatmul.mubr.f32.gmra.mxu0 %v425
      %v732 = vpop.f32.mrf.mxu0
      %v733 = vadd.f32 0.0, %v732
      %v734 = vpop.f32.mrf.mxu0
      %735 = vmatprep.mubr.f32.mxu0 %v487
      %736 = vmatmul.mubr.f32.gmra.mxu0 %v427
      %v737 = vpop.f32.mrf.mxu0
      %v738 = vadd.f32 0.0, %v737
      %v739 = vpop.f32.mrf.mxu0
      %740 = vmatprep.mubr.f32.mxu0 %v489
      %741 = vmatmul.mubr.f32.gmra.mxu0 %v428
      %v742 = vpop.f32.mrf.mxu0
      %v743 = vadd.f32 0.0, %v742
      %v744 = vpop.f32.mrf.mxu0
      %745 = vmatprep.mubr.f32.mxu0 %v492
      %746 = vmatmul.mubr.f32.gmra.mxu0 %v430
      %v747 = vpop.f32.mrf.mxu0
      %v748 = vadd.f32 0.0, %v747
      %v749 = vpop.f32.mrf.mxu0
      %750 = vmatprep.mubr.f32.mxu0 %v494
      %751 = vmatmul.mubr.f32.gmra.mxu0 %v431
      %v752 = vpop.f32.mrf.mxu0
      %v753 = vadd.f32 0.0, %v752
      %v754 = vpop.f32.mrf.mxu0
      %755 = vmatprep.mubr.f32.mxu0 %v497
      %756 = vmatmul.mubr.f32.gmra.mxu0 %v433
      %v757 = vpop.f32.mrf.mxu0
      %v758 = vadd.f32 0.0, %v757
      %v759 = vpop.f32.mrf.mxu0
      %760 = vmatprep.mubr.f32.mxu0 %v499
      %761 = vmatmul.mubr.f32.gmra.mxu0 %v434
      %v762 = vpop.f32.mrf.mxu0
      %v763 = vadd.f32 0.0, %v762
      %v764 = vpop.f32.mrf.mxu0
      %765 = vdwg.mxu0
      %766 = vmatprep.subr.mxu0 0.0
      %767 = vmatpush1.msra.mxu0 %v620
      %768 = vmatprep.subr.mxu0 0.0
      %769 = vmatpush1.msra.mxu0 %v619
      %770 = vmatprep.subr.mxu0 0.0
      %771 = vmatpush1.msra.mxu0 %v618
      %772 = vmatprep.subr.mxu0 0.0
      %773 = vmatpush1.msra.mxu0 %v617
      %774 = vmatprep.subr.mxu0 0.0
      %775 = vmatpush1.msra.mxu0 %v616
      %776 = vmatprep.subr.mxu0 0.0
      %777 = vmatpush1.msra.mxu0 %v615
      %778 = vmatprep.subr.mxu0 0.0
      %779 = vmatpush1.msra.mxu0 %v614
      %780 = vmatprep.subr.mxu0 0.0
      %781 = vmatpush1.msra.mxu0 %v613
      %782 = vmatprep.subr.mxu0 0.0
      %783 = vmatpush1.msra.mxu0 %v612
      %784 = vmatprep.subr.mxu0 0.0
      %785 = vmatpush1.msra.mxu0 %v611
      %786 = vmatprep.subr.mxu0 0.0
      %787 = vmatpush1.msra.mxu0 %v610
      %788 = vmatprep.subr.mxu0 0.0
      %789 = vmatpush1.msra.mxu0 %v609
      %790 = vmatprep.subr.mxu0 0.0
      %791 = vmatpush1.msra.mxu0 %v608
      %792 = vmatprep.subr.mxu0 0.0
      %793 = vmatpush1.msra.mxu0 %v607
      %794 = vmatprep.subr.mxu0 0.0
      %795 = vmatpush1.msra.mxu0 %v606
      %796 = vmatprep.subr.mxu0 0.0
      %797 = vmatpush1.msra.mxu0 %v605
      %798 = vmatprep.subr.mxu0 0.0
      %799 = vmatpush2.msra.mxu0 0.0
      %800 = vmatprep.subr.mxu0 0.0
      %801 = vmatpush2.msra.mxu0 0.0
      %802 = vmatprep.subr.mxu0 0.0
      %803 = vmatpush2.msra.mxu0 0.0
      %804 = vmatprep.subr.mxu0 0.0
      %805 = vmatpush2.msra.mxu0 0.0
      %806 = vmatprep.subr.mxu0 0.0
      %807 = vmatpush2.msra.mxu0 0.0
      %808 = vmatprep.subr.mxu0 0.0
      %809 = vmatpush2.msra.mxu0 0.0
      %810 = vmatprep.subr.mxu0 0.0
      %811 = vmatpush2.msra.mxu0 0.0
      %812 = vmatprep.subr.mxu0 0.0
      %813 = vmatpush2.msra.mxu0 0.0
      %814 = vmatprep.subr.mxu0 0.0
      %815 = vmatpush2.msra.mxu0 0.0
      %816 = vmatprep.subr.mxu0 0.0
      %817 = vmatpush2.msra.mxu0 0.0
      %818 = vmatprep.subr.mxu0 0.0
      %819 = vmatpush2.msra.mxu0 0.0
      %820 = vmatprep.subr.mxu0 0.0
      %821 = vmatpush2.msra.mxu0 0.0
      %822 = vmatprep.subr.mxu0 0.0
      %823 = vmatpush2.msra.mxu0 0.0
      %824 = vmatprep.subr.mxu0 0.0
      %825 = vmatpush2.msra.mxu0 0.0
      %826 = vmatprep.subr.mxu0 0.0
      %827 = vmatpush2.msra.mxu0 0.0
      %828 = vmatprep.subr.mxu0 0.0
      %829 = vmatpush2.msra.mxu0 0.0
      %830 = vmatprep.mubr.f32.mxu0 0.0
      %831 = vmatmul.mubr.f32.gmra.mxu0 %v518
      %v832 = vpop.f32.mrf.mxu0
      %v833 = vadd.f32 %v688, %v832
      %v834 = vpop.f32.mrf.mxu0
      %835 = vmatprep.mubr.f32.mxu0 0.0
      %836 = vmatmul.mubr.f32.gmra.mxu0 %v520
      %v837 = vpop.f32.mrf.mxu0
      %v838 = vadd.f32 %v693, %v837
      %v839 = vpop.f32.mrf.mxu0
      %840 = vmatprep.mubr.f32.mxu0 0.0
      %841 = vmatmul.mubr.f32.gmra.mxu0 %v523
      %v842 = vpop.f32.mrf.mxu0
      %v843 = vadd.f32 %v698, %v842
      %v844 = vpop.f32.mrf.mxu0
      %845 = vmatprep.mubr.f32.mxu0 0.0
      %846 = vmatmul.mubr.f32.gmra.mxu0 %v525
      %v847 = vpop.f32.mrf.mxu0
      %v848 = vadd.f32 %v703, %v847
      %v849 = vpop.f32.mrf.mxu0
      %850 = vmatprep.mubr.f32.mxu0 0.0
      %851 = vmatmul.mubr.f32.gmra.mxu0 %v528
      %v852 = vpop.f32.mrf.mxu0
      %v853 = vadd.f32 %v708, %v852
      %v854 = vpop.f32.mrf.mxu0
      %855 = vmatprep.mubr.f32.mxu0 0.0
      %856 = vmatmul.mubr.f32.gmra.mxu0 %v530
      %v857 = vpop.f32.mrf.mxu0
      %v858 = vadd.f32 %v713, %v857
      %v859 = vpop.f32.mrf.mxu0
      %860 = vmatprep.mubr.f32.mxu0 0.0
      %861 = vmatmul.mubr.f32.gmra.mxu0 %v533
      %v862 = vpop.f32.mrf.mxu0
      %v863 = vadd.f32 %v718, %v862
      %v864 = vpop.f32.mrf.mxu0
      %865 = vmatprep.mubr.f32.mxu0 0.0
      %866 = vmatmul.mubr.f32.gmra.mxu0 %v535
      %v867 = vpop.f32.mrf.mxu0
      %v868 = vadd.f32 %v723, %v867
      %v869 = vpop.f32.mrf.mxu0
      %870 = vmatprep.mubr.f32.mxu0 0.0
      %871 = vmatmul.mubr.f32.gmra.mxu0 %v538
      %v872 = vpop.f32.mrf.mxu0
      %v873 = vadd.f32 %v728, %v872
      %v874 = vpop.f32.mrf.mxu0
      %875 = vmatprep.mubr.f32.mxu0 0.0
      %876 = vmatmul.mubr.f32.gmra.mxu0 %v540
      %v877 = vpop.f32.mrf.mxu0
      %v878 = vadd.f32 %v733, %v877
      %v879 = vpop.f32.mrf.mxu0
      %880 = vmatprep.mubr.f32.mxu0 0.0
      %881 = vmatmul.mubr.f32.gmra.mxu0 %v543
      %v882 = vpop.f32.mrf.mxu0
      %v883 = vadd.f32 %v738, %v882
      %v884 = vpop.f32.mrf.mxu0
      %885 = vmatprep.mubr.f32.mxu0 0.0
      %886 = vmatmul.mubr.f32.gmra.mxu0 %v545
      %v887 = vpop.f32.mrf.mxu0
      %v888 = vadd.f32 %v743, %v887
      %v889 = vpop.f32.mrf.mxu0
      %890 = vmatprep.mubr.f32.mxu0 0.0
      %891 = vmatmul.mubr.f32.gmra.mxu0 %v548
      %v892 = vpop.f32.mrf.mxu0
      %v893 = vadd.f32 %v748, %v892
      %v894 = vpop.f32.mrf.mxu0
      %895 = vmatprep.mubr.f32.mxu0 0.0
      %896 = vmatmul.mubr.f32.gmra.mxu0 %v550
      %v897 = vpop.f32.mrf.mxu0
      %v898 = vadd.f32 %v753, %v897
      %v899 = vpop.f32.mrf.mxu0
      %900 = vmatprep.mubr.f32.mxu0 0.0
      %901 = vmatmul.mubr.f32.gmra.mxu0 %v553
      %v902 = vpop.f32.mrf.mxu0
      %v903 = vadd.f32 %v758, %v902
      %v904 = vpop.f32.mrf.mxu0
      %905 = vmatprep.mubr.f32.mxu0 0.0
      %906 = vmatmul.mubr.f32.gmra.mxu0 %v555
      %v907 = vpop.f32.mrf.mxu0
      %v908 = vadd.f32 %v763, %v907
      %v909 = vpop.f32.mrf.mxu0
      %910 = vdwg.mxu0
      %911 = vmatprep.subr.mxu0 0.0
      %912 = vmatpush1.msra.mxu0 %v376
      %913 = vmatprep.subr.mxu0 0.0
      %914 = vmatpush1.msra.mxu0 %v375
      %915 = vmatprep.subr.mxu0 0.0
      %916 = vmatpush1.msra.mxu0 %v374
      %917 = vmatprep.subr.mxu0 0.0
      %918 = vmatpush1.msra.mxu0 %v373
      %919 = vmatprep.subr.mxu0 0.0
      %920 = vmatpush1.msra.mxu0 %v372
      %921 = vmatprep.subr.mxu0 0.0
      %922 = vmatpush1.msra.mxu0 %v371
      %923 = vmatprep.subr.mxu0 0.0
      %924 = vmatpush1.msra.mxu0 %v370
      %925 = vmatprep.subr.mxu0 0.0
      %926 = vmatpush1.msra.mxu0 %v369
      %927 = vmatprep.subr.mxu0 0.0
      %928 = vmatpush1.msra.mxu0 %v368
      %929 = vmatprep.subr.mxu0 0.0
      %930 = vmatpush1.msra.mxu0 %v367
      %931 = vmatprep.subr.mxu0 0.0
      %932 = vmatpush1.msra.mxu0 %v366
      %933 = vmatprep.subr.mxu0 0.0
      %934 = vmatpush1.msra.mxu0 %v365
      %935 = vmatprep.subr.mxu0 0.0
      %936 = vmatpush1.msra.mxu0 %v364
      %937 = vmatprep.subr.mxu0 0.0
      %938 = vmatpush1.msra.mxu0 %v363
      %939 = vmatprep.subr.mxu0 0.0
      %940 = vmatpush1.msra.mxu0 %v362
      %941 = vmatprep.subr.mxu0 0.0
      %942 = vmatpush1.msra.mxu0 %v361
      %943 = vmatprep.subr.mxu0 0.0
      %944 = vmatpush2.msra.mxu0 %v392
      %945 = vmatprep.subr.mxu0 0.0
      %946 = vmatpush2.msra.mxu0 %v391
      %947 = vmatprep.subr.mxu0 0.0
      %948 = vmatpush2.msra.mxu0 %v390
      %949 = vmatprep.subr.mxu0 0.0
      %950 = vmatpush2.msra.mxu0 %v389
      %951 = vmatprep.subr.mxu0 0.0
      %952 = vmatpush2.msra.mxu0 %v388
      %953 = vmatprep.subr.mxu0 0.0
      %954 = vmatpush2.msra.mxu0 %v387
      %955 = vmatprep.subr.mxu0 0.0
      %956 = vmatpush2.msra.mxu0 %v386
      %957 = vmatprep.subr.mxu0 0.0
      %958 = vmatpush2.msra.mxu0 %v385
      %959 = vmatprep.subr.mxu0 0.0
      %960 = vmatpush2.msra.mxu0 %v384
      %961 = vmatprep.subr.mxu0 0.0
      %962 = vmatpush2.msra.mxu0 %v383
      %963 = vmatprep.subr.mxu0 0.0
      %964 = vmatpush2.msra.mxu0 %v382
      %965 = vmatprep.subr.mxu0 0.0
      %966 = vmatpush2.msra.mxu0 %v381
      %967 = vmatprep.subr.mxu0 0.0
      %968 = vmatpush2.msra.mxu0 %v380
      %969 = vmatprep.subr.mxu0 0.0
      %970 = vmatpush2.msra.mxu0 %v379
      %971 = vmatprep.subr.mxu0 0.0
      %972 = vmatpush2.msra.mxu0 %v378
      %973 = vmatprep.subr.mxu0 0.0
      %974 = vmatpush2.msra.mxu0 %v377
      %975 = vmatprep.mubr.f32.mxu0 %v250
      %976 = vmatmul.mubr.f32.gmra.mxu0 %v199
      %v977 = vpop.f32.mrf.mxu0
      %v978 = vadd.f32 %v833, %v977
      %v979 = vpop.f32.mrf.mxu0
      %980 = vmatprep.mubr.f32.mxu0 %v252
      %981 = vmatmul.mubr.f32.gmra.mxu0 %v200
      %v982 = vpop.f32.mrf.mxu0
      %v983 = vadd.f32 %v838, %v982
      %v984 = vpop.f32.mrf.mxu0
      %985 = vmatprep.mubr.f32.mxu0 %v255
      %986 = vmatmul.mubr.f32.gmra.mxu0 %v202
      %v987 = vpop.f32.mrf.mxu0
      %v988 = vadd.f32 %v843, %v987
      %v989 = vpop.f32.mrf.mxu0
      %990 = vmatprep.mubr.f32.mxu0 %v257
      %991 = vmatmul.mubr.f32.gmra.mxu0 %v203
      %v992 = vpop.f32.mrf.mxu0
      %v993 = vadd.f32 %v848, %v992
      %v994 = vpop.f32.mrf.mxu0
      %995 = vmatprep.mubr.f32.mxu0 %v260
      %996 = vmatmul.mubr.f32.gmra.mxu0 %v205
      %v997 = vpop.f32.mrf.mxu0
      %v998 = vadd.f32 %v853, %v997
      %v999 = vpop.f32.mrf.mxu0
      %1000 = vmatprep.mubr.f32.mxu0 %v262
      %1001 = vmatmul.mubr.f32.gmra.mxu0 %v206
      %v1002 = vpop.f32.mrf.mxu0
      %v1003 = vadd.f32 %v858, %v1002
      %v1004 = vpop.f32.mrf.mxu0
      %1005 = vmatprep.mubr.f32.mxu0 %v265
      %1006 = vmatmul.mubr.f32.gmra.mxu0 %v208
      %v1007 = vpop.f32.mrf.mxu0
      %v1008 = vadd.f32 %v863, %v1007
      %v1009 = vpop.f32.mrf.mxu0
      %1010 = vmatprep.mubr.f32.mxu0 %v267
      %1011 = vmatmul.mubr.f32.gmra.mxu0 %v209
      %v1012 = vpop.f32.mrf.mxu0
      %v1013 = vadd.f32 %v868, %v1012
      %v1014 = vpop.f32.mrf.mxu0
      %1015 = vmatprep.mubr.f32.mxu0 %v270
      %1016 = vmatmul.mubr.f32.gmra.mxu0 %v211
      %v1017 = vpop.f32.mrf.mxu0
      %v1018 = vadd.f32 %v873, %v1017
      %v1019 = vpop.f32.mrf.mxu0
      %1020 = vmatprep.mubr.f32.mxu0 %v272
      %1021 = vmatmul.mubr.f32.gmra.mxu0 %v212
      %v1022 = vpop.f32.mrf.mxu0
      %v1023 = vadd.f32 %v878, %v1022
      %v1024 = vpop.f32.mrf.mxu0
      %1025 = vmatprep.mubr.f32.mxu0 %v275
      %1026 = vmatmul.mubr.f32.gmra.mxu0 %v214
      %v1027 = vpop.f32.mrf.mxu0
      %v1028 = vadd.f32 %v883, %v1027
      %v1029 = vpop.f32.mrf.mxu0
      %1030 = vmatprep.mubr.f32.mxu0 %v277
      %1031 = vmatmul.mubr.f32.gmra.mxu0 %v215
      %v1032 = vpop.f32.mrf.mxu0
      %v1033 = vadd.f32 %v888, %v1032
      %v1034 = vpop.f32.mrf.mxu0
      %1035 = vmatprep.mubr.f32.mxu0 %v280
      %1036 = vmatmul.mubr.f32.gmra.mxu0 %v217
      %v1037 = vpop.f32.mrf.mxu0
      %v1038 = vadd.f32 %v893, %v1037
      %v1039 = vpop.f32.mrf.mxu0
      %1040 = vmatprep.mubr.f32.mxu0 %v282
      %1041 = vmatmul.mubr.f32.gmra.mxu0 %v218
      %v1042 = vpop.f32.mrf.mxu0
      %v1043 = vadd.f32 %v898, %v1042
      %v1044 = vpop.f32.mrf.mxu0
      %1045 = vmatprep.mubr.f32.mxu0 %v285
      %1046 = vmatmul.mubr.f32.gmra.mxu0 %v220
      %v1047 = vpop.f32.mrf.mxu0
      %v1048 = vadd.f32 %v903, %v1047
      %v1049 = vpop.f32.mrf.mxu0
      %1050 = vmatprep.mubr.f32.mxu0 %v287
      %1051 = vmatmul.mubr.f32.gmra.mxu0 %v221
      %v1052 = vpop.f32.mrf.mxu0
      %v1053 = vadd.f32 %v908, %v1052
      %v1054 = vpop.f32.mrf.mxu0
      %1055 = vdwg.mxu0
      %1056 = vmatprep.subr.mxu0 0.0
      %1057 = vmatpush1.msra.mxu0 %v408
      %1058 = vmatprep.subr.mxu0 0.0
      %1059 = vmatpush1.msra.mxu0 %v407
      %1060 = vmatprep.subr.mxu0 0.0
      %1061 = vmatpush1.msra.mxu0 %v406
      %1062 = vmatprep.subr.mxu0 0.0
      %1063 = vmatpush1.msra.mxu0 %v405
      %1064 = vmatprep.subr.mxu0 0.0
      %1065 = vmatpush1.msra.mxu0 %v404
      %1066 = vmatprep.subr.mxu0 0.0
      %1067 = vmatpush1.msra.mxu0 %v403
      %1068 = vmatprep.subr.mxu0 0.0
      %1069 = vmatpush1.msra.mxu0 %v402
      %1070 = vmatprep.subr.mxu0 0.0
      %1071 = vmatpush1.msra.mxu0 %v401
      %1072 = vmatprep.subr.mxu0 0.0
      %1073 = vmatpush1.msra.mxu0 %v400
      %1074 = vmatprep.subr.mxu0 0.0
      %1075 = vmatpush1.msra.mxu0 %v399
      %1076 = vmatprep.subr.mxu0 0.0
      %1077 = vmatpush1.msra.mxu0 %v398
      %1078 = vmatprep.subr.mxu0 0.0
      %1079 = vmatpush1.msra.mxu0 %v397
      %1080 = vmatprep.subr.mxu0 0.0
      %1081 = vmatpush1.msra.mxu0 %v396
      %1082 = vmatprep.subr.mxu0 0.0
      %1083 = vmatpush1.msra.mxu0 %v395
      %1084 = vmatprep.subr.mxu0 0.0
      %1085 = vmatpush1.msra.mxu0 %v394
      %1086 = vmatprep.subr.mxu0 0.0
      %1087 = vmatpush1.msra.mxu0 %v393
      %1088 = vmatprep.subr.mxu0 0.0
      %1089 = vmatpush2.msra.mxu0 0.0
      %1090 = vmatprep.subr.mxu0 0.0
      %1091 = vmatpush2.msra.mxu0 0.0
      %1092 = vmatprep.subr.mxu0 0.0
      %1093 = vmatpush2.msra.mxu0 0.0
      %1094 = vmatprep.subr.mxu0 0.0
      %1095 = vmatpush2.msra.mxu0 0.0
      %1096 = vmatprep.subr.mxu0 0.0
      %1097 = vmatpush2.msra.mxu0 0.0
      %1098 = vmatprep.subr.mxu0 0.0
      %1099 = vmatpush2.msra.mxu0 0.0
      %1100 = vmatprep.subr.mxu0 0.0
      %1101 = vmatpush2.msra.mxu0 0.0
      %1102 = vmatprep.subr.mxu0 0.0
      %1103 = vmatpush2.msra.mxu0 0.0
      %1104 = vmatprep.subr.mxu0 0.0
      %1105 = vmatpush2.msra.mxu0 0.0
      %1106 = vmatprep.subr.mxu0 0.0
      %1107 = vmatpush2.msra.mxu0 0.0
      %1108 = vmatprep.subr.mxu0 0.0
      %1109 = vmatpush2.msra.mxu0 0.0
      %1110 = vmatprep.subr.mxu0 0.0
      %1111 = vmatpush2.msra.mxu0 0.0
      %1112 = vmatprep.subr.mxu0 0.0
      %1113 = vmatpush2.msra.mxu0 0.0
      %1114 = vmatprep.subr.mxu0 0.0
      %1115 = vmatpush2.msra.mxu0 0.0
      %1116 = vmatprep.subr.mxu0 0.0
      %1117 = vmatpush2.msra.mxu0 0.0
      %1118 = vmatprep.subr.mxu0 0.0
      %1119 = vmatpush2.msra.mxu0 0.0
      %1120 = vmatprep.mubr.f32.mxu0 0.0
      %1121 = vmatmul.mubr.f32.gmra.mxu0 %v307
      %v1122 = vpop.f32.mrf.mxu0
      %v1123 = vadd.f32 %v978, %v1122
      %v1124 = vpop.f32.mrf.mxu0
      %1125 = vmatprep.mubr.f32.mxu0 0.0
      %1126 = vmatmul.mubr.f32.gmra.mxu0 %v309
      %v1127 = vpop.f32.mrf.mxu0
      %v1128 = vadd.f32 %v983, %v1127
      %v1129 = vpop.f32.mrf.mxu0
      %1130 = vmatprep.mubr.f32.mxu0 0.0
      %1131 = vmatmul.mubr.f32.gmra.mxu0 %v312
      %v1132 = vpop.f32.mrf.mxu0
      %v1133 = vadd.f32 %v988, %v1132
      %v1134 = vpop.f32.mrf.mxu0
      %1135 = vmatprep.mubr.f32.mxu0 0.0
      %1136 = vmatmul.mubr.f32.gmra.mxu0 %v314
      %v1137 = vpop.f32.mrf.mxu0
      %v1138 = vadd.f32 %v993, %v1137
      %v1139 = vpop.f32.mrf.mxu0
      %1140 = vmatprep.mubr.f32.mxu0 0.0
      %1141 = vmatmul.mubr.f32.gmra.mxu0 %v317
      %v1142 = vpop.f32.mrf.mxu0
      %v1143 = vadd.f32 %v998, %v1142
      %v1144 = vpop.f32.mrf.mxu0
      %1145 = vmatprep.mubr.f32.mxu0 0.0
      %1146 = vmatmul.mubr.f32.gmra.mxu0 %v319
      %v1147 = vpop.f32.mrf.mxu0
      %v1148 = vadd.f32 %v1003, %v1147
      %v1149 = vpop.f32.mrf.mxu0
      %1150 = vmatprep.mubr.f32.mxu0 0.0
      %1151 = vmatmul.mubr.f32.gmra.mxu0 %v322
      %v1152 = vpop.f32.mrf.mxu0
      %v1153 = vadd.f32 %v1008, %v1152
      %v1154 = vpop.f32.mrf.mxu0
      %1155 = vmatprep.mubr.f32.mxu0 0.0
      %1156 = vmatmul.mubr.f32.gmra.mxu0 %v324
      %v1157 = vpop.f32.mrf.mxu0
      %v1158 = vadd.f32 %v1013, %v1157
      %v1159 = vpop.f32.mrf.mxu0
      %1160 = vmatprep.mubr.f32.mxu0 0.0
      %1161 = vmatmul.mubr.f32.gmra.mxu0 %v327
      %v1162 = vpop.f32.mrf.mxu0
      %v1163 = vadd.f32 %v1018, %v1162
      %v1164 = vpop.f32.mrf.mxu0
      %1165 = vmatprep.mubr.f32.mxu0 0.0
      %1166 = vmatmul.mubr.f32.gmra.mxu0 %v329
      %v1167 = vpop.f32.mrf.mxu0
      %v1168 = vadd.f32 %v1023, %v1167
      %v1169 = vpop.f32.mrf.mxu0
      %1170 = vmatprep.mubr.f32.mxu0 0.0
      %1171 = vmatmul.mubr.f32.gmra.mxu0 %v332
      %v1172 = vpop.f32.mrf.mxu0
      %v1173 = vadd.f32 %v1028, %v1172
      %v1174 = vpop.f32.mrf.mxu0
      %1175 = vmatprep.mubr.f32.mxu0 0.0
      %1176 = vmatmul.mubr.f32.gmra.mxu0 %v334
      %v1177 = vpop.f32.mrf.mxu0
      %v1178 = vadd.f32 %v1033, %v1177
      %v1179 = vpop.f32.mrf.mxu0
      %1180 = vmatprep.mubr.f32.mxu0 0.0
      %1181 = vmatmul.mubr.f32.gmra.mxu0 %v337
      %v1182 = vpop.f32.mrf.mxu0
      %v1183 = vadd.f32 %v1038, %v1182
      %v1184 = vpop.f32.mrf.mxu0
      %1185 = vmatprep.mubr.f32.mxu0 0.0
      %1186 = vmatmul.mubr.f32.gmra.mxu0 %v339
      %v1187 = vpop.f32.mrf.mxu0
      %v1188 = vadd.f32 %v1043, %v1187
      %v1189 = vpop.f32.mrf.mxu0
      %1190 = vmatprep.mubr.f32.mxu0 0.0
      %1191 = vmatmul.mubr.f32.gmra.mxu0 %v342
      %v1192 = vpop.f32.mrf.mxu0
      %v1193 = vadd.f32 %v1048, %v1192
      %v1194 = vpop.f32.mrf.mxu0
      %1195 = vmatprep.mubr.f32.mxu0 0.0
      %1196 = vmatmul.mubr.f32.gmra.mxu0 %v344
      %v1197 = vpop.f32.mrf.mxu0
      %v1198 = vadd.f32 %v1053, %v1197
      %v1199 = vpop.f32.mrf.mxu0
      %1200 = vdwg.mxu0
      %s1201 = sadd.s32 %s196, 2
      %s1202 = smul.u32 %s1201, 24
      %s1203 = scalar_lea.vmem %s184, %s1202
      %v1204 = vld [vmem:[%s1203] sm:$0xff]
      %v1205 = vld [vmem:[%s1203 + $0x8] sm:$0xff]
      %v1206 = vld [vmem:[%s1203 + $0x10] sm:$0x3]
      %v1207 = vld [vmem:[%s1203 + $0x18] sm:$0xff]
      %v1208 = vld [vmem:[%s1203 + $0x20] sm:$0xff]
      %v1209 = vld [vmem:[%s1203 + $0x28] sm:$0x3]
      %v1210 = vld [vmem:[%s1203 + $0x30] sm:$0xff]
      %v1211 = vld [vmem:[%s1203 + $0x38] sm:$0xff]
      %v1212 = vld [vmem:[%s1203 + $0x40] sm:$0x3]
      %v1213 = vld [vmem:[%s1203 + $0x48] sm:$0xff]
      %v1214 = vld [vmem:[%s1203 + $0x50] sm:$0xff]
      %v1215 = vld [vmem:[%s1203 + $0x58] sm:$0x3]
      %v1216 = vld [vmem:[%s1203 + $0x60] sm:$0xff]
      %v1217 = vld [vmem:[%s1203 + $0x68] sm:$0xff]
      %v1218 = vld [vmem:[%s1203 + $0x70] sm:$0x3]
      %v1219 = vld [vmem:[%s1203 + $0x78] sm:$0xff]
      %v1220 = vld [vmem:[%s1203 + $0x80] sm:$0xff]
      %v1221 = vld [vmem:[%s1203 + $0x88] sm:$0x3]
      %v1222 = vld [vmem:[%s1203 + $0x90] sm:$0xff]
      %v1223 = vld [vmem:[%s1203 + $0x98] sm:$0xff]
      %v1224 = vld [vmem:[%s1203 + $0xa0] sm:$0x3]
      %v1225 = vld [vmem:[%s1203 + $0xa8] sm:$0xff]
      %v1226 = vld [vmem:[%s1203 + $0xb0] sm:$0xff]
      %v1227 = vld [vmem:[%s1203 + $0xb8] sm:$0x3]
      %v1252 = vrot.slane %v1204, 1
      %v1253 = vrot.slane %v1205, 1
      %v1254 = vsel %vm247, %v1252, %v1253
      %v1255 = vrot.slane %v1206, 1
      %v1256 = vsel %vm247, %v1253, %v1255
      %v1257 = vrot.slane %v1207, 1
      %v1258 = vrot.slane %v1208, 1
      %v1259 = vsel %vm247, %v1257, %v1258
      %v1260 = vrot.slane %v1209, 1
      %v1261 = vsel %vm247, %v1258, %v1260
      %v1262 = vrot.slane %v1210, 1
      %v1263 = vrot.slane %v1211, 1
      %v1264 = vsel %vm247, %v1262, %v1263
      %v1265 = vrot.slane %v1212, 1
      %v1266 = vsel %vm247, %v1263, %v1265
      %v1267 = vrot.slane %v1213, 1
      %v1268 = vrot.slane %v1214, 1
      %v1269 = vsel %vm247, %v1267, %v1268
      %v1270 = vrot.slane %v1215, 1
      %v1271 = vsel %vm247, %v1268, %v1270
      %v1272 = vrot.slane %v1216, 1
      %v1273 = vrot.slane %v1217, 1
      %v1274 = vsel %vm247, %v1272, %v1273
      %v1275 = vrot.slane %v1218, 1
      %v1276 = vsel %vm247, %v1273, %v1275
      %v1277 = vrot.slane %v1219, 1
      %v1278 = vrot.slane %v1220, 1
      %v1279 = vsel %vm247, %v1277, %v1278
      %v1280 = vrot.slane %v1221, 1
      %v1281 = vsel %vm247, %v1278, %v1280
      %v1282 = vrot.slane %v1222, 1
      %v1283 = vrot.slane %v1223, 1
      %v1284 = vsel %vm247, %v1282, %v1283
      %v1285 = vrot.slane %v1224, 1
      %v1286 = vsel %vm247, %v1283, %v1285
      %v1287 = vrot.slane %v1225, 1
      %v1288 = vrot.slane %v1226, 1
      %v1289 = vsel %vm247, %v1287, %v1288
      %v1290 = vrot.slane %v1227, 1
      %v1291 = vsel %vm247, %v1288, %v1290
      %v1308 = vrot.slane %v1204, 2
      %v1309 = vrot.slane %v1205, 2
      %v1310 = vsel %vm304, %v1308, %v1309
      %v1311 = vrot.slane %v1206, 2
      %v1312 = vsel %vm304, %v1309, %v1311
      %v1313 = vrot.slane %v1207, 2
      %v1314 = vrot.slane %v1208, 2
      %v1315 = vsel %vm304, %v1313, %v1314
      %v1316 = vrot.slane %v1209, 2
      %v1317 = vsel %vm304, %v1314, %v1316
      %v1318 = vrot.slane %v1210, 2
      %v1319 = vrot.slane %v1211, 2
      %v1320 = vsel %vm304, %v1318, %v1319
      %v1321 = vrot.slane %v1212, 2
      %v1322 = vsel %vm304, %v1319, %v1321
      %v1323 = vrot.slane %v1213, 2
      %v1324 = vrot.slane %v1214, 2
      %v1325 = vsel %vm304, %v1323, %v1324
      %v1326 = vrot.slane %v1215, 2
      %v1327 = vsel %vm304, %v1324, %v1326
      %v1328 = vrot.slane %v1216, 2
      %v1329 = vrot.slane %v1217, 2
      %v1330 = vsel %vm304, %v1328, %v1329
      %v1331 = vrot.slane %v1218, 2
      %v1332 = vsel %vm304, %v1329, %v1331
      %v1333 = vrot.slane %v1219, 2
      %v1334 = vrot.slane %v1220, 2
      %v1335 = vsel %vm304, %v1333, %v1334
      %v1336 = vrot.slane %v1221, 2
      %v1337 = vsel %vm304, %v1334, %v1336
      %v1338 = vrot.slane %v1222, 2
      %v1339 = vrot.slane %v1223, 2
      %v1340 = vsel %vm304, %v1338, %v1339
      %v1341 = vrot.slane %v1224, 2
      %v1342 = vsel %vm304, %v1339, %v1341
      %v1343 = vrot.slane %v1225, 2
      %v1344 = vrot.slane %v1226, 2
      %v1345 = vsel %vm304, %v1343, %v1344
      %v1346 = vrot.slane %v1227, 2
      %v1347 = vsel %vm304, %v1344, %v1346
      %s1364 = scalar_lea.vmem %s1, 768
      %v1365 = vld [vmem:[%s1364] sm:$0xff]
      %v1366 = vld [vmem:[%s1364 + $0x8] sm:$0xff]
      %v1367 = vld [vmem:[%s1364 + $0x10] sm:$0xff]
      %v1368 = vld [vmem:[%s1364 + $0x18] sm:$0xff]
      %v1369 = vld [vmem:[%s1364 + $0x20] sm:$0xff]
      %v1370 = vld [vmem:[%s1364 + $0x28] sm:$0xff]
      %v1371 = vld [vmem:[%s1364 + $0x30] sm:$0xff]
      %v1372 = vld [vmem:[%s1364 + $0x38] sm:$0xff]
      %v1373 = vld [vmem:[%s1364 + $0x40] sm:$0xff]
      %v1374 = vld [vmem:[%s1364 + $0x48] sm:$0xff]
      %v1375 = vld [vmem:[%s1364 + $0x50] sm:$0xff]
      %v1376 = vld [vmem:[%s1364 + $0x58] sm:$0xff]
      %v1377 = vld [vmem:[%s1364 + $0x60] sm:$0xff]
      %v1378 = vld [vmem:[%s1364 + $0x68] sm:$0xff]
      %v1379 = vld [vmem:[%s1364 + $0x70] sm:$0xff]
      %v1380 = vld [vmem:[%s1364 + $0x78] sm:$0xff]
      %v1381 = vld [vmem:[%s1364 + $0x80] sm:$0xff]
      %v1382 = vld [vmem:[%s1364 + $0x88] sm:$0xff]
      %v1383 = vld [vmem:[%s1364 + $0x90] sm:$0xff]
      %v1384 = vld [vmem:[%s1364 + $0x98] sm:$0xff]
      %v1385 = vld [vmem:[%s1364 + $0xa0] sm:$0xff]
      %v1386 = vld [vmem:[%s1364 + $0xa8] sm:$0xff]
      %v1387 = vld [vmem:[%s1364 + $0xb0] sm:$0xff]
      %v1388 = vld [vmem:[%s1364 + $0xb8] sm:$0xff]
      %v1389 = vld [vmem:[%s1364 + $0xc0] sm:$0xff]
      %v1390 = vld [vmem:[%s1364 + $0xc8] sm:$0xff]
      %v1391 = vld [vmem:[%s1364 + $0xd0] sm:$0xff]
      %v1392 = vld [vmem:[%s1364 + $0xd8] sm:$0xff]
      %v1393 = vld [vmem:[%s1364 + $0xe0] sm:$0xff]
      %v1394 = vld [vmem:[%s1364 + $0xe8] sm:$0xff]
      %v1395 = vld [vmem:[%s1364 + $0xf0] sm:$0xff]
      %v1396 = vld [vmem:[%s1364 + $0xf8] sm:$0xff]
      %v1397 = vld [vmem:[%s1364 + $0x100] sm:$0xff]
      %v1398 = vld [vmem:[%s1364 + $0x108] sm:$0xff]
      %v1399 = vld [vmem:[%s1364 + $0x110] sm:$0xff]
      %v1400 = vld [vmem:[%s1364 + $0x118] sm:$0xff]
      %v1401 = vld [vmem:[%s1364 + $0x120] sm:$0xff]
      %v1402 = vld [vmem:[%s1364 + $0x128] sm:$0xff]
      %v1403 = vld [vmem:[%s1364 + $0x130] sm:$0xff]
      %v1404 = vld [vmem:[%s1364 + $0x138] sm:$0xff]
      %v1405 = vld [vmem:[%s1364 + $0x140] sm:$0xff]
      %v1406 = vld [vmem:[%s1364 + $0x148] sm:$0xff]
      %v1407 = vld [vmem:[%s1364 + $0x150] sm:$0xff]
      %v1408 = vld [vmem:[%s1364 + $0x158] sm:$0xff]
      %v1409 = vld [vmem:[%s1364 + $0x160] sm:$0xff]
      %v1410 = vld [vmem:[%s1364 + $0x168] sm:$0xff]
      %v1411 = vld [vmem:[%s1364 + $0x170] sm:$0xff]
      %v1412 = vld [vmem:[%s1364 + $0x178] sm:$0xff]
      %1413 = vmatprep.subr.mxu0 0.0
      %1414 = vmatpush1.msra.mxu0 %v1380
      %1415 = vmatprep.subr.mxu0 0.0
      %1416 = vmatpush1.msra.mxu0 %v1379
      %1417 = vmatprep.subr.mxu0 0.0
      %1418 = vmatpush1.msra.mxu0 %v1378
      %1419 = vmatprep.subr.mxu0 0.0
      %1420 = vmatpush1.msra.mxu0 %v1377
      %1421 = vmatprep.subr.mxu0 0.0
      %1422 = vmatpush1.msra.mxu0 %v1376
      %1423 = vmatprep.subr.mxu0 0.0
      %1424 = vmatpush1.msra.mxu0 %v1375
      %1425 = vmatprep.subr.mxu0 0.0
      %1426 = vmatpush1.msra.mxu0 %v1374
      %1427 = vmatprep.subr.mxu0 0.0
      %1428 = vmatpush1.msra.mxu0 %v1373
      %1429 = vmatprep.subr.mxu0 0.0
      %1430 = vmatpush1.msra.mxu0 %v1372
      %1431 = vmatprep.subr.mxu0 0.0
      %1432 = vmatpush1.msra.mxu0 %v1371
      %1433 = vmatprep.subr.mxu0 0.0
      %1434 = vmatpush1.msra.mxu0 %v1370
      %1435 = vmatprep.subr.mxu0 0.0
      %1436 = vmatpush1.msra.mxu0 %v1369
      %1437 = vmatprep.subr.mxu0 0.0
      %1438 = vmatpush1.msra.mxu0 %v1368
      %1439 = vmatprep.subr.mxu0 0.0
      %1440 = vmatpush1.msra.mxu0 %v1367
      %1441 = vmatprep.subr.mxu0 0.0
      %1442 = vmatpush1.msra.mxu0 %v1366
      %1443 = vmatprep.subr.mxu0 0.0
      %1444 = vmatpush1.msra.mxu0 %v1365
      %1445 = vmatprep.subr.mxu0 0.0
      %1446 = vmatpush2.msra.mxu0 %v1396
      %1447 = vmatprep.subr.mxu0 0.0
      %1448 = vmatpush2.msra.mxu0 %v1395
      %1449 = vmatprep.subr.mxu0 0.0
      %1450 = vmatpush2.msra.mxu0 %v1394
      %1451 = vmatprep.subr.mxu0 0.0
      %1452 = vmatpush2.msra.mxu0 %v1393
      %1453 = vmatprep.subr.mxu0 0.0
      %1454 = vmatpush2.msra.mxu0 %v1392
      %1455 = vmatprep.subr.mxu0 0.0
      %1456 = vmatpush2.msra.mxu0 %v1391
      %1457 = vmatprep.subr.mxu0 0.0
      %1458 = vmatpush2.msra.mxu0 %v1390
      %1459 = vmatprep.subr.mxu0 0.0
      %1460 = vmatpush2.msra.mxu0 %v1389
      %1461 = vmatprep.subr.mxu0 0.0
      %1462 = vmatpush2.msra.mxu0 %v1388
      %1463 = vmatprep.subr.mxu0 0.0
      %1464 = vmatpush2.msra.mxu0 %v1387
      %1465 = vmatprep.subr.mxu0 0.0
      %1466 = vmatpush2.msra.mxu0 %v1386
      %1467 = vmatprep.subr.mxu0 0.0
      %1468 = vmatpush2.msra.mxu0 %v1385
      %1469 = vmatprep.subr.mxu0 0.0
      %1470 = vmatpush2.msra.mxu0 %v1384
      %1471 = vmatprep.subr.mxu0 0.0
      %1472 = vmatpush2.msra.mxu0 %v1383
      %1473 = vmatprep.subr.mxu0 0.0
      %1474 = vmatpush2.msra.mxu0 %v1382
      %1475 = vmatprep.subr.mxu0 0.0
      %1476 = vmatpush2.msra.mxu0 %v1381
      %1477 = vmatprep.mubr.f32.mxu0 %v1254
      %1478 = vmatmul.mubr.f32.gmra.mxu0 %v1204
      %v1479 = vpop.f32.mrf.mxu0
      %v1480 = vadd.f32 0.0, %v1479
      %v1481 = vpop.f32.mrf.mxu0
      %1482 = vmatprep.mubr.f32.mxu0 %v1256
      %1483 = vmatmul.mubr.f32.gmra.mxu0 %v1205
      %v1484 = vpop.f32.mrf.mxu0
      %v1485 = vadd.f32 0.0, %v1484
      %v1486 = vpop.f32.mrf.mxu0
      %1487 = vmatprep.mubr.f32.mxu0 %v1259
      %1488 = vmatmul.mubr.f32.gmra.mxu0 %v1207
      %v1489 = vpop.f32.mrf.mxu0
      %v1490 = vadd.f32 0.0, %v1489
      %v1491 = vpop.f32.mrf.mxu0
      %1492 = vmatprep.mubr.f32.mxu0 %v1261
      %1493 = vmatmul.mubr.f32.gmra.mxu0 %v1208
      %v1494 = vpop.f32.mrf.mxu0
      %v1495 = vadd.f32 0.0, %v1494
      %v1496 = vpop.f32.mrf.mxu0
      %1497 = vmatprep.mubr.f32.mxu0 %v1264
      %1498 = vmatmul.mubr.f32.gmra.mxu0 %v1210
      %v1499 = vpop.f32.mrf.mxu0
      %v1500 = vadd.f32 0.0, %v1499
      %v1501 = vpop.f32.mrf.mxu0
      %1502 = vmatprep.mubr.f32.mxu0 %v1266
      %1503 = vmatmul.mubr.f32.gmra.mxu0 %v1211
      %v1504 = vpop.f32.mrf.mxu0
      %v1505 = vadd.f32 0.0, %v1504
      %v1506 = vpop.f32.mrf.mxu0
      %1507 = vmatprep.mubr.f32.mxu0 %v1269
      %1508 = vmatmul.mubr.f32.gmra.mxu0 %v1213
      %v1509 = vpop.f32.mrf.mxu0
      %v1510 = vadd.f32 0.0, %v1509
      %v1511 = vpop.f32.mrf.mxu0
      %1512 = vmatprep.mubr.f32.mxu0 %v1271
      %1513 = vmatmul.mubr.f32.gmra.mxu0 %v1214
      %v1514 = vpop.f32.mrf.mxu0
      %v1515 = vadd.f32 0.0, %v1514
      %v1516 = vpop.f32.mrf.mxu0
      %1517 = vmatprep.mubr.f32.mxu0 %v1274
      %1518 = vmatmul.mubr.f32.gmra.mxu0 %v1216
      %v1519 = vpop.f32.mrf.mxu0
      %v1520 = vadd.f32 0.0, %v1519
      %v1521 = vpop.f32.mrf.mxu0
      %1522 = vmatprep.mubr.f32.mxu0 %v1276
      %1523 = vmatmul.mubr.f32.gmra.mxu0 %v1217
      %v1524 = vpop.f32.mrf.mxu0
      %v1525 = vadd.f32 0.0, %v1524
      %v1526 = vpop.f32.mrf.mxu0
      %1527 = vmatprep.mubr.f32.mxu0 %v1279
      %1528 = vmatmul.mubr.f32.gmra.mxu0 %v1219
      %v1529 = vpop.f32.mrf.mxu0
      %v1530 = vadd.f32 0.0, %v1529
      %v1531 = vpop.f32.mrf.mxu0
      %1532 = vmatprep.mubr.f32.mxu0 %v1281
      %1533 = vmatmul.mubr.f32.gmra.mxu0 %v1220
      %v1534 = vpop.f32.mrf.mxu0
      %v1535 = vadd.f32 0.0, %v1534
      %v1536 = vpop.f32.mrf.mxu0
      %1537 = vmatprep.mubr.f32.mxu0 %v1284
      %1538 = vmatmul.mubr.f32.gmra.mxu0 %v1222
      %v1539 = vpop.f32.mrf.mxu0
      %v1540 = vadd.f32 0.0, %v1539
      %v1541 = vpop.f32.mrf.mxu0
      %1542 = vmatprep.mubr.f32.mxu0 %v1286
      %1543 = vmatmul.mubr.f32.gmra.mxu0 %v1223
      %v1544 = vpop.f32.mrf.mxu0
      %v1545 = vadd.f32 0.0, %v1544
      %v1546 = vpop.f32.mrf.mxu0
      %1547 = vmatprep.mubr.f32.mxu0 %v1289
      %1548 = vmatmul.mubr.f32.gmra.mxu0 %v1225
      %v1549 = vpop.f32.mrf.mxu0
      %v1550 = vadd.f32 0.0, %v1549
      %v1551 = vpop.f32.mrf.mxu0
      %1552 = vmatprep.mubr.f32.mxu0 %v1291
      %1553 = vmatmul.mubr.f32.gmra.mxu0 %v1226
      %v1554 = vpop.f32.mrf.mxu0
      %v1555 = vadd.f32 0.0, %v1554
      %v1556 = vpop.f32.mrf.mxu0
      %1557 = vdwg.mxu0
      %1558 = vmatprep.subr.mxu0 0.0
      %1559 = vmatpush1.msra.mxu0 %v1412
      %1560 = vmatprep.subr.mxu0 0.0
      %1561 = vmatpush1.msra.mxu0 %v1411
      %1562 = vmatprep.subr.mxu0 0.0
      %1563 = vmatpush1.msra.mxu0 %v1410
      %1564 = vmatprep.subr.mxu0 0.0
      %1565 = vmatpush1.msra.mxu0 %v1409
      %1566 = vmatprep.subr.mxu0 0.0
      %1567 = vmatpush1.msra.mxu0 %v1408
      %1568 = vmatprep.subr.mxu0 0.0
      %1569 = vmatpush1.msra.mxu0 %v1407
      %1570 = vmatprep.subr.mxu0 0.0
      %1571 = vmatpush1.msra.mxu0 %v1406
      %1572 = vmatprep.subr.mxu0 0.0
      %1573 = vmatpush1.msra.mxu0 %v1405
      %1574 = vmatprep.subr.mxu0 0.0
      %1575 = vmatpush1.msra.mxu0 %v1404
      %1576 = vmatprep.subr.mxu0 0.0
      %1577 = vmatpush1.msra.mxu0 %v1403
      %1578 = vmatprep.subr.mxu0 0.0
      %1579 = vmatpush1.msra.mxu0 %v1402
      %1580 = vmatprep.subr.mxu0 0.0
      %1581 = vmatpush1.msra.mxu0 %v1401
      %1582 = vmatprep.subr.mxu0 0.0
      %1583 = vmatpush1.msra.mxu0 %v1400
      %1584 = vmatprep.subr.mxu0 0.0
      %1585 = vmatpush1.msra.mxu0 %v1399
      %1586 = vmatprep.subr.mxu0 0.0
      %1587 = vmatpush1.msra.mxu0 %v1398
      %1588 = vmatprep.subr.mxu0 0.0
      %1589 = vmatpush1.msra.mxu0 %v1397
      %1590 = vmatprep.subr.mxu0 0.0
      %1591 = vmatpush2.msra.mxu0 0.0
      %1592 = vmatprep.subr.mxu0 0.0
      %1593 = vmatpush2.msra.mxu0 0.0
      %1594 = vmatprep.subr.mxu0 0.0
      %1595 = vmatpush2.msra.mxu0 0.0
      %1596 = vmatprep.subr.mxu0 0.0
      %1597 = vmatpush2.msra.mxu0 0.0
      %1598 = vmatprep.subr.mxu0 0.0
      %1599 = vmatpush2.msra.mxu0 0.0
      %1600 = vmatprep.subr.mxu0 0.0
      %1601 = vmatpush2.msra.mxu0 0.0
      %1602 = vmatprep.subr.mxu0 0.0
      %1603 = vmatpush2.msra.mxu0 0.0
      %1604 = vmatprep.subr.mxu0 0.0
      %1605 = vmatpush2.msra.mxu0 0.0
      %1606 = vmatprep.subr.mxu0 0.0
      %1607 = vmatpush2.msra.mxu0 0.0
      %1608 = vmatprep.subr.mxu0 0.0
      %1609 = vmatpush2.msra.mxu0 0.0
      %1610 = vmatprep.subr.mxu0 0.0
      %1611 = vmatpush2.msra.mxu0 0.0
      %1612 = vmatprep.subr.mxu0 0.0
      %1613 = vmatpush2.msra.mxu0 0.0
      %1614 = vmatprep.subr.mxu0 0.0
      %1615 = vmatpush2.msra.mxu0 0.0
      %1616 = vmatprep.subr.mxu0 0.0
      %1617 = vmatpush2.msra.mxu0 0.0
      %1618 = vmatprep.subr.mxu0 0.0
      %1619 = vmatpush2.msra.mxu0 0.0
      %1620 = vmatprep.subr.mxu0 0.0
      %1621 = vmatpush2.msra.mxu0 0.0
      %1622 = vmatprep.mubr.f32.mxu0 0.0
      %1623 = vmatmul.mubr.f32.gmra.mxu0 %v1310
      %v1624 = vpop.f32.mrf.mxu0
      %v1625 = vadd.f32 %v1480, %v1624
      %v1626 = vpop.f32.mrf.mxu0
      %1627 = vmatprep.mubr.f32.mxu0 0.0
      %1628 = vmatmul.mubr.f32.gmra.mxu0 %v1312
      %v1629 = vpop.f32.mrf.mxu0
      %v1630 = vadd.f32 %v1485, %v1629
      %v1631 = vpop.f32.mrf.mxu0
      %1632 = vmatprep.mubr.f32.mxu0 0.0
      %1633 = vmatmul.mubr.f32.gmra.mxu0 %v1315
      %v1634 = vpop.f32.mrf.mxu0
      %v1635 = vadd.f32 %v1490, %v1634
      %v1636 = vpop.f32.mrf.mxu0
      %1637 = vmatprep.mubr.f32.mxu0 0.0
      %1638 = vmatmul.mubr.f32.gmra.mxu0 %v1317
      %v1639 = vpop.f32.mrf.mxu0
      %v1640 = vadd.f32 %v1495, %v1639
      %v1641 = vpop.f32.mrf.mxu0
      %1642 = vmatprep.mubr.f32.mxu0 0.0
      %1643 = vmatmul.mubr.f32.gmra.mxu0 %v1320
      %v1644 = vpop.f32.mrf.mxu0
      %v1645 = vadd.f32 %v1500, %v1644
      %v1646 = vpop.f32.mrf.mxu0
      %1647 = vmatprep.mubr.f32.mxu0 0.0
      %1648 = vmatmul.mubr.f32.gmra.mxu0 %v1322
      %v1649 = vpop.f32.mrf.mxu0
      %v1650 = vadd.f32 %v1505, %v1649
      %v1651 = vpop.f32.mrf.mxu0
      %1652 = vmatprep.mubr.f32.mxu0 0.0
      %1653 = vmatmul.mubr.f32.gmra.mxu0 %v1325
      %v1654 = vpop.f32.mrf.mxu0
      %v1655 = vadd.f32 %v1510, %v1654
      %v1656 = vpop.f32.mrf.mxu0
      %1657 = vmatprep.mubr.f32.mxu0 0.0
      %1658 = vmatmul.mubr.f32.gmra.mxu0 %v1327
      %v1659 = vpop.f32.mrf.mxu0
      %v1660 = vadd.f32 %v1515, %v1659
      %v1661 = vpop.f32.mrf.mxu0
      %1662 = vmatprep.mubr.f32.mxu0 0.0
      %1663 = vmatmul.mubr.f32.gmra.mxu0 %v1330
      %v1664 = vpop.f32.mrf.mxu0
      %v1665 = vadd.f32 %v1520, %v1664
      %v1666 = vpop.f32.mrf.mxu0
      %1667 = vmatprep.mubr.f32.mxu0 0.0
      %1668 = vmatmul.mubr.f32.gmra.mxu0 %v1332
      %v1669 = vpop.f32.mrf.mxu0
      %v1670 = vadd.f32 %v1525, %v1669
      %v1671 = vpop.f32.mrf.mxu0
      %1672 = vmatprep.mubr.f32.mxu0 0.0
      %1673 = vmatmul.mubr.f32.gmra.mxu0 %v1335
      %v1674 = vpop.f32.mrf.mxu0
      %v1675 = vadd.f32 %v1530, %v1674
      %v1676 = vpop.f32.mrf.mxu0
      %1677 = vmatprep.mubr.f32.mxu0 0.0
      %1678 = vmatmul.mubr.f32.gmra.mxu0 %v1337
      %v1679 = vpop.f32.mrf.mxu0
      %v1680 = vadd.f32 %v1535, %v1679
      %v1681 = vpop.f32.mrf.mxu0
      %1682 = vmatprep.mubr.f32.mxu0 0.0
      %1683 = vmatmul.mubr.f32.gmra.mxu0 %v1340
      %v1684 = vpop.f32.mrf.mxu0
      %v1685 = vadd.f32 %v1540, %v1684
      %v1686 = vpop.f32.mrf.mxu0
      %1687 = vmatprep.mubr.f32.mxu0 0.0
      %1688 = vmatmul.mubr.f32.gmra.mxu0 %v1342
      %v1689 = vpop.f32.mrf.mxu0
      %v1690 = vadd.f32 %v1545, %v1689
      %v1691 = vpop.f32.mrf.mxu0
      %1692 = vmatprep.mubr.f32.mxu0 0.0
      %1693 = vmatmul.mubr.f32.gmra.mxu0 %v1345
      %v1694 = vpop.f32.mrf.mxu0
      %v1695 = vadd.f32 %v1550, %v1694
      %v1696 = vpop.f32.mrf.mxu0
      %1697 = vmatprep.mubr.f32.mxu0 0.0
      %1698 = vmatmul.mubr.f32.gmra.mxu0 %v1347
      %v1699 = vpop.f32.mrf.mxu0
      %v1700 = vadd.f32 %v1555, %v1699
      %v1701 = vpop.f32.mrf.mxu0
      %1702 = vdwg.mxu0
      %v1703 = vadd.f32 %v1123, %v1625
      %v1704 = vadd.f32 %v1128, %v1630
      %v1705 = vadd.f32 %v1133, %v1635
      %v1706 = vadd.f32 %v1138, %v1640
      %v1707 = vadd.f32 %v1143, %v1645
      %v1708 = vadd.f32 %v1148, %v1650
      %v1709 = vadd.f32 %v1153, %v1655
      %v1710 = vadd.f32 %v1158, %v1660
      %v1711 = vadd.f32 %v1163, %v1665
      %v1712 = vadd.f32 %v1168, %v1670
      %v1713 = vadd.f32 %v1173, %v1675
      %v1714 = vadd.f32 %v1178, %v1680
      %v1715 = vadd.f32 %v1183, %v1685
      %v1716 = vadd.f32 %v1188, %v1690
      %v1717 = vadd.f32 %v1193, %v1695
      %v1718 = vadd.f32 %v1198, %v1700
      %v1719 = vld [vmem:[%s2] sm:$0x1]
      %v1721 = vlaneseq
      %v1722 = vshrl.u32 %v1721, 7
      %v1723 = vsub.s32 0, %v1722
      %v1724 = vrot.slane %v1719, %v1723
      %v1726 = vadd.f32 %v1703, %v1724
      %v1727 = vadd.f32 %v1704, %v1724
      %v1728 = vadd.f32 %v1705, %v1724
      %v1729 = vadd.f32 %v1706, %v1724
      %v1730 = vadd.f32 %v1707, %v1724
      %v1731 = vadd.f32 %v1708, %v1724
      %v1732 = vadd.f32 %v1709, %v1724
      %v1733 = vadd.f32 %v1710, %v1724
      %v1734 = vadd.f32 %v1711, %v1724
      %v1735 = vadd.f32 %v1712, %v1724
      %v1736 = vadd.f32 %v1713, %v1724
      %v1737 = vadd.f32 %v1714, %v1724
      %v1738 = vadd.f32 %v1715, %v1724
      %v1739 = vadd.f32 %v1716, %v1724
      %v1740 = vadd.f32 %v1717, %v1724
      %v1741 = vadd.f32 %v1718, %v1724
      %v1742 = vmax.f32 %v1726, 0.0
      %v1743 = vmax.f32 %v1727, 0.0
      %v1744 = vmax.f32 %v1728, 0.0
      %v1745 = vmax.f32 %v1729, 0.0
      %v1746 = vmax.f32 %v1730, 0.0
      %v1747 = vmax.f32 %v1731, 0.0
      %v1748 = vmax.f32 %v1732, 0.0
      %v1749 = vmax.f32 %v1733, 0.0
      %v1750 = vmax.f32 %v1734, 0.0
      %v1751 = vmax.f32 %v1735, 0.0
      %v1752 = vmax.f32 %v1736, 0.0
      %v1753 = vmax.f32 %v1737, 0.0
      %v1754 = vmax.f32 %v1738, 0.0
      %v1755 = vmax.f32 %v1739, 0.0
      %v1756 = vmax.f32 %v1740, 0.0
      %v1757 = vmax.f32 %v1741, 0.0
      %1758 = vst [vmem:[%s194] sm:$0xff] %v1742
      %1759 = vst [vmem:[%s194 + $0x8] sm:$0xff] %v1743
      %1760 = vst [vmem:[%s194 + $0x10] sm:$0xff] %v1744
      %1761 = vst [vmem:[%s194 + $0x18] sm:$0xff] %v1745
      %1762 = vst [vmem:[%s194 + $0x20] sm:$0xff] %v1746
      %1763 = vst [vmem:[%s194 + $0x28] sm:$0xff] %v1747
      %1764 = vst [vmem:[%s194 + $0x30] sm:$0xff] %v1748
      %1765 = vst [vmem:[%s194 + $0x38] sm:$0xff] %v1749
      %1766 = vst [vmem:[%s194 + $0x40] sm:$0xff] %v1750
      %1767 = vst [vmem:[%s194 + $0x48] sm:$0xff] %v1751
      %1768 = vst [vmem:[%s194 + $0x50] sm:$0xff] %v1752
      %1769 = vst [vmem:[%s194 + $0x58] sm:$0xff] %v1753
      %1770 = vst [vmem:[%s194 + $0x60] sm:$0xff] %v1754
      %1771 = vst [vmem:[%s194 + $0x68] sm:$0xff] %v1755
      %1772 = vst [vmem:[%s194 + $0x70] sm:$0xff] %v1756
      %1773 = vst [vmem:[%s194 + $0x78] sm:$0xff] %v1757
      %s1774 = smul.u32 8, %s19
      %p1775 = scmp.lt.s32.totalorder %s18, 1
      %s1776 = scalar_select %p1775, %s18, 1
      %p1777 = scmp.lt.s32.totalorder %s1774, 15
      %s1778 = scalar_select %p1777, %s1774, 15
      %s1779 = smul.addr %s1778, 2
      %s1780 = smul.addr %s1776, 32
      %s1781 = sadd.s32 %s1779, %s1780
      %s1782 = smul.addr %s1781, 8
      %s1783 = scalar_lea.vmem %s3, %s1782
      // Predicated region
      $region33: #{bottleneck_forward.6} parent=31 // pred_check
        %p1784 = pneg %p114
      $region34: #{bottleneck_forward.6} parent=31 // pred_check_branch
        %1786 = sbr.rel (%p1784) target = $region36
      $region35: #{bottleneck_forward.6} parent=31 // pred_region
        %s1787 = smul.u32 8, %s19
      $region36: #{bottleneck_forward.6} parent=31 // pred_fallthru
        _
    $region32: #{bottleneck_forward.6} parent=5 // pred_fallthru
      _
    %p1788 = scmp.le.s32.totalorder 2, %s9
    // Predicated region
    $region37: #{bottleneck_forward.6} parent=5 // pred_check
      %p1789 = pneg %p1788
    $region38: #{bottleneck_forward.6} parent=5 // pred_check_branch
      %1791 = sbr.rel (%p1789) target = $region40
    $region39: #{bottleneck_forward.6} parent=5 // pred_region
      %s1792 = ssub.s32 %s9, 2
      // Predicated region
      $region41: #{bottleneck_forward.6} parent=39 // pred_check
        %p1793 = pneg %p120
      $region42: #{bottleneck_forward.6} parent=39 // pred_check_branch
        %1795 = sbr.rel (%p1793) target = $region44
      $region43: #{bottleneck_forward.6} parent=39 // pred_region
        %s1796 = smul.u32 8, %s21
        %p1797 = scmp.lt.s32.totalorder %s20, 1
        %s1798 = scalar_select %p1797, %s20, 1
        %p1799 = scmp.lt.s32.totalorder %s1796, 15
        %s1800 = scalar_select %p1799, %s1796, 15
        %s1801 = smul.addr %s1800, 2
        %s1802 = smul.addr %s1798, 32
        %s1803 = sadd.s32 %s1801, %s1802
        %s1804 = smul.addr %s1803, 8
        %s1805 = scalar_lea.vmem %s3, %s1804
      $region44: #{bottleneck_forward.6} parent=39 // pred_fallthru
        _
    $region40: #{bottleneck_forward.6} parent=5 // pred_fallthru
      _
  $region6: #{bottleneck_forward.6} parent=0 // loop_footer
    %s13 = sadd.s32 1, %s9
  $region7: #{bottleneck_forward.6} parent=0 // loop_footer_branch
    %8 = sbr.rel target = $region3
  $region8: #{bottleneck_forward.6} parent=0 // loop_exit
    _

// kernel: bottleneck_forward.9
$region0: #{bottleneck_forward.9}
  #allocation0 [shape = 'u32[]', space=smem, size = 0x4, offset = 0x4, fixed_abs, tag = 'smem constant byte address 0x4 - core index']
  #allocation1 [shape = 'u32[144,128]{1,0:T(1,128)}', space=vmem, size = 0x12000, scoped, tag = 'internal scratch']
  %s0 = inlined_call_operand.vmem [shape: f32[198], index: 0, kind: input, shape index: {}]
  %s1 = inlined_call_operand.vmem [shape: f32[2,16,16,128], index: 1, kind: input, shape index: {}]
  %s2 = inlined_call_operand.vmem [shape: f32[2,16,16,128], index: 2, kind: input, shape index: {}]
  %s3 = inlined_call_operand.vmem [shape: f32[2,16,16,128], index: 3, kind: output, shape index: {}]
  %s4 = sld [smem:[#allocation0]]
  $region49: #{bottleneck_forward.9} parent=0
    _
  %s6 = ssub.s32 1, %s4
  %s7 = scalar_select 0, %s6, %s4
  $region1: #{bottleneck_forward.9} parent=0
    #allocation2 [shape = 'u8[1024]{0}', space=smem, size = 0x400, scoped, tag = 'input window, operand 0, single buffered']
    #allocation3 [shape = 's32[2]{0}', space=sflag, size = 0x8, scoped, tag = 'scoped memory for bottleneck_forward.9']
    %8 = vsyncpa [#allocation3], 0
    loop: start=0, step=1, limit=4
    $region2: #{bottleneck_forward.9} parent=1 // loop_pre_header
      _
    $region3: #{bottleneck_forward.9} parent=1 // loop_header
      %s10 = sphi 0, %s14
      %p11 = scmp.ge.s32.totalorder %s10, 4
      %s18 = sphi 0, %s18
      %s20 = sphi 0, %s18
      %s21 = sphi 0, %s20
      %s35 = sphi 0, %s21
      %s41 = sphi 0, %s43
      %s44 = sphi 0, %s41
      %s45 = sphi 0, %s44
      %s61 = sphi 0, %s45
      %s67 = sphi 0, %s69
      %s70 = sphi 0, %s67
      %s71 = sphi 0, %s70
      %s87 = sphi 0, %s71
      %s93 = sphi 0, %s95
      %s96 = sphi 0, %s93
      %s97 = sphi 0, %s96
      %s113 = sphi 0, %s97
    $region4: #{bottleneck_forward.9} parent=1 // loop_header_branch
      %13 = sbr.rel (%p11) target = $region8
    $region5: #{bottleneck_forward.9} parent=1 // loop_body
      %s15 = ssub.s32 %s10, 1
      %s16 = ssub.s32 %s10, 2
      %s17 = sadd.s32 %s10, 1
      %s19 = sadd.s32 %s18, 1
      %p22 = scmp.eq.s32.totalorder %s10, 1
      %p23 = scmp.ne.s32.totalorder %s18, %s20
      %p24 = scmp.eq.s32.totalorder %s10, 0
      %p25 = por %p23, %p24
      %p26 = scmp.ne.s32.totalorder %s18, %s20
      %p27 = scmp.eq.s32.totalorder %s15, 1
      %p28 = por %p26, %p27
      %p29 = scmp.ne.s32.totalorder %s20, %s21
      %p30 = scmp.eq.s32.totalorder %s15, 0
      %p31 = por %p29, %p30
      %p32 = scmp.ne.s32.totalorder %s20, %s21
      %p33 = scmp.eq.s32.totalorder %s16, 1
      %p34 = por %p32, %p33
      %p36 = scmp.ne.s32.totalorder %s21, %s35
      %p37 = scmp.eq.s32.totalorder %s16, 0
      %p38 = por %p36, %p37
      %s39 = ssub.s32 %s10, %s17
      %p40 = scmp.eq.s32.totalorder %s39, 0
      %s42 = sadd.s32 %s41, 1
      %s43 = scalar_select %p40, %s41, %s42
      %p46 = pneg %p40
      %p47 = scmp.eq.s32.totalorder %s10, 1
      %p48 = por %p46, %p47
      %p49 = scmp.ne.s32.totalorder %s41, %s44
      %p50 = scmp.eq.s32.totalorder %s10, 0
      %p51 = por %p49, %p50
      %p52 = scmp.ne.s32.totalorder %s41, %s44
      %p53 = scmp.eq.s32.totalorder %s15, 1
      %p54 = por %p52, %p53
      %p55 = scmp.ne.s32.totalorder %s44, %s45
      %p56 = scmp.eq.s32.totalorder %s15, 0
      %p57 = por %p55, %p56
      %p58 = scmp.ne.s32.totalorder %s44, %s45
      %p59 = scmp.eq.s32.totalorder %s16, 1
      %p60 = por %p58, %p59
      %p62 = scmp.ne.s32.totalorder %s45, %s61
      %p63 = scmp.eq.s32.totalorder %s16, 0
      %p64 = por %p62, %p63
      %s65 = ssub.s32 %s10, %s17
      %p66 = scmp.eq.s32.totalorder %s65, 0
      %s68 = sadd.s32 %s67, 1
      %s69 = scalar_select %p66, %s67, %s68
      %p72 = pneg %p66
      %p73 = scmp.eq.s32.totalorder %s10, 1
      %p74 = por %p72, %p73
      %p75 = scmp.ne.s32.totalorder %s67, %s70
      %p76 = scmp.eq.s32.totalorder %s10, 0
      %p77 = por %p75, %p76
      %p78 = scmp.ne.s32.totalorder %s67, %s70
      %p79 = scmp.eq.s32.totalorder %s15, 1
      %p80 = por %p78, %p79
      %p81 = scmp.ne.s32.totalorder %s70, %s71
      %p82 = scmp.eq.s32.totalorder %s15, 0
      %p83 = por %p81, %p82
      %p84 = scmp.ne.s32.totalorder %s70, %s71
      %p85 = scmp.eq.s32.totalorder %s16, 1
      %p86 = por %p84, %p85
      %p88 = scmp.ne.s32.totalorder %s71, %s87
      %p89 = scmp.eq.s32.totalorder %s16, 0
      %p90 = por %p88, %p89
      %s91 = ssub.s32 %s10, %s17
      %p92 = scmp.eq.s32.totalorder %s91, 0
      %s94 = sadd.s32 %s93, 1
      %s95 = scalar_select %p92, %s93, %s94
      %p98 = pneg %p92
      %p99 = scmp.eq.s32.totalorder %s10, 1
      %p100 = por %p98, %p99
      %p101 = scmp.ne.s32.totalorder %s93, %s96
      %p102 = scmp.eq.s32.totalorder %s10, 0
      %p103 = por %p101, %p102
      %p104 = scmp.ne.s32.totalorder %s93, %s96
      %p105 = scmp.eq.s32.totalorder %s15, 1
      %p106 = por %p104, %p105
      %p107 = scmp.ne.s32.totalorder %s96, %s97
      %p108 = scmp.eq.s32.totalorder %s15, 0
      %p109 = por %p107, %p108
      %p110 = scmp.ne.s32.totalorder %s96, %s97
      %p111 = scmp.eq.s32.totalorder %s16, 1
      %p112 = por %p110, %p111
      %p114 = scmp.ne.s32.totalorder %s97, %s113
      %p115 = scmp.eq.s32.totalorder %s16, 0
      %p116 = por %p114, %p115
      %p117 = scmp.le.s32.totalorder 1, %s10
      %p118 = scmp.lt.s32.totalorder %s10, 3
      %p119 = pnand %p117, %p118
      %p120 = pneg %p119
      // Predicated region
      $region9: #{bottleneck_forward.9} parent=5 // pred_check
        _
      $region10: #{bottleneck_forward.9} parent=5 // pred_check_branch
        %122 = sbr.rel (%p119) target = $region12
      $region11: #{bottleneck_forward.9} parent=5 // pred_region
        %s123 = ssub.s32 %s10, 1
        // Predicated region
        $region13: #{bottleneck_forward.9} parent=11 // pred_check
          %p124 = pneg %p31
        $region14: #{bottleneck_forward.9} parent=11 // pred_check_branch
          %126 = sbr.rel (%p124) target = $region16
        $region15: #{bottleneck_forward.9} parent=11 // pred_region
          %s128 = ssub.s32 32, 32
          %129 = vsyncadd [#allocation3], %s128
          %s131 = sshll.u32 %s0, 4
          %s132 = int_to_ptr.vmem [resolvable:$true] %s131
          %134 = dma.vmem_to_smem %s132, 32, [#allocation2], [#allocation3]
        $region16: #{bottleneck_forward.9} parent=11 // pred_fallthru
          _
      $region12: #{bottleneck_forward.9} parent=5 // pred_fallthru
        _
      %p135 = scmp.lt.s32.totalorder %s10, 2
      // Predicated region
      $region17: #{bottleneck_forward.9} parent=5 // pred_check
        %p136 = pneg %p135
      $region18: #{bottleneck_forward.9} parent=5 // pred_check_branch
        %138 = sbr.rel (%p136) target = $region20
      $region19: #{bottleneck_forward.9} parent=5 // pred_region
        // Predicated region
        $region21: #{bottleneck_forward.9} parent=19 // pred_check
          %p139 = pneg %p51
        $region22: #{bottleneck_forward.9} parent=19 // pred_check_branch
          %141 = sbr.rel (%p139) target = $region24
        $region23: #{bottleneck_forward.9} parent=19 // pred_region
          %p142 = scmp.lt.s32.totalorder %s10, 1
          %s143 = scalar_select %p142, %s10, 1
          %s144 = smul.addr %s143, 32
          %s145 = smul.addr %s144, 8
          %s146 = scalar_lea.vmem %s1, %s145
        $region24: #{bottleneck_forward.9} parent=19 // pred_fallthru
          _
        // Predicated region
        $region25: #{bottleneck_forward.9} parent=19 // pred_check
          %p147 = pneg %p77
        $region26: #{bottleneck_forward.9} parent=19 // pred_check_branch
          %149 = sbr.rel (%p147) target = $region28
        $region27: #{bottleneck_forward.9} parent=19 // pred_region
          %p150 = scmp.lt.s32.totalorder %s10, 1
          %s151 = scalar_select %p150, %s10, 1
          %s152 = smul.addr %s151, 32
          %s153 = smul.addr %s152, 8
          %s154 = scalar_lea.vmem %s2, %s153
        $region28: #{bottleneck_forward.9} parent=19 // pred_fallthru
          _
      $region20: #{bottleneck_forward.9} parent=5 // pred_fallthru
        _
      %p155 = scmp.le.s32.totalorder 1, %s10
      %p156 = scmp.lt.s32.totalorder %s10, 3
      %p157 = pnand %p155, %p156
      %p158 = pneg %p157
      // Predicated region
      $region29: #{bottleneck_forward.9} parent=5 // pred_check
        _
      $region30: #{bottleneck_forward.9} parent=5 // pred_check_branch
        %160 = sbr.rel (%p157) target = $region32
      $region31: #{bottleneck_forward.9} parent=5 // pred_region
        %s161 = ssub.s32 %s10, 1
        // Predicated region
        $region33: #{bottleneck_forward.9} parent=31 // pred_check
          %p162 = pneg %p31
        $region34: #{bottleneck_forward.9} parent=31 // pred_check_branch
          %164 = sbr.rel (%p162) target = $region36
        $region35: #{bottleneck_forward.9} parent=31 // pred_region
          %165 = dma.done [#allocation3], 32
        $region36: #{bottleneck_forward.9} parent=31 // pred_fallthru
          _
        %166 = sfence
        %p167 = pneg %p31
        %p168 = pneg %p28
        %p169 = scmp.lt.s32.totalorder %s15, 1
        %s170 = scalar_select %p169, %s15, 1
        %s171 = smul.addr %s170, 32
        %s172 = smul.addr %s171, 8
        %s173 = scalar_lea.vmem %s1, %s172
        %p174 = pneg %p57
        %p175 = pneg %p54
        %p176 = scmp.lt.s32.totalorder %s15, 1
        %s177 = scalar_select %p176, %s15, 1
        %s178 = smul.addr %s177, 32
        %s179 = smul.addr %s178, 8
        %s180 = scalar_lea.vmem %s2, %s179
        %p181 = pneg %p83
        %p182 = pneg %p80
        %p183 = pneg %p109
        %p184 = pneg %p106
        %p185 = scmp.lt.s32.totalorder %s15, 1
        %s186 = scalar_select %p185, %s15, 1
        %s187 = smul.addr %s186, 32
        %s188 = smul.addr %s187, 8
        %s189 = scalar_lea.vmem %s3, %s188
        %p190 = scmp.lt.s32.totalorder %s15, 1
        %s191 = scalar_select %p190, %s15, 1
        %s192 = smul.addr %s191, 32
        %s193 = smul.addr %s192, 8
        %s194 = scalar_lea.vmem %s1, %s193
        %p195 = scmp.lt.s32.totalorder %s15, 1
        %s196 = scalar_select %p195, %s15, 1
        %s197 = smul.addr %s196, 32
        %s198 = smul.addr %s197, 8
        %s199 = scalar_lea.vmem %s2, %s198
        %p200 = scmp.lt.s32.totalorder %s15, 1
        %s201 = scalar_select %p200, %s15, 1
        %s202 = smul.addr %s201, 32
        %s203 = smul.addr %s202, 8
        %s204 = scalar_lea.vmem %s3, %s203
        %v205 = vld [vmem:[%s194] sm:$0xff]
        %v206 = vld [vmem:[%s194 + $0x8] sm:$0xff]
        %v207 = vld [vmem:[%s194 + $0x10] sm:$0xff]
        %v208 = vld [vmem:[%s194 + $0x18] sm:$0xff]
        %v209 = vld [vmem:[%s194 + $0x20] sm:$0xff]
        %v210 = vld [vmem:[%s194 + $0x28] sm:$0xff]
        %v211 = vld [vmem:[%s194 + $0x30] sm:$0xff]
        %v212 = vld [vmem:[%s194 + $0x38] sm:$0xff]
        %v213 = vld [vmem:[%s194 + $0x40] sm:$0xff]
        %v214 = vld [vmem:[%s194 + $0x48] sm:$0xff]
        %v215 = vld [vmem:[%s194 + $0x50] sm:$0xff]
        %v216 = vld [vmem:[%s194 + $0x58] sm:$0xff]
        %v217 = vld [vmem:[%s194 + $0x60] sm:$0xff]
        %v218 = vld [vmem:[%s194 + $0x68] sm:$0xff]
        %v219 = vld [vmem:[%s194 + $0x70] sm:$0xff]
        %v220 = vld [vmem:[%s194 + $0x78] sm:$0xff]
        %v221 = vld [vmem:[%s194 + $0x80] sm:$0xff]
        %v222 = vld [vmem:[%s194 + $0x88] sm:$0xff]
        %v223 = vld [vmem:[%s194 + $0x90] sm:$0xff]
        %v224 = vld [vmem:[%s194 + $0x98] sm:$0xff]
        %v225 = vld [vmem:[%s194 + $0xa0] sm:$0xff]
        %v226 = vld [vmem:[%s194 + $0xa8] sm:$0xff]
        %v227 = vld [vmem:[%s194 + $0xb0] sm:$0xff]
        %v228 = vld [vmem:[%s194 + $0xb8] sm:$0xff]
        %v229 = vld [vmem:[%s194 + $0xc0] sm:$0xff]
        %v230 = vld [vmem:[%s194 + $0xc8] sm:$0xff]
        %v231 = vld [vmem:[%s194 + $0xd0] sm:$0xff]
        %v232 = vld [vmem:[%s194 + $0xd8] sm:$0xff]
        %v233 = vld [vmem:[%s194 + $0xe0] sm:$0xff]
        %v234 = vld [vmem:[%s194 + $0xe8] sm:$0xff]
        %v235 = vld [vmem:[%s194 + $0xf0] sm:$0xff]
        %v236 = vld [vmem:[%s194 + $0xf8] sm:$0xff]
        %v237 = vmax.f32 %v205, %v209
        %v238 = vmax.f32 %v207, %v211
        %v239 = vmax.f32 %v237, %v213
        %v240 = vmax.f32 %v238, %v215
        %v241 = vmax.f32 %v239, %v217
        %v242 = vmax.f32 %v240, %v219
        %v243 = vmax.f32 %v241, %v221
        %v244 = vmax.f32 %v242, %v223
        %v245 = vmax.f32 %v243, %v225
        %v246 = vmax.f32 %v244, %v227
        %v247 = vmax.f32 %v245, %v229
        %v248 = vmax.f32 %v246, %v231
        %v249 = vmax.f32 %v247, %v233
        %v250 = vmax.f32 %v248, %v235
        %v251 = vmax.f32 %v249, %v250
        %v252 = vmax.f32 %v206, %v210
        %v253 = vmax.f32 %v208, %v212
        %v254 = vmax.f32 %v252, %v214
        %v255 = vmax.f32 %v253, %v216
        %v256 = vmax.f32 %v254, %v218
        %v257 = vmax.f32 %v255, %v220
        %v258 = vmax.f32 %v256, %v222
        %v259 = vmax.f32 %v257, %v224
        %v260 = vmax.f32 %v258, %v226
        %v261 = vmax.f32 %v259, %v228
        %v262 = vmax.f32 %v260, %v230
        %v263 = vmax.f32 %v261, %v232
        %v264 = vmax.f32 %v262, %v234
        %v265 = vmax.f32 %v263, %v236
        %v266 = vmax.f32 %v264, %v265
        %v267 = vadd.f32 %v205, %v207
        %v268 = vadd.f32 %v267, %v209
        %v269 = vadd.f32 %v268, %v211
        %v270 = vadd.f32 %v269, %v213
        %v271 = vadd.f32 %v270, %v215
        %v272 = vadd.f32 %v271, %v217
        %v273 = vadd.f32 %v272, %v219
        %v274 = vadd.f32 %v273, %v221
        %v275 = vadd.f32 %v274, %v223
        %v276 = vadd.f32 %v275, %v225
        %v277 = vadd.f32 %v276, %v227
        %v278 = vadd.f32 %v277, %v229
        %v279 = vadd.f32 %v278, %v231
        %v280 = vadd.f32 %v279, %v233
        %v281 = vadd.f32 %v280, %v235
        %v282 = vadd.f32 %v206, %v208
        %v283 = vadd.f32 %v282, %v210
        %v284 = vadd.f32 %v283, %v212
        %v285 = vadd.f32 %v284, %v214
        %v286 = vadd.f32 %v285, %v216
        %v287 = vadd.f32 %v286, %v218
        %v288 = vadd.f32 %v287, %v220
        %v289 = vadd.f32 %v288, %v222
        %v290 = vadd.f32 %v289, %v224
        %v291 = vadd.f32 %v290, %v226
        %v292 = vadd.f32 %v291, %v228
        %v293 = vadd.f32 %v292, %v230
        %v294 = vadd.f32 %v293, %v232
        %v295 = vadd.f32 %v294, %v234
        %v296 = vadd.f32 %v295, %v236
        %v297 = vrcp.pop 16.0
        %v298 = vmul.f32 %v281, %v297
        %v299 = vmul.f32 %v296, %v297
        %vm302 = vcmask 1042432
        %v303 = vrot.slane %v251, 5
        %v304 = vrot.slane %v266, 5
        %v305 = vsel %vm302, %v303, %v304
        %v308 = vsel %vm302, 0.0, %v303
        %v309 = vsel %vm302, %v304, 0.0
        %312 = vrot.lane.b32.xlu0 %v308, 3
        %v313 = vpop.permute.xlu0 %312
        %314 = vrot.lane.b32.xlu0 %v305, 3
        %v315 = vpop.permute.xlu0 %314
        %316 = vrot.lane.b32.xlu0 %v309, 3
        %v317 = vpop.permute.xlu0 %316
        %vm321 = vcmask 23552
        %v322 = vsel %vm321, 0.0, %v313
        %v323 = vsel %vm321, 0.0, %v315
        %v324 = vsel %vm321, 0.0, %v317
        %vm325 = vcmask 154624
        %v326 = vsel %vm325, %v322, 0.0
        %v327 = vsel %vm325, %v323, 0.0
        %v328 = vsel %vm325, %v324, 0.0
        %v331 = vrot.slane %v298, 5
        %v332 = vrot.slane %v299, 5
        %v333 = vsel %vm302, %v331, %v332
        %v336 = vsel %vm302, 0.0, %v331
        %v337 = vsel %vm302, %v332, 0.0
        %340 = vrot.lane.b32.xlu0 %v336, 3
        %v341 = vpop.permute.xlu0 %340
        %342 = vrot.lane.b32.xlu0 %v333, 3
        %v343 = vpop.permute.xlu0 %342
        %344 = vrot.lane.b32.xlu0 %v337, 3
        %v345 = vpop.permute.xlu0 %344
        %v349 = vsel %vm321, 0.0, %v341
        %v350 = vsel %vm321, 0.0, %v343
        %v351 = vsel %vm321, 0.0, %v345
        %v352 = vsel %vm325, %v349, 0.0
        %v353 = vsel %vm325, %v350, 0.0
        %v354 = vsel %vm325, %v351, 0.0
        %s355 = sld [smem:[#allocation2]]
        %v356 = vstv %s355
        %v357 = vmul.f32 %v356, %v326
        %v358 = vmul.f32 %v356, %v327
        %v359 = vadd.f32 %v357, 0.0
        %v360 = vadd.f32 %v358, 0.0
        %s361 = sld [smem:[#allocation2 + $0x1]]
        %v362 = vstv %s361
        %v363 = vmul.f32 %v362, %v326
        %v364 = vmul.f32 %v362, %v327
        %367 = vrot.lane.b32.xlu0 %v363, 127
        %v368 = vpop.permute.xlu0 %367
        %369 = vrot.lane.b32.xlu0 %v364, 127
        %v370 = vpop.permute.xlu0 %369
        %v373 = vadd.f32 %v359, %v368
        %v374 = vadd.f32 %v360, %v370
        %s375 = sld [smem:[#allocation2 + $0x2]]
        %v376 = vstv %s375
        %v377 = vmul.f32 %v376, %v326
        %v378 = vmul.f32 %v376, %v327
        %381 = vrot.lane.b32.xlu0 %v377, 126
        %v382 = vpop.permute.xlu0 %381
        %383 = vrot.lane.b32.xlu0 %v378, 126
        %v384 = vpop.permute.xlu0 %383
        %v387 = vadd.f32 %v373, %v382
        %v388 = vadd.f32 %v374, %v384
        %s389 = sld [smem:[#allocation2 + $0x3]]
        %v390 = vstv %s389
        %v391 = vmul.f32 %v390, %v326
        %v392 = vmul.f32 %v390, %v327
        %395 = vrot.lane.b32.xlu0 %v391, 125
        %v396 = vpop.permute.xlu0 %395
        %397 = vrot.lane.b32.xlu0 %v392, 125
        %v398 = vpop.permute.xlu0 %397
        %v401 = vadd.f32 %v387, %v396
        %v402 = vadd.f32 %v388, %v398
        %s403 = sld [smem:[#allocation2 + $0x4]]
        %v404 = vstv %s403
        %v405 = vmul.f32 %v404, %v326
        %v406 = vmul.f32 %v404, %v327
        %409 = vrot.lane.b32.xlu0 %v405, 124
        %v410 = vpop.permute.xlu0 %409
        %411 = vrot.lane.b32.xlu0 %v406, 124
        %v412 = vpop.permute.xlu0 %411
        %v415 = vadd.f32 %v401, %v410
        %v416 = vadd.f32 %v402, %v412
        %s417 = sld [smem:[#allocation2 + $0x5]]
        %v418 = vstv %s417
        %v419 = vmul.f32 %v418, %v326
        %v420 = vmul.f32 %v418, %v327
        %423 = vrot.lane.b32.xlu0 %v419, 123
        %v424 = vpop.permute.xlu0 %423
        %425 = vrot.lane.b32.xlu0 %v420, 123
        %v426 = vpop.permute.xlu0 %425
        %v429 = vadd.f32 %v415, %v424
        %v430 = vadd.f32 %v416, %v426
        %s431 = sld [smem:[#allocation2 + $0x6]]
        %v432 = vstv %s431
        %v433 = vmul.f32 %v432, %v326
        %v434 = vmul.f32 %v432, %v327
        %437 = vrot.lane.b32.xlu0 %v433, 122
        %v438 = vpop.permute.xlu0 %437
        %439 = vrot.lane.b32.xlu0 %v434, 122
        %v440 = vpop.permute.xlu0 %439
        %v443 = vadd.f32 %v429, %v438
        %v444 = vadd.f32 %v430, %v440
        %s445 = sld [smem:[#allocation2 + $0x7]]
        %v446 = vstv %s445
        %v447 = vmul.f32 %v446, %v326
        %v448 = vmul.f32 %v446, %v327
        %v449 = vmul.f32 %v446, %v328
        %vm453 = vcmask 1046528
        %v454 = vrot.slane %v447, 1
        %v455 = vrot.slane %v448, 1
        %v456 = vsel %vm453, %v454, %v455
        %v457 = vrot.slane %v449, 1
        %v458 = vsel %vm453, %v455, %v457
        %v461 = vadd.f32 %v443, %v456
        %v462 = vadd.f32 %v444, %v458
        %s463 = sld [smem:[#allocation2 + $0x8]]
        %v464 = vstv %s463
        %v465 = vmul.f32 %v464, %v326
        %v466 = vmul.f32 %v464, %v327
        %v467 = vmul.f32 %v464, %v328
        %v471 = vrot.slane %v465, 1
        %v472 = vrot.slane %v466, 1
        %v473 = vsel %vm453, %v471, %v472
        %v474 = vrot.slane %v467, 1
        %v475 = vsel %vm453, %v472, %v474
        %476 = vrot.lane.b32.xlu0 %v473, 127
        %v477 = vpop.permute.xlu0 %476
        %478 = vrot.lane.b32.xlu0 %v475, 127
        %v479 = vpop.permute.xlu0 %478
        %v482 = vadd.f32 %v461, %v477
        %v483 = vadd.f32 %v462, %v479
        %s484 = sld [smem:[#allocation2 + $0x9]]
        %v485 = vstv %s484
        %v486 = vmul.f32 %v485, %v326
        %v487 = vmul.f32 %v485, %v327
        %v488 = vmul.f32 %v485, %v328
        %v492 = vrot.slane %v486, 1
        %v493 = vrot.slane %v487, 1
        %v494 = vsel %vm453, %v492, %v493
        %v495 = vrot.slane %v488, 1
        %v496 = vsel %vm453, %v493, %v495
        %497 = vrot.lane.b32.xlu0 %v494, 126
        %v498 = vpop.permute.xlu0 %497
        %499 = vrot.lane.b32.xlu0 %v496, 126
        %v500 = vpop.permute.xlu0 %499
        %v503 = vadd.f32 %v482, %v498
        %v504 = vadd.f32 %v483, %v500
        %s505 = sld [smem:[#allocation2 + $0xa]]
        %v506 = vstv %s505
        %v507 = vmul.f32 %v506, %v326
        %v508 = vmul.f32 %v506, %v327
        %v509 = vmul.f32 %v506, %v328
        %v513 = vrot.slane %v507, 1
        %v514 = vrot.slane %v508, 1
        %v515 = vsel %vm453, %v513, %v514
        %v516 = vrot.slane %v509, 1
        %v517 = vsel %vm453, %v514, %v516
        %518 = vrot.lane.b32.xlu0 %v515, 125
        %v519 = vpop.permute.xlu0 %518
        %520 = vrot.lane.b32.xlu0 %v517, 125
        %v521 = vpop.permute.xlu0 %520
        %v524 = vadd.f32 %v503, %v519
        %v525 = vadd.f32 %v504, %v521
        %s526 = sld [smem:[#allocation2 + $0xb]]
        %v527 = vstv %s526
        %v528 = vmul.f32 %v527, %v326
        %v529 = vmul.f32 %v527, %v327
        %v530 = vmul.f32 %v527, %v328
        %v534 = vrot.slane %v528, 1
        %v535 = vrot.slane %v529, 1
        %v536 = vsel %vm453, %v534, %v535
        %v537 = vrot.slane %v530, 1
        %v538 = vsel %vm453, %v535, %v537
        %539 = vrot.lane.b32.xlu0 %v536, 124
        %v540 = vpop.permute.xlu0 %539
        %541 = vrot.lane.b32.xlu0 %v538, 124
        %v542 = vpop.permute.xlu0 %541
        %v545 = vadd.f32 %v524, %v540
        %v546 = vadd.f32 %v525, %v542
        %s547 = sld [smem:[#allocation2 + $0xc]]
        %v548 = vstv %s547
        %v549 = vmul.f32 %v548, %v326
        %v550 = vmul.f32 %v548, %v327
        %v551 = vmul.f32 %v548, %v328
        %v555 = vrot.slane %v549, 1
        %v556 = vrot.slane %v550, 1
        %v557 = vsel %vm453, %v555, %v556
        %v558 = vrot.slane %v551, 1
        %v559 = vsel %vm453, %v556, %v558
        %560 = vrot.lane.b32.xlu0 %v557, 123
        %v561 = vpop.permute.xlu0 %560
        %562 = vrot.lane.b32.xlu0 %v559, 123
        %v563 = vpop.permute.xlu0 %562
        %v566 = vadd.f32 %v545, %v561
        %v567 = vadd.f32 %v546, %v563
        %s568 = sld [smem:[#allocation2 + $0xd]]
        %v569 = vstv %s568
        %v570 = vmul.f32 %v569, %v326
        %v571 = vmul.f32 %v569, %v327
        %v572 = vmul.f32 %v569, %v328
        %v576 = vrot.slane %v570, 1
        %v577 = vrot.slane %v571, 1
        %v578 = vsel %vm453, %v576, %v577
        %v579 = vrot.slane %v572, 1
        %v580 = vsel %vm453, %v577, %v579
        %581 = vrot.lane.b32.xlu0 %v578, 122
        %v582 = vpop.permute.xlu0 %581
        %583 = vrot.lane.b32.xlu0 %v580, 122
        %v584 = vpop.permute.xlu0 %583
        %v587 = vadd.f32 %v566, %v582
        %v588 = vadd.f32 %v567, %v584
        %s589 = sld [smem:[#allocation2 + $0xe]]
        %v590 = vstv %s589
        %v591 = vmul.f32 %v590, %v326
        %v592 = vmul.f32 %v590, %v327
        %v593 = vmul.f32 %v590, %v328
        %vm597 = vcmask 1045504
        %v598 = vrot.slane %v591, 2
        %v599 = vrot.slane %v592, 2
        %v600 = vsel %vm597, %v598, %v599
        %v601 = vrot.slane %v593, 2
        %v602 = vsel %vm597, %v599, %v601
        %v605 = vadd.f32 %v587, %v600
        %v606 = vadd.f32 %v588, %v602
        %s607 = sld [smem:[#allocation2 + $0xf]]
        %v608 = vstv %s607
        %v609 = vmul.f32 %v608, %v326
        %v610 = vmul.f32 %v608, %v327
        %v611 = vmul.f32 %v608, %v328
        %v615 = vrot.slane %v609, 2
        %v616 = vrot.slane %v610, 2
        %v617 = vsel %vm597, %v615, %v616
        %v618 = vrot.slane %v611, 2
        %v619 = vsel %vm597, %v616, %v618
        %620 = vrot.lane.b32.xlu0 %v617, 127
        %v621 = vpop.permute.xlu0 %620
        %622 = vrot.lane.b32.xlu0 %v619, 127
        %v623 = vpop.permute.xlu0 %622
        %v626 = vadd.f32 %v605, %v621
        %v627 = vadd.f32 %v606, %v623
        %s628 = sld [smem:[#allocation2 + $0x10]]
        %v629 = vstv %s628
        %v630 = vmul.f32 %v629, %v326
        %v631 = vmul.f32 %v629, %v327
        %v632 = vmul.f32 %v629, %v328
        %v636 = vrot.slane %v630, 2
        %v637 = vrot.slane %v631, 2
        %v638 = vsel %vm597, %v636, %v637
        %v639 = vrot.slane %v632, 2
        %v640 = vsel %vm597, %v637, %v639
        %641 = vrot.lane.b32.xlu0 %v638, 126
        %v642 = vpop.permute.xlu0 %641
        %643 = vrot.lane.b32.xlu0 %v640, 126
        %v644 = vpop.permute.xlu0 %643
        %v647 = vadd.f32 %v626, %v642
        %v648 = vadd.f32 %v627, %v644
        %s649 = sld [smem:[#allocation2 + $0x11]]
        %v650 = vstv %s649
        %v651 = vmul.f32 %v650, %v326
        %v652 = vmul.f32 %v650, %v327
        %v653 = vmul.f32 %v650, %v328
        %v657 = vrot.slane %v651, 2
        %v658 = vrot.slane %v652, 2
        %v659 = vsel %vm597, %v657, %v658
        %v660 = vrot.slane %v653, 2
        %v661 = vsel %vm597, %v658, %v660
        %662 = vrot.lane.b32.xlu0 %v659, 125
        %v663 = vpop.permute.xlu0 %662
        %664 = vrot.lane.b32.xlu0 %v661, 125
        %v665 = vpop.permute.xlu0 %664
        %v668 = vadd.f32 %v647, %v663
        %v669 = vadd.f32 %v648, %v665
        %s670 = sld [smem:[#allocation2 + $0x12]]
        %v671 = vstv %s670
        %v672 = vmul.f32 %v671, %v326
        %v673 = vmul.f32 %v671, %v327
        %v674 = vmul.f32 %v671, %v328
        %v678 = vrot.slane %v672, 2
        %v679 = vrot.slane %v673, 2
        %v680 = vsel %vm597, %v678, %v679
        %v681 = vrot.slane %v674, 2
        %v682 = vsel %vm597, %v679, %v681
        %683 = vrot.lane.b32.xlu0 %v680, 124
        %v684 = vpop.permute.xlu0 %683
        %685 = vrot.lane.b32.xlu0 %v682, 124
        %v686 = vpop.permute.xlu0 %685
        %v689 = vadd.f32 %v668, %v684
        %v690 = vadd.f32 %v669, %v686
        %s691 = sld [smem:[#allocation2 + $0x13]]
        %v692 = vstv %s691
        %v693 = vmul.f32 %v692, %v326
        %v694 = vmul.f32 %v692, %v327
        %v695 = vmul.f32 %v692, %v328
        %v699 = vrot.slane %v693, 2
        %v700 = vrot.slane %v694, 2
        %v701 = vsel %vm597, %v699, %v700
        %v702 = vrot.slane %v695, 2
        %v703 = vsel %vm597, %v700, %v702
        %704 = vrot.lane.b32.xlu0 %v701, 123
        %v705 = vpop.permute.xlu0 %704
        %706 = vrot.lane.b32.xlu0 %v703, 123
        %v707 = vpop.permute.xlu0 %706
        %v710 = vadd.f32 %v689, %v705
        %v711 = vadd.f32 %v690, %v707
        %s712 = sld [smem:[#allocation2 + $0x14]]
        %v713 = vstv %s712
        %v714 = vmul.f32 %v713, %v326
        %v715 = vmul.f32 %v713, %v327
        %v716 = vmul.f32 %v713, %v328
        %v720 = vrot.slane %v714, 2
        %v721 = vrot.slane %v715, 2
        %v722 = vsel %vm597, %v720, %v721
        %v723 = vrot.slane %v716, 2
        %v724 = vsel %vm597, %v721, %v723
        %725 = vrot.lane.b32.xlu0 %v722, 122
        %v726 = vpop.permute.xlu0 %725
        %727 = vrot.lane.b32.xlu0 %v724, 122
        %v728 = vpop.permute.xlu0 %727
        %v731 = vadd.f32 %v710, %v726
        %v732 = vadd.f32 %v711, %v728
        %s733 = sld [smem:[#allocation2 + $0x15]]
        %v734 = vstv %s733
        %v735 = vmul.f32 %v734, %v326
        %v736 = vmul.f32 %v734, %v327
        %v737 = vmul.f32 %v734, %v328
        %vm741 = vcmask 1044480
        %v742 = vrot.slane %v735, 3
        %v743 = vrot.slane %v736, 3
        %v744 = vsel %vm741, %v742, %v743
        %v745 = vrot.slane %v737, 3
        %v746 = vsel %vm741, %v743, %v745
        %v749 = vadd.f32 %v731, %v744
        %v750 = vadd.f32 %v732, %v746
        %s751 = sld [smem:[#allocation2 + $0x16]]
        %v752 = vstv %s751
        %v753 = vmul.f32 %v752, %v326
        %v754 = vmul.f32 %v752, %v327
        %v755 = vmul.f32 %v752, %v328
        %v759 = vrot.slane %v753, 3
        %v760 = vrot.slane %v754, 3
        %v761 = vsel %vm741, %v759, %v760
        %v762 = vrot.slane %v755, 3
        %v763 = vsel %vm741, %v760, %v762
        %764 = vrot.lane.b32.xlu0 %v761, 127
        %v765 = vpop.permute.xlu0 %764
        %766 = vrot.lane.b32.xlu0 %v763, 127
        %v767 = vpop.permute.xlu0 %766
        %v770 = vadd.f32 %v749, %v765
        %v771 = vadd.f32 %v750, %v767
        %s772 = sld [smem:[#allocation2 + $0x17]]
        %v773 = vstv %s772
        %v774 = vmul.f32 %v773, %v326
        %v775 = vmul.f32 %v773, %v327
        %v776 = vmul.f32 %v773, %v328
        %v780 = vrot.slane %v774, 3
        %v781 = vrot.slane %v775, 3
        %v782 = vsel %vm741, %v780, %v781
        %v783 = vrot.slane %v776, 3
        %v784 = vsel %vm741, %v781, %v783
        %785 = vrot.lane.b32.xlu0 %v782, 126
        %v786 = vpop.permute.xlu0 %785
        %787 = vrot.lane.b32.xlu0 %v784, 126
        %v788 = vpop.permute.xlu0 %787
        %v791 = vadd.f32 %v770, %v786
        %v792 = vadd.f32 %v771, %v788
        %s793 = sld [smem:[#allocation2 + $0x18]]
        %v794 = vstv %s793
        %v795 = vmul.f32 %v794, %v326
        %v796 = vmul.f32 %v794, %v327
        %v797 = vmul.f32 %v794, %v328
        %v801 = vrot.slane %v795, 3
        %v802 = vrot.slane %v796, 3
        %v803 = vsel %vm741, %v801, %v802
        %v804 = vrot.slane %v797, 3
        %v805 = vsel %vm741, %v802, %v804
        %806 = vrot.lane.b32.xlu0 %v803, 125
        %v807 = vpop.permute.xlu0 %806
        %808 = vrot.lane.b32.xlu0 %v805, 125
        %v809 = vpop.permute.xlu0 %808
        %v812 = vadd.f32 %v791, %v807
        %v813 = vadd.f32 %v792, %v809
        %s814 = sld [smem:[#allocation2 + $0x19]]
        %v815 = vstv %s814
        %v816 = vmul.f32 %v815, %v326
        %v817 = vmul.f32 %v815, %v327
        %v818 = vmul.f32 %v815, %v328
        %v822 = vrot.slane %v816, 3
        %v823 = vrot.slane %v817, 3
        %v824 = vsel %vm741, %v822, %v823
        %v825 = vrot.slane %v818, 3
        %v826 = vsel %vm741, %v823, %v825
        %827 = vrot.lane.b32.xlu0 %v824, 124
        %v828 = vpop.permute.xlu0 %827
        %829 = vrot.lane.b32.xlu0 %v826, 124
        %v830 = vpop.permute.xlu0 %829
        %v833 = vadd.f32 %v812, %v828
        %v834 = vadd.f32 %v813, %v830
        %s835 = sld [smem:[#allocation2 + $0x1a]]
        %v836 = vstv %s835
        %v837 = vmul.f32 %v836, %v326
        %v838 = vmul.f32 %v836, %v327
        %v839 = vmul.f32 %v836, %v328
        %v843 = vrot.slane %v837, 3
        %v844 = vrot.slane %v838, 3
        %v845 = vsel %vm741, %v843, %v844
        %v846 = vrot.slane %v839, 3
        %v847 = vsel %vm741, %v844, %v846
        %848 = vrot.lane.b32.xlu0 %v845, 123
        %v849 = vpop.permute.xlu0 %848
        %850 = vrot.lane.b32.xlu0 %v847, 123
        %v851 = vpop.permute.xlu0 %850
        %v854 = vadd.f32 %v833, %v849
        %v855 = vadd.f32 %v834, %v851
        %s856 = sld [smem:[#allocation2 + $0x1b]]
        %v857 = vstv %s856
        %v858 = vmul.f32 %v857, %v326
        %v859 = vmul.f32 %v857, %v327
        %v860 = vmul.f32 %v857, %v328
        %v864 = vrot.slane %v858, 3
        %v865 = vrot.slane %v859, 3
        %v866 = vsel %vm741, %v864, %v865
        %v867 = vrot.slane %v860, 3
        %v868 = vsel %vm741, %v865, %v867
        %869 = vrot.lane.b32.xlu0 %v866, 122
        %v870 = vpop.permute.xlu0 %869
        %871 = vrot.lane.b32.xlu0 %v868, 122
        %v872 = vpop.permute.xlu0 %871
        %v875 = vadd.f32 %v854, %v870
        %v876 = vadd.f32 %v855, %v872
        %s877 = sld [smem:[#allocation2 + $0x1c]]
        %v878 = vstv %s877
        %v879 = vmul.f32 %v878, %v326
        %v880 = vmul.f32 %v878, %v327
        %v881 = vmul.f32 %v878, %v328
        %vm885 = vcmask 1043456
        %v886 = vrot.slane %v879, 4
        %v887 = vrot.slane %v880, 4
        %v888 = vsel %vm885, %v886, %v887
        %v889 = vrot.slane %v881, 4
        %v890 = vsel %vm885, %v887, %v889
        %v893 = vadd.f32 %v875, %v888
        %v894 = vadd.f32 %v876, %v890
        %s895 = sld [smem:[#allocation2 + $0x1d]]
        %v896 = vstv %s895
        %v897 = vmul.f32 %v896, %v326
        %v898 = vmul.f32 %v896, %v327
        %v899 = vmul.f32 %v896, %v328
        %v903 = vrot.slane %v897, 4
        %v904 = vrot.slane %v898, 4
        %v905 = vsel %vm885, %v903, %v904
        %v906 = vrot.slane %v899, 4
        %v907 = vsel %vm885, %v904, %v906
        %908 = vrot.lane.b32.xlu0 %v905, 127
        %v909 = vpop.permute.xlu0 %908
        %910 = vrot.lane.b32.xlu0 %v907, 127
        %v911 = vpop.permute.xlu0 %910
        %v914 = vadd.f32 %v893, %v909
        %v915 = vadd.f32 %v894, %v911
        %s916 = sld [smem:[#allocation2 + $0x1e]]
        %v917 = vstv %s916
        %v918 = vmul.f32 %v917, %v326
        %v919 = vmul.f32 %v917, %v327
        %v920 = vmul.f32 %v917, %v328
        %v924 = vrot.slane %v918, 4
        %v925 = vrot.slane %v919, 4
        %v926 = vsel %vm885, %v924, %v925
        %v927 = vrot.slane %v920, 4
        %v928 = vsel %vm885, %v925, %v927
        %929 = vrot.lane.b32.xlu0 %v926, 126
        %v930 = vpop.permute.xlu0 %929
        %931 = vrot.lane.b32.xlu0 %v928, 126
        %v932 = vpop.permute.xlu0 %931
        %v935 = vadd.f32 %v914, %v930
        %v936 = vadd.f32 %v915, %v932
        %s937 = sld [smem:[#allocation2 + $0x1f]]
        %v938 = vstv %s937
        %v939 = vmul.f32 %v938, %v326
        %v940 = vmul.f32 %v938, %v327
        %v941 = vmul.f32 %v938, %v328
        %v945 = vrot.slane %v939, 4
        %v946 = vrot.slane %v940, 4
        %v947 = vsel %vm885, %v945, %v946
        %v948 = vrot.slane %v941, 4
        %v949 = vsel %vm885, %v946, %v948
        %950 = vrot.lane.b32.xlu0 %v947, 125
        %v951 = vpop.permute.xlu0 %950
        %952 = vrot.lane.b32.xlu0 %v949, 125
        %v953 = vpop.permute.xlu0 %952
        %v956 = vadd.f32 %v935, %v951
        %v957 = vadd.f32 %v936, %v953
        %s958 = sld [smem:[#allocation2 + $0x20]]
        %v959 = vstv %s958
        %v960 = vmul.f32 %v959, %v326
        %v961 = vmul.f32 %v959, %v327
        %v962 = vmul.f32 %v959, %v328
        %v966 = vrot.slane %v960, 4
        %v967 = vrot.slane %v961, 4
        %v968 = vsel %vm885, %v966, %v967
        %v969 = vrot.slane %v962, 4
        %v970 = vsel %vm885, %v967, %v969
        %971 = vrot.lane.b32.xlu0 %v968, 124
        %v972 = vpop.permute.xlu0 %971
        %973 = vrot.lane.b32.xlu0 %v970, 124
        %v974 = vpop.permute.xlu0 %973
        %v977 = vadd.f32 %v956, %v972
        %v978 = vadd.f32 %v957, %v974
        %s979 = sld [smem:[#allocation2 + $0x21]]
        %v980 = vstv %s979
        %v981 = vmul.f32 %v980, %v326
        %v982 = vmul.f32 %v980, %v327
        %v983 = vmul.f32 %v980, %v328
        %v987 = vrot.slane %v981, 4
        %v988 = vrot.slane %v982, 4
        %v989 = vsel %vm885, %v987, %v988
        %v990 = vrot.slane %v983, 4
        %v991 = vsel %vm885, %v988, %v990
        %992 = vrot.lane.b32.xlu0 %v989, 123
        %v993 = vpop.permute.xlu0 %992
        %994 = vrot.lane.b32.xlu0 %v991, 123
        %v995 = vpop.permute.xlu0 %994
        %v998 = vadd.f32 %v977, %v993
        %v999 = vadd.f32 %v978, %v995
        %s1000 = sld [smem:[#allocation2 + $0x22]]
        %v1001 = vstv %s1000
        %v1002 = vmul.f32 %v1001, %v326
        %v1003 = vmul.f32 %v1001, %v327
        %v1004 = vmul.f32 %v1001, %v328
        %v1008 = vrot.slane %v1002, 4
        %v1009 = vrot.slane %v1003, 4
        %v1010 = vsel %vm885, %v1008, %v1009
        %v1011 = vrot.slane %v1004, 4
        %v1012 = vsel %vm885, %v1009, %v1011
        %1013 = vrot.lane.b32.xlu0 %v1010, 122
        %v1014 = vpop.permute.xlu0 %1013
        %1015 = vrot.lane.b32.xlu0 %v1012, 122
        %v1016 = vpop.permute.xlu0 %1015
        %v1019 = vadd.f32 %v998, %v1014
        %v1020 = vadd.f32 %v999, %v1016
        %s1021 = sld [smem:[#allocation2 + $0x23]]
        %v1022 = vstv %s1021
        %v1023 = vmul.f32 %v1022, %v326
        %v1024 = vmul.f32 %v1022, %v327
        %v1025 = vmul.f32 %v1022, %v328
        %v1029 = vrot.slane %v1023, 5
        %v1030 = vrot.slane %v1024, 5
        %v1031 = vsel %vm302, %v1029, %v1030
        %v1032 = vrot.slane %v1025, 5
        %v1033 = vsel %vm302, %v1030, %v1032
        %v1036 = vadd.f32 %v1019, %v1031
        %v1037 = vadd.f32 %v1020, %v1033
        %s1038 = sld [smem:[#allocation2 + $0x24]]
        %v1039 = vstv %s1038
        %v1040 = vmul.f32 %v1039, %v326
        %v1041 = vmul.f32 %v1039, %v327
        %v1042 = vmul.f32 %v1039, %v328
        %v1046 = vrot.slane %v1040, 5
        %v1047 = vrot.slane %v1041, 5
        %v1048 = vsel %vm302, %v1046, %v1047
        %v1049 = vrot.slane %v1042, 5
        %v1050 = vsel %vm302, %v1047, %v1049
        %1051 = vrot.lane.b32.xlu0 %v1048, 127
        %v1052 = vpop.permute.xlu0 %1051
        %1053 = vrot.lane.b32.xlu0 %v1050, 127
        %v1054 = vpop.permute.xlu0 %1053
        %v1057 = vadd.f32 %v1036, %v1052
        %v1058 = vadd.f32 %v1037, %v1054
        %s1059 = sld [smem:[#allocation2 + $0x25]]
        %v1060 = vstv %s1059
        %v1061 = vmul.f32 %v1060, %v326
        %v1062 = vmul.f32 %v1060, %v327
        %v1063 = vmul.f32 %v1060, %v328
        %v1067 = vrot.slane %v1061, 5
        %v1068 = vrot.slane %v1062, 5
        %v1069 = vsel %vm302, %v1067, %v1068
        %v1070 = vrot.slane %v1063, 5
        %v1071 = vsel %vm302, %v1068, %v1070
        %1072 = vrot.lane.b32.xlu0 %v1069, 126
        %v1073 = vpop.permute.xlu0 %1072
        %1074 = vrot.lane.b32.xlu0 %v1071, 126
        %v1075 = vpop.permute.xlu0 %1074
        %v1078 = vadd.f32 %v1057, %v1073
        %v1079 = vadd.f32 %v1058, %v1075
        %s1080 = sld [smem:[#allocation2 + $0x26]]
        %v1081 = vstv %s1080
        %v1082 = vmul.f32 %v1081, %v326
        %v1083 = vmul.f32 %v1081, %v327
        %v1084 = vmul.f32 %v1081, %v328
        %v1088 = vrot.slane %v1082, 5
        %v1089 = vrot.slane %v1083, 5
        %v1090 = vsel %vm302, %v1088, %v1089
        %v1091 = vrot.slane %v1084, 5
        %v1092 = vsel %vm302, %v1089, %v1091
        %1093 = vrot.lane.b32.xlu0 %v1090, 125
        %v1094 = vpop.permute.xlu0 %1093
        %1095 = vrot.lane.b32.xlu0 %v1092, 125
        %v1096 = vpop.permute.xlu0 %1095
        %v1099 = vadd.f32 %v1078, %v1094
        %v1100 = vadd.f32 %v1079, %v1096
        %s1101 = sld [smem:[#allocation2 + $0x27]]
        %v1102 = vstv %s1101
        %v1103 = vmul.f32 %v1102, %v326
        %v1104 = vmul.f32 %v1102, %v327
        %v1105 = vmul.f32 %v1102, %v328
        %v1109 = vrot.slane %v1103, 5
        %v1110 = vrot.slane %v1104, 5
        %v1111 = vsel %vm302, %v1109, %v1110
        %v1112 = vrot.slane %v1105, 5
        %v1113 = vsel %vm302, %v1110, %v1112
        %1114 = vrot.lane.b32.xlu0 %v1111, 124
        %v1115 = vpop.permute.xlu0 %1114
        %1116 = vrot.lane.b32.xlu0 %v1113, 124
        %v1117 = vpop.permute.xlu0 %1116
        %v1120 = vadd.f32 %v1099, %v1115
        %v1121 = vadd.f32 %v1100, %v1117
        %s1122 = sld [smem:[#allocation2 + $0x28]]
        %v1123 = vstv %s1122
        %v1124 = vmul.f32 %v1123, %v326
        %v1125 = vmul.f32 %v1123, %v327
        %v1126 = vmul.f32 %v1123, %v328
        %v1130 = vrot.slane %v1124, 5
        %v1131 = vrot.slane %v1125, 5
        %v1132 = vsel %vm302, %v1130, %v1131
        %v1133 = vrot.slane %v1126, 5
        %v1134 = vsel %vm302, %v1131, %v1133
        %1135 = vrot.lane.b32.xlu0 %v1132, 123
        %v1136 = vpop.permute.xlu0 %1135
        %1137 = vrot.lane.b32.xlu0 %v1134, 123
        %v1138 = vpop.permute.xlu0 %1137
        %v1141 = vadd.f32 %v1120, %v1136
        %v1142 = vadd.f32 %v1121, %v1138
        %s1143 = sld [smem:[#allocation2 + $0x29]]
        %v1144 = vstv %s1143
        %v1145 = vmul.f32 %v1144, %v326
        %v1146 = vmul.f32 %v1144, %v327
        %v1147 = vmul.f32 %v1144, %v328
        %v1151 = vrot.slane %v1145, 5
        %v1152 = vrot.slane %v1146, 5
        %v1153 = vsel %vm302, %v1151, %v1152
        %v1154 = vrot.slane %v1147, 5
        %v1155 = vsel %vm302, %v1152, %v1154
        %1156 = vrot.lane.b32.xlu0 %v1153, 122
        %v1157 = vpop.permute.xlu0 %1156
        %1158 = vrot.lane.b32.xlu0 %v1155, 122
        %v1159 = vpop.permute.xlu0 %1158
        %v1162 = vadd.f32 %v1141, %v1157
        %v1163 = vadd.f32 %v1142, %v1159
        %s1164 = sld [smem:[#allocation2 + $0x2a]]
        %v1165 = vstv %s1164
        %v1166 = vmul.f32 %v1165, %v326
        %v1167 = vmul.f32 %v1165, %v327
        %v1168 = vmul.f32 %v1165, %v328
        %vm1172 = vcmask 1041408
        %v1173 = vrot.slane %v1166, 6
        %v1174 = vrot.slane %v1167, 6
        %v1175 = vsel %vm1172, %v1173, %v1174
        %v1176 = vrot.slane %v1168, 6
        %v1177 = vsel %vm1172, %v1174, %v1176
        %v1180 = vadd.f32 %v1162, %v1175
        %v1181 = vadd.f32 %v1163, %v1177
        %s1182 = sld [smem:[#allocation2 + $0x2b]]
        %v1183 = vstv %s1182
        %v1184 = vmul.f32 %v1183, %v326
        %v1185 = vmul.f32 %v1183, %v327
        %v1186 = vmul.f32 %v1183, %v328
        %v1190 = vrot.slane %v1184, 6
        %v1191 = vrot.slane %v1185, 6
        %v1192 = vsel %vm1172, %v1190, %v1191
        %v1193 = vrot.slane %v1186, 6
        %v1194 = vsel %vm1172, %v1191, %v1193
        %1195 = vrot.lane.b32.xlu0 %v1192, 127
        %v1196 = vpop.permute.xlu0 %1195
        %1197 = vrot.lane.b32.xlu0 %v1194, 127
        %v1198 = vpop.permute.xlu0 %1197
        %v1201 = vadd.f32 %v1180, %v1196
        %v1202 = vadd.f32 %v1181, %v1198
        %s1203 = sld [smem:[#allocation2 + $0x2c]]
        %v1204 = vstv %s1203
        %v1205 = vmul.f32 %v1204, %v326
        %v1206 = vmul.f32 %v1204, %v327
        %v1207 = vmul.f32 %v1204, %v328
        %v1211 = vrot.slane %v1205, 6
        %v1212 = vrot.slane %v1206, 6
        %v1213 = vsel %vm1172, %v1211, %v1212
        %v1214 = vrot.slane %v1207, 6
        %v1215 = vsel %vm1172, %v1212, %v1214
        %1216 = vrot.lane.b32.xlu0 %v1213, 126
        %v1217 = vpop.permute.xlu0 %1216
        %1218 = vrot.lane.b32.xlu0 %v1215, 126
        %v1219 = vpop.permute.xlu0 %1218
        %v1222 = vadd.f32 %v1201, %v1217
        %v1223 = vadd.f32 %v1202, %v1219
        %s1224 = sld [smem:[#allocation2 + $0x2d]]
        %v1225 = vstv %s1224
        %v1226 = vmul.f32 %v1225, %v326
        %v1227 = vmul.f32 %v1225, %v327
        %v1228 = vmul.f32 %v1225, %v328
        %v1232 = vrot.slane %v1226, 6
        %v1233 = vrot.slane %v1227, 6
        %v1234 = vsel %vm1172, %v1232, %v1233
        %v1235 = vrot.slane %v1228, 6
        %v1236 = vsel %vm1172, %v1233, %v1235
        %1237 = vrot.lane.b32.xlu0 %v1234, 125
        %v1238 = vpop.permute.xlu0 %1237
        %1239 = vrot.lane.b32.xlu0 %v1236, 125
        %v1240 = vpop.permute.xlu0 %1239
        %v1243 = vadd.f32 %v1222, %v1238
        %v1244 = vadd.f32 %v1223, %v1240
        %s1245 = sld [smem:[#allocation2 + $0x2e]]
        %v1246 = vstv %s1245
        %v1247 = vmul.f32 %v1246, %v326
        %v1248 = vmul.f32 %v1246, %v327
        %v1249 = vmul.f32 %v1246, %v328
        %v1253 = vrot.slane %v1247, 6
        %v1254 = vrot.slane %v1248, 6
        %v1255 = vsel %vm1172, %v1253, %v1254
        %v1256 = vrot.slane %v1249, 6
        %v1257 = vsel %vm1172, %v1254, %v1256
        %1258 = vrot.lane.b32.xlu0 %v1255, 124
        %v1259 = vpop.permute.xlu0 %1258
        %1260 = vrot.lane.b32.xlu0 %v1257, 124
        %v1261 = vpop.permute.xlu0 %1260
        %v1264 = vadd.f32 %v1243, %v1259
        %v1265 = vadd.f32 %v1244, %v1261
        %s1266 = sld [smem:[#allocation2 + $0x2f]]
        %v1267 = vstv %s1266
        %v1268 = vmul.f32 %v1267, %v326
        %v1269 = vmul.f32 %v1267, %v327
        %v1270 = vmul.f32 %v1267, %v328
        %v1274 = vrot.slane %v1268, 6
        %v1275 = vrot.slane %v1269, 6
        %v1276 = vsel %vm1172, %v1274, %v1275
        %v1277 = vrot.slane %v1270, 6
        %v1278 = vsel %vm1172, %v1275, %v1277
        %1279 = vrot.lane.b32.xlu0 %v1276, 123
        %v1280 = vpop.permute.xlu0 %1279
        %1281 = vrot.lane.b32.xlu0 %v1278, 123
        %v1282 = vpop.permute.xlu0 %1281
        %v1285 = vadd.f32 %v1264, %v1280
        %v1286 = vadd.f32 %v1265, %v1282
        %s1287 = sld [smem:[#allocation2 + $0x30]]
        %v1288 = vstv %s1287
        %v1289 = vmul.f32 %v1288, %v326
        %v1290 = vmul.f32 %v1288, %v327
        %v1291 = vmul.f32 %v1288, %v328
        %v1295 = vrot.slane %v1289, 6
        %v1296 = vrot.slane %v1290, 6
        %v1297 = vsel %vm1172, %v1295, %v1296
        %v1298 = vrot.slane %v1291, 6
        %v1299 = vsel %vm1172, %v1296, %v1298
        %1300 = vrot.lane.b32.xlu0 %v1297, 122
        %v1301 = vpop.permute.xlu0 %1300
        %1302 = vrot.lane.b32.xlu0 %v1299, 122
        %v1303 = vpop.permute.xlu0 %1302
        %v1306 = vadd.f32 %v1285, %v1301
        %v1307 = vadd.f32 %v1286, %v1303
        %s1308 = sld [smem:[#allocation2 + $0x31]]
        %v1309 = vstv %s1308
        %v1310 = vmul.f32 %v1309, %v352
        %v1311 = vmul.f32 %v1309, %v353
        %v1312 = vadd.f32 %v1306, %v1310
        %v1313 = vadd.f32 %v1307, %v1311
        %s1314 = sld [smem:[#allocation2 + $0x32]]
        %v1315 = vstv %s1314
        %v1316 = vmul.f32 %v1315, %v352
        %v1317 = vmul.f32 %v1315, %v353
        %1320 = vrot.lane.b32.xlu0 %v1316, 127
        %v1321 = vpop.permute.xlu0 %1320
        %1322 = vrot.lane.b32.xlu0 %v1317, 127
        %v1323 = vpop.permute.xlu0 %1322
        %v1326 = vadd.f32 %v1312, %v1321
        %v1327 = vadd.f32 %v1313, %v1323
        %s1328 = sld [smem:[#allocation2 + $0x33]]
        %v1329 = vstv %s1328
        %v1330 = vmul.f32 %v1329, %v352
        %v1331 = vmul.f32 %v1329, %v353
        %1334 = vrot.lane.b32.xlu0 %v1330, 126
        %v1335 = vpop.permute.xlu0 %1334
        %1336 = vrot.lane.b32.xlu0 %v1331, 126
        %v1337 = vpop.permute.xlu0 %1336
        %v1340 = vadd.f32 %v1326, %v1335
        %v1341 = vadd.f32 %v1327, %v1337
        %s1342 = sld [smem:[#allocation2 + $0x34]]
        %v1343 = vstv %s1342
        %v1344 = vmul.f32 %v1343, %v352
        %v1345 = vmul.f32 %v1343, %v353
        %1348 = vrot.lane.b32.xlu0 %v1344, 125
        %v1349 = vpop.permute.xlu0 %1348
        %1350 = vrot.lane.b32.xlu0 %v1345, 125
        %v1351 = vpop.permute.xlu0 %1350
        %v1354 = vadd.f32 %v1340, %v1349
        %v1355 = vadd.f32 %v1341, %v1351
        %s1356 = sld [smem:[#allocation2 + $0x35]]
        %v1357 = vstv %s1356
        %v1358 = vmul.f32 %v1357, %v352
        %v1359 = vmul.f32 %v1357, %v353
        %1362 = vrot.lane.b32.xlu0 %v1358, 124
        %v1363 = vpop.permute.xlu0 %1362
        %1364 = vrot.lane.b32.xlu0 %v1359, 124
        %v1365 = vpop.permute.xlu0 %1364
        %v1368 = vadd.f32 %v1354, %v1363
        %v1369 = vadd.f32 %v1355, %v1365
        %s1370 = sld [smem:[#allocation2 + $0x36]]
        %v1371 = vstv %s1370
        %v1372 = vmul.f32 %v1371, %v352
        %v1373 = vmul.f32 %v1371, %v353
        %1376 = vrot.lane.b32.xlu0 %v1372, 123
        %v1377 = vpop.permute.xlu0 %1376
        %1378 = vrot.lane.b32.xlu0 %v1373, 123
        %v1379 = vpop.permute.xlu0 %1378
        %v1382 = vadd.f32 %v1368, %v1377
        %v1383 = vadd.f32 %v1369, %v1379
        %s1384 = sld [smem:[#allocation2 + $0x37]]
        %v1385 = vstv %s1384
        %v1386 = vmul.f32 %v1385, %v352
        %v1387 = vmul.f32 %v1385, %v353
        %1390 = vrot.lane.b32.xlu0 %v1386, 122
        %v1391 = vpop.permute.xlu0 %1390
        %1392 = vrot.lane.b32.xlu0 %v1387, 122
        %v1393 = vpop.permute.xlu0 %1392
        %v1396 = vadd.f32 %v1382, %v1391
        %v1397 = vadd.f32 %v1383, %v1393
        %s1398 = sld [smem:[#allocation2 + $0x38]]
        %v1399 = vstv %s1398
        %v1400 = vmul.f32 %v1399, %v352
        %v1401 = vmul.f32 %v1399, %v353
        %v1402 = vmul.f32 %v1399, %v354
        %v1406 = vrot.slane %v1400, 1
        %v1407 = vrot.slane %v1401, 1
        %v1408 = vsel %vm453, %v1406, %v1407
        %v1409 = vrot.slane %v1402, 1
        %v1410 = vsel %vm453, %v1407, %v1409
        %v1413 = vadd.f32 %v1396, %v1408
        %v1414 = vadd.f32 %v1397, %v1410
        %s1415 = sld [smem:[#allocation2 + $0x39]]
        %v1416 = vstv %s1415
        %v1417 = vmul.f32 %v1416, %v352
        %v1418 = vmul.f32 %v1416, %v353
        %v1419 = vmul.f32 %v1416, %v354
        %v1423 = vrot.slane %v1417, 1
        %v1424 = vrot.slane %v1418, 1
        %v1425 = vsel %vm453, %v1423, %v1424
        %v1426 = vrot.slane %v1419, 1
        %v1427 = vsel %vm453, %v1424, %v1426
        %1428 = vrot.lane.b32.xlu0 %v1425, 127
        %v1429 = vpop.permute.xlu0 %1428
        %1430 = vrot.lane.b32.xlu0 %v1427, 127
        %v1431 = vpop.permute.xlu0 %1430
        %v1434 = vadd.f32 %v1413, %v1429
        %v1435 = vadd.f32 %v1414, %v1431
        %s1436 = sld [smem:[#allocation2 + $0x3a]]
        %v1437 = vstv %s1436
        %v1438 = vmul.f32 %v1437, %v352
        %v1439 = vmul.f32 %v1437, %v353
        %v1440 = vmul.f32 %v1437, %v354
        %v1444 = vrot.slane %v1438, 1
        %v1445 = vrot.slane %v1439, 1
        %v1446 = vsel %vm453, %v1444, %v1445
        %v1447 = vrot.slane %v1440, 1
        %v1448 = vsel %vm453, %v1445, %v1447
        %1449 = vrot.lane.b32.xlu0 %v1446, 126
        %v1450 = vpop.permute.xlu0 %1449
        %1451 = vrot.lane.b32.xlu0 %v1448, 126
        %v1452 = vpop.permute.xlu0 %1451
        %v1455 = vadd.f32 %v1434, %v1450
        %v1456 = vadd.f32 %v1435, %v1452
        %s1457 = sld [smem:[#allocation2 + $0x3b]]
        %v1458 = vstv %s1457
        %v1459 = vmul.f32 %v1458, %v352
        %v1460 = vmul.f32 %v1458, %v353
        %v1461 = vmul.f32 %v1458, %v354
        %v1465 = vrot.slane %v1459, 1
        %v1466 = vrot.slane %v1460, 1
        %v1467 = vsel %vm453, %v1465, %v1466
        %v1468 = vrot.slane %v1461, 1
        %v1469 = vsel %vm453, %v1466, %v1468
        %1470 = vrot.lane.b32.xlu0 %v1467, 125
        %v1471 = vpop.permute.xlu0 %1470
        %1472 = vrot.lane.b32.xlu0 %v1469, 125
        %v1473 = vpop.permute.xlu0 %1472
        %v1476 = vadd.f32 %v1455, %v1471
        %v1477 = vadd.f32 %v1456, %v1473
        %s1478 = sld [smem:[#allocation2 + $0x3c]]
        %v1479 = vstv %s1478
        %v1480 = vmul.f32 %v1479, %v352
        %v1481 = vmul.f32 %v1479, %v353
        %v1482 = vmul.f32 %v1479, %v354
        %v1486 = vrot.slane %v1480, 1
        %v1487 = vrot.slane %v1481, 1
        %v1488 = vsel %vm453, %v1486, %v1487
        %v1489 = vrot.slane %v1482, 1
        %v1490 = vsel %vm453, %v1487, %v1489
        %1491 = vrot.lane.b32.xlu0 %v1488, 124
        %v1492 = vpop.permute.xlu0 %1491
        %1493 = vrot.lane.b32.xlu0 %v1490, 124
        %v1494 = vpop.permute.xlu0 %1493
        %v1497 = vadd.f32 %v1476, %v1492
        %v1498 = vadd.f32 %v1477, %v1494
        %s1499 = sld [smem:[#allocation2 + $0x3d]]
        %v1500 = vstv %s1499
        %v1501 = vmul.f32 %v1500, %v352
        %v1502 = vmul.f32 %v1500, %v353
        %v1503 = vmul.f32 %v1500, %v354
        %v1507 = vrot.slane %v1501, 1
        %v1508 = vrot.slane %v1502, 1
        %v1509 = vsel %vm453, %v1507, %v1508
        %v1510 = vrot.slane %v1503, 1
        %v1511 = vsel %vm453, %v1508, %v1510
        %1512 = vrot.lane.b32.xlu0 %v1509, 123
        %v1513 = vpop.permute.xlu0 %1512
        %1514 = vrot.lane.b32.xlu0 %v1511, 123
        %v1515 = vpop.permute.xlu0 %1514
        %v1518 = vadd.f32 %v1497, %v1513
        %v1519 = vadd.f32 %v1498, %v1515
        %s1520 = sld [smem:[#allocation2 + $0x3e]]
        %v1521 = vstv %s1520
        %v1522 = vmul.f32 %v1521, %v352
        %v1523 = vmul.f32 %v1521, %v353
        %v1524 = vmul.f32 %v1521, %v354
        %v1528 = vrot.slane %v1522, 1
        %v1529 = vrot.slane %v1523, 1
        %v1530 = vsel %vm453, %v1528, %v1529
        %v1531 = vrot.slane %v1524, 1
        %v1532 = vsel %vm453, %v1529, %v1531
        %1533 = vrot.lane.b32.xlu0 %v1530, 122
        %v1534 = vpop.permute.xlu0 %1533
        %1535 = vrot.lane.b32.xlu0 %v1532, 122
        %v1536 = vpop.permute.xlu0 %1535
        %v1539 = vadd.f32 %v1518, %v1534
        %v1540 = vadd.f32 %v1519, %v1536
        %s1541 = sld [smem:[#allocation2 + $0x3f]]
        %v1542 = vstv %s1541
        %v1543 = vmul.f32 %v1542, %v352
        %v1544 = vmul.f32 %v1542, %v353
        %v1545 = vmul.f32 %v1542, %v354
        %v1549 = vrot.slane %v1543, 2
        %v1550 = vrot.slane %v1544, 2
        %v1551 = vsel %vm597, %v1549, %v1550
        %v1552 = vrot.slane %v1545, 2
        %v1553 = vsel %vm597, %v1550, %v1552
        %v1556 = vadd.f32 %v1539, %v1551
        %v1557 = vadd.f32 %v1540, %v1553
        %s1558 = sld [smem:[#allocation2 + $0x40]]
        %v1559 = vstv %s1558
        %v1560 = vmul.f32 %v1559, %v352
        %v1561 = vmul.f32 %v1559, %v353
        %v1562 = vmul.f32 %v1559, %v354
        %v1566 = vrot.slane %v1560, 2
        %v1567 = vrot.slane %v1561, 2
        %v1568 = vsel %vm597, %v1566, %v1567
        %v1569 = vrot.slane %v1562, 2
        %v1570 = vsel %vm597, %v1567, %v1569
        %1571 = vrot.lane.b32.xlu0 %v1568, 127
        %v1572 = vpop.permute.xlu0 %1571
        %1573 = vrot.lane.b32.xlu0 %v1570, 127
        %v1574 = vpop.permute.xlu0 %1573
        %v1577 = vadd.f32 %v1556, %v1572
        %v1578 = vadd.f32 %v1557, %v1574
        %s1579 = sld [smem:[#allocation2 + $0x41]]
        %v1580 = vstv %s1579
        %v1581 = vmul.f32 %v1580, %v352
        %v1582 = vmul.f32 %v1580, %v353
        %v1583 = vmul.f32 %v1580, %v354
        %v1587 = vrot.slane %v1581, 2
        %v1588 = vrot.slane %v1582, 2
        %v1589 = vsel %vm597, %v1587, %v1588
        %v1590 = vrot.slane %v1583, 2
        %v1591 = vsel %vm597, %v1588, %v1590
        %1592 = vrot.lane.b32.xlu0 %v1589, 126
        %v1593 = vpop.permute.xlu0 %1592
        %1594 = vrot.lane.b32.xlu0 %v1591, 126
        %v1595 = vpop.permute.xlu0 %1594
        %v1598 = vadd.f32 %v1577, %v1593
        %v1599 = vadd.f32 %v1578, %v1595
        %s1600 = sld [smem:[#allocation2 + $0x42]]
        %v1601 = vstv %s1600
        %v1602 = vmul.f32 %v1601, %v352
        %v1603 = vmul.f32 %v1601, %v353
        %v1604 = vmul.f32 %v1601, %v354
        %v1608 = vrot.slane %v1602, 2
        %v1609 = vrot.slane %v1603, 2
        %v1610 = vsel %vm597, %v1608, %v1609
        %v1611 = vrot.slane %v1604, 2
        %v1612 = vsel %vm597, %v1609, %v1611
        %1613 = vrot.lane.b32.xlu0 %v1610, 125
        %v1614 = vpop.permute.xlu0 %1613
        %1615 = vrot.lane.b32.xlu0 %v1612, 125
        %v1616 = vpop.permute.xlu0 %1615
        %v1619 = vadd.f32 %v1598, %v1614
        %v1620 = vadd.f32 %v1599, %v1616
        %s1621 = sld [smem:[#allocation2 + $0x43]]
        %v1622 = vstv %s1621
        %v1623 = vmul.f32 %v1622, %v352
        %v1624 = vmul.f32 %v1622, %v353
        %v1625 = vmul.f32 %v1622, %v354
        %v1629 = vrot.slane %v1623, 2
        %v1630 = vrot.slane %v1624, 2
        %v1631 = vsel %vm597, %v1629, %v1630
        %v1632 = vrot.slane %v1625, 2
        %v1633 = vsel %vm597, %v1630, %v1632
        %1634 = vrot.lane.b32.xlu0 %v1631, 124
        %v1635 = vpop.permute.xlu0 %1634
        %1636 = vrot.lane.b32.xlu0 %v1633, 124
        %v1637 = vpop.permute.xlu0 %1636
        %v1640 = vadd.f32 %v1619, %v1635
        %v1641 = vadd.f32 %v1620, %v1637
        %s1642 = sld [smem:[#allocation2 + $0x44]]
        %v1643 = vstv %s1642
        %v1644 = vmul.f32 %v1643, %v352
        %v1645 = vmul.f32 %v1643, %v353
        %v1646 = vmul.f32 %v1643, %v354
        %v1650 = vrot.slane %v1644, 2
        %v1651 = vrot.slane %v1645, 2
        %v1652 = vsel %vm597, %v1650, %v1651
        %v1653 = vrot.slane %v1646, 2
        %v1654 = vsel %vm597, %v1651, %v1653
        %1655 = vrot.lane.b32.xlu0 %v1652, 123
        %v1656 = vpop.permute.xlu0 %1655
        %1657 = vrot.lane.b32.xlu0 %v1654, 123
        %v1658 = vpop.permute.xlu0 %1657
        %v1661 = vadd.f32 %v1640, %v1656
        %v1662 = vadd.f32 %v1641, %v1658
        %s1663 = sld [smem:[#allocation2 + $0x45]]
        %v1664 = vstv %s1663
        %v1665 = vmul.f32 %v1664, %v352
        %v1666 = vmul.f32 %v1664, %v353
        %v1667 = vmul.f32 %v1664, %v354
        %v1671 = vrot.slane %v1665, 2
        %v1672 = vrot.slane %v1666, 2
        %v1673 = vsel %vm597, %v1671, %v1672
        %v1674 = vrot.slane %v1667, 2
        %v1675 = vsel %vm597, %v1672, %v1674
        %1676 = vrot.lane.b32.xlu0 %v1673, 122
        %v1677 = vpop.permute.xlu0 %1676
        %1678 = vrot.lane.b32.xlu0 %v1675, 122
        %v1679 = vpop.permute.xlu0 %1678
        %v1682 = vadd.f32 %v1661, %v1677
        %v1683 = vadd.f32 %v1662, %v1679
        %s1684 = sld [smem:[#allocation2 + $0x46]]
        %v1685 = vstv %s1684
        %v1686 = vmul.f32 %v1685, %v352
        %v1687 = vmul.f32 %v1685, %v353
        %v1688 = vmul.f32 %v1685, %v354
        %v1692 = vrot.slane %v1686, 3
        %v1693 = vrot.slane %v1687, 3
        %v1694 = vsel %vm741, %v1692, %v1693
        %v1695 = vrot.slane %v1688, 3
        %v1696 = vsel %vm741, %v1693, %v1695
        %v1699 = vadd.f32 %v1682, %v1694
        %v1700 = vadd.f32 %v1683, %v1696
        %s1701 = sld [smem:[#allocation2 + $0x47]]
        %v1702 = vstv %s1701
        %v1703 = vmul.f32 %v1702, %v352
        %v1704 = vmul.f32 %v1702, %v353
        %v1705 = vmul.f32 %v1702, %v354
        %v1709 = vrot.slane %v1703, 3
        %v1710 = vrot.slane %v1704, 3
        %v1711 = vsel %vm741, %v1709, %v1710
        %v1712 = vrot.slane %v1705, 3
        %v1713 = vsel %vm741, %v1710, %v1712
        %1714 = vrot.lane.b32.xlu0 %v1711, 127
        %v1715 = vpop.permute.xlu0 %1714
        %1716 = vrot.lane.b32.xlu0 %v1713, 127
        %v1717 = vpop.permute.xlu0 %1716
        %v1720 = vadd.f32 %v1699, %v1715
        %v1721 = vadd.f32 %v1700, %v1717
        %s1722 = sld [smem:[#allocation2 + $0x48]]
        %v1723 = vstv %s1722
        %v1724 = vmul.f32 %v1723, %v352
        %v1725 = vmul.f32 %v1723, %v353
        %v1726 = vmul.f32 %v1723, %v354
        %v1730 = vrot.slane %v1724, 3
        %v1731 = vrot.slane %v1725, 3
        %v1732 = vsel %vm741, %v1730, %v1731
        %v1733 = vrot.slane %v1726, 3
        %v1734 = vsel %vm741, %v1731, %v1733
        %1735 = vrot.lane.b32.xlu0 %v1732, 126
        %v1736 = vpop.permute.xlu0 %1735
        %1737 = vrot.lane.b32.xlu0 %v1734, 126
        %v1738 = vpop.permute.xlu0 %1737
        %v1741 = vadd.f32 %v1720, %v1736
        %v1742 = vadd.f32 %v1721, %v1738
        %s1743 = sld [smem:[#allocation2 + $0x49]]
        %v1744 = vstv %s1743
        %v1745 = vmul.f32 %v1744, %v352
        %v1746 = vmul.f32 %v1744, %v353
        %v1747 = vmul.f32 %v1744, %v354
        %v1751 = vrot.slane %v1745, 3
        %v1752 = vrot.slane %v1746, 3
        %v1753 = vsel %vm741, %v1751, %v1752
        %v1754 = vrot.slane %v1747, 3
        %v1755 = vsel %vm741, %v1752, %v1754
        %1756 = vrot.lane.b32.xlu0 %v1753, 125
        %v1757 = vpop.permute.xlu0 %1756
        %1758 = vrot.lane.b32.xlu0 %v1755, 125
        %v1759 = vpop.permute.xlu0 %1758
        %v1762 = vadd.f32 %v1741, %v1757
        %v1763 = vadd.f32 %v1742, %v1759
        %s1764 = sld [smem:[#allocation2 + $0x4a]]
        %v1765 = vstv %s1764
        %v1766 = vmul.f32 %v1765, %v352
        %v1767 = vmul.f32 %v1765, %v353
        %v1768 = vmul.f32 %v1765, %v354
        %v1772 = vrot.slane %v1766, 3
        %v1773 = vrot.slane %v1767, 3
        %v1774 = vsel %vm741, %v1772, %v1773
        %v1775 = vrot.slane %v1768, 3
        %v1776 = vsel %vm741, %v1773, %v1775
        %1777 = vrot.lane.b32.xlu0 %v1774, 124
        %v1778 = vpop.permute.xlu0 %1777
        %1779 = vrot.lane.b32.xlu0 %v1776, 124
        %v1780 = vpop.permute.xlu0 %1779
        %v1783 = vadd.f32 %v1762, %v1778
        %v1784 = vadd.f32 %v1763, %v1780
        %s1785 = sld [smem:[#allocation2 + $0x4b]]
        %v1786 = vstv %s1785
        %v1787 = vmul.f32 %v1786, %v352
        %v1788 = vmul.f32 %v1786, %v353
        %v1789 = vmul.f32 %v1786, %v354
        %v1793 = vrot.slane %v1787, 3
        %v1794 = vrot.slane %v1788, 3
        %v1795 = vsel %vm741, %v1793, %v1794
        %v1796 = vrot.slane %v1789, 3
        %v1797 = vsel %vm741, %v1794, %v1796
        %1798 = vrot.lane.b32.xlu0 %v1795, 123
        %v1799 = vpop.permute.xlu0 %1798
        %1800 = vrot.lane.b32.xlu0 %v1797, 123
        %v1801 = vpop.permute.xlu0 %1800
        %v1804 = vadd.f32 %v1783, %v1799
        %v1805 = vadd.f32 %v1784, %v1801
        %s1806 = sld [smem:[#allocation2 + $0x4c]]
        %v1807 = vstv %s1806
        %v1808 = vmul.f32 %v1807, %v352
        %v1809 = vmul.f32 %v1807, %v353
        %v1810 = vmul.f32 %v1807, %v354
        %v1814 = vrot.slane %v1808, 3
        %v1815 = vrot.slane %v1809, 3
        %v1816 = vsel %vm741, %v1814, %v1815
        %v1817 = vrot.slane %v1810, 3
        %v1818 = vsel %vm741, %v1815, %v1817
        %1819 = vrot.lane.b32.xlu0 %v1816, 122
        %v1820 = vpop.permute.xlu0 %1819
        %1821 = vrot.lane.b32.xlu0 %v1818, 122
        %v1822 = vpop.permute.xlu0 %1821
        %v1825 = vadd.f32 %v1804, %v1820
        %v1826 = vadd.f32 %v1805, %v1822
        %s1827 = sld [smem:[#allocation2 + $0x4d]]
        %v1828 = vstv %s1827
        %v1829 = vmul.f32 %v1828, %v352
        %v1830 = vmul.f32 %v1828, %v353
        %v1831 = vmul.f32 %v1828, %v354
        %v1835 = vrot.slane %v1829, 4
        %v1836 = vrot.slane %v1830, 4
        %v1837 = vsel %vm885, %v1835, %v1836
        %v1838 = vrot.slane %v1831, 4
        %v1839 = vsel %vm885, %v1836, %v1838
        %v1842 = vadd.f32 %v1825, %v1837
        %v1843 = vadd.f32 %v1826, %v1839
        %s1844 = sld [smem:[#allocation2 + $0x4e]]
        %v1845 = vstv %s1844
        %v1846 = vmul.f32 %v1845, %v352
        %v1847 = vmul.f32 %v1845, %v353
        %v1848 = vmul.f32 %v1845, %v354
        %v1852 = vrot.slane %v1846, 4
        %v1853 = vrot.slane %v1847, 4
        %v1854 = vsel %vm885, %v1852, %v1853
        %v1855 = vrot.slane %v1848, 4
        %v1856 = vsel %vm885, %v1853, %v1855
        %1857 = vrot.lane.b32.xlu0 %v1854, 127
        %v1858 = vpop.permute.xlu0 %1857
        %1859 = vrot.lane.b32.xlu0 %v1856, 127
        %v1860 = vpop.permute.xlu0 %1859
        %v1863 = vadd.f32 %v1842, %v1858
        %v1864 = vadd.f32 %v1843, %v1860
        %s1865 = sld [smem:[#allocation2 + $0x4f]]
        %v1866 = vstv %s1865
        %v1867 = vmul.f32 %v1866, %v352
        %v1868 = vmul.f32 %v1866, %v353
        %v1869 = vmul.f32 %v1866, %v354
        %v1873 = vrot.slane %v1867, 4
        %v1874 = vrot.slane %v1868, 4
        %v1875 = vsel %vm885, %v1873, %v1874
        %v1876 = vrot.slane %v1869, 4
        %v1877 = vsel %vm885, %v1874, %v1876
        %1878 = vrot.lane.b32.xlu0 %v1875, 126
        %v1879 = vpop.permute.xlu0 %1878
        %1880 = vrot.lane.b32.xlu0 %v1877, 126
        %v1881 = vpop.permute.xlu0 %1880
        %v1884 = vadd.f32 %v1863, %v1879
        %v1885 = vadd.f32 %v1864, %v1881
        %s1886 = sld [smem:[#allocation2 + $0x50]]
        %v1887 = vstv %s1886
        %v1888 = vmul.f32 %v1887, %v352
        %v1889 = vmul.f32 %v1887, %v353
        %v1890 = vmul.f32 %v1887, %v354
        %v1894 = vrot.slane %v1888, 4
        %v1895 = vrot.slane %v1889, 4
        %v1896 = vsel %vm885, %v1894, %v1895
        %v1897 = vrot.slane %v1890, 4
        %v1898 = vsel %vm885, %v1895, %v1897
        %1899 = vrot.lane.b32.xlu0 %v1896, 125
        %v1900 = vpop.permute.xlu0 %1899
        %1901 = vrot.lane.b32.xlu0 %v1898, 125
        %v1902 = vpop.permute.xlu0 %1901
        %v1905 = vadd.f32 %v1884, %v1900
        %v1906 = vadd.f32 %v1885, %v1902
        %s1907 = sld [smem:[#allocation2 + $0x51]]
        %v1908 = vstv %s1907
        %v1909 = vmul.f32 %v1908, %v352
        %v1910 = vmul.f32 %v1908, %v353
        %v1911 = vmul.f32 %v1908, %v354
        %v1915 = vrot.slane %v1909, 4
        %v1916 = vrot.slane %v1910, 4
        %v1917 = vsel %vm885, %v1915, %v1916
        %v1918 = vrot.slane %v1911, 4
        %v1919 = vsel %vm885, %v1916, %v1918
        %1920 = vrot.lane.b32.xlu0 %v1917, 124
        %v1921 = vpop.permute.xlu0 %1920
        %1922 = vrot.lane.b32.xlu0 %v1919, 124
        %v1923 = vpop.permute.xlu0 %1922
        %v1926 = vadd.f32 %v1905, %v1921
        %v1927 = vadd.f32 %v1906, %v1923
        %s1928 = sld [smem:[#allocation2 + $0x52]]
        %v1929 = vstv %s1928
        %v1930 = vmul.f32 %v1929, %v352
        %v1931 = vmul.f32 %v1929, %v353
        %v1932 = vmul.f32 %v1929, %v354
        %v1936 = vrot.slane %v1930, 4
        %v1937 = vrot.slane %v1931, 4
        %v1938 = vsel %vm885, %v1936, %v1937
        %v1939 = vrot.slane %v1932, 4
        %v1940 = vsel %vm885, %v1937, %v1939
        %1941 = vrot.lane.b32.xlu0 %v1938, 123
        %v1942 = vpop.permute.xlu0 %1941
        %1943 = vrot.lane.b32.xlu0 %v1940, 123
        %v1944 = vpop.permute.xlu0 %1943
        %v1947 = vadd.f32 %v1926, %v1942
        %v1948 = vadd.f32 %v1927, %v1944
        %s1949 = sld [smem:[#allocation2 + $0x53]]
        %v1950 = vstv %s1949
        %v1951 = vmul.f32 %v1950, %v352
        %v1952 = vmul.f32 %v1950, %v353
        %v1953 = vmul.f32 %v1950, %v354
        %v1957 = vrot.slane %v1951, 4
        %v1958 = vrot.slane %v1952, 4
        %v1959 = vsel %vm885, %v1957, %v1958
        %v1960 = vrot.slane %v1953, 4
        %v1961 = vsel %vm885, %v1958, %v1960
        %1962 = vrot.lane.b32.xlu0 %v1959, 122
        %v1963 = vpop.permute.xlu0 %1962
        %1964 = vrot.lane.b32.xlu0 %v1961, 122
        %v1965 = vpop.permute.xlu0 %1964
        %v1968 = vadd.f32 %v1947, %v1963
        %v1969 = vadd.f32 %v1948, %v1965
        %s1970 = sld [smem:[#allocation2 + $0x54]]
        %v1971 = vstv %s1970
        %v1972 = vmul.f32 %v1971, %v352
        %v1973 = vmul.f32 %v1971, %v353
        %v1974 = vmul.f32 %v1971, %v354
        %v1978 = vrot.slane %v1972, 5
        %v1979 = vrot.slane %v1973, 5
        %v1980 = vsel %vm302, %v1978, %v1979
        %v1981 = vrot.slane %v1974, 5
        %v1982 = vsel %vm302, %v1979, %v1981
        %v1985 = vadd.f32 %v1968, %v1980
        %v1986 = vadd.f32 %v1969, %v1982
        %s1987 = sld [smem:[#allocation2 + $0x55]]
        %v1988 = vstv %s1987
        %v1989 = vmul.f32 %v1988, %v352
        %v1990 = vmul.f32 %v1988, %v353
        %v1991 = vmul.f32 %v1988, %v354
        %v1995 = vrot.slane %v1989, 5
        %v1996 = vrot.slane %v1990, 5
        %v1997 = vsel %vm302, %v1995, %v1996
        %v1998 = vrot.slane %v1991, 5
        %v1999 = vsel %vm302, %v1996, %v1998
        %2000 = vrot.lane.b32.xlu0 %v1997, 127
        %v2001 = vpop.permute.xlu0 %2000
        %2002 = vrot.lane.b32.xlu0 %v1999, 127
        %v2003 = vpop.permute.xlu0 %2002
        %v2006 = vadd.f32 %v1985, %v2001
        %v2007 = vadd.f32 %v1986, %v2003
        %s2008 = sld [smem:[#allocation2 + $0x56]]
        %v2009 = vstv %s2008
        %v2010 = vmul.f32 %v2009, %v352
        %v2011 = vmul.f32 %v2009, %v353
        %v2012 = vmul.f32 %v2009, %v354
        %v2016 = vrot.slane %v2010, 5
        %v2017 = vrot.slane %v2011, 5
        %v2018 = vsel %vm302, %v2016, %v2017
        %v2019 = vrot.slane %v2012, 5
        %v2020 = vsel %vm302, %v2017, %v2019
        %2021 = vrot.lane.b32.xlu0 %v2018, 126
        %v2022 = vpop.permute.xlu0 %2021
        %2023 = vrot.lane.b32.xlu0 %v2020, 126
        %v2024 = vpop.permute.xlu0 %2023
        %v2027 = vadd.f32 %v2006, %v2022
        %v2028 = vadd.f32 %v2007, %v2024
        %s2029 = sld [smem:[#allocation2 + $0x57]]
        %v2030 = vstv %s2029
        %v2031 = vmul.f32 %v2030, %v352
        %v2032 = vmul.f32 %v2030, %v353
        %v2033 = vmul.f32 %v2030, %v354
        %v2037 = vrot.slane %v2031, 5
        %v2038 = vrot.slane %v2032, 5
        %v2039 = vsel %vm302, %v2037, %v2038
        %v2040 = vrot.slane %v2033, 5
        %v2041 = vsel %vm302, %v2038, %v2040
        %2042 = vrot.lane.b32.xlu0 %v2039, 125
        %v2043 = vpop.permute.xlu0 %2042
        %2044 = vrot.lane.b32.xlu0 %v2041, 125
        %v2045 = vpop.permute.xlu0 %2044
        %v2048 = vadd.f32 %v2027, %v2043
        %v2049 = vadd.f32 %v2028, %v2045
        %s2050 = sld [smem:[#allocation2 + $0x58]]
        %v2051 = vstv %s2050
        %v2052 = vmul.f32 %v2051, %v352
        %v2053 = vmul.f32 %v2051, %v353
        %v2054 = vmul.f32 %v2051, %v354
        %v2058 = vrot.slane %v2052, 5
        %v2059 = vrot.slane %v2053, 5
        %v2060 = vsel %vm302, %v2058, %v2059
        %v2061 = vrot.slane %v2054, 5
        %v2062 = vsel %vm302, %v2059, %v2061
        %2063 = vrot.lane.b32.xlu0 %v2060, 124
        %v2064 = vpop.permute.xlu0 %2063
        %2065 = vrot.lane.b32.xlu0 %v2062, 124
        %v2066 = vpop.permute.xlu0 %2065
        %v2069 = vadd.f32 %v2048, %v2064
        %v2070 = vadd.f32 %v2049, %v2066
        %s2071 = sld [smem:[#allocation2 + $0x59]]
        %v2072 = vstv %s2071
        %v2073 = vmul.f32 %v2072, %v352
        %v2074 = vmul.f32 %v2072, %v353
        %v2075 = vmul.f32 %v2072, %v354
        %v2079 = vrot.slane %v2073, 5
        %v2080 = vrot.slane %v2074, 5
        %v2081 = vsel %vm302, %v2079, %v2080
        %v2082 = vrot.slane %v2075, 5
        %v2083 = vsel %vm302, %v2080, %v2082
        %2084 = vrot.lane.b32.xlu0 %v2081, 123
        %v2085 = vpop.permute.xlu0 %2084
        %2086 = vrot.lane.b32.xlu0 %v2083, 123
        %v2087 = vpop.permute.xlu0 %2086
        %v2090 = vadd.f32 %v2069, %v2085
        %v2091 = vadd.f32 %v2070, %v2087
        %s2092 = sld [smem:[#allocation2 + $0x5a]]
        %v2093 = vstv %s2092
        %v2094 = vmul.f32 %v2093, %v352
        %v2095 = vmul.f32 %v2093, %v353
        %v2096 = vmul.f32 %v2093, %v354
        %v2100 = vrot.slane %v2094, 5
        %v2101 = vrot.slane %v2095, 5
        %v2102 = vsel %vm302, %v2100, %v2101
        %v2103 = vrot.slane %v2096, 5
        %v2104 = vsel %vm302, %v2101, %v2103
        %2105 = vrot.lane.b32.xlu0 %v2102, 122
        %v2106 = vpop.permute.xlu0 %2105
        %2107 = vrot.lane.b32.xlu0 %v2104, 122
        %v2108 = vpop.permute.xlu0 %2107
        %v2111 = vadd.f32 %v2090, %v2106
        %v2112 = vadd.f32 %v2091, %v2108
        %s2113 = sld [smem:[#allocation2 + $0x5b]]
        %v2114 = vstv %s2113
        %v2115 = vmul.f32 %v2114, %v352
        %v2116 = vmul.f32 %v2114, %v353
        %v2117 = vmul.f32 %v2114, %v354
        %v2121 = vrot.slane %v2115, 6
        %v2122 = vrot.slane %v2116, 6
        %v2123 = vsel %vm1172, %v2121, %v2122
        %v2124 = vrot.slane %v2117, 6
        %v2125 = vsel %vm1172, %v2122, %v2124
        %v2128 = vadd.f32 %v2111, %v2123
        %v2129 = vadd.f32 %v2112, %v2125
        %s2130 = sld [smem:[#allocation2 + $0x5c]]
        %v2131 = vstv %s2130
        %v2132 = vmul.f32 %v2131, %v352
        %v2133 = vmul.f32 %v2131, %v353
        %v2134 = vmul.f32 %v2131, %v354
        %v2138 = vrot.slane %v2132, 6
        %v2139 = vrot.slane %v2133, 6
        %v2140 = vsel %vm1172, %v2138, %v2139
        %v2141 = vrot.slane %v2134, 6
        %v2142 = vsel %vm1172, %v2139, %v2141
        %2143 = vrot.lane.b32.xlu0 %v2140, 127
        %v2144 = vpop.permute.xlu0 %2143
        %2145 = vrot.lane.b32.xlu0 %v2142, 127
        %v2146 = vpop.permute.xlu0 %2145
        %v2149 = vadd.f32 %v2128, %v2144
        %v2150 = vadd.f32 %v2129, %v2146
        %s2151 = sld [smem:[#allocation2 + $0x5d]]
        %v2152 = vstv %s2151
        %v2153 = vmul.f32 %v2152, %v352
        %v2154 = vmul.f32 %v2152, %v353
        %v2155 = vmul.f32 %v2152, %v354
        %v2159 = vrot.slane %v2153, 6
        %v2160 = vrot.slane %v2154, 6
        %v2161 = vsel %vm1172, %v2159, %v2160
        %v2162 = vrot.slane %v2155, 6
        %v2163 = vsel %vm1172, %v2160, %v2162
        %2164 = vrot.lane.b32.xlu0 %v2161, 126
        %v2165 = vpop.permute.xlu0 %2164
        %2166 = vrot.lane.b32.xlu0 %v2163, 126
        %v2167 = vpop.permute.xlu0 %2166
        %v2170 = vadd.f32 %v2149, %v2165
        %v2171 = vadd.f32 %v2150, %v2167
        %s2172 = sld [smem:[#allocation2 + $0x5e]]
        %v2173 = vstv %s2172
        %v2174 = vmul.f32 %v2173, %v352
        %v2175 = vmul.f32 %v2173, %v353
        %v2176 = vmul.f32 %v2173, %v354
        %v2180 = vrot.slane %v2174, 6
        %v2181 = vrot.slane %v2175, 6
        %v2182 = vsel %vm1172, %v2180, %v2181
        %v2183 = vrot.slane %v2176, 6
        %v2184 = vsel %vm1172, %v2181, %v2183
        %2185 = vrot.lane.b32.xlu0 %v2182, 125
        %v2186 = vpop.permute.xlu0 %2185
        %2187 = vrot.lane.b32.xlu0 %v2184, 125
        %v2188 = vpop.permute.xlu0 %2187
        %v2191 = vadd.f32 %v2170, %v2186
        %v2192 = vadd.f32 %v2171, %v2188
        %s2193 = sld [smem:[#allocation2 + $0x5f]]
        %v2194 = vstv %s2193
        %v2195 = vmul.f32 %v2194, %v352
        %v2196 = vmul.f32 %v2194, %v353
        %v2197 = vmul.f32 %v2194, %v354
        %v2201 = vrot.slane %v2195, 6
        %v2202 = vrot.slane %v2196, 6
        %v2203 = vsel %vm1172, %v2201, %v2202
        %v2204 = vrot.slane %v2197, 6
        %v2205 = vsel %vm1172, %v2202, %v2204
        %2206 = vrot.lane.b32.xlu0 %v2203, 124
        %v2207 = vpop.permute.xlu0 %2206
        %2208 = vrot.lane.b32.xlu0 %v2205, 124
        %v2209 = vpop.permute.xlu0 %2208
        %v2212 = vadd.f32 %v2191, %v2207
        %v2213 = vadd.f32 %v2192, %v2209
        %s2214 = sld [smem:[#allocation2 + $0x60]]
        %v2215 = vstv %s2214
        %v2216 = vmul.f32 %v2215, %v352
        %v2217 = vmul.f32 %v2215, %v353
        %v2218 = vmul.f32 %v2215, %v354
        %v2222 = vrot.slane %v2216, 6
        %v2223 = vrot.slane %v2217, 6
        %v2224 = vsel %vm1172, %v2222, %v2223
        %v2225 = vrot.slane %v2218, 6
        %v2226 = vsel %vm1172, %v2223, %v2225
        %2227 = vrot.lane.b32.xlu0 %v2224, 123
        %v2228 = vpop.permute.xlu0 %2227
        %2229 = vrot.lane.b32.xlu0 %v2226, 123
        %v2230 = vpop.permute.xlu0 %2229
        %v2233 = vadd.f32 %v2212, %v2228
        %v2234 = vadd.f32 %v2213, %v2230
        %s2235 = sld [smem:[#allocation2 + $0x61]]
        %v2236 = vstv %s2235
        %v2237 = vmul.f32 %v2236, %v352
        %v2238 = vmul.f32 %v2236, %v353
        %v2239 = vmul.f32 %v2236, %v354
        %v2243 = vrot.slane %v2237, 6
        %v2244 = vrot.slane %v2238, 6
        %v2245 = vsel %vm1172, %v2243, %v2244
        %v2246 = vrot.slane %v2239, 6
        %v2247 = vsel %vm1172, %v2244, %v2246
        %2248 = vrot.lane.b32.xlu0 %v2245, 122
        %v2249 = vpop.permute.xlu0 %2248
        %2250 = vrot.lane.b32.xlu0 %v2247, 122
        %v2251 = vpop.permute.xlu0 %2250
        %v2254 = vadd.f32 %v2233, %v2249
        %v2255 = vadd.f32 %v2234, %v2251
        %s2256 = sld [smem:[#allocation2 + $0x62]]
        %v2257 = vstv %s2256
        %v2258 = vadd.f32 %v2254, %v2257
        %v2259 = vadd.f32 %v2255, %v2257
        %v2260 = vxor.u32 %v2258, 2147483648
        %v2261 = vxor.u32 %v2259, 2147483648
        %v2262 = vmul.f32 %v2260, 1.442695
        %v2263 = vpow.pop %v2262
        %v2264 = vmul.f32 %v2261, 1.442695
        %v2265 = vpow.pop %v2264
        %v2266 = vadd.f32 %v2263, 1.0
        %v2267 = vadd.f32 %v2265, 1.0
        %v2268 = vrcp.pop %v2266
        %v2269 = vmul.f32 1.0, %v2268
        %v2270 = vrcp.pop %v2267
        %v2271 = vmul.f32 1.0, %v2270
        %v2272 = vmax.f32 %v205, %v206
        %v2273 = vrot.slane %v2272, 4
        %v2274 = vmax.f32 %v2272, %v2273
        %v2275 = vrot.slane %v2274, 2
        %v2276 = vmax.f32 %v2274, %v2275
        %v2277 = vrot.slane %v2276, 1
        %v2278 = vmax.f32 %v2276, %v2277
        %v2279 = vmax.f32 %v207, %v208
        %v2280 = vrot.slane %v2279, 4
        %v2281 = vmax.f32 %v2279, %v2280
        %v2282 = vrot.slane %v2281, 2
        %v2283 = vmax.f32 %v2281, %v2282
        %v2284 = vrot.slane %v2283, 1
        %v2285 = vmax.f32 %v2283, %v2284
        %v2286 = vmax.f32 %v209, %v210
        %v2287 = vrot.slane %v2286, 4
        %v2288 = vmax.f32 %v2286, %v2287
        %v2289 = vrot.slane %v2288, 2
        %v2290 = vmax.f32 %v2288, %v2289
        %v2291 = vrot.slane %v2290, 1
        %v2292 = vmax.f32 %v2290, %v2291
        %v2293 = vmax.f32 %v211, %v212
        %v2294 = vrot.slane %v2293, 4
        %v2295 = vmax.f32 %v2293, %v2294
        %v2296 = vrot.slane %v2295, 2
        %v2297 = vmax.f32 %v2295, %v2296
        %v2298 = vrot.slane %v2297, 1
        %v2299 = vmax.f32 %v2297, %v2298
        %v2300 = vmax.f32 %v213, %v214
        %v2301 = vrot.slane %v2300, 4
        %v2302 = vmax.f32 %v2300, %v2301
        %v2303 = vrot.slane %v2302, 2
        %v2304 = vmax.f32 %v2302, %v2303
        %v2305 = vrot.slane %v2304, 1
        %v2306 = vmax.f32 %v2304, %v2305
        %v2307 = vmax.f32 %v215, %v216
        %v2308 = vrot.slane %v2307, 4
        %v2309 = vmax.f32 %v2307, %v2308
        %v2310 = vrot.slane %v2309, 2
        %v2311 = vmax.f32 %v2309, %v2310
        %v2312 = vrot.slane %v2311, 1
        %v2313 = vmax.f32 %v2311, %v2312
        %v2314 = vmax.f32 %v217, %v218
        %v2315 = vrot.slane %v2314, 4
        %v2316 = vmax.f32 %v2314, %v2315
        %v2317 = vrot.slane %v2316, 2
        %v2318 = vmax.f32 %v2316, %v2317
        %v2319 = vrot.slane %v2318, 1
        %v2320 = vmax.f32 %v2318, %v2319
        %v2321 = vmax.f32 %v219, %v220
        %v2322 = vrot.slane %v2321, 4
        %v2323 = vmax.f32 %v2321, %v2322
        %v2324 = vrot.slane %v2323, 2
        %v2325 = vmax.f32 %v2323, %v2324
        %v2326 = vrot.slane %v2325, 1
        %v2327 = vmax.f32 %v2325, %v2326
        %v2328 = vmax.f32 %v221, %v222
        %v2329 = vrot.slane %v2328, 4
        %v2330 = vmax.f32 %v2328, %v2329
        %v2331 = vrot.slane %v2330, 2
        %v2332 = vmax.f32 %v2330, %v2331
        %v2333 = vrot.slane %v2332, 1
        %v2334 = vmax.f32 %v2332, %v2333
        %v2335 = vmax.f32 %v223, %v224
        %v2336 = vrot.slane %v2335, 4
        %v2337 = vmax.f32 %v2335, %v2336
        %v2338 = vrot.slane %v2337, 2
        %v2339 = vmax.f32 %v2337, %v2338
        %v2340 = vrot.slane %v2339, 1
        %v2341 = vmax.f32 %v2339, %v2340
        %v2342 = vmax.f32 %v225, %v226
        %v2343 = vrot.slane %v2342, 4
        %v2344 = vmax.f32 %v2342, %v2343
        %v2345 = vrot.slane %v2344, 2
        %v2346 = vmax.f32 %v2344, %v2345
        %v2347 = vrot.slane %v2346, 1
        %v2348 = vmax.f32 %v2346, %v2347
        %v2349 = vmax.f32 %v227, %v228
        %v2350 = vrot.slane %v2349, 4
        %v2351 = vmax.f32 %v2349, %v2350
        %v2352 = vrot.slane %v2351, 2
        %v2353 = vmax.f32 %v2351, %v2352
        %v2354 = vrot.slane %v2353, 1
        %v2355 = vmax.f32 %v2353, %v2354
        %v2356 = vmax.f32 %v229, %v230
        %v2357 = vrot.slane %v2356, 4
        %v2358 = vmax.f32 %v2356, %v2357
        %v2359 = vrot.slane %v2358, 2
        %v2360 = vmax.f32 %v2358, %v2359
        %v2361 = vrot.slane %v2360, 1
        %v2362 = vmax.f32 %v2360, %v2361
        %v2363 = vmax.f32 %v231, %v232
        %v2364 = vrot.slane %v2363, 4
        %v2365 = vmax.f32 %v2363, %v2364
        %v2366 = vrot.slane %v2365, 2
        %v2367 = vmax.f32 %v2365, %v2366
        %v2368 = vrot.slane %v2367, 1
        %v2369 = vmax.f32 %v2367, %v2368
        %v2370 = vmax.f32 %v233, %v234
        %v2371 = vrot.slane %v2370, 4
        %v2372 = vmax.f32 %v2370, %v2371
        %v2373 = vrot.slane %v2372, 2
        %v2374 = vmax.f32 %v2372, %v2373
        %v2375 = vrot.slane %v2374, 1
        %v2376 = vmax.f32 %v2374, %v2375
        %v2377 = vmax.f32 %v235, %v236
        %v2378 = vrot.slane %v2377, 4
        %v2379 = vmax.f32 %v2377, %v2378
        %v2380 = vrot.slane %v2379, 2
        %v2381 = vmax.f32 %v2379, %v2380
        %v2382 = vrot.slane %v2381, 1
        %v2383 = vmax.f32 %v2381, %v2382
        %v2384 = vadd.f32 %v205, %v206
        %v2385 = vrot.slane %v2384, 4
        %v2386 = vadd.f32 %v2384, %v2385
        %v2387 = vrot.slane %v2386, 2
        %v2388 = vadd.f32 %v2386, %v2387
        %v2389 = vrot.slane %v2388, 1
        %v2390 = vadd.f32 %v2388, %v2389
        %v2391 = vadd.f32 %v207, %v208
        %v2392 = vrot.slane %v2391, 4
        %v2393 = vadd.f32 %v2391, %v2392
        %v2394 = vrot.slane %v2393, 2
        %v2395 = vadd.f32 %v2393, %v2394
        %v2396 = vrot.slane %v2395, 1
        %v2397 = vadd.f32 %v2395, %v2396
        %v2398 = vadd.f32 %v209, %v210
        %v2399 = vrot.slane %v2398, 4
        %v2400 = vadd.f32 %v2398, %v2399
        %v2401 = vrot.slane %v2400, 2
        %v2402 = vadd.f32 %v2400, %v2401
        %v2403 = vrot.slane %v2402, 1
        %v2404 = vadd.f32 %v2402, %v2403
        %v2405 = vadd.f32 %v211, %v212
        %v2406 = vrot.slane %v2405, 4
        %v2407 = vadd.f32 %v2405, %v2406
        %v2408 = vrot.slane %v2407, 2
        %v2409 = vadd.f32 %v2407, %v2408
        %v2410 = vrot.slane %v2409, 1
        %v2411 = vadd.f32 %v2409, %v2410
        %v2412 = vadd.f32 %v213, %v214
        %v2413 = vrot.slane %v2412, 4
        %v2414 = vadd.f32 %v2412, %v2413
        %v2415 = vrot.slane %v2414, 2
        %v2416 = vadd.f32 %v2414, %v2415
        %v2417 = vrot.slane %v2416, 1
        %v2418 = vadd.f32 %v2416, %v2417
        %v2419 = vadd.f32 %v215, %v216
        %v2420 = vrot.slane %v2419, 4
        %v2421 = vadd.f32 %v2419, %v2420
        %v2422 = vrot.slane %v2421, 2
        %v2423 = vadd.f32 %v2421, %v2422
        %v2424 = vrot.slane %v2423, 1
        %v2425 = vadd.f32 %v2423, %v2424
        %v2426 = vadd.f32 %v217, %v218
        %v2427 = vrot.slane %v2426, 4
        %v2428 = vadd.f32 %v2426, %v2427
        %v2429 = vrot.slane %v2428, 2
        %v2430 = vadd.f32 %v2428, %v2429
        %v2431 = vrot.slane %v2430, 1
        %v2432 = vadd.f32 %v2430, %v2431
        %v2433 = vadd.f32 %v219, %v220
        %v2434 = vrot.slane %v2433, 4
        %v2435 = vadd.f32 %v2433, %v2434
        %v2436 = vrot.slane %v2435, 2
        %v2437 = vadd.f32 %v2435, %v2436
        %v2438 = vrot.slane %v2437, 1
        %v2439 = vadd.f32 %v2437, %v2438
        %v2440 = vadd.f32 %v221, %v222
        %v2441 = vrot.slane %v2440, 4
        %v2442 = vadd.f32 %v2440, %v2441
        %v2443 = vrot.slane %v2442, 2
        %v2444 = vadd.f32 %v2442, %v2443
        %v2445 = vrot.slane %v2444, 1
        %v2446 = vadd.f32 %v2444, %v2445
        %v2447 = vadd.f32 %v223, %v224
        %v2448 = vrot.slane %v2447, 4
        %v2449 = vadd.f32 %v2447, %v2448
        %v2450 = vrot.slane %v2449, 2
        %v2451 = vadd.f32 %v2449, %v2450
        %v2452 = vrot.slane %v2451, 1
        %v2453 = vadd.f32 %v2451, %v2452
        %v2454 = vadd.f32 %v225, %v226
        %v2455 = vrot.slane %v2454, 4
        %v2456 = vadd.f32 %v2454, %v2455
        %v2457 = vrot.slane %v2456, 2
        %v2458 = vadd.f32 %v2456, %v2457
        %v2459 = vrot.slane %v2458, 1
        %v2460 = vadd.f32 %v2458, %v2459
        %v2461 = vadd.f32 %v227, %v228
        %v2462 = vrot.slane %v2461, 4
        %v2463 = vadd.f32 %v2461, %v2462
        %v2464 = vrot.slane %v2463, 2
        %v2465 = vadd.f32 %v2463, %v2464
        %v2466 = vrot.slane %v2465, 1
        %v2467 = vadd.f32 %v2465, %v2466
        %v2468 = vadd.f32 %v229, %v230
        %v2469 = vrot.slane %v2468, 4
        %v2470 = vadd.f32 %v2468, %v2469
        %v2471 = vrot.slane %v2470, 2
        %v2472 = vadd.f32 %v2470, %v2471
        %v2473 = vrot.slane %v2472, 1
        %v2474 = vadd.f32 %v2472, %v2473
        %v2475 = vadd.f32 %v231, %v232
        %v2476 = vrot.slane %v2475, 4
        %v2477 = vadd.f32 %v2475, %v2476
        %v2478 = vrot.slane %v2477, 2
        %v2479 = vadd.f32 %v2477, %v2478
        %v2480 = vrot.slane %v2479, 1
        %v2481 = vadd.f32 %v2479, %v2480
        %v2482 = vadd.f32 %v233, %v234
        %v2483 = vrot.slane %v2482, 4
        %v2484 = vadd.f32 %v2482, %v2483
        %v2485 = vrot.slane %v2484, 2
        %v2486 = vadd.f32 %v2484, %v2485
        %v2487 = vrot.slane %v2486, 1
        %v2488 = vadd.f32 %v2486, %v2487
        %v2489 = vadd.f32 %v235, %v236
        %v2490 = vrot.slane %v2489, 4
        %v2491 = vadd.f32 %v2489, %v2490
        %v2492 = vrot.slane %v2491, 2
        %v2493 = vadd.f32 %v2491, %v2492
        %v2494 = vrot.slane %v2493, 1
        %v2495 = vadd.f32 %v2493, %v2494
        %v2496 = vmul.f32 %v2390, %v297
        %v2497 = vmul.f32 %v2397, %v297
        %v2498 = vmul.f32 %v2404, %v297
        %v2499 = vmul.f32 %v2411, %v297
        %v2500 = vmul.f32 %v2418, %v297
        %v2501 = vmul.f32 %v2425, %v297
        %v2502 = vmul.f32 %v2432, %v297
        %v2503 = vmul.f32 %v2439, %v297
        %v2504 = vmul.f32 %v2446, %v297
        %v2505 = vmul.f32 %v2453, %v297
        %v2506 = vmul.f32 %v2460, %v297
        %v2507 = vmul.f32 %v2467, %v297
        %v2508 = vmul.f32 %v2474, %v297
        %v2509 = vmul.f32 %v2481, %v297
        %v2510 = vmul.f32 %v2488, %v297
        %v2511 = vmul.f32 %v2495, %v297
        %vm2528 = vcmask 1044484
        %v2529 = vsel %vm2528, %v2285, %v2278
        %vm2530 = vcmask 1045509
        %v2531 = vsel %vm2530, %v2292, %v2529
        %vm2532 = vcmask 1046534
        %v2533 = vsel %vm2532, %v2299, %v2531
        %vm2534 = vcmask 1047559
        %v2535 = vsel %vm2534, %v2306, %v2533
        %vm2536 = vcmask 1041409
        %v2537 = vsel %vm2536, %v2320, %v2313
        %vm2538 = vcmask 1042434
        %v2539 = vsel %vm2538, %v2327, %v2537
        %vm2540 = vcmask 1043459
        %v2541 = vsel %vm2540, %v2334, %v2539
        %v2542 = vsel %vm2528, %v2341, %v2541
        %v2543 = vsel %vm2530, %v2348, %v2542
        %v2544 = vsel %vm2532, %v2355, %v2543
        %v2545 = vsel %vm2534, %v2362, %v2544
        %v2546 = vsel %vm2536, %v2376, %v2369
        %v2547 = vsel %vm2538, %v2383, %v2546
        %v2550 = vsel %vm302, 0.0, %v2535
        %v2551 = vsel %vm302, %v2547, 0.0
        %2554 = vrot.lane.b32.xlu0 %v2550, 3
        %v2555 = vpop.permute.xlu0 %2554
        %2556 = vrot.lane.b32.xlu0 %v2545, 3
        %v2557 = vpop.permute.xlu0 %2556
        %2558 = vrot.lane.b32.xlu0 %v2551, 3
        %v2559 = vpop.permute.xlu0 %2558
        %v2563 = vsel %vm321, 0.0, %v2555
        %v2564 = vsel %vm321, 0.0, %v2557
        %v2565 = vsel %vm321, 0.0, %v2559
        %v2566 = vsel %vm325, %v2563, 0.0
        %v2567 = vsel %vm325, %v2564, 0.0
        %v2568 = vsel %vm325, %v2565, 0.0
        %v2585 = vsel %vm2528, %v2497, %v2496
        %v2586 = vsel %vm2530, %v2498, %v2585
        %v2587 = vsel %vm2532, %v2499, %v2586
        %v2588 = vsel %vm2534, %v2500, %v2587
        %v2589 = vsel %vm2536, %v2502, %v2501
        %v2590 = vsel %vm2538, %v2503, %v2589
        %v2591 = vsel %vm2540, %v2504, %v2590
        %v2592 = vsel %vm2528, %v2505, %v2591
        %v2593 = vsel %vm2530, %v2506, %v2592
        %v2594 = vsel %vm2532, %v2507, %v2593
        %v2595 = vsel %vm2534, %v2508, %v2594
        %v2596 = vsel %vm2536, %v2510, %v2509
        %v2597 = vsel %vm2538, %v2511, %v2596
        %v2600 = vsel %vm302, 0.0, %v2588
        %v2601 = vsel %vm302, %v2597, 0.0
        %2604 = vrot.lane.b32.xlu0 %v2600, 3
        %v2605 = vpop.permute.xlu0 %2604
        %2606 = vrot.lane.b32.xlu0 %v2595, 3
        %v2607 = vpop.permute.xlu0 %2606
        %2608 = vrot.lane.b32.xlu0 %v2601, 3
        %v2609 = vpop.permute.xlu0 %2608
        %v2613 = vsel %vm321, 0.0, %v2605
        %v2614 = vsel %vm321, 0.0, %v2607
        %v2615 = vsel %vm321, 0.0, %v2609
        %v2616 = vsel %vm325, %v2613, 0.0
        %v2617 = vsel %vm325, %v2614, 0.0
        %v2618 = vsel %vm325, %v2615, 0.0
        %s2619 = sld [smem:[#allocation2 + $0x63]]
        %v2620 = vstv %s2619
        %v2621 = vmul.f32 %v2620, %v2566
        %v2622 = vmul.f32 %v2620, %v2567
        %v2623 = vadd.f32 %v2621, 0.0
        %v2624 = vadd.f32 %v2622, 0.0
        %s2625 = sld [smem:[#allocation2 + $0x64]]
        %v2626 = vstv %s2625
        %v2627 = vmul.f32 %v2626, %v2566
        %v2628 = vmul.f32 %v2626, %v2567
        %2631 = vrot.lane.b32.xlu0 %v2627, 127
        %v2632 = vpop.permute.xlu0 %2631
        %2633 = vrot.lane.b32.xlu0 %v2628, 127
        %v2634 = vpop.permute.xlu0 %2633
        %v2637 = vadd.f32 %v2623, %v2632
        %v2638 = vadd.f32 %v2624, %v2634
        %s2639 = sld [smem:[#allocation2 + $0x65]]
        %v2640 = vstv %s2639
        %v2641 = vmul.f32 %v2640, %v2566
        %v2642 = vmul.f32 %v2640, %v2567
        %2645 = vrot.lane.b32.xlu0 %v2641, 126
        %v2646 = vpop.permute.xlu0 %2645
        %2647 = vrot.lane.b32.xlu0 %v2642, 126
        %v2648 = vpop.permute.xlu0 %2647
        %v2651 = vadd.f32 %v2637, %v2646
        %v2652 = vadd.f32 %v2638, %v2648
        %s2653 = sld [smem:[#allocation2 + $0x66]]
        %v2654 = vstv %s2653
        %v2655 = vmul.f32 %v2654, %v2566
        %v2656 = vmul.f32 %v2654, %v2567
        %2659 = vrot.lane.b32.xlu0 %v2655, 125
        %v2660 = vpop.permute.xlu0 %2659
        %2661 = vrot.lane.b32.xlu0 %v2656, 125
        %v2662 = vpop.permute.xlu0 %2661
        %v2665 = vadd.f32 %v2651, %v2660
        %v2666 = vadd.f32 %v2652, %v2662
        %s2667 = sld [smem:[#allocation2 + $0x67]]
        %v2668 = vstv %s2667
        %v2669 = vmul.f32 %v2668, %v2566
        %v2670 = vmul.f32 %v2668, %v2567
        %2673 = vrot.lane.b32.xlu0 %v2669, 124
        %v2674 = vpop.permute.xlu0 %2673
        %2675 = vrot.lane.b32.xlu0 %v2670, 124
        %v2676 = vpop.permute.xlu0 %2675
        %v2679 = vadd.f32 %v2665, %v2674
        %v2680 = vadd.f32 %v2666, %v2676
        %s2681 = sld [smem:[#allocation2 + $0x68]]
        %v2682 = vstv %s2681
        %v2683 = vmul.f32 %v2682, %v2566
        %v2684 = vmul.f32 %v2682, %v2567
        %2687 = vrot.lane.b32.xlu0 %v2683, 123
        %v2688 = vpop.permute.xlu0 %2687
        %2689 = vrot.lane.b32.xlu0 %v2684, 123
        %v2690 = vpop.permute.xlu0 %2689
        %v2693 = vadd.f32 %v2679, %v2688
        %v2694 = vadd.f32 %v2680, %v2690
        %s2695 = sld [smem:[#allocation2 + $0x69]]
        %v2696 = vstv %s2695
        %v2697 = vmul.f32 %v2696, %v2566
        %v2698 = vmul.f32 %v2696, %v2567
        %2701 = vrot.lane.b32.xlu0 %v2697, 122
        %v2702 = vpop.permute.xlu0 %2701
        %2703 = vrot.lane.b32.xlu0 %v2698, 122
        %v2704 = vpop.permute.xlu0 %2703
        %v2707 = vadd.f32 %v2693, %v2702
        %v2708 = vadd.f32 %v2694, %v2704
        %s2709 = sld [smem:[#allocation2 + $0x6a]]
        %v2710 = vstv %s2709
        %v2711 = vmul.f32 %v2710, %v2566
        %v2712 = vmul.f32 %v2710, %v2567
        %v2713 = vmul.f32 %v2710, %v2568
        %v2717 = vrot.slane %v2711, 1
        %v2718 = vrot.slane %v2712, 1
        %v2719 = vsel %vm453, %v2717, %v2718
        %v2720 = vrot.slane %v2713, 1
        %v2721 = vsel %vm453, %v2718, %v2720
        %v2724 = vadd.f32 %v2707, %v2719
        %v2725 = vadd.f32 %v2708, %v2721
        %s2726 = sld [smem:[#allocation2 + $0x6b]]
        %v2727 = vstv %s2726
        %v2728 = vmul.f32 %v2727, %v2566
        %v2729 = vmul.f32 %v2727, %v2567
        %v2730 = vmul.f32 %v2727, %v2568
        %v2734 = vrot.slane %v2728, 1
        %v2735 = vrot.slane %v2729, 1
        %v2736 = vsel %vm453, %v2734, %v2735
        %v2737 = vrot.slane %v2730, 1
        %v2738 = vsel %vm453, %v2735, %v2737
        %2739 = vrot.lane.b32.xlu0 %v2736, 127
        %v2740 = vpop.permute.xlu0 %2739
        %2741 = vrot.lane.b32.xlu0 %v2738, 127
        %v2742 = vpop.permute.xlu0 %2741
        %v2745 = vadd.f32 %v2724, %v2740
        %v2746 = vadd.f32 %v2725, %v2742
        %s2747 = sld [smem:[#allocation2 + $0x6c]]
        %v2748 = vstv %s2747
        %v2749 = vmul.f32 %v2748, %v2566
        %v2750 = vmul.f32 %v2748, %v2567
        %v2751 = vmul.f32 %v2748, %v2568
        %v2755 = vrot.slane %v2749, 1
        %v2756 = vrot.slane %v2750, 1
        %v2757 = vsel %vm453, %v2755, %v2756
        %v2758 = vrot.slane %v2751, 1
        %v2759 = vsel %vm453, %v2756, %v2758
        %2760 = vrot.lane.b32.xlu0 %v2757, 126
        %v2761 = vpop.permute.xlu0 %2760
        %2762 = vrot.lane.b32.xlu0 %v2759, 126
        %v2763 = vpop.permute.xlu0 %2762
        %v2766 = vadd.f32 %v2745, %v2761
        %v2767 = vadd.f32 %v2746, %v2763
        %s2768 = sld [smem:[#allocation2 + $0x6d]]
        %v2769 = vstv %s2768
        %v2770 = vmul.f32 %v2769, %v2566
        %v2771 = vmul.f32 %v2769, %v2567
        %v2772 = vmul.f32 %v2769, %v2568
        %v2776 = vrot.slane %v2770, 1
        %v2777 = vrot.slane %v2771, 1
        %v2778 = vsel %vm453, %v2776, %v2777
        %v2779 = vrot.slane %v2772, 1
        %v2780 = vsel %vm453, %v2777, %v2779
        %2781 = vrot.lane.b32.xlu0 %v2778, 125
        %v2782 = vpop.permute.xlu0 %2781
        %2783 = vrot.lane.b32.xlu0 %v2780, 125
        %v2784 = vpop.permute.xlu0 %2783
        %v2787 = vadd.f32 %v2766, %v2782
        %v2788 = vadd.f32 %v2767, %v2784
        %s2789 = sld [smem:[#allocation2 + $0x6e]]
        %v2790 = vstv %s2789
        %v2791 = vmul.f32 %v2790, %v2566
        %v2792 = vmul.f32 %v2790, %v2567
        %v2793 = vmul.f32 %v2790, %v2568
        %v2797 = vrot.slane %v2791, 1
        %v2798 = vrot.slane %v2792, 1
        %v2799 = vsel %vm453, %v2797, %v2798
        %v2800 = vrot.slane %v2793, 1
        %v2801 = vsel %vm453, %v2798, %v2800
        %2802 = vrot.lane.b32.xlu0 %v2799, 124
        %v2803 = vpop.permute.xlu0 %2802
        %2804 = vrot.lane.b32.xlu0 %v2801, 124
        %v2805 = vpop.permute.xlu0 %2804
        %v2808 = vadd.f32 %v2787, %v2803
        %v2809 = vadd.f32 %v2788, %v2805
        %s2810 = sld [smem:[#allocation2 + $0x6f]]
        %v2811 = vstv %s2810
        %v2812 = vmul.f32 %v2811, %v2566
        %v2813 = vmul.f32 %v2811, %v2567
        %v2814 = vmul.f32 %v2811, %v2568
        %v2818 = vrot.slane %v2812, 1
        %v2819 = vrot.slane %v2813, 1
        %v2820 = vsel %vm453, %v2818, %v2819
        %v2821 = vrot.slane %v2814, 1
        %v2822 = vsel %vm453, %v2819, %v2821
        %2823 = vrot.lane.b32.xlu0 %v2820, 123
        %v2824 = vpop.permute.xlu0 %2823
        %2825 = vrot.lane.b32.xlu0 %v2822, 123
        %v2826 = vpop.permute.xlu0 %2825
        %v2829 = vadd.f32 %v2808, %v2824
        %v2830 = vadd.f32 %v2809, %v2826
        %s2831 = sld [smem:[#allocation2 + $0x70]]
        %v2832 = vstv %s2831
        %v2833 = vmul.f32 %v2832, %v2566
        %v2834 = vmul.f32 %v2832, %v2567
        %v2835 = vmul.f32 %v2832, %v2568
        %v2839 = vrot.slane %v2833, 1
        %v2840 = vrot.slane %v2834, 1
        %v2841 = vsel %vm453, %v2839, %v2840
        %v2842 = vrot.slane %v2835, 1
        %v2843 = vsel %vm453, %v2840, %v2842
        %2844 = vrot.lane.b32.xlu0 %v2841, 122
        %v2845 = vpop.permute.xlu0 %2844
        %2846 = vrot.lane.b32.xlu0 %v2843, 122
        %v2847 = vpop.permute.xlu0 %2846
        %v2850 = vadd.f32 %v2829, %v2845
        %v2851 = vadd.f32 %v2830, %v2847
        %s2852 = sld [smem:[#allocation2 + $0x71]]
        %v2853 = vstv %s2852
        %v2854 = vmul.f32 %v2853, %v2566
        %v2855 = vmul.f32 %v2853, %v2567
        %v2856 = vmul.f32 %v2853, %v2568
        %v2860 = vrot.slane %v2854, 2
        %v2861 = vrot.slane %v2855, 2
        %v2862 = vsel %vm597, %v2860, %v2861
        %v2863 = vrot.slane %v2856, 2
        %v2864 = vsel %vm597, %v2861, %v2863
        %v2867 = vadd.f32 %v2850, %v2862
        %v2868 = vadd.f32 %v2851, %v2864
        %s2869 = sld [smem:[#allocation2 + $0x72]]
        %v2870 = vstv %s2869
        %v2871 = vmul.f32 %v2870, %v2566
        %v2872 = vmul.f32 %v2870, %v2567
        %v2873 = vmul.f32 %v2870, %v2568
        %v2877 = vrot.slane %v2871, 2
        %v2878 = vrot.slane %v2872, 2
        %v2879 = vsel %vm597, %v2877, %v2878
        %v2880 = vrot.slane %v2873, 2
        %v2881 = vsel %vm597, %v2878, %v2880
        %2882 = vrot.lane.b32.xlu0 %v2879, 127
        %v2883 = vpop.permute.xlu0 %2882
        %2884 = vrot.lane.b32.xlu0 %v2881, 127
        %v2885 = vpop.permute.xlu0 %2884
        %v2888 = vadd.f32 %v2867, %v2883
        %v2889 = vadd.f32 %v2868, %v2885
        %s2890 = sld [smem:[#allocation2 + $0x73]]
        %v2891 = vstv %s2890
        %v2892 = vmul.f32 %v2891, %v2566
        %v2893 = vmul.f32 %v2891, %v2567
        %v2894 = vmul.f32 %v2891, %v2568
        %v2898 = vrot.slane %v2892, 2
        %v2899 = vrot.slane %v2893, 2
        %v2900 = vsel %vm597, %v2898, %v2899
        %v2901 = vrot.slane %v2894, 2
        %v2902 = vsel %vm597, %v2899, %v2901
        %2903 = vrot.lane.b32.xlu0 %v2900, 126
        %v2904 = vpop.permute.xlu0 %2903
        %2905 = vrot.lane.b32.xlu0 %v2902, 126
        %v2906 = vpop.permute.xlu0 %2905
        %v2909 = vadd.f32 %v2888, %v2904
        %v2910 = vadd.f32 %v2889, %v2906
        %s2911 = sld [smem:[#allocation2 + $0x74]]
        %v2912 = vstv %s2911
        %v2913 = vmul.f32 %v2912, %v2566
        %v2914 = vmul.f32 %v2912, %v2567
        %v2915 = vmul.f32 %v2912, %v2568
        %v2919 = vrot.slane %v2913, 2
        %v2920 = vrot.slane %v2914, 2
        %v2921 = vsel %vm597, %v2919, %v2920
        %v2922 = vrot.slane %v2915, 2
        %v2923 = vsel %vm597, %v2920, %v2922
        %2924 = vrot.lane.b32.xlu0 %v2921, 125
        %v2925 = vpop.permute.xlu0 %2924
        %2926 = vrot.lane.b32.xlu0 %v2923, 125
        %v2927 = vpop.permute.xlu0 %2926
        %v2930 = vadd.f32 %v2909, %v2925
        %v2931 = vadd.f32 %v2910, %v2927
        %s2932 = sld [smem:[#allocation2 + $0x75]]
        %v2933 = vstv %s2932
        %v2934 = vmul.f32 %v2933, %v2566
        %v2935 = vmul.f32 %v2933, %v2567
        %v2936 = vmul.f32 %v2933, %v2568
        %v2940 = vrot.slane %v2934, 2
        %v2941 = vrot.slane %v2935, 2
        %v2942 = vsel %vm597, %v2940, %v2941
        %v2943 = vrot.slane %v2936, 2
        %v2944 = vsel %vm597, %v2941, %v2943
        %2945 = vrot.lane.b32.xlu0 %v2942, 124
        %v2946 = vpop.permute.xlu0 %2945
        %2947 = vrot.lane.b32.xlu0 %v2944, 124
        %v2948 = vpop.permute.xlu0 %2947
        %v2951 = vadd.f32 %v2930, %v2946
        %v2952 = vadd.f32 %v2931, %v2948
        %s2953 = sld [smem:[#allocation2 + $0x76]]
        %v2954 = vstv %s2953
        %v2955 = vmul.f32 %v2954, %v2566
        %v2956 = vmul.f32 %v2954, %v2567
        %v2957 = vmul.f32 %v2954, %v2568
        %v2961 = vrot.slane %v2955, 2
        %v2962 = vrot.slane %v2956, 2
        %v2963 = vsel %vm597, %v2961, %v2962
        %v2964 = vrot.slane %v2957, 2
        %v2965 = vsel %vm597, %v2962, %v2964
        %2966 = vrot.lane.b32.xlu0 %v2963, 123
        %v2967 = vpop.permute.xlu0 %2966
        %2968 = vrot.lane.b32.xlu0 %v2965, 123
        %v2969 = vpop.permute.xlu0 %2968
        %v2972 = vadd.f32 %v2951, %v2967
        %v2973 = vadd.f32 %v2952, %v2969
        %s2974 = sld [smem:[#allocation2 + $0x77]]
        %v2975 = vstv %s2974
        %v2976 = vmul.f32 %v2975, %v2566
        %v2977 = vmul.f32 %v2975, %v2567
        %v2978 = vmul.f32 %v2975, %v2568
        %v2982 = vrot.slane %v2976, 2
        %v2983 = vrot.slane %v2977, 2
        %v2984 = vsel %vm597, %v2982, %v2983
        %v2985 = vrot.slane %v2978, 2
        %v2986 = vsel %vm597, %v2983, %v2985
        %2987 = vrot.lane.b32.xlu0 %v2984, 122
        %v2988 = vpop.permute.xlu0 %2987
        %2989 = vrot.lane.b32.xlu0 %v2986, 122
        %v2990 = vpop.permute.xlu0 %2989
        %v2993 = vadd.f32 %v2972, %v2988
        %v2994 = vadd.f32 %v2973, %v2990
        %s2995 = sld [smem:[#allocation2 + $0x78]]
        %v2996 = vstv %s2995
        %v2997 = vmul.f32 %v2996, %v2566
        %v2998 = vmul.f32 %v2996, %v2567
        %v2999 = vmul.f32 %v2996, %v2568
        %v3003 = vrot.slane %v2997, 3
        %v3004 = vrot.slane %v2998, 3
        %v3005 = vsel %vm741, %v3003, %v3004
        %v3006 = vrot.slane %v2999, 3
        %v3007 = vsel %vm741, %v3004, %v3006
        %v3010 = vadd.f32 %v2993, %v3005
        %v3011 = vadd.f32 %v2994, %v3007
        %s3012 = sld [smem:[#allocation2 + $0x79]]
        %v3013 = vstv %s3012
        %v3014 = vmul.f32 %v3013, %v2566
        %v3015 = vmul.f32 %v3013, %v2567
        %v3016 = vmul.f32 %v3013, %v2568
        %v3020 = vrot.slane %v3014, 3
        %v3021 = vrot.slane %v3015, 3
        %v3022 = vsel %vm741, %v3020, %v3021
        %v3023 = vrot.slane %v3016, 3
        %v3024 = vsel %vm741, %v3021, %v3023
        %3025 = vrot.lane.b32.xlu0 %v3022, 127
        %v3026 = vpop.permute.xlu0 %3025
        %3027 = vrot.lane.b32.xlu0 %v3024, 127
        %v3028 = vpop.permute.xlu0 %3027
        %v3031 = vadd.f32 %v3010, %v3026
        %v3032 = vadd.f32 %v3011, %v3028
        %s3033 = sld [smem:[#allocation2 + $0x7a]]
        %v3034 = vstv %s3033
        %v3035 = vmul.f32 %v3034, %v2566
        %v3036 = vmul.f32 %v3034, %v2567
        %v3037 = vmul.f32 %v3034, %v2568
        %v3041 = vrot.slane %v3035, 3
        %v3042 = vrot.slane %v3036, 3
        %v3043 = vsel %vm741, %v3041, %v3042
        %v3044 = vrot.slane %v3037, 3
        %v3045 = vsel %vm741, %v3042, %v3044
        %3046 = vrot.lane.b32.xlu0 %v3043, 126
        %v3047 = vpop.permute.xlu0 %3046
        %3048 = vrot.lane.b32.xlu0 %v3045, 126
        %v3049 = vpop.permute.xlu0 %3048
        %v3052 = vadd.f32 %v3031, %v3047
        %v3053 = vadd.f32 %v3032, %v3049
        %s3054 = sld [smem:[#allocation2 + $0x7b]]
        %v3055 = vstv %s3054
        %v3056 = vmul.f32 %v3055, %v2566
        %v3057 = vmul.f32 %v3055, %v2567
        %v3058 = vmul.f32 %v3055, %v2568
        %v3062 = vrot.slane %v3056, 3
        %v3063 = vrot.slane %v3057, 3
        %v3064 = vsel %vm741, %v3062, %v3063
        %v3065 = vrot.slane %v3058, 3
        %v3066 = vsel %vm741, %v3063, %v3065
        %3067 = vrot.lane.b32.xlu0 %v3064, 125
        %v3068 = vpop.permute.xlu0 %3067
        %3069 = vrot.lane.b32.xlu0 %v3066, 125
        %v3070 = vpop.permute.xlu0 %3069
        %v3073 = vadd.f32 %v3052, %v3068
        %v3074 = vadd.f32 %v3053, %v3070
        %s3075 = sld [smem:[#allocation2 + $0x7c]]
        %v3076 = vstv %s3075
        %v3077 = vmul.f32 %v3076, %v2566
        %v3078 = vmul.f32 %v3076, %v2567
        %v3079 = vmul.f32 %v3076, %v2568
        %v3083 = vrot.slane %v3077, 3
        %v3084 = vrot.slane %v3078, 3
        %v3085 = vsel %vm741, %v3083, %v3084
        %v3086 = vrot.slane %v3079, 3
        %v3087 = vsel %vm741, %v3084, %v3086
        %3088 = vrot.lane.b32.xlu0 %v3085, 124
        %v3089 = vpop.permute.xlu0 %3088
        %3090 = vrot.lane.b32.xlu0 %v3087, 124
        %v3091 = vpop.permute.xlu0 %3090
        %v3094 = vadd.f32 %v3073, %v3089
        %v3095 = vadd.f32 %v3074, %v3091
        %s3096 = sld [smem:[#allocation2 + $0x7d]]
        %v3097 = vstv %s3096
        %v3098 = vmul.f32 %v3097, %v2566
        %v3099 = vmul.f32 %v3097, %v2567
        %v3100 = vmul.f32 %v3097, %v2568
        %v3104 = vrot.slane %v3098, 3
        %v3105 = vrot.slane %v3099, 3
        %v3106 = vsel %vm741, %v3104, %v3105
        %v3107 = vrot.slane %v3100, 3
        %v3108 = vsel %vm741, %v3105, %v3107
        %3109 = vrot.lane.b32.xlu0 %v3106, 123
        %v3110 = vpop.permute.xlu0 %3109
        %3111 = vrot.lane.b32.xlu0 %v3108, 123
        %v3112 = vpop.permute.xlu0 %3111
        %v3115 = vadd.f32 %v3094, %v3110
        %v3116 = vadd.f32 %v3095, %v3112
        %s3117 = sld [smem:[#allocation2 + $0x7e]]
        %v3118 = vstv %s3117
        %v3119 = vmul.f32 %v3118, %v2566
        %v3120 = vmul.f32 %v3118, %v2567
        %v3121 = vmul.f32 %v3118, %v2568
        %v3125 = vrot.slane %v3119, 3
        %v3126 = vrot.slane %v3120, 3
        %v3127 = vsel %vm741, %v3125, %v3126
        %v3128 = vrot.slane %v3121, 3
        %v3129 = vsel %vm741, %v3126, %v3128
        %3130 = vrot.lane.b32.xlu0 %v3127, 122
        %v3131 = vpop.permute.xlu0 %3130
        %3132 = vrot.lane.b32.xlu0 %v3129, 122
        %v3133 = vpop.permute.xlu0 %3132
        %v3136 = vadd.f32 %v3115, %v3131
        %v3137 = vadd.f32 %v3116, %v3133
        %s3138 = sld [smem:[#allocation2 + $0x7f]]
        %v3139 = vstv %s3138
        %v3140 = vmul.f32 %v3139, %v2566
        %v3141 = vmul.f32 %v3139, %v2567
        %v3142 = vmul.f32 %v3139, %v2568
        %v3146 = vrot.slane %v3140, 4
        %v3147 = vrot.slane %v3141, 4
        %v3148 = vsel %vm885, %v3146, %v3147
        %v3149 = vrot.slane %v3142, 4
        %v3150 = vsel %vm885, %v3147, %v3149
        %v3153 = vadd.f32 %v3136, %v3148
        %v3154 = vadd.f32 %v3137, %v3150
        %s3155 = sld [smem:[#allocation2 + $0x80]]
        %v3156 = vstv %s3155
        %v3157 = vmul.f32 %v3156, %v2566
        %v3158 = vmul.f32 %v3156, %v2567
        %v3159 = vmul.f32 %v3156, %v2568
        %v3163 = vrot.slane %v3157, 4
        %v3164 = vrot.slane %v3158, 4
        %v3165 = vsel %vm885, %v3163, %v3164
        %v3166 = vrot.slane %v3159, 4
        %v3167 = vsel %vm885, %v3164, %v3166
        %3168 = vrot.lane.b32.xlu0 %v3165, 127
        %v3169 = vpop.permute.xlu0 %3168
        %3170 = vrot.lane.b32.xlu0 %v3167, 127
        %v3171 = vpop.permute.xlu0 %3170
        %v3174 = vadd.f32 %v3153, %v3169
        %v3175 = vadd.f32 %v3154, %v3171
        %s3176 = sld [smem:[#allocation2 + $0x81]]
        %v3177 = vstv %s3176
        %v3178 = vmul.f32 %v3177, %v2566
        %v3179 = vmul.f32 %v3177, %v2567
        %v3180 = vmul.f32 %v3177, %v2568
        %v3184 = vrot.slane %v3178, 4
        %v3185 = vrot.slane %v3179, 4
        %v3186 = vsel %vm885, %v3184, %v3185
        %v3187 = vrot.slane %v3180, 4
        %v3188 = vsel %vm885, %v3185, %v3187
        %3189 = vrot.lane.b32.xlu0 %v3186, 126
        %v3190 = vpop.permute.xlu0 %3189
        %3191 = vrot.lane.b32.xlu0 %v3188, 126
        %v3192 = vpop.permute.xlu0 %3191
        %v3195 = vadd.f32 %v3174, %v3190
        %v3196 = vadd.f32 %v3175, %v3192
        %s3197 = sld [smem:[#allocation2 + $0x82]]
        %v3198 = vstv %s3197
        %v3199 = vmul.f32 %v3198, %v2566
        %v3200 = vmul.f32 %v3198, %v2567
        %v3201 = vmul.f32 %v3198, %v2568
        %v3205 = vrot.slane %v3199, 4
        %v3206 = vrot.slane %v3200, 4
        %v3207 = vsel %vm885, %v3205, %v3206
        %v3208 = vrot.slane %v3201, 4
        %v3209 = vsel %vm885, %v3206, %v3208
        %3210 = vrot.lane.b32.xlu0 %v3207, 125
        %v3211 = vpop.permute.xlu0 %3210
        %3212 = vrot.lane.b32.xlu0 %v3209, 125
        %v3213 = vpop.permute.xlu0 %3212
        %v3216 = vadd.f32 %v3195, %v3211
        %v3217 = vadd.f32 %v3196, %v3213
        %s3218 = sld [smem:[#allocation2 + $0x83]]
        %v3219 = vstv %s3218
        %v3220 = vmul.f32 %v3219, %v2566
        %v3221 = vmul.f32 %v3219, %v2567
        %v3222 = vmul.f32 %v3219, %v2568
        %v3226 = vrot.slane %v3220, 4
        %v3227 = vrot.slane %v3221, 4
        %v3228 = vsel %vm885, %v3226, %v3227
        %v3229 = vrot.slane %v3222, 4
        %v3230 = vsel %vm885, %v3227, %v3229
        %3231 = vrot.lane.b32.xlu0 %v3228, 124
        %v3232 = vpop.permute.xlu0 %3231
        %3233 = vrot.lane.b32.xlu0 %v3230, 124
        %v3234 = vpop.permute.xlu0 %3233
        %v3237 = vadd.f32 %v3216, %v3232
        %v3238 = vadd.f32 %v3217, %v3234
        %s3239 = sld [smem:[#allocation2 + $0x84]]
        %v3240 = vstv %s3239
        %v3241 = vmul.f32 %v3240, %v2566
        %v3242 = vmul.f32 %v3240, %v2567
        %v3243 = vmul.f32 %v3240, %v2568
        %v3247 = vrot.slane %v3241, 4
        %v3248 = vrot.slane %v3242, 4
        %v3249 = vsel %vm885, %v3247, %v3248
        %v3250 = vrot.slane %v3243, 4
        %v3251 = vsel %vm885, %v3248, %v3250
        %3252 = vrot.lane.b32.xlu0 %v3249, 123
        %v3253 = vpop.permute.xlu0 %3252
        %3254 = vrot.lane.b32.xlu0 %v3251, 123
        %v3255 = vpop.permute.xlu0 %3254
        %v3258 = vadd.f32 %v3237, %v3253
        %v3259 = vadd.f32 %v3238, %v3255
        %s3260 = sld [smem:[#allocation2 + $0x85]]
        %v3261 = vstv %s3260
        %v3262 = vmul.f32 %v3261, %v2566
        %v3263 = vmul.f32 %v3261, %v2567
        %v3264 = vmul.f32 %v3261, %v2568
        %v3268 = vrot.slane %v3262, 4
        %v3269 = vrot.slane %v3263, 4
        %v3270 = vsel %vm885, %v3268, %v3269
        %v3271 = vrot.slane %v3264, 4
        %v3272 = vsel %vm885, %v3269, %v3271
        %3273 = vrot.lane.b32.xlu0 %v3270, 122
        %v3274 = vpop.permute.xlu0 %3273
        %3275 = vrot.lane.b32.xlu0 %v3272, 122
        %v3276 = vpop.permute.xlu0 %3275
        %v3279 = vadd.f32 %v3258, %v3274
        %v3280 = vadd.f32 %v3259, %v3276
        %s3281 = sld [smem:[#allocation2 + $0x86]]
        %v3282 = vstv %s3281
        %v3283 = vmul.f32 %v3282, %v2566
        %v3284 = vmul.f32 %v3282, %v2567
        %v3285 = vmul.f32 %v3282, %v2568
        %v3289 = vrot.slane %v3283, 5
        %v3290 = vrot.slane %v3284, 5
        %v3291 = vsel %vm302, %v3289, %v3290
        %v3292 = vrot.slane %v3285, 5
        %v3293 = vsel %vm302, %v3290, %v3292
        %v3296 = vadd.f32 %v3279, %v3291
        %v3297 = vadd.f32 %v3280, %v3293
        %s3298 = sld [smem:[#allocation2 + $0x87]]
        %v3299 = vstv %s3298
        %v3300 = vmul.f32 %v3299, %v2566
        %v3301 = vmul.f32 %v3299, %v2567
        %v3302 = vmul.f32 %v3299, %v2568
        %v3306 = vrot.slane %v3300, 5
        %v3307 = vrot.slane %v3301, 5
        %v3308 = vsel %vm302, %v3306, %v3307
        %v3309 = vrot.slane %v3302, 5
        %v3310 = vsel %vm302, %v3307, %v3309
        %3311 = vrot.lane.b32.xlu0 %v3308, 127
        %v3312 = vpop.permute.xlu0 %3311
        %3313 = vrot.lane.b32.xlu0 %v3310, 127
        %v3314 = vpop.permute.xlu0 %3313
        %v3317 = vadd.f32 %v3296, %v3312
        %v3318 = vadd.f32 %v3297, %v3314
        %s3319 = sld [smem:[#allocation2 + $0x88]]
        %v3320 = vstv %s3319
        %v3321 = vmul.f32 %v3320, %v2566
        %v3322 = vmul.f32 %v3320, %v2567
        %v3323 = vmul.f32 %v3320, %v2568
        %v3327 = vrot.slane %v3321, 5
        %v3328 = vrot.slane %v3322, 5
        %v3329 = vsel %vm302, %v3327, %v3328
        %v3330 = vrot.slane %v3323, 5
        %v3331 = vsel %vm302, %v3328, %v3330
        %3332 = vrot.lane.b32.xlu0 %v3329, 126
        %v3333 = vpop.permute.xlu0 %3332
        %3334 = vrot.lane.b32.xlu0 %v3331, 126
        %v3335 = vpop.permute.xlu0 %3334
        %v3338 = vadd.f32 %v3317, %v3333
        %v3339 = vadd.f32 %v3318, %v3335
        %s3340 = sld [smem:[#allocation2 + $0x89]]
        %v3341 = vstv %s3340
        %v3342 = vmul.f32 %v3341, %v2566
        %v3343 = vmul.f32 %v3341, %v2567
        %v3344 = vmul.f32 %v3341, %v2568
        %v3348 = vrot.slane %v3342, 5
        %v3349 = vrot.slane %v3343, 5
        %v3350 = vsel %vm302, %v3348, %v3349
        %v3351 = vrot.slane %v3344, 5
        %v3352 = vsel %vm302, %v3349, %v3351
        %3353 = vrot.lane.b32.xlu0 %v3350, 125
        %v3354 = vpop.permute.xlu0 %3353
        %3355 = vrot.lane.b32.xlu0 %v3352, 125
        %v3356 = vpop.permute.xlu0 %3355
        %v3359 = vadd.f32 %v3338, %v3354
        %v3360 = vadd.f32 %v3339, %v3356
        %s3361 = sld [smem:[#allocation2 + $0x8a]]
        %v3362 = vstv %s3361
        %v3363 = vmul.f32 %v3362, %v2566
        %v3364 = vmul.f32 %v3362, %v2567
        %v3365 = vmul.f32 %v3362, %v2568
        %v3369 = vrot.slane %v3363, 5
        %v3370 = vrot.slane %v3364, 5
        %v3371 = vsel %vm302, %v3369, %v3370
        %v3372 = vrot.slane %v3365, 5
        %v3373 = vsel %vm302, %v3370, %v3372
        %3374 = vrot.lane.b32.xlu0 %v3371, 124
        %v3375 = vpop.permute.xlu0 %3374
        %3376 = vrot.lane.b32.xlu0 %v3373, 124
        %v3377 = vpop.permute.xlu0 %3376
        %v3380 = vadd.f32 %v3359, %v3375
        %v3381 = vadd.f32 %v3360, %v3377
        %s3382 = sld [smem:[#allocation2 + $0x8b]]
        %v3383 = vstv %s3382
        %v3384 = vmul.f32 %v3383, %v2566
        %v3385 = vmul.f32 %v3383, %v2567
        %v3386 = vmul.f32 %v3383, %v2568
        %v3390 = vrot.slane %v3384, 5
        %v3391 = vrot.slane %v3385, 5
        %v3392 = vsel %vm302, %v3390, %v3391
        %v3393 = vrot.slane %v3386, 5
        %v3394 = vsel %vm302, %v3391, %v3393
        %3395 = vrot.lane.b32.xlu0 %v3392, 123
        %v3396 = vpop.permute.xlu0 %3395
        %3397 = vrot.lane.b32.xlu0 %v3394, 123
        %v3398 = vpop.permute.xlu0 %3397
        %v3401 = vadd.f32 %v3380, %v3396
        %v3402 = vadd.f32 %v3381, %v3398
        %s3403 = sld [smem:[#allocation2 + $0x8c]]
        %v3404 = vstv %s3403
        %v3405 = vmul.f32 %v3404, %v2566
        %v3406 = vmul.f32 %v3404, %v2567
        %v3407 = vmul.f32 %v3404, %v2568
        %v3411 = vrot.slane %v3405, 5
        %v3412 = vrot.slane %v3406, 5
        %v3413 = vsel %vm302, %v3411, %v3412
        %v3414 = vrot.slane %v3407, 5
        %v3415 = vsel %vm302, %v3412, %v3414
        %3416 = vrot.lane.b32.xlu0 %v3413, 122
        %v3417 = vpop.permute.xlu0 %3416
        %3418 = vrot.lane.b32.xlu0 %v3415, 122
        %v3419 = vpop.permute.xlu0 %3418
        %v3422 = vadd.f32 %v3401, %v3417
        %v3423 = vadd.f32 %v3402, %v3419
        %s3424 = sld [smem:[#allocation2 + $0x8d]]
        %v3425 = vstv %s3424
        %v3426 = vmul.f32 %v3425, %v2566
        %v3427 = vmul.f32 %v3425, %v2567
        %v3428 = vmul.f32 %v3425, %v2568
        %v3432 = vrot.slane %v3426, 6
        %v3433 = vrot.slane %v3427, 6
        %v3434 = vsel %vm1172, %v3432, %v3433
        %v3435 = vrot.slane %v3428, 6
        %v3436 = vsel %vm1172, %v3433, %v3435
        %v3439 = vadd.f32 %v3422, %v3434
        %v3440 = vadd.f32 %v3423, %v3436
        %s3441 = sld [smem:[#allocation2 + $0x8e]]
        %v3442 = vstv %s3441
        %v3443 = vmul.f32 %v3442, %v2566
        %v3444 = vmul.f32 %v3442, %v2567
        %v3445 = vmul.f32 %v3442, %v2568
        %v3449 = vrot.slane %v3443, 6
        %v3450 = vrot.slane %v3444, 6
        %v3451 = vsel %vm1172, %v3449, %v3450
        %v3452 = vrot.slane %v3445, 6
        %v3453 = vsel %vm1172, %v3450, %v3452
        %3454 = vrot.lane.b32.xlu0 %v3451, 127
        %v3455 = vpop.permute.xlu0 %3454
        %3456 = vrot.lane.b32.xlu0 %v3453, 127
        %v3457 = vpop.permute.xlu0 %3456
        %v3460 = vadd.f32 %v3439, %v3455
        %v3461 = vadd.f32 %v3440, %v3457
        %s3462 = sld [smem:[#allocation2 + $0x8f]]
        %v3463 = vstv %s3462
        %v3464 = vmul.f32 %v3463, %v2566
        %v3465 = vmul.f32 %v3463, %v2567
        %v3466 = vmul.f32 %v3463, %v2568
        %v3470 = vrot.slane %v3464, 6
        %v3471 = vrot.slane %v3465, 6
        %v3472 = vsel %vm1172, %v3470, %v3471
        %v3473 = vrot.slane %v3466, 6
        %v3474 = vsel %vm1172, %v3471, %v3473
        %3475 = vrot.lane.b32.xlu0 %v3472, 126
        %v3476 = vpop.permute.xlu0 %3475
        %3477 = vrot.lane.b32.xlu0 %v3474, 126
        %v3478 = vpop.permute.xlu0 %3477
        %v3481 = vadd.f32 %v3460, %v3476
        %v3482 = vadd.f32 %v3461, %v3478
        %s3483 = sld [smem:[#allocation2 + $0x90]]
        %v3484 = vstv %s3483
        %v3485 = vmul.f32 %v3484, %v2566
        %v3486 = vmul.f32 %v3484, %v2567
        %v3487 = vmul.f32 %v3484, %v2568
        %v3491 = vrot.slane %v3485, 6
        %v3492 = vrot.slane %v3486, 6
        %v3493 = vsel %vm1172, %v3491, %v3492
        %v3494 = vrot.slane %v3487, 6
        %v3495 = vsel %vm1172, %v3492, %v3494
        %3496 = vrot.lane.b32.xlu0 %v3493, 125
        %v3497 = vpop.permute.xlu0 %3496
        %3498 = vrot.lane.b32.xlu0 %v3495, 125
        %v3499 = vpop.permute.xlu0 %3498
        %v3502 = vadd.f32 %v3481, %v3497
        %v3503 = vadd.f32 %v3482, %v3499
        %s3504 = sld [smem:[#allocation2 + $0x91]]
        %v3505 = vstv %s3504
        %v3506 = vmul.f32 %v3505, %v2566
        %v3507 = vmul.f32 %v3505, %v2567
        %v3508 = vmul.f32 %v3505, %v2568
        %v3512 = vrot.slane %v3506, 6
        %v3513 = vrot.slane %v3507, 6
        %v3514 = vsel %vm1172, %v3512, %v3513
        %v3515 = vrot.slane %v3508, 6
        %v3516 = vsel %vm1172, %v3513, %v3515
        %3517 = vrot.lane.b32.xlu0 %v3514, 124
        %v3518 = vpop.permute.xlu0 %3517
        %3519 = vrot.lane.b32.xlu0 %v3516, 124
        %v3520 = vpop.permute.xlu0 %3519
        %v3523 = vadd.f32 %v3502, %v3518
        %v3524 = vadd.f32 %v3503, %v3520
        %s3525 = sld [smem:[#allocation2 + $0x92]]
        %v3526 = vstv %s3525
        %v3527 = vmul.f32 %v3526, %v2566
        %v3528 = vmul.f32 %v3526, %v2567
        %v3529 = vmul.f32 %v3526, %v2568
        %v3533 = vrot.slane %v3527, 6
        %v3534 = vrot.slane %v3528, 6
        %v3535 = vsel %vm1172, %v3533, %v3534
        %v3536 = vrot.slane %v3529, 6
        %v3537 = vsel %vm1172, %v3534, %v3536
        %3538 = vrot.lane.b32.xlu0 %v3535, 123
        %v3539 = vpop.permute.xlu0 %3538
        %3540 = vrot.lane.b32.xlu0 %v3537, 123
        %v3541 = vpop.permute.xlu0 %3540
        %v3544 = vadd.f32 %v3523, %v3539
        %v3545 = vadd.f32 %v3524, %v3541
        %s3546 = sld [smem:[#allocation2 + $0x93]]
        %v3547 = vstv %s3546
        %v3548 = vmul.f32 %v3547, %v2566
        %v3549 = vmul.f32 %v3547, %v2567
        %v3550 = vmul.f32 %v3547, %v2568
        %v3554 = vrot.slane %v3548, 6
        %v3555 = vrot.slane %v3549, 6
        %v3556 = vsel %vm1172, %v3554, %v3555
        %v3557 = vrot.slane %v3550, 6
        %v3558 = vsel %vm1172, %v3555, %v3557
        %3559 = vrot.lane.b32.xlu0 %v3556, 122
        %v3560 = vpop.permute.xlu0 %3559
        %3561 = vrot.lane.b32.xlu0 %v3558, 122
        %v3562 = vpop.permute.xlu0 %3561
        %v3565 = vadd.f32 %v3544, %v3560
        %v3566 = vadd.f32 %v3545, %v3562
        %s3567 = sld [smem:[#allocation2 + $0x94]]
        %v3568 = vstv %s3567
        %v3569 = vmul.f32 %v3568, %v2616
        %v3570 = vmul.f32 %v3568, %v2617
        %v3571 = vadd.f32 %v3565, %v3569
        %v3572 = vadd.f32 %v3566, %v3570
        %s3573 = sld [smem:[#allocation2 + $0x95]]
        %v3574 = vstv %s3573
        %v3575 = vmul.f32 %v3574, %v2616
        %v3576 = vmul.f32 %v3574, %v2617
        %3579 = vrot.lane.b32.xlu0 %v3575, 127
        %v3580 = vpop.permute.xlu0 %3579
        %3581 = vrot.lane.b32.xlu0 %v3576, 127
        %v3582 = vpop.permute.xlu0 %3581
        %v3585 = vadd.f32 %v3571, %v3580
        %v3586 = vadd.f32 %v3572, %v3582
        %s3587 = sld [smem:[#allocation2 + $0x96]]
        %v3588 = vstv %s3587
        %v3589 = vmul.f32 %v3588, %v2616
        %v3590 = vmul.f32 %v3588, %v2617
        %3593 = vrot.lane.b32.xlu0 %v3589, 126
        %v3594 = vpop.permute.xlu0 %3593
        %3595 = vrot.lane.b32.xlu0 %v3590, 126
        %v3596 = vpop.permute.xlu0 %3595
        %v3599 = vadd.f32 %v3585, %v3594
        %v3600 = vadd.f32 %v3586, %v3596
        %s3601 = sld [smem:[#allocation2 + $0x97]]
        %v3602 = vstv %s3601
        %v3603 = vmul.f32 %v3602, %v2616
        %v3604 = vmul.f32 %v3602, %v2617
        %3607 = vrot.lane.b32.xlu0 %v3603, 125
        %v3608 = vpop.permute.xlu0 %3607
        %3609 = vrot.lane.b32.xlu0 %v3604, 125
        %v3610 = vpop.permute.xlu0 %3609
        %v3613 = vadd.f32 %v3599, %v3608
        %v3614 = vadd.f32 %v3600, %v3610
        %s3615 = sld [smem:[#allocation2 + $0x98]]
        %v3616 = vstv %s3615
        %v3617 = vmul.f32 %v3616, %v2616
        %v3618 = vmul.f32 %v3616, %v2617
        %3621 = vrot.lane.b32.xlu0 %v3617, 124
        %v3622 = vpop.permute.xlu0 %3621
        %3623 = vrot.lane.b32.xlu0 %v3618, 124
        %v3624 = vpop.permute.xlu0 %3623
        %v3627 = vadd.f32 %v3613, %v3622
        %v3628 = vadd.f32 %v3614, %v3624
        %s3629 = sld [smem:[#allocation2 + $0x99]]
        %v3630 = vstv %s3629
        %v3631 = vmul.f32 %v3630, %v2616
        %v3632 = vmul.f32 %v3630, %v2617
        %3635 = vrot.lane.b32.xlu0 %v3631, 123
        %v3636 = vpop.permute.xlu0 %3635
        %3637 = vrot.lane.b32.xlu0 %v3632, 123
        %v3638 = vpop.permute.xlu0 %3637
        %v3641 = vadd.f32 %v3627, %v3636
        %v3642 = vadd.f32 %v3628, %v3638
        %s3643 = sld [smem:[#allocation2 + $0x9a]]
        %v3644 = vstv %s3643
        %v3645 = vmul.f32 %v3644, %v2616
        %v3646 = vmul.f32 %v3644, %v2617
        %3649 = vrot.lane.b32.xlu0 %v3645, 122
        %v3650 = vpop.permute.xlu0 %3649
        %3651 = vrot.lane.b32.xlu0 %v3646, 122
        %v3652 = vpop.permute.xlu0 %3651
        %v3655 = vadd.f32 %v3641, %v3650
        %v3656 = vadd.f32 %v3642, %v3652
        %s3657 = sld [smem:[#allocation2 + $0x9b]]
        %v3658 = vstv %s3657
        %v3659 = vmul.f32 %v3658, %v2616
        %v3660 = vmul.f32 %v3658, %v2617
        %v3661 = vmul.f32 %v3658, %v2618
        %v3665 = vrot.slane %v3659, 1
        %v3666 = vrot.slane %v3660, 1
        %v3667 = vsel %vm453, %v3665, %v3666
        %v3668 = vrot.slane %v3661, 1
        %v3669 = vsel %vm453, %v3666, %v3668
        %v3672 = vadd.f32 %v3655, %v3667
        %v3673 = vadd.f32 %v3656, %v3669
        %s3674 = sld [smem:[#allocation2 + $0x9c]]
        %v3675 = vstv %s3674
        %v3676 = vmul.f32 %v3675, %v2616
        %v3677 = vmul.f32 %v3675, %v2617
        %v3678 = vmul.f32 %v3675, %v2618
        %v3682 = vrot.slane %v3676, 1
        %v3683 = vrot.slane %v3677, 1
        %v3684 = vsel %vm453, %v3682, %v3683
        %v3685 = vrot.slane %v3678, 1
        %v3686 = vsel %vm453, %v3683, %v3685
        %3687 = vrot.lane.b32.xlu0 %v3684, 127
        %v3688 = vpop.permute.xlu0 %3687
        %3689 = vrot.lane.b32.xlu0 %v3686, 127
        %v3690 = vpop.permute.xlu0 %3689
        %v3693 = vadd.f32 %v3672, %v3688
        %v3694 = vadd.f32 %v3673, %v3690
        %s3695 = sld [smem:[#allocation2 + $0x9d]]
        %v3696 = vstv %s3695
        %v3697 = vmul.f32 %v3696, %v2616
        %v3698 = vmul.f32 %v3696, %v2617
        %v3699 = vmul.f32 %v3696, %v2618
        %v3703 = vrot.slane %v3697, 1
        %v3704 = vrot.slane %v3698, 1
        %v3705 = vsel %vm453, %v3703, %v3704
        %v3706 = vrot.slane %v3699, 1
        %v3707 = vsel %vm453, %v3704, %v3706
        %3708 = vrot.lane.b32.xlu0 %v3705, 126
        %v3709 = vpop.permute.xlu0 %3708
        %3710 = vrot.lane.b32.xlu0 %v3707, 126
        %v3711 = vpop.permute.xlu0 %3710
        %v3714 = vadd.f32 %v3693, %v3709
        %v3715 = vadd.f32 %v3694, %v3711
        %s3716 = sld [smem:[#allocation2 + $0x9e]]
        %v3717 = vstv %s3716
        %v3718 = vmul.f32 %v3717, %v2616
        %v3719 = vmul.f32 %v3717, %v2617
        %v3720 = vmul.f32 %v3717, %v2618
        %v3724 = vrot.slane %v3718, 1
        %v3725 = vrot.slane %v3719, 1
        %v3726 = vsel %vm453, %v3724, %v3725
        %v3727 = vrot.slane %v3720, 1
        %v3728 = vsel %vm453, %v3725, %v3727
        %3729 = vrot.lane.b32.xlu0 %v3726, 125
        %v3730 = vpop.permute.xlu0 %3729
        %3731 = vrot.lane.b32.xlu0 %v3728, 125
        %v3732 = vpop.permute.xlu0 %3731
        %v3735 = vadd.f32 %v3714, %v3730
        %v3736 = vadd.f32 %v3715, %v3732
        %s3737 = sld [smem:[#allocation2 + $0x9f]]
        %v3738 = vstv %s3737
        %v3739 = vmul.f32 %v3738, %v2616
        %v3740 = vmul.f32 %v3738, %v2617
        %v3741 = vmul.f32 %v3738, %v2618
        %v3745 = vrot.slane %v3739, 1
        %v3746 = vrot.slane %v3740, 1
        %v3747 = vsel %vm453, %v3745, %v3746
        %v3748 = vrot.slane %v3741, 1
        %v3749 = vsel %vm453, %v3746, %v3748
        %3750 = vrot.lane.b32.xlu0 %v3747, 124
        %v3751 = vpop.permute.xlu0 %3750
        %3752 = vrot.lane.b32.xlu0 %v3749, 124
        %v3753 = vpop.permute.xlu0 %3752
        %v3756 = vadd.f32 %v3735, %v3751
        %v3757 = vadd.f32 %v3736, %v3753
        %s3758 = sld [smem:[#allocation2 + $0xa0]]
        %v3759 = vstv %s3758
        %v3760 = vmul.f32 %v3759, %v2616
        %v3761 = vmul.f32 %v3759, %v2617
        %v3762 = vmul.f32 %v3759, %v2618
        %v3766 = vrot.slane %v3760, 1
        %v3767 = vrot.slane %v3761, 1
        %v3768 = vsel %vm453, %v3766, %v3767
        %v3769 = vrot.slane %v3762, 1
        %v3770 = vsel %vm453, %v3767, %v3769
        %3771 = vrot.lane.b32.xlu0 %v3768, 123
        %v3772 = vpop.permute.xlu0 %3771
        %3773 = vrot.lane.b32.xlu0 %v3770, 123
        %v3774 = vpop.permute.xlu0 %3773
        %v3777 = vadd.f32 %v3756, %v3772
        %v3778 = vadd.f32 %v3757, %v3774
        %s3779 = sld [smem:[#allocation2 + $0xa1]]
        %v3780 = vstv %s3779
        %v3781 = vmul.f32 %v3780, %v2616
        %v3782 = vmul.f32 %v3780, %v2617
        %v3783 = vmul.f32 %v3780, %v2618
        %v3787 = vrot.slane %v3781, 1
        %v3788 = vrot.slane %v3782, 1
        %v3789 = vsel %vm453, %v3787, %v3788
        %v3790 = vrot.slane %v3783, 1
        %v3791 = vsel %vm453, %v3788, %v3790
        %3792 = vrot.lane.b32.xlu0 %v3789, 122
        %v3793 = vpop.permute.xlu0 %3792
        %3794 = vrot.lane.b32.xlu0 %v3791, 122
        %v3795 = vpop.permute.xlu0 %3794
        %v3798 = vadd.f32 %v3777, %v3793
        %v3799 = vadd.f32 %v3778, %v3795
        %s3800 = sld [smem:[#allocation2 + $0xa2]]
        %v3801 = vstv %s3800
        %v3802 = vmul.f32 %v3801, %v2616
        %v3803 = vmul.f32 %v3801, %v2617
        %v3804 = vmul.f32 %v3801, %v2618
        %v3808 = vrot.slane %v3802, 2
        %v3809 = vrot.slane %v3803, 2
        %v3810 = vsel %vm597, %v3808, %v3809
        %v3811 = vrot.slane %v3804, 2
        %v3812 = vsel %vm597, %v3809, %v3811
        %v3815 = vadd.f32 %v3798, %v3810
        %v3816 = vadd.f32 %v3799, %v3812
        %s3817 = sld [smem:[#allocation2 + $0xa3]]
        %v3818 = vstv %s3817
        %v3819 = vmul.f32 %v3818, %v2616
        %v3820 = vmul.f32 %v3818, %v2617
        %v3821 = vmul.f32 %v3818, %v2618
        %v3825 = vrot.slane %v3819, 2
        %v3826 = vrot.slane %v3820, 2
        %v3827 = vsel %vm597, %v3825, %v3826
        %v3828 = vrot.slane %v3821, 2
        %v3829 = vsel %vm597, %v3826, %v3828
        %3830 = vrot.lane.b32.xlu0 %v3827, 127
        %v3831 = vpop.permute.xlu0 %3830
        %3832 = vrot.lane.b32.xlu0 %v3829, 127
        %v3833 = vpop.permute.xlu0 %3832
        %v3836 = vadd.f32 %v3815, %v3831
        %v3837 = vadd.f32 %v3816, %v3833
        %s3838 = sld [smem:[#allocation2 + $0xa4]]
        %v3839 = vstv %s3838
        %v3840 = vmul.f32 %v3839, %v2616
        %v3841 = vmul.f32 %v3839, %v2617
        %v3842 = vmul.f32 %v3839, %v2618
        %v3846 = vrot.slane %v3840, 2
        %v3847 = vrot.slane %v3841, 2
        %v3848 = vsel %vm597, %v3846, %v3847
        %v3849 = vrot.slane %v3842, 2
        %v3850 = vsel %vm597, %v3847, %v3849
        %3851 = vrot.lane.b32.xlu0 %v3848, 126
        %v3852 = vpop.permute.xlu0 %3851
        %3853 = vrot.lane.b32.xlu0 %v3850, 126
        %v3854 = vpop.permute.xlu0 %3853
        %v3857 = vadd.f32 %v3836, %v3852
        %v3858 = vadd.f32 %v3837, %v3854
        %s3859 = sld [smem:[#allocation2 + $0xa5]]
        %v3860 = vstv %s3859
        %v3861 = vmul.f32 %v3860, %v2616
        %v3862 = vmul.f32 %v3860, %v2617
        %v3863 = vmul.f32 %v3860, %v2618
        %v3867 = vrot.slane %v3861, 2
        %v3868 = vrot.slane %v3862, 2
        %v3869 = vsel %vm597, %v3867, %v3868
        %v3870 = vrot.slane %v3863, 2
        %v3871 = vsel %vm597, %v3868, %v3870
        %3872 = vrot.lane.b32.xlu0 %v3869, 125
        %v3873 = vpop.permute.xlu0 %3872
        %3874 = vrot.lane.b32.xlu0 %v3871, 125
        %v3875 = vpop.permute.xlu0 %3874
        %v3878 = vadd.f32 %v3857, %v3873
        %v3879 = vadd.f32 %v3858, %v3875
        %s3880 = sld [smem:[#allocation2 + $0xa6]]
        %v3881 = vstv %s3880
        %v3882 = vmul.f32 %v3881, %v2616
        %v3883 = vmul.f32 %v3881, %v2617
        %v3884 = vmul.f32 %v3881, %v2618
        %v3888 = vrot.slane %v3882, 2
        %v3889 = vrot.slane %v3883, 2
        %v3890 = vsel %vm597, %v3888, %v3889
        %v3891 = vrot.slane %v3884, 2
        %v3892 = vsel %vm597, %v3889, %v3891
        %3893 = vrot.lane.b32.xlu0 %v3890, 124
        %v3894 = vpop.permute.xlu0 %3893
        %3895 = vrot.lane.b32.xlu0 %v3892, 124
        %v3896 = vpop.permute.xlu0 %3895
        %v3899 = vadd.f32 %v3878, %v3894
        %v3900 = vadd.f32 %v3879, %v3896
        %s3901 = sld [smem:[#allocation2 + $0xa7]]
        %v3902 = vstv %s3901
        %v3903 = vmul.f32 %v3902, %v2616
        %v3904 = vmul.f32 %v3902, %v2617
        %v3905 = vmul.f32 %v3902, %v2618
        %v3909 = vrot.slane %v3903, 2
        %v3910 = vrot.slane %v3904, 2
        %v3911 = vsel %vm597, %v3909, %v3910
        %v3912 = vrot.slane %v3905, 2
        %v3913 = vsel %vm597, %v3910, %v3912
        %3914 = vrot.lane.b32.xlu0 %v3911, 123
        %v3915 = vpop.permute.xlu0 %3914
        %3916 = vrot.lane.b32.xlu0 %v3913, 123
        %v3917 = vpop.permute.xlu0 %3916
        %v3920 = vadd.f32 %v3899, %v3915
        %v3921 = vadd.f32 %v3900, %v3917
        %s3922 = sld [smem:[#allocation2 + $0xa8]]
        %v3923 = vstv %s3922
        %v3924 = vmul.f32 %v3923, %v2616
        %v3925 = vmul.f32 %v3923, %v2617
        %v3926 = vmul.f32 %v3923, %v2618
        %v3930 = vrot.slane %v3924, 2
        %v3931 = vrot.slane %v3925, 2
        %v3932 = vsel %vm597, %v3930, %v3931
        %v3933 = vrot.slane %v3926, 2
        %v3934 = vsel %vm597, %v3931, %v3933
        %3935 = vrot.lane.b32.xlu0 %v3932, 122
        %v3936 = vpop.permute.xlu0 %3935
        %3937 = vrot.lane.b32.xlu0 %v3934, 122
        %v3938 = vpop.permute.xlu0 %3937
        %v3941 = vadd.f32 %v3920, %v3936
        %v3942 = vadd.f32 %v3921, %v3938
        %s3943 = sld [smem:[#allocation2 + $0xa9]]
        %v3944 = vstv %s3943
        %v3945 = vmul.f32 %v3944, %v2616
        %v3946 = vmul.f32 %v3944, %v2617
        %v3947 = vmul.f32 %v3944, %v2618
        %v3951 = vrot.slane %v3945, 3
        %v3952 = vrot.slane %v3946, 3
        %v3953 = vsel %vm741, %v3951, %v3952
        %v3954 = vrot.slane %v3947, 3
        %v3955 = vsel %vm741, %v3952, %v3954
        %v3958 = vadd.f32 %v3941, %v3953
        %v3959 = vadd.f32 %v3942, %v3955
        %s3960 = sld [smem:[#allocation2 + $0xaa]]
        %v3961 = vstv %s3960
        %v3962 = vmul.f32 %v3961, %v2616
        %v3963 = vmul.f32 %v3961, %v2617
        %v3964 = vmul.f32 %v3961, %v2618
        %v3968 = vrot.slane %v3962, 3
        %v3969 = vrot.slane %v3963, 3
        %v3970 = vsel %vm741, %v3968, %v3969
        %v3971 = vrot.slane %v3964, 3
        %v3972 = vsel %vm741, %v3969, %v3971
        %3973 = vrot.lane.b32.xlu0 %v3970, 127
        %v3974 = vpop.permute.xlu0 %3973
        %3975 = vrot.lane.b32.xlu0 %v3972, 127
        %v3976 = vpop.permute.xlu0 %3975
        %v3979 = vadd.f32 %v3958, %v3974
        %v3980 = vadd.f32 %v3959, %v3976
        %s3981 = sld [smem:[#allocation2 + $0xab]]
        %v3982 = vstv %s3981
        %v3983 = vmul.f32 %v3982, %v2616
        %v3984 = vmul.f32 %v3982, %v2617
        %v3985 = vmul.f32 %v3982, %v2618
        %v3989 = vrot.slane %v3983, 3
        %v3990 = vrot.slane %v3984, 3
        %v3991 = vsel %vm741, %v3989, %v3990
        %v3992 = vrot.slane %v3985, 3
        %v3993 = vsel %vm741, %v3990, %v3992
        %3994 = vrot.lane.b32.xlu0 %v3991, 126
        %v3995 = vpop.permute.xlu0 %3994
        %3996 = vrot.lane.b32.xlu0 %v3993, 126
        %v3997 = vpop.permute.xlu0 %3996
        %v4000 = vadd.f32 %v3979, %v3995
        %v4001 = vadd.f32 %v3980, %v3997
        %s4002 = sld [smem:[#allocation2 + $0xac]]
        %v4003 = vstv %s4002
        %v4004 = vmul.f32 %v4003, %v2616
        %v4005 = vmul.f32 %v4003, %v2617
        %v4006 = vmul.f32 %v4003, %v2618
        %v4010 = vrot.slane %v4004, 3
        %v4011 = vrot.slane %v4005, 3
        %v4012 = vsel %vm741, %v4010, %v4011
        %v4013 = vrot.slane %v4006, 3
        %v4014 = vsel %vm741, %v4011, %v4013
        %4015 = vrot.lane.b32.xlu0 %v4012, 125
        %v4016 = vpop.permute.xlu0 %4015
        %4017 = vrot.lane.b32.xlu0 %v4014, 125
        %v4018 = vpop.permute.xlu0 %4017
        %v4021 = vadd.f32 %v4000, %v4016
        %v4022 = vadd.f32 %v4001, %v4018
        %s4023 = sld [smem:[#allocation2 + $0xad]]
        %v4024 = vstv %s4023
        %v4025 = vmul.f32 %v4024, %v2616
        %v4026 = vmul.f32 %v4024, %v2617
        %v4027 = vmul.f32 %v4024, %v2618
        %v4031 = vrot.slane %v4025, 3
        %v4032 = vrot.slane %v4026, 3
        %v4033 = vsel %vm741, %v4031, %v4032
        %v4034 = vrot.slane %v4027, 3
        %v4035 = vsel %vm741, %v4032, %v4034
        %4036 = vrot.lane.b32.xlu0 %v4033, 124
        %v4037 = vpop.permute.xlu0 %4036
        %4038 = vrot.lane.b32.xlu0 %v4035, 124
        %v4039 = vpop.permute.xlu0 %4038
        %v4042 = vadd.f32 %v4021, %v4037
        %v4043 = vadd.f32 %v4022, %v4039
        %s4044 = sld [smem:[#allocation2 + $0xae]]
        %v4045 = vstv %s4044
        %v4046 = vmul.f32 %v4045, %v2616
        %v4047 = vmul.f32 %v4045, %v2617
        %v4048 = vmul.f32 %v4045, %v2618
        %v4052 = vrot.slane %v4046, 3
        %v4053 = vrot.slane %v4047, 3
        %v4054 = vsel %vm741, %v4052, %v4053
        %v4055 = vrot.slane %v4048, 3
        %v4056 = vsel %vm741, %v4053, %v4055
        %4057 = vrot.lane.b32.xlu0 %v4054, 123
        %v4058 = vpop.permute.xlu0 %4057
        %4059 = vrot.lane.b32.xlu0 %v4056, 123
        %v4060 = vpop.permute.xlu0 %4059
        %v4063 = vadd.f32 %v4042, %v4058
        %v4064 = vadd.f32 %v4043, %v4060
        %s4065 = sld [smem:[#allocation2 + $0xaf]]
        %v4066 = vstv %s4065
        %v4067 = vmul.f32 %v4066, %v2616
        %v4068 = vmul.f32 %v4066, %v2617
        %v4069 = vmul.f32 %v4066, %v2618
        %v4073 = vrot.slane %v4067, 3
        %v4074 = vrot.slane %v4068, 3
        %v4075 = vsel %vm741, %v4073, %v4074
        %v4076 = vrot.slane %v4069, 3
        %v4077 = vsel %vm741, %v4074, %v4076
        %4078 = vrot.lane.b32.xlu0 %v4075, 122
        %v4079 = vpop.permute.xlu0 %4078
        %4080 = vrot.lane.b32.xlu0 %v4077, 122
        %v4081 = vpop.permute.xlu0 %4080
        %v4084 = vadd.f32 %v4063, %v4079
        %v4085 = vadd.f32 %v4064, %v4081
        %s4086 = sld [smem:[#allocation2 + $0xb0]]
        %v4087 = vstv %s4086
        %v4088 = vmul.f32 %v4087, %v2616
        %v4089 = vmul.f32 %v4087, %v2617
        %v4090 = vmul.f32 %v4087, %v2618
        %v4094 = vrot.slane %v4088, 4
        %v4095 = vrot.slane %v4089, 4
        %v4096 = vsel %vm885, %v4094, %v4095
        %v4097 = vrot.slane %v4090, 4
        %v4098 = vsel %vm885, %v4095, %v4097
        %v4101 = vadd.f32 %v4084, %v4096
        %v4102 = vadd.f32 %v4085, %v4098
        %s4103 = sld [smem:[#allocation2 + $0xb1]]
        %v4104 = vstv %s4103
        %v4105 = vmul.f32 %v4104, %v2616
        %v4106 = vmul.f32 %v4104, %v2617
        %v4107 = vmul.f32 %v4104, %v2618
        %v4111 = vrot.slane %v4105, 4
        %v4112 = vrot.slane %v4106, 4
        %v4113 = vsel %vm885, %v4111, %v4112
        %v4114 = vrot.slane %v4107, 4
        %v4115 = vsel %vm885, %v4112, %v4114
        %4116 = vrot.lane.b32.xlu0 %v4113, 127
        %v4117 = vpop.permute.xlu0 %4116
        %4118 = vrot.lane.b32.xlu0 %v4115, 127
        %v4119 = vpop.permute.xlu0 %4118
        %v4122 = vadd.f32 %v4101, %v4117
        %v4123 = vadd.f32 %v4102, %v4119
        %s4124 = sld [smem:[#allocation2 + $0xb2]]
        %v4125 = vstv %s4124
        %v4126 = vmul.f32 %v4125, %v2616
        %v4127 = vmul.f32 %v4125, %v2617
        %v4128 = vmul.f32 %v4125, %v2618
        %v4132 = vrot.slane %v4126, 4
        %v4133 = vrot.slane %v4127, 4
        %v4134 = vsel %vm885, %v4132, %v4133
        %v4135 = vrot.slane %v4128, 4
        %v4136 = vsel %vm885, %v4133, %v4135
        %4137 = vrot.lane.b32.xlu0 %v4134, 126
        %v4138 = vpop.permute.xlu0 %4137
        %4139 = vrot.lane.b32.xlu0 %v4136, 126
        %v4140 = vpop.permute.xlu0 %4139
        %v4143 = vadd.f32 %v4122, %v4138
        %v4144 = vadd.f32 %v4123, %v4140
        %s4145 = sld [smem:[#allocation2 + $0xb3]]
        %v4146 = vstv %s4145
        %v4147 = vmul.f32 %v4146, %v2616
        %v4148 = vmul.f32 %v4146, %v2617
        %v4149 = vmul.f32 %v4146, %v2618
        %v4153 = vrot.slane %v4147, 4
        %v4154 = vrot.slane %v4148, 4
        %v4155 = vsel %vm885, %v4153, %v4154
        %v4156 = vrot.slane %v4149, 4
        %v4157 = vsel %vm885, %v4154, %v4156
        %4158 = vrot.lane.b32.xlu0 %v4155, 125
        %v4159 = vpop.permute.xlu0 %4158
        %4160 = vrot.lane.b32.xlu0 %v4157, 125
        %v4161 = vpop.permute.xlu0 %4160
        %v4164 = vadd.f32 %v4143, %v4159
        %v4165 = vadd.f32 %v4144, %v4161
        %s4166 = sld [smem:[#allocation2 + $0xb4]]
        %v4167 = vstv %s4166
        %v4168 = vmul.f32 %v4167, %v2616
        %v4169 = vmul.f32 %v4167, %v2617
        %v4170 = vmul.f32 %v4167, %v2618
        %v4174 = vrot.slane %v4168, 4
        %v4175 = vrot.slane %v4169, 4
        %v4176 = vsel %vm885, %v4174, %v4175
        %v4177 = vrot.slane %v4170, 4
        %v4178 = vsel %vm885, %v4175, %v4177
        %4179 = vrot.lane.b32.xlu0 %v4176, 124
        %v4180 = vpop.permute.xlu0 %4179
        %4181 = vrot.lane.b32.xlu0 %v4178, 124
        %v4182 = vpop.permute.xlu0 %4181
        %v4185 = vadd.f32 %v4164, %v4180
        %v4186 = vadd.f32 %v4165, %v4182
        %s4187 = sld [smem:[#allocation2 + $0xb5]]
        %v4188 = vstv %s4187
        %v4189 = vmul.f32 %v4188, %v2616
        %v4190 = vmul.f32 %v4188, %v2617
        %v4191 = vmul.f32 %v4188, %v2618
        %v4195 = vrot.slane %v4189, 4
        %v4196 = vrot.slane %v4190, 4
        %v4197 = vsel %vm885, %v4195, %v4196
        %v4198 = vrot.slane %v4191, 4
        %v4199 = vsel %vm885, %v4196, %v4198
        %4200 = vrot.lane.b32.xlu0 %v4197, 123
        %v4201 = vpop.permute.xlu0 %4200
        %4202 = vrot.lane.b32.xlu0 %v4199, 123
        %v4203 = vpop.permute.xlu0 %4202
        %v4206 = vadd.f32 %v4185, %v4201
        %v4207 = vadd.f32 %v4186, %v4203
        %s4208 = sld [smem:[#allocation2 + $0xb6]]
        %v4209 = vstv %s4208
        %v4210 = vmul.f32 %v4209, %v2616
        %v4211 = vmul.f32 %v4209, %v2617
        %v4212 = vmul.f32 %v4209, %v2618
        %v4216 = vrot.slane %v4210, 4
        %v4217 = vrot.slane %v4211, 4
        %v4218 = vsel %vm885, %v4216, %v4217
        %v4219 = vrot.slane %v4212, 4
        %v4220 = vsel %vm885, %v4217, %v4219
        %4221 = vrot.lane.b32.xlu0 %v4218, 122
        %v4222 = vpop.permute.xlu0 %4221
        %4223 = vrot.lane.b32.xlu0 %v4220, 122
        %v4224 = vpop.permute.xlu0 %4223
        %v4227 = vadd.f32 %v4206, %v4222
        %v4228 = vadd.f32 %v4207, %v4224
        %s4229 = sld [smem:[#allocation2 + $0xb7]]
        %v4230 = vstv %s4229
        %v4231 = vmul.f32 %v4230, %v2616
        %v4232 = vmul.f32 %v4230, %v2617
        %v4233 = vmul.f32 %v4230, %v2618
        %v4237 = vrot.slane %v4231, 5
        %v4238 = vrot.slane %v4232, 5
        %v4239 = vsel %vm302, %v4237, %v4238
        %v4240 = vrot.slane %v4233, 5
        %v4241 = vsel %vm302, %v4238, %v4240
        %v4244 = vadd.f32 %v4227, %v4239
        %v4245 = vadd.f32 %v4228, %v4241
        %s4246 = sld [smem:[#allocation2 + $0xb8]]
        %v4247 = vstv %s4246
        %v4248 = vmul.f32 %v4247, %v2616
        %v4249 = vmul.f32 %v4247, %v2617
        %v4250 = vmul.f32 %v4247, %v2618
        %v4254 = vrot.slane %v4248, 5
        %v4255 = vrot.slane %v4249, 5
        %v4256 = vsel %vm302, %v4254, %v4255
        %v4257 = vrot.slane %v4250, 5
        %v4258 = vsel %vm302, %v4255, %v4257
        %4259 = vrot.lane.b32.xlu0 %v4256, 127
        %v4260 = vpop.permute.xlu0 %4259
        %4261 = vrot.lane.b32.xlu0 %v4258, 127
        %v4262 = vpop.permute.xlu0 %4261
        %v4265 = vadd.f32 %v4244, %v4260
        %v4266 = vadd.f32 %v4245, %v4262
        %s4267 = sld [smem:[#allocation2 + $0xb9]]
        %v4268 = vstv %s4267
        %v4269 = vmul.f32 %v4268, %v2616
        %v4270 = vmul.f32 %v4268, %v2617
        %v4271 = vmul.f32 %v4268, %v2618
        %v4275 = vrot.slane %v4269, 5
        %v4276 = vrot.slane %v4270, 5
        %v4277 = vsel %vm302, %v4275, %v4276
        %v4278 = vrot.slane %v4271, 5
        %v4279 = vsel %vm302, %v4276, %v4278
        %4280 = vrot.lane.b32.xlu0 %v4277, 126
        %v4281 = vpop.permute.xlu0 %4280
        %4282 = vrot.lane.b32.xlu0 %v4279, 126
        %v4283 = vpop.permute.xlu0 %4282
        %v4286 = vadd.f32 %v4265, %v4281
        %v4287 = vadd.f32 %v4266, %v4283
        %s4288 = sld [smem:[#allocation2 + $0xba]]
        %v4289 = vstv %s4288
        %v4290 = vmul.f32 %v4289, %v2616
        %v4291 = vmul.f32 %v4289, %v2617
        %v4292 = vmul.f32 %v4289, %v2618
        %v4296 = vrot.slane %v4290, 5
        %v4297 = vrot.slane %v4291, 5
        %v4298 = vsel %vm302, %v4296, %v4297
        %v4299 = vrot.slane %v4292, 5
        %v4300 = vsel %vm302, %v4297, %v4299
        %4301 = vrot.lane.b32.xlu0 %v4298, 125
        %v4302 = vpop.permute.xlu0 %4301
        %4303 = vrot.lane.b32.xlu0 %v4300, 125
        %v4304 = vpop.permute.xlu0 %4303
        %v4307 = vadd.f32 %v4286, %v4302
        %v4308 = vadd.f32 %v4287, %v4304
        %s4309 = sld [smem:[#allocation2 + $0xbb]]
        %v4310 = vstv %s4309
        %v4311 = vmul.f32 %v4310, %v2616
        %v4312 = vmul.f32 %v4310, %v2617
        %v4313 = vmul.f32 %v4310, %v2618
        %v4317 = vrot.slane %v4311, 5
        %v4318 = vrot.slane %v4312, 5
        %v4319 = vsel %vm302, %v4317, %v4318
        %v4320 = vrot.slane %v4313, 5
        %v4321 = vsel %vm302, %v4318, %v4320
        %4322 = vrot.lane.b32.xlu0 %v4319, 124
        %v4323 = vpop.permute.xlu0 %4322
        %4324 = vrot.lane.b32.xlu0 %v4321, 124
        %v4325 = vpop.permute.xlu0 %4324
        %v4328 = vadd.f32 %v4307, %v4323
        %v4329 = vadd.f32 %v4308, %v4325
        %s4330 = sld [smem:[#allocation2 + $0xbc]]
        %v4331 = vstv %s4330
        %v4332 = vmul.f32 %v4331, %v2616
        %v4333 = vmul.f32 %v4331, %v2617
        %v4334 = vmul.f32 %v4331, %v2618
        %v4338 = vrot.slane %v4332, 5
        %v4339 = vrot.slane %v4333, 5
        %v4340 = vsel %vm302, %v4338, %v4339
        %v4341 = vrot.slane %v4334, 5
        %v4342 = vsel %vm302, %v4339, %v4341
        %4343 = vrot.lane.b32.xlu0 %v4340, 123
        %v4344 = vpop.permute.xlu0 %4343
        %4345 = vrot.lane.b32.xlu0 %v4342, 123
        %v4346 = vpop.permute.xlu0 %4345
        %v4349 = vadd.f32 %v4328, %v4344
        %v4350 = vadd.f32 %v4329, %v4346
        %s4351 = sld [smem:[#allocation2 + $0xbd]]
        %v4352 = vstv %s4351
        %v4353 = vmul.f32 %v4352, %v2616
        %v4354 = vmul.f32 %v4352, %v2617
        %v4355 = vmul.f32 %v4352, %v2618
        %v4359 = vrot.slane %v4353, 5
        %v4360 = vrot.slane %v4354, 5
        %v4361 = vsel %vm302, %v4359, %v4360
        %v4362 = vrot.slane %v4355, 5
        %v4363 = vsel %vm302, %v4360, %v4362
        %4364 = vrot.lane.b32.xlu0 %v4361, 122
        %v4365 = vpop.permute.xlu0 %4364
        %4366 = vrot.lane.b32.xlu0 %v4363, 122
        %v4367 = vpop.permute.xlu0 %4366
        %v4370 = vadd.f32 %v4349, %v4365
        %v4371 = vadd.f32 %v4350, %v4367
        %s4372 = sld [smem:[#allocation2 + $0xbe]]
        %v4373 = vstv %s4372
        %v4374 = vmul.f32 %v4373, %v2616
        %v4375 = vmul.f32 %v4373, %v2617
        %v4376 = vmul.f32 %v4373, %v2618
        %v4380 = vrot.slane %v4374, 6
        %v4381 = vrot.slane %v4375, 6
        %v4382 = vsel %vm1172, %v4380, %v4381
        %v4383 = vrot.slane %v4376, 6
        %v4384 = vsel %vm1172, %v4381, %v4383
        %v4387 = vadd.f32 %v4370, %v4382
        %v4388 = vadd.f32 %v4371, %v4384
        %s4389 = sld [smem:[#allocation2 + $0xbf]]
        %v4390 = vstv %s4389
        %v4391 = vmul.f32 %v4390, %v2616
        %v4392 = vmul.f32 %v4390, %v2617
        %v4393 = vmul.f32 %v4390, %v2618
        %v4397 = vrot.slane %v4391, 6
        %v4398 = vrot.slane %v4392, 6
        %v4399 = vsel %vm1172, %v4397, %v4398
        %v4400 = vrot.slane %v4393, 6
        %v4401 = vsel %vm1172, %v4398, %v4400
        %4402 = vrot.lane.b32.xlu0 %v4399, 127
        %v4403 = vpop.permute.xlu0 %4402
        %4404 = vrot.lane.b32.xlu0 %v4401, 127
        %v4405 = vpop.permute.xlu0 %4404
        %v4408 = vadd.f32 %v4387, %v4403
        %v4409 = vadd.f32 %v4388, %v4405
        %s4410 = sld [smem:[#allocation2 + $0xc0]]
        %v4411 = vstv %s4410
        %v4412 = vmul.f32 %v4411, %v2616
        %v4413 = vmul.f32 %v4411, %v2617
        %v4414 = vmul.f32 %v4411, %v2618
        %v4418 = vrot.slane %v4412, 6
        %v4419 = vrot.slane %v4413, 6
        %v4420 = vsel %vm1172, %v4418, %v4419
        %v4421 = vrot.slane %v4414, 6
        %v4422 = vsel %vm1172, %v4419, %v4421
        %4423 = vrot.lane.b32.xlu0 %v4420, 126
        %v4424 = vpop.permute.xlu0 %4423
        %4425 = vrot.lane.b32.xlu0 %v4422, 126
        %v4426 = vpop.permute.xlu0 %4425
        %v4429 = vadd.f32 %v4408, %v4424
        %v4430 = vadd.f32 %v4409, %v4426
        %s4431 = sld [smem:[#allocation2 + $0xc1]]
        %v4432 = vstv %s4431
        %v4433 = vmul.f32 %v4432, %v2616
        %v4434 = vmul.f32 %v4432, %v2617
        %v4435 = vmul.f32 %v4432, %v2618
        %v4439 = vrot.slane %v4433, 6
        %v4440 = vrot.slane %v4434, 6
        %v4441 = vsel %vm1172, %v4439, %v4440
        %v4442 = vrot.slane %v4435, 6
        %v4443 = vsel %vm1172, %v4440, %v4442
        %4444 = vrot.lane.b32.xlu0 %v4441, 125
        %v4445 = vpop.permute.xlu0 %4444
        %4446 = vrot.lane.b32.xlu0 %v4443, 125
        %v4447 = vpop.permute.xlu0 %4446
        %v4450 = vadd.f32 %v4429, %v4445
        %v4451 = vadd.f32 %v4430, %v4447
        %s4452 = sld [smem:[#allocation2 + $0xc2]]
        %v4453 = vstv %s4452
        %v4454 = vmul.f32 %v4453, %v2616
        %v4455 = vmul.f32 %v4453, %v2617
        %v4456 = vmul.f32 %v4453, %v2618
        %v4460 = vrot.slane %v4454, 6
        %v4461 = vrot.slane %v4455, 6
        %v4462 = vsel %vm1172, %v4460, %v4461
        %v4463 = vrot.slane %v4456, 6
        %v4464 = vsel %vm1172, %v4461, %v4463
        %4465 = vrot.lane.b32.xlu0 %v4462, 124
        %v4466 = vpop.permute.xlu0 %4465
        %4467 = vrot.lane.b32.xlu0 %v4464, 124
        %v4468 = vpop.permute.xlu0 %4467
        %v4471 = vadd.f32 %v4450, %v4466
        %v4472 = vadd.f32 %v4451, %v4468
        %s4473 = sld [smem:[#allocation2 + $0xc3]]
        %v4474 = vstv %s4473
        %v4475 = vmul.f32 %v4474, %v2616
        %v4476 = vmul.f32 %v4474, %v2617
        %v4477 = vmul.f32 %v4474, %v2618
        %v4481 = vrot.slane %v4475, 6
        %v4482 = vrot.slane %v4476, 6
        %v4483 = vsel %vm1172, %v4481, %v4482
        %v4484 = vrot.slane %v4477, 6
        %v4485 = vsel %vm1172, %v4482, %v4484
        %4486 = vrot.lane.b32.xlu0 %v4483, 123
        %v4487 = vpop.permute.xlu0 %4486
        %4488 = vrot.lane.b32.xlu0 %v4485, 123
        %v4489 = vpop.permute.xlu0 %4488
        %v4492 = vadd.f32 %v4471, %v4487
        %v4493 = vadd.f32 %v4472, %v4489
        %s4494 = sld [smem:[#allocation2 + $0xc4]]
        %v4495 = vstv %s4494
        %v4496 = vmul.f32 %v4495, %v2616
        %v4497 = vmul.f32 %v4495, %v2617
        %v4498 = vmul.f32 %v4495, %v2618
        %v4502 = vrot.slane %v4496, 6
        %v4503 = vrot.slane %v4497, 6
        %v4504 = vsel %vm1172, %v4502, %v4503
        %v4505 = vrot.slane %v4498, 6
        %v4506 = vsel %vm1172, %v4503, %v4505
        %4507 = vrot.lane.b32.xlu0 %v4504, 122
        %v4508 = vpop.permute.xlu0 %4507
        %4509 = vrot.lane.b32.xlu0 %v4506, 122
        %v4510 = vpop.permute.xlu0 %4509
        %v4513 = vadd.f32 %v4492, %v4508
        %v4514 = vadd.f32 %v4493, %v4510
        %s4515 = sld [smem:[#allocation2 + $0xc5]]
        %v4516 = vstv %s4515
        %v4517 = vadd.f32 %v4513, %v4516
        %v4518 = vadd.f32 %v4514, %v4516
        %v4519 = vxor.u32 %v4517, 2147483648
        %v4520 = vxor.u32 %v4518, 2147483648
        %v4521 = vmul.f32 %v4519, 1.442695
        %v4522 = vpow.pop %v4521
        %v4523 = vmul.f32 %v4520, 1.442695
        %v4524 = vpow.pop %v4523
        %v4525 = vadd.f32 %v4522, 1.0
        %v4526 = vadd.f32 %v4524, 1.0
        %v4527 = vrcp.pop %v4525
        %v4528 = vmul.f32 1.0, %v4527
        %v4529 = vrcp.pop %v4526
        %v4530 = vmul.f32 1.0, %v4529
        %vm4531 = vcmask 130048
        %v4532 = vsel %vm4531, %v2269, 0.0
        %v4533 = vsel %vm4531, %v2271, 0.0
        %v4534 = vsel %vm4531, %v4528, 0.0
        %v4535 = vsel %vm4531, %v4530, 0.0
        %v4538 = vcombine.high %v4534, %v4534
        %v4540 = vunpack.c.l.s4 1966171168
        %v4541 = vunpack.c.0.s8 %v4540
        %v4542 = vlaneseq
        %v4543 = vshrl.u32 %v4542, 7
        %v4544 = vsub.s32 %v4541, %v4543
        %v4545 = vrot.slane %v4534, %v4544
        %v4547 = vunpack.c.l.s4 1966171168
        %v4548 = vunpack.c.0.s8 %v4547
        %v4549 = vlaneseq
        %v4550 = vshrl.u32 %v4549, 7
        %v4551 = vsub.s32 %v4548, %v4550
        %v4552 = vrot.slane %v4538, %v4551
        %v4553 = vcombine.high %v4545, %v4545
        %v4554 = vcombine.high %v4552, %v4552
        %v4556 = vunpack.c.l.s4 1966171168
        %v4557 = vunpack.c.0.s8 %v4556
        %v4558 = vlaneseq
        %v4559 = vshrl.u32 %v4558, 7
        %v4560 = vsub.s32 %v4557, %v4559
        %v4561 = vrot.slane %v4545, %v4560
        %v4563 = vunpack.c.l.s4 1966171168
        %v4564 = vunpack.c.0.s8 %v4563
        %v4565 = vlaneseq
        %v4566 = vshrl.u32 %v4565, 7
        %v4567 = vsub.s32 %v4564, %v4566
        %v4568 = vrot.slane %v4552, %v4567
        %v4570 = vunpack.c.l.s4 1966171168
        %v4571 = vunpack.c.0.s8 %v4570
        %v4572 = vlaneseq
        %v4573 = vshrl.u32 %v4572, 7
        %v4574 = vsub.s32 %v4571, %v4573
        %v4575 = vrot.slane %v4553, %v4574
        %v4577 = vunpack.c.l.s4 1966171168
        %v4578 = vunpack.c.0.s8 %v4577
        %v4579 = vlaneseq
        %v4580 = vshrl.u32 %v4579, 7
        %v4581 = vsub.s32 %v4578, %v4580
        %v4582 = vrot.slane %v4554, %v4581
        %v4583 = vcombine.high %v4561, %v4561
        %v4584 = vcombine.high %v4568, %v4568
        %v4585 = vcombine.high %v4575, %v4575
        %v4586 = vcombine.high %v4582, %v4582
        %v4587 = vcombine.high %v4535, %v4535
        %v4589 = vunpack.c.l.s4 1966171168
        %v4590 = vunpack.c.0.s8 %v4589
        %v4591 = vlaneseq
        %v4592 = vshrl.u32 %v4591, 7
        %v4593 = vsub.s32 %v4590, %v4592
        %v4594 = vrot.slane %v4535, %v4593
        %v4596 = vunpack.c.l.s4 1966171168
        %v4597 = vunpack.c.0.s8 %v4596
        %v4598 = vlaneseq
        %v4599 = vshrl.u32 %v4598, 7
        %v4600 = vsub.s32 %v4597, %v4599
        %v4601 = vrot.slane %v4587, %v4600
        %v4602 = vcombine.high %v4594, %v4594
        %v4603 = vcombine.high %v4601, %v4601
        %v4605 = vunpack.c.l.s4 1966171168
        %v4606 = vunpack.c.0.s8 %v4605
        %v4607 = vlaneseq
        %v4608 = vshrl.u32 %v4607, 7
        %v4609 = vsub.s32 %v4606, %v4608
        %v4610 = vrot.slane %v4594, %v4609
        %v4612 = vunpack.c.l.s4 1966171168
        %v4613 = vunpack.c.0.s8 %v4612
        %v4614 = vlaneseq
        %v4615 = vshrl.u32 %v4614, 7
        %v4616 = vsub.s32 %v4613, %v4615
        %v4617 = vrot.slane %v4601, %v4616
        %v4619 = vunpack.c.l.s4 1966171168
        %v4620 = vunpack.c.0.s8 %v4619
        %v4621 = vlaneseq
        %v4622 = vshrl.u32 %v4621, 7
        %v4623 = vsub.s32 %v4620, %v4622
        %v4624 = vrot.slane %v4602, %v4623
        %v4626 = vunpack.c.l.s4 1966171168
        %v4627 = vunpack.c.0.s8 %v4626
        %v4628 = vlaneseq
        %v4629 = vshrl.u32 %v4628, 7
        %v4630 = vsub.s32 %v4627, %v4629
        %v4631 = vrot.slane %v4603, %v4630
        %v4632 = vcombine.high %v4610, %v4610
        %v4633 = vcombine.high %v4617, %v4617
        %v4634 = vcombine.high %v4624, %v4624
        %v4635 = vcombine.high %v4631, %v4631
        %v4636 = vlaneseq
        %v4637 = vshrl.u32 %v4636, 7
        %v4638 = vsub.s32 0, %v4637
        %v4639 = vrot.slane %v4561, %v4638
        %v4640 = vlaneseq
        %v4641 = vshrl.u32 %v4640, 7
        %v4642 = vsub.s32 0, %v4641
        %v4643 = vrot.slane %v4575, %v4642
        %v4644 = vlaneseq
        %v4645 = vshrl.u32 %v4644, 7
        %v4646 = vsub.s32 0, %v4645
        %v4647 = vrot.slane %v4583, %v4646
        %v4648 = vlaneseq
        %v4649 = vshrl.u32 %v4648, 7
        %v4650 = vsub.s32 0, %v4649
        %v4651 = vrot.slane %v4585, %v4650
        %v4652 = vlaneseq
        %v4653 = vshrl.u32 %v4652, 7
        %v4654 = vsub.s32 0, %v4653
        %v4655 = vrot.slane %v4568, %v4654
        %v4656 = vlaneseq
        %v4657 = vshrl.u32 %v4656, 7
        %v4658 = vsub.s32 0, %v4657
        %v4659 = vrot.slane %v4582, %v4658
        %v4660 = vlaneseq
        %v4661 = vshrl.u32 %v4660, 7
        %v4662 = vsub.s32 0, %v4661
        %v4663 = vrot.slane %v4584, %v4662
        %v4664 = vlaneseq
        %v4665 = vshrl.u32 %v4664, 7
        %v4666 = vsub.s32 0, %v4665
        %v4667 = vrot.slane %v4586, %v4666
        %v4668 = vlaneseq
        %v4669 = vshrl.u32 %v4668, 7
        %v4670 = vsub.s32 0, %v4669
        %v4671 = vrot.slane %v4610, %v4670
        %v4672 = vlaneseq
        %v4673 = vshrl.u32 %v4672, 7
        %v4674 = vsub.s32 0, %v4673
        %v4675 = vrot.slane %v4624, %v4674
        %v4676 = vlaneseq
        %v4677 = vshrl.u32 %v4676, 7
        %v4678 = vsub.s32 0, %v4677
        %v4679 = vrot.slane %v4632, %v4678
        %v4680 = vlaneseq
        %v4681 = vshrl.u32 %v4680, 7
        %v4682 = vsub.s32 0, %v4681
        %v4683 = vrot.slane %v4634, %v4682
        %v4684 = vlaneseq
        %v4685 = vshrl.u32 %v4684, 7
        %v4686 = vsub.s32 0, %v4685
        %v4687 = vrot.slane %v4617, %v4686
        %v4688 = vlaneseq
        %v4689 = vshrl.u32 %v4688, 7
        %v4690 = vsub.s32 0, %v4689
        %v4691 = vrot.slane %v4631, %v4690
        %v4692 = vlaneseq
        %v4693 = vshrl.u32 %v4692, 7
        %v4694 = vsub.s32 0, %v4693
        %v4695 = vrot.slane %v4633, %v4694
        %v4696 = vlaneseq
        %v4697 = vshrl.u32 %v4696, 7
        %v4698 = vsub.s32 0, %v4697
        %v4699 = vrot.slane %v4635, %v4698
        %v4716 = vadd.f32 %v4532, %v4639
        %v4717 = vadd.f32 %v4533, %v4639
        %v4718 = vadd.f32 %v4532, %v4643
        %v4719 = vadd.f32 %v4533, %v4643
        %v4720 = vadd.f32 %v4532, %v4647
        %v4721 = vadd.f32 %v4533, %v4647
        %v4722 = vadd.f32 %v4532, %v4651
        %v4723 = vadd.f32 %v4533, %v4651
        %v4724 = vadd.f32 %v4532, %v4655
        %v4725 = vadd.f32 %v4533, %v4655
        %v4726 = vadd.f32 %v4532, %v4659
        %v4727 = vadd.f32 %v4533, %v4659
        %v4728 = vadd.f32 %v4532, %v4663
        %v4729 = vadd.f32 %v4533, %v4663
        %v4730 = vadd.f32 %v4532, %v4667
        %v4731 = vadd.f32 %v4533, %v4667
        %v4732 = vadd.f32 %v4532, %v4671
        %v4733 = vadd.f32 %v4533, %v4671
        %v4734 = vadd.f32 %v4532, %v4675
        %v4735 = vadd.f32 %v4533, %v4675
        %v4736 = vadd.f32 %v4532, %v4679
        %v4737 = vadd.f32 %v4533, %v4679
        %v4738 = vadd.f32 %v4532, %v4683
        %v4739 = vadd.f32 %v4533, %v4683
        %v4740 = vadd.f32 %v4532, %v4687
        %v4741 = vadd.f32 %v4533, %v4687
        %v4742 = vadd.f32 %v4532, %v4691
        %v4743 = vadd.f32 %v4533, %v4691
        %v4744 = vadd.f32 %v4532, %v4695
        %v4745 = vadd.f32 %v4533, %v4695
        %v4746 = vadd.f32 %v4532, %v4699
        %v4747 = vadd.f32 %v4533, %v4699
        %v4748 = vmul.f32 %v4716, 0.5
        %v4749 = vmul.f32 %v4717, 0.5
        %v4750 = vmul.f32 %v4718, 0.5
        %v4751 = vmul.f32 %v4719, 0.5
        %v4752 = vmul.f32 %v4720, 0.5
        %v4753 = vmul.f32 %v4721, 0.5
        %v4754 = vmul.f32 %v4722, 0.5
        %v4755 = vmul.f32 %v4723, 0.5
        %v4756 = vmul.f32 %v4724, 0.5
        %v4757 = vmul.f32 %v4725, 0.5
        %v4758 = vmul.f32 %v4726, 0.5
        %v4759 = vmul.f32 %v4727, 0.5
        %v4760 = vmul.f32 %v4728, 0.5
        %v4761 = vmul.f32 %v4729, 0.5
        %v4762 = vmul.f32 %v4730, 0.5
        %v4763 = vmul.f32 %v4731, 0.5
        %v4764 = vmul.f32 %v4732, 0.5
        %v4765 = vmul.f32 %v4733, 0.5
        %v4766 = vmul.f32 %v4734, 0.5
        %v4767 = vmul.f32 %v4735, 0.5
        %v4768 = vmul.f32 %v4736, 0.5
        %v4769 = vmul.f32 %v4737, 0.5
        %v4770 = vmul.f32 %v4738, 0.5
        %v4771 = vmul.f32 %v4739, 0.5
        %v4772 = vmul.f32 %v4740, 0.5
        %v4773 = vmul.f32 %v4741, 0.5
        %v4774 = vmul.f32 %v4742, 0.5
        %v4775 = vmul.f32 %v4743, 0.5
        %v4776 = vmul.f32 %v4744, 0.5
        %v4777 = vmul.f32 %v4745, 0.5
        %v4778 = vmul.f32 %v4746, 0.5
        %v4779 = vmul.f32 %v4747, 0.5
        %v4780 = vmul.f32 %v205, %v4748
        %v4781 = vmul.f32 %v206, %v4749
        %v4782 = vmul.f32 %v207, %v4750
        %v4783 = vmul.f32 %v208, %v4751
        %v4784 = vmul.f32 %v209, %v4752
        %v4785 = vmul.f32 %v210, %v4753
        %v4786 = vmul.f32 %v211, %v4754
        %v4787 = vmul.f32 %v212, %v4755
        %v4788 = vmul.f32 %v213, %v4756
        %v4789 = vmul.f32 %v214, %v4757
        %v4790 = vmul.f32 %v215, %v4758
        %v4791 = vmul.f32 %v216, %v4759
        %v4792 = vmul.f32 %v217, %v4760
        %v4793 = vmul.f32 %v218, %v4761
        %v4794 = vmul.f32 %v219, %v4762
        %v4795 = vmul.f32 %v220, %v4763
        %v4796 = vmul.f32 %v221, %v4764
        %v4797 = vmul.f32 %v222, %v4765
        %v4798 = vmul.f32 %v223, %v4766
        %v4799 = vmul.f32 %v224, %v4767
        %v4800 = vmul.f32 %v225, %v4768
        %v4801 = vmul.f32 %v226, %v4769
        %v4802 = vmul.f32 %v227, %v4770
        %v4803 = vmul.f32 %v228, %v4771
        %v4804 = vmul.f32 %v229, %v4772
        %v4805 = vmul.f32 %v230, %v4773
        %v4806 = vmul.f32 %v231, %v4774
        %v4807 = vmul.f32 %v232, %v4775
        %v4808 = vmul.f32 %v233, %v4776
        %v4809 = vmul.f32 %v234, %v4777
        %v4810 = vmul.f32 %v235, %v4778
        %v4811 = vmul.f32 %v236, %v4779
        %v4812 = vld [vmem:[%s199] sm:$0xff]
        %v4813 = vld [vmem:[%s199 + $0x8] sm:$0xff]
        %v4814 = vld [vmem:[%s199 + $0x10] sm:$0xff]
        %v4815 = vld [vmem:[%s199 + $0x18] sm:$0xff]
        %v4816 = vld [vmem:[%s199 + $0x20] sm:$0xff]
        %v4817 = vld [vmem:[%s199 + $0x28] sm:$0xff]
        %v4818 = vld [vmem:[%s199 + $0x30] sm:$0xff]
        %v4819 = vld [vmem:[%s199 + $0x38] sm:$0xff]
        %v4820 = vld [vmem:[%s199 + $0x40] sm:$0xff]
        %v4821 = vld [vmem:[%s199 + $0x48] sm:$0xff]
        %v4822 = vld [vmem:[%s199 + $0x50] sm:$0xff]
        %v4823 = vld [vmem:[%s199 + $0x58] sm:$0xff]
        %v4824 = vld [vmem:[%s199 + $0x60] sm:$0xff]
        %v4825 = vld [vmem:[%s199 + $0x68] sm:$0xff]
        %v4826 = vld [vmem:[%s199 + $0x70] sm:$0xff]
        %v4827 = vld [vmem:[%s199 + $0x78] sm:$0xff]
        %v4828 = vld [vmem:[%s199 + $0x80] sm:$0xff]
        %v4829 = vld [vmem:[%s199 + $0x88] sm:$0xff]
        %v4830 = vld [vmem:[%s199 + $0x90] sm:$0xff]
        %v4831 = vld [vmem:[%s199 + $0x98] sm:$0xff]
        %v4832 = vld [vmem:[%s199 + $0xa0] sm:$0xff]
        %v4833 = vld [vmem:[%s199 + $0xa8] sm:$0xff]
        %v4834 = vld [vmem:[%s199 + $0xb0] sm:$0xff]
        %v4835 = vld [vmem:[%s199 + $0xb8] sm:$0xff]
        %v4836 = vld [vmem:[%s199 + $0xc0] sm:$0xff]
        %v4837 = vld [vmem:[%s199 + $0xc8] sm:$0xff]
        %v4838 = vld [vmem:[%s199 + $0xd0] sm:$0xff]
        %v4839 = vld [vmem:[%s199 + $0xd8] sm:$0xff]
        %v4840 = vld [vmem:[%s199 + $0xe0] sm:$0xff]
        %v4841 = vld [vmem:[%s199 + $0xe8] sm:$0xff]
        %v4842 = vld [vmem:[%s199 + $0xf0] sm:$0xff]
        %v4843 = vld [vmem:[%s199 + $0xf8] sm:$0xff]
        %v4844 = vadd.f32 %v4780, %v4812
        %v4845 = vadd.f32 %v4781, %v4813
        %v4846 = vadd.f32 %v4782, %v4814
        %v4847 = vadd.f32 %v4783, %v4815
        %v4848 = vadd.f32 %v4784, %v4816
        %v4849 = vadd.f32 %v4785, %v4817
        %v4850 = vadd.f32 %v4786, %v4818
        %v4851 = vadd.f32 %v4787, %v4819
        %v4852 = vadd.f32 %v4788, %v4820
        %v4853 = vadd.f32 %v4789, %v4821
        %v4854 = vadd.f32 %v4790, %v4822
        %v4855 = vadd.f32 %v4791, %v4823
        %v4856 = vadd.f32 %v4792, %v4824
        %v4857 = vadd.f32 %v4793, %v4825
        %v4858 = vadd.f32 %v4794, %v4826
        %v4859 = vadd.f32 %v4795, %v4827
        %v4860 = vadd.f32 %v4796, %v4828
        %v4861 = vadd.f32 %v4797, %v4829
        %v4862 = vadd.f32 %v4798, %v4830
        %v4863 = vadd.f32 %v4799, %v4831
        %v4864 = vadd.f32 %v4800, %v4832
        %v4865 = vadd.f32 %v4801, %v4833
        %v4866 = vadd.f32 %v4802, %v4834
        %v4867 = vadd.f32 %v4803, %v4835
        %v4868 = vadd.f32 %v4804, %v4836
        %v4869 = vadd.f32 %v4805, %v4837
        %v4870 = vadd.f32 %v4806, %v4838
        %v4871 = vadd.f32 %v4807, %v4839
        %v4872 = vadd.f32 %v4808, %v4840
        %v4873 = vadd.f32 %v4809, %v4841
        %v4874 = vadd.f32 %v4810, %v4842
        %v4875 = vadd.f32 %v4811, %v4843
        %v4876 = vmax.f32 %v4844, 0.0
        %v4877 = vmax.f32 %v4845, 0.0
        %v4878 = vmax.f32 %v4846, 0.0
        %v4879 = vmax.f32 %v4847, 0.0
        %v4880 = vmax.f32 %v4848, 0.0
        %v4881 = vmax.f32 %v4849, 0.0
        %v4882 = vmax.f32 %v4850, 0.0
        %v4883 = vmax.f32 %v4851, 0.0
        %v4884 = vmax.f32 %v4852, 0.0
        %v4885 = vmax.f32 %v4853, 0.0
        %v4886 = vmax.f32 %v4854, 0.0
        %v4887 = vmax.f32 %v4855, 0.0
        %v4888 = vmax.f32 %v4856, 0.0
        %v4889 = vmax.f32 %v4857, 0.0
        %v4890 = vmax.f32 %v4858, 0.0
        %v4891 = vmax.f32 %v4859, 0.0
        %v4892 = vmax.f32 %v4860, 0.0
        %v4893 = vmax.f32 %v4861, 0.0
        %v4894 = vmax.f32 %v4862, 0.0
        %v4895 = vmax.f32 %v4863, 0.0
        %v4896 = vmax.f32 %v4864, 0.0
        %v4897 = vmax.f32 %v4865, 0.0
        %v4898 = vmax.f32 %v4866, 0.0
        %v4899 = vmax.f32 %v4867, 0.0
        %v4900 = vmax.f32 %v4868, 0.0
        %v4901 = vmax.f32 %v4869, 0.0
        %v4902 = vmax.f32 %v4870, 0.0
        %v4903 = vmax.f32 %v4871, 0.0
        %v4904 = vmax.f32 %v4872, 0.0
        %v4905 = vmax.f32 %v4873, 0.0
        %v4906 = vmax.f32 %v4874, 0.0
        %v4907 = vmax.f32 %v4875, 0.0
        %4908 = vst [vmem:[%s204] sm:$0xff] %v4876
        %4909 = vst [vmem:[%s204 + $0x8] sm:$0xff] %v4877
        %4910 = vst [vmem:[%s204 + $0x10] sm:$0xff] %v4878
        %4911 = vst [vmem:[%s204 + $0x18] sm:$0xff] %v4879
        %4912 = vst [vmem:[%s204 + $0x20] sm:$0xff] %v4880
        %4913 = vst [vmem:[%s204 + $0x28] sm:$0xff] %v4881
        %4914 = vst [vmem:[%s204 + $0x30] sm:$0xff] %v4882
        %4915 = vst [vmem:[%s204 + $0x38] sm:$0xff] %v4883
        %4916 = vst [vmem:[%s204 + $0x40] sm:$0xff] %v4884
        %4917 = vst [vmem:[%s204 + $0x48] sm:$0xff] %v4885
        %4918 = vst [vmem:[%s204 + $0x50] sm:$0xff] %v4886
        %4919 = vst [vmem:[%s204 + $0x58] sm:$0xff] %v4887
        %4920 = vst [vmem:[%s204 + $0x60] sm:$0xff] %v4888
        %4921 = vst [vmem:[%s204 + $0x68] sm:$0xff] %v4889
        %4922 = vst [vmem:[%s204 + $0x70] sm:$0xff] %v4890
        %4923 = vst [vmem:[%s204 + $0x78] sm:$0xff] %v4891
        %4924 = vst [vmem:[%s204 + $0x80] sm:$0xff] %v4892
        %4925 = vst [vmem:[%s204 + $0x88] sm:$0xff] %v4893
        %4926 = vst [vmem:[%s204 + $0x90] sm:$0xff] %v4894
        %4927 = vst [vmem:[%s204 + $0x98] sm:$0xff] %v4895
        %4928 = vst [vmem:[%s204 + $0xa0] sm:$0xff] %v4896
        %4929 = vst [vmem:[%s204 + $0xa8] sm:$0xff] %v4897
        %4930 = vst [vmem:[%s204 + $0xb0] sm:$0xff] %v4898
        %4931 = vst [vmem:[%s204 + $0xb8] sm:$0xff] %v4899
        %4932 = vst [vmem:[%s204 + $0xc0] sm:$0xff] %v4900
        %4933 = vst [vmem:[%s204 + $0xc8] sm:$0xff] %v4901
        %4934 = vst [vmem:[%s204 + $0xd0] sm:$0xff] %v4902
        %4935 = vst [vmem:[%s204 + $0xd8] sm:$0xff] %v4903
        %4936 = vst [vmem:[%s204 + $0xe0] sm:$0xff] %v4904
        %4937 = vst [vmem:[%s204 + $0xe8] sm:$0xff] %v4905
        %4938 = vst [vmem:[%s204 + $0xf0] sm:$0xff] %v4906
        %4939 = vst [vmem:[%s204 + $0xf8] sm:$0xff] %v4907
        %p4940 = scmp.lt.s32.totalorder %s15, 1
        %s4941 = scalar_select %p4940, %s15, 1
        %s4942 = smul.addr %s4941, 32
        %s4943 = smul.addr %s4942, 8
        %s4944 = scalar_lea.vmem %s3, %s4943
        // Predicated region
        $region37: #{bottleneck_forward.9} parent=31 // pred_check
          %p4945 = pneg %p106
        $region38: #{bottleneck_forward.9} parent=31 // pred_check_branch
          %4947 = sbr.rel (%p4945) target = $region40
        $region39: #{bottleneck_forward.9} parent=31 // pred_region
          _
        $region40: #{bottleneck_forward.9} parent=31 // pred_fallthru
          _
      $region32: #{bottleneck_forward.9} parent=5 // pred_fallthru
        _
      %p4948 = scmp.le.s32.totalorder 2, %s10
      // Predicated region
      $region41: #{bottleneck_forward.9} parent=5 // pred_check
        %p4949 = pneg %p4948
      $region42: #{bottleneck_forward.9} parent=5 // pred_check_branch
        %4951 = sbr.rel (%p4949) target = $region44
      $region43: #{bottleneck_forward.9} parent=5 // pred_region
        %s4952 = ssub.s32 %s10, 2
        // Predicated region
        $region45: #{bottleneck_forward.9} parent=43 // pred_check
          %p4953 = pneg %p112
        $region46: #{bottleneck_forward.9} parent=43 // pred_check_branch
          %4955 = sbr.rel (%p4953) target = $region48
        $region47: #{bottleneck_forward.9} parent=43 // pred_region
          %p4956 = scmp.lt.s32.totalorder %s16, 1
          %s4957 = scalar_select %p4956, %s16, 1
          %s4958 = smul.addr %s4957, 32
          %s4959 = smul.addr %s4958, 8
          %s4960 = scalar_lea.vmem %s3, %s4959
        $region48: #{bottleneck_forward.9} parent=43 // pred_fallthru
          _
      $region44: #{bottleneck_forward.9} parent=5 // pred_fallthru
        _
    $region6: #{bottleneck_forward.9} parent=1 // loop_footer
      %s14 = sadd.s32 1, %s10
    $region7: #{bottleneck_forward.9} parent=1 // loop_footer_branch
      %9 = sbr.rel target = $region3
    $region8: #{bottleneck_forward.9} parent=1 // loop_exit
      _
    %4961 = vsyncpa [#allocation3], 1
    %s4962 = scalar_lea.sflag [#allocation3], 1
    %4963 = vsyncpa %s4962, 1

</llo_original>
